<compile_context>
chip_gen: v7x
topology: tpu7x:2x2x1
jax: 0.10.0
libtpu: 0.0.40
codegen_flags: <defaults>
</compile_context>

<pallas_src>
import functools

import jax
import jax.numpy as jnp
from jax import lax
from jax.experimental import pallas as pl
from jax.experimental.pallas import tpu as pltpu

VOCAB = 32128
NUM_HEAVY_TOKENS = 4
NEG_INF = -1e9
EPS = 1e-6
WDT = jnp.bfloat16  # storage dtype for matmul weights (fp32 accumulation on MXU)


# ----------------------------- Pallas kernels -------------------------------

def _light_attn_kernel(x_ref, g_ref, wqkv_ref, bqkv_ref, wo_ref, bo_ref,
                       *rest, heads, dim_head, has_mask):
    """Fused RMSNorm -> QKV proj -> per-head softmax attention -> out proj."""
    if has_mask:
        km_ref, o_ref = rest
    else:
        (o_ref,) = rest

    x = x_ref[0]                                                   # [S, D]
    inv = lax.rsqrt(jnp.mean(x * x, axis=-1, keepdims=True) + EPS)
    xn = x * inv * g_ref[...]                                      # [S, D]

    inner = heads * dim_head
    qkv = jnp.dot(xn.astype(WDT), wqkv_ref[...],
                  preferred_element_type=jnp.float32) + bqkv_ref[...]  # [S, 3*inner]
    q = qkv[:, :inner]
    k = qkv[:, inner:2 * inner]
    v = qkv[:, 2 * inner:]

    scale = dim_head ** -0.5
    if has_mask:
        km = km_ref[0]                                             # [1, S] (keys)

    outs = []
    for h in range(heads):
        sl = slice(h * dim_head, (h + 1) * dim_head)
        qh, kh, vh = q[:, sl], k[:, sl], v[:, sl]
        s = lax.dot_general(qh.astype(WDT), kh.astype(WDT),
                            (((1,), (1,)), ((), ())),
                            preferred_element_type=jnp.float32) * scale   # [S, S]
        if has_mask:
            s = jnp.where(km > 0.5, s, NEG_INF)
        m = jnp.max(s, axis=-1, keepdims=True)
        p = jnp.exp(s - m)
        denom = jnp.sum(p, axis=-1, keepdims=True)
        oh = jnp.dot(p.astype(WDT), vh.astype(WDT),
                     preferred_element_type=jnp.float32)
        outs.append(oh * pl.reciprocal(denom, approx=True))
    out = jnp.concatenate(outs, axis=-1) if heads > 1 else outs[0]  # [S, inner]

    o_ref[0] = jnp.dot(out.astype(WDT), wo_ref[...],
                       preferred_element_type=jnp.float32) + bo_ref[...]


def _heavy_attn_kernel(x_ref, ohq_ref, scatq_ref, ohkv_ref, qg_ref, kvg_ref,
                       g_ref, wq_ref, bq_ref, wkv_ref, bkv_ref, wo_ref, bo_ref,
                       nk_ref, nv_ref, *rest, heads, dim_head, has_mask):
    """Heavy routed attention: one-hot gather, RMSNorm, Q / (K|V) proj, softmax
    with learned null key/value, value & query gates, out proj, one-hot scatter."""
    if has_mask:
        kvm_ref, o_ref = rest
    else:
        (o_ref,) = rest

    x = x_ref[0]                                                    # [S, D]
    ohq = ohq_ref[0]                                                # [kq, S]
    ohkv = ohkv_ref[0]                                              # [kkv, S]

    q_tok = jnp.dot(ohq, x, preferred_element_type=jnp.float32)     # [kq, D]
    kv_tok = jnp.dot(ohkv, x, preferred_element_type=jnp.float32)   # [kkv, D]

    def rms(t):
        return t * lax.rsqrt(jnp.mean(t * t, axis=-1, keepdims=True) + EPS) * g_ref[...]

    qn = rms(q_tok)
    kvn = rms(kv_tok)

    inner = heads * dim_head
    q = jnp.dot(qn.astype(WDT), wq_ref[...],
                preferred_element_type=jnp.float32) + bq_ref[...]    # [kq, inner]
    kv = jnp.dot(kvn.astype(WDT), wkv_ref[...],
                 preferred_element_type=jnp.float32) + bkv_ref[...]  # [kkv, 2*inner]
    k = kv[:, :inner]
    v = kv[:, inner:] * kvg_ref[0]                                   # kv gate [kkv,1]

    scale = dim_head ** -0.5
    nk = nk_ref[...]                                                 # [heads, dh]
    nv = nv_ref[...]
    if has_mask:
        kvm = kvm_ref[0]                                             # [1, kkv]

    outs = []
    for h in range(heads):
        sl = slice(h * dim_head, (h + 1) * dim_head)
        qh, kh, vh = q[:, sl], k[:, sl], v[:, sl]
        s = lax.dot_general(qh.astype(WDT), kh.astype(WDT),
                            (((1,), (1,)), ((), ())),
                            preferred_element_type=jnp.float32) * scale  # [kq, kkv]
        if has_mask:
            s = jnp.where(kvm > 0.5, s, NEG_INF)
        # learned null key/value (always attendable)
        s_null = jnp.sum(qh * nk[h:h + 1, :], axis=-1, keepdims=True) * scale  # [kq,1]
        m = jnp.maximum(jnp.max(s, axis=-1, keepdims=True), s_null)
        p = jnp.exp(s - m)
        p_null = jnp.exp(s_null - m)
        denom = jnp.sum(p, axis=-1, keepdims=True) + p_null
        oh = jnp.dot(p.astype(WDT), vh.astype(WDT),
                     preferred_element_type=jnp.float32) + p_null * nv[h:h + 1, :]
        outs.append(oh * pl.reciprocal(denom, approx=True))
    out = jnp.concatenate(outs, axis=-1) if heads > 1 else outs[0]   # [kq, inner]

    out = jnp.dot(out.astype(WDT), wo_ref[...],
                  preferred_element_type=jnp.float32) + bo_ref[...]  # [kq, D]
    out = out * qg_ref[0]                                            # query gate [kq,1]
    # scatter back to the full sequence (one-hot^T on the MXU)
    o_ref[0] = jnp.dot(scatq_ref[0], out, preferred_element_type=jnp.float32)


def _cond_ff_kernel(x_ref, oh_ref, scat_ref, gate_ref,
                    gl_ref, w1l_ref, b1l_ref, w2l_ref, b2l_ref,
                    gh_ref, w1h_ref, b1h_ref, w2h_ref, b2h_ref, o_ref):
    """Fused light FF (all tokens) + heavy routed FF (top-k tokens), scattered back."""
    x = x_ref[0]                                                     # [S, D]

    def ff(t, g, w1_ref, b1, w2_ref, b2):
        tn = t * lax.rsqrt(jnp.mean(t * t, axis=-1, keepdims=True) + EPS) * g
        h = jnp.dot(tn.astype(WDT), w1_ref[...],
                    preferred_element_type=jnp.float32) + b1
        h = jax.nn.gelu(h)
        return jnp.dot(h.astype(WDT), w2_ref[...],
                       preferred_element_type=jnp.float32) + b2

    light = ff(x, gl_ref[...], w1l_ref, b1l_ref[...], w2l_ref, b2l_ref[...])   # [S, D]

    routed = jnp.dot(oh_ref[0], x, preferred_element_type=jnp.float32)         # [kff, D]
    heavy = ff(routed, gh_ref[...], w1h_ref, b1h_ref[...], w2h_ref, b2h_ref[...])
    heavy = heavy * gate_ref[0]                                                # [kff, 1]

    o_ref[0] = light + jnp.dot(scat_ref[0], heavy,
                               preferred_element_type=jnp.float32)


# ------------------------------ block wrappers -------------------------------

def _parallel_params():
    return pltpu.CompilerParams(dimension_semantics=("parallel",))


def light_self_attention(x, p, heads, dim_head, mask=None):
    b, s, d = x.shape
    inner = heads * dim_head
    has_mask = mask is not None
    kern = functools.partial(_light_attn_kernel, heads=heads, dim_head=dim_head,
                             has_mask=has_mask)
    args = [x,
            p["norm"].reshape(1, d),
            p["wqkv"],
            p["bqkv"].reshape(1, 3 * inner),
            p["wo"],
            p["bo"].reshape(1, d)]
    in_specs = [pl.BlockSpec((1, s, d), lambda i: (i, 0, 0)),
                pl.BlockSpec((1, d), lambda i: (0, 0)),
                pl.BlockSpec((d, 3 * inner), lambda i: (0, 0)),
                pl.BlockSpec((1, 3 * inner), lambda i: (0, 0)),
                pl.BlockSpec((inner, d), lambda i: (0, 0)),
                pl.BlockSpec((1, d), lambda i: (0, 0))]
    if has_mask:
        args.append(mask.astype(jnp.float32).reshape(b, 1, s))
        in_specs.append(pl.BlockSpec((1, 1, s), lambda i: (i, 0, 0)))

    flops = b * (2 * s * d * 3 * inner + 4 * heads * s * s * dim_head
                 + 2 * s * inner * d)
    bytes_accessed = 4 * (2 * b * s * d) + 2 * (d * 3 * inner + inner * d)
    return pl.pallas_call(
        kern,
        out_shape=jax.ShapeDtypeStruct((b, s, d), jnp.float32),
        grid=(b,),
        in_specs=in_specs,
        out_specs=pl.BlockSpec((1, s, d), lambda i: (i, 0, 0)),
        compiler_params=_parallel_params(),
        cost_estimate=pl.CostEstimate(flops=int(flops),
                                      transcendentals=int(b * heads * s * s),
                                      bytes_accessed=int(bytes_accessed)),
    )(*args)


def route(x, router_gamma, w_router, k, mask=None):
    """Top-k routing (plain-JAX glue): RMSNorm score -> top-k -> sigmoid gate + one-hot."""
    # TODO(synk): coordinate-descent sparse router approximated by hard top-k + sigmoid gate.
    b, s, _ = x.shape
    inv = lax.rsqrt(jnp.mean(x * x, axis=-1, keepdims=True) + EPS)
    xn = x * inv * router_gamma
    scores = jnp.einsum('bsd,d->bs', xn, w_router)
    if mask is not None:
        scores = jnp.where(mask, scores, NEG_INF)
    top_scores, idx = lax.top_k(scores, k)
    gates = jax.nn.sigmoid(top_scores)
    onehot = (idx[:, :, None] == jnp.arange(s)[None, None, :]).astype(jnp.float32)
    return onehot, gates, idx


def heavy_self_attention(x, p, heads, dim_head, kq, kkv, mask=None):
    b, s, d = x.shape
    inner = heads * dim_head
    ohq, qgate, _ = route(x, p["router_norm"], p["router_q"], kq, mask)
    ohkv, kvgate, kv_idx = route(x, p["router_norm"], p["router_kv"], kkv, mask)
    scat_q = jnp.transpose(ohq, (0, 2, 1))                           # [B, S, kq]
    has_mask = mask is not None

    kern = functools.partial(_heavy_attn_kernel, heads=heads, dim_head=dim_head,
                             has_mask=has_mask)
    args = [x, ohq, scat_q, ohkv,
            qgate[:, :, None], kvgate[:, :, None],
            p["norm"].reshape(1, d),
            p["wq"], p["bq"].reshape(1, inner),
            p["wkv"], p["bkv"].reshape(1, 2 * inner),
            p["wo"], p["bo"].reshape(1, d),
            p["null_k"], p["null_v"]]
    in_specs = [pl.BlockSpec((1, s, d), lambda i: (i, 0, 0)),
                pl.BlockSpec((1, kq, s), lambda i: (i, 0, 0)),
                pl.BlockSpec((1, s, kq), lambda i: (i, 0, 0)),
                pl.BlockSpec((1, kkv, s), lambda i: (i, 0, 0)),
                pl.BlockSpec((1, kq, 1), lambda i: (i, 0, 0)),
                pl.BlockSpec((1, kkv, 1), lambda i: (i, 0, 0)),
                pl.BlockSpec((1, d), lambda i: (0, 0)),
                pl.BlockSpec((d, inner), lambda i: (0, 0)),
                pl.BlockSpec((1, inner), lambda i: (0, 0)),
                pl.BlockSpec((d, 2 * inner), lambda i: (0, 0)),
                pl.BlockSpec((1, 2 * inner), lambda i: (0, 0)),
                pl.BlockSpec((inner, d), lambda i: (0, 0)),
                pl.BlockSpec((1, d), lambda i: (0, 0)),
                pl.BlockSpec((heads, dim_head), lambda i: (0, 0)),
                pl.BlockSpec((heads, dim_head), lambda i: (0, 0))]
    if has_mask:
        kv_mask = jnp.take_along_axis(mask, kv_idx, axis=1)
        args.append(kv_mask.astype(jnp.float32).reshape(b, 1, kkv))
        in_specs.append(pl.BlockSpec((1, 1, kkv), lambda i: (i, 0, 0)))

    return pl.pallas_call(
        kern,
        out_shape=jax.ShapeDtypeStruct((b, s, d), jnp.float32),
        grid=(b,),
        in_specs=in_specs,
        out_specs=pl.BlockSpec((1, s, d), lambda i: (i, 0, 0)),
        compiler_params=_parallel_params(),
    )(*args)


def conditional_feedforward(x, p, kff, mask=None):
    b, s, d = x.shape
    hl = p["light"]["w1"].shape[1]
    hh = p["heavy"]["w1"].shape[1]
    oh, gate, _ = route(x, p["router_norm"], p["router"], kff, mask)
    scat = jnp.transpose(oh, (0, 2, 1))                              # [B, S, kff]

    args = [x, oh, scat, gate[:, :, None],
            p["light"]["gamma"].reshape(1, d), p["light"]["w1"],
            p["light"]["b1"].reshape(1, hl), p["light"]["w2"],
            p["light"]["b2"].reshape(1, d),
            p["heavy"]["gamma"].reshape(1, d), p["heavy"]["w1"],
            p["heavy"]["b1"].reshape(1, hh), p["heavy"]["w2"],
            p["heavy"]["b2"].reshape(1, d)]
    in_specs = [pl.BlockSpec((1, s, d), lambda i: (i, 0, 0)),
                pl.BlockSpec((1, kff, s), lambda i: (i, 0, 0)),
                pl.BlockSpec((1, s, kff), lambda i: (i, 0, 0)),
                pl.BlockSpec((1, kff, 1), lambda i: (i, 0, 0)),
                pl.BlockSpec((1, d), lambda i: (0, 0)),
                pl.BlockSpec((d, hl), lambda i: (0, 0)),
                pl.BlockSpec((1, hl), lambda i: (0, 0)),
                pl.BlockSpec((hl, d), lambda i: (0, 0)),
                pl.BlockSpec((1, d), lambda i: (0, 0)),
                pl.BlockSpec((1, d), lambda i: (0, 0)),
                pl.BlockSpec((d, hh), lambda i: (0, 0)),
                pl.BlockSpec((1, hh), lambda i: (0, 0)),
                pl.BlockSpec((hh, d), lambda i: (0, 0)),
                pl.BlockSpec((1, d), lambda i: (0, 0))]

    flops = b * (4 * s * d * hl + 4 * kff * d * hh + 4 * kff * s * d)
    bytes_accessed = 4 * (2 * b * s * d) + 2 * 2 * (d * hl + d * hh)
    return pl.pallas_call(
        _cond_ff_kernel,
        out_shape=jax.ShapeDtypeStruct((b, s, d), jnp.float32),
        grid=(b,),
        in_specs=in_specs,
        out_specs=pl.BlockSpec((1, s, d), lambda i: (i, 0, 0)),
        compiler_params=_parallel_params(),
        cost_estimate=pl.CostEstimate(flops=int(flops),
                                      transcendentals=int(b * (s * hl + kff * hh)),
                                      bytes_accessed=int(bytes_accessed)),
    )(*args)


def encoder_block(x, p, cfg, mask=None):
    attn = (light_self_attention(x, p["light_attn"], cfg["heads"],
                                 cfg["dim_head"], mask)
            + heavy_self_attention(x, p["heavy_attn"], cfg["heads"],
                                   cfg["dim_head"], cfg["nq"], cfg["nkv"], mask))
    x = x + attn
    x = x + conditional_feedforward(x, p["ff"], cfg["nff"], mask)
    return x


def colt5_encoder_forward(params, input_ids, cfg, mask=None):
    x = jnp.take(params["embed"], input_ids, axis=0)
    for lp in params["layers"]:
        x = encoder_block(x, lp, cfg, mask)
    return x


# ------------------------------ parameter init -------------------------------

def init_params(key, num_layers, dim, heads, dim_head):
    inner = heads * dim_head
    keys = iter(jax.random.split(key, 4096))

    def nrm(shape, scale=0.02, dtype=jnp.float32):
        return (jax.random.normal(next(keys), shape, jnp.float32) * scale).astype(dtype)

    def light_attn_p():
        return {"norm": jnp.ones((dim,), jnp.float32),
                "wqkv": nrm((dim, 3 * inner), dtype=WDT),
                "bqkv": jnp.zeros((3 * inner,), jnp.float32),
                "wo": nrm((inner, dim), dtype=WDT),
                "bo": jnp.zeros((dim,), jnp.float32)}

    def heavy_attn_p():
        return {"router_norm": jnp.ones((dim,), jnp.float32),
                "router_q": nrm((dim,)),
                "router_kv": nrm((dim,)),
                "norm": jnp.ones((dim,), jnp.float32),
                "wq": nrm((dim, inner), dtype=WDT),
                "bq": jnp.zeros((inner,), jnp.float32),
                "wkv": nrm((dim, 2 * inner), dtype=WDT),
                "bkv": jnp.zeros((2 * inner,), jnp.float32),
                "wo": nrm((inner, dim), dtype=WDT),
                "bo": jnp.zeros((dim,), jnp.float32),
                "null_k": nrm((heads, dim_head), scale=1.0),
                "null_v": nrm((heads, dim_head), scale=1.0)}

    def ff_p(hidden):
        return {"gamma": jnp.ones((dim,), jnp.float32),
                "w1": nrm((dim, hidden), dtype=WDT),
                "b1": jnp.zeros((hidden,), jnp.float32),
                "w2": nrm((hidden, dim), dtype=WDT),
                "b2": jnp.zeros((dim,), jnp.float32)}

    def ff_block_p():
        return {"router_norm": jnp.ones((dim,), jnp.float32),
                "router": nrm((dim,)),
                "light": ff_p(max(dim // 2, 8)),
                "heavy": ff_p(dim * 4)}

    def layer():
        return {"light_attn": light_attn_p(),
                "heavy_attn": heavy_attn_p(),
                "ff": ff_block_p()}

    return {"embed": nrm((VOCAB, dim)),
            "layers": [layer() for _ in range(num_layers)]}


# ----------------------------------- main ------------------------------------

if __name__ == "__main__":
    num_layers = 2
    dim = 32
    heads = 2
    dim_head = 16
    batch = 2
    seq = 8

    cfg = {"heads": heads, "dim_head": dim_head,
           "nq": NUM_HEAVY_TOKENS, "nkv": NUM_HEAVY_TOKENS,
           "nff": NUM_HEAVY_TOKENS}

    key = jax.random.PRNGKey(0)
    k_inp, k_par = jax.random.split(key)
    input_ids = jax.random.randint(k_inp, (batch, seq), 0, VOCAB, dtype=jnp.int32)
    params = init_params(k_par, num_layers, dim, heads, dim_head)

    fwd = jax.jit(functools.partial(colt5_encoder_forward, cfg=cfg))
    out = fwd(params, input_ids)
    jax.block_until_ready(out)

    assert out.shape == (batch, seq, dim), out.shape
    assert bool(jnp.all(jnp.isfinite(out)))
    print("KERNEL_OK")
</pallas_src>

<mosaic_0001>
module attributes {stable_mosaic.version = 11 : i64} {
  func.func @_light_attn_kernel(%arg0: i32, %arg1: memref<1x8x32xf32, #tpu.memory_space<vmem>>, %arg2: memref<1x32xf32, #tpu.memory_space<vmem>>, %arg3: memref<32x96xbf16, #tpu.memory_space<vmem>>, %arg4: memref<1x96xf32, #tpu.memory_space<vmem>>, %arg5: memref<32x32xbf16, #tpu.memory_space<vmem>>, %arg6: memref<1x32xf32, #tpu.memory_space<vmem>>, %arg7: memref<1x8x32xf32, #tpu.memory_space<vmem>>) attributes {dimension_semantics = [#tpu.dimension_semantics<parallel>], iteration_bounds = array<i64: 2>, scalar_prefetch = 0 : i64, scratch_operands = 0 : i64, tpu.core_type = #tpu.core_type<tc>, window_params = [{transform_indices = @transform_0, window_bounds = array<i64: 1, 8, 32>}, {pipeline_mode = #tpu.pipeline_mode<synchronous>, transform_indices = @transform_1, window_bounds = array<i64: 1, 32>}, {pipeline_mode = #tpu.pipeline_mode<synchronous>, transform_indices = @transform_2, window_bounds = array<i64: 32, 96>}, {pipeline_mode = #tpu.pipeline_mode<synchronous>, transform_indices = @transform_3, window_bounds = array<i64: 1, 96>}, {pipeline_mode = #tpu.pipeline_mode<synchronous>, transform_indices = @transform_4, window_bounds = array<i64: 32, 32>}, {pipeline_mode = #tpu.pipeline_mode<synchronous>, transform_indices = @transform_5, window_bounds = array<i64: 1, 32>}, {transform_indices = @transform_6, window_bounds = array<i64: 1, 8, 32>}]} {
    %c0 = arith.constant 0 : index
    %c0_0 = arith.constant 0 : index
    %c0_1 = arith.constant 0 : index
    %0 = vector.load %arg1[%c0, %c0_0, %c0_1] : memref<1x8x32xf32, #tpu.memory_space<vmem>>, vector<1x8x32xf32>
    %1 = vector.shape_cast %0 : vector<1x8x32xf32> to vector<8x32xf32>
    %2 = arith.mulf %1, %1 : vector<8x32xf32>
    %cst = arith.constant dense<0.000000e+00> : vector<8xf32>
    %3 = vector.multi_reduction <add>, %2, %cst [1] : vector<8x32xf32> to vector<8xf32>
    %4 = vector.shape_cast %3 : vector<8xf32> to vector<8x1xf32>
    %cst_2 = arith.constant 3.200000e+01 : f32
    %5 = vector.broadcast %cst_2 : f32 to vector<8x1xf32>
    %6 = arith.divf %4, %5 : vector<8x1xf32>
    %cst_3 = arith.constant 9.99999997E-7 : f32
    %7 = vector.broadcast %cst_3 : f32 to vector<8x1xf32>
    %8 = arith.addf %6, %7 : vector<8x1xf32>
    %9 = math.rsqrt %8 : vector<8x1xf32>
    %10 = vector.broadcast %9 : vector<8x1xf32> to vector<8x32xf32>
    %11 = arith.mulf %1, %10 : vector<8x32xf32>
    %c0_4 = arith.constant 0 : index
    %c0_5 = arith.constant 0 : index
    %12 = vector.load %arg2[%c0_4, %c0_5] : memref<1x32xf32, #tpu.memory_space<vmem>>, vector<1x32xf32>
    %13 = vector.broadcast %12 : vector<1x32xf32> to vector<8x32xf32>
    %14 = arith.mulf %11, %13 : vector<8x32xf32>
    %15 = arith.truncf %14 : vector<8x32xf32> to vector<8x32xbf16>
    %c0_6 = arith.constant 0 : index
    %c0_7 = arith.constant 0 : index
    %16 = vector.load %arg3[%c0_6, %c0_7] : memref<32x96xbf16, #tpu.memory_space<vmem>>, vector<32x96xbf16>
    %cst_8 = arith.constant dense<0.000000e+00> : vector<8x96xf32>
    %17 = tpu.matmul %15, %16, %cst_8 {dimension_numbers = #tpu.dot_dimension_numbers<[1], [0], [0], [1], [0, 0, 1, 1], [], []>} : vector<8x32xbf16>, vector<32x96xbf16>, vector<8x96xf32> -> vector<8x96xf32>
    %c0_9 = arith.constant 0 : index
    %c0_10 = arith.constant 0 : index
    %18 = vector.load %arg4[%c0_9, %c0_10] : memref<1x96xf32, #tpu.memory_space<vmem>>, vector<1x96xf32>
    %19 = vector.broadcast %18 : vector<1x96xf32> to vector<8x96xf32>
    %20 = arith.addf %17, %19 : vector<8x96xf32>
    %21 = vector.extract_strided_slice %20 {offsets = [0, 0], sizes = [8, 32], strides = [1, 1]} : vector<8x96xf32> to vector<8x32xf32>
    %22 = vector.extract_strided_slice %20 {offsets = [0, 32], sizes = [8, 32], strides = [1, 1]} : vector<8x96xf32> to vector<8x32xf32>
    %23 = vector.extract_strided_slice %20 {offsets = [0, 64], sizes = [8, 32], strides = [1, 1]} : vector<8x96xf32> to vector<8x32xf32>
    %24 = vector.extract_strided_slice %21 {offsets = [0, 0], sizes = [8, 16], strides = [1, 1]} : vector<8x32xf32> to vector<8x16xf32>
    %25 = vector.extract_strided_slice %22 {offsets = [0, 0], sizes = [8, 16], strides = [1, 1]} : vector<8x32xf32> to vector<8x16xf32>
    %26 = vector.extract_strided_slice %23 {offsets = [0, 0], sizes = [8, 16], strides = [1, 1]} : vector<8x32xf32> to vector<8x16xf32>
    %27 = arith.truncf %24 : vector<8x16xf32> to vector<8x16xbf16>
    %28 = arith.truncf %25 : vector<8x16xf32> to vector<8x16xbf16>
    %cst_11 = arith.constant dense<0.000000e+00> : vector<8x8xf32>
    %29 = tpu.matmul %27, %28, %cst_11 {dimension_numbers = #tpu.dot_dimension_numbers<[1], [1], [0], [0], [0, 0, 1, 0], [], []>} : vector<8x16xbf16>, vector<8x16xbf16>, vector<8x8xf32> -> vector<8x8xf32>
    %cst_12 = arith.constant 2.500000e-01 : f32
    %30 = vector.broadcast %cst_12 : f32 to vector<8x8xf32>
    %31 = arith.mulf %29, %30 : vector<8x8xf32>
    %cst_13 = arith.constant dense<0xFF800000> : vector<8xf32>
    %32 = vector.multi_reduction <maximumf>, %31, %cst_13 [1] : vector<8x8xf32> to vector<8xf32>
    %33 = vector.shape_cast %32 : vector<8xf32> to vector<8x1xf32>
    %34 = vector.broadcast %33 : vector<8x1xf32> to vector<8x8xf32>
    %35 = arith.subf %31, %34 : vector<8x8xf32>
    %36 = math.exp %35 : vector<8x8xf32>
    %cst_14 = arith.constant dense<0.000000e+00> : vector<8xf32>
    %37 = vector.multi_reduction <add>, %36, %cst_14 [1] : vector<8x8xf32> to vector<8xf32>
    %38 = vector.shape_cast %37 : vector<8xf32> to vector<8x1xf32>
    %39 = arith.truncf %36 : vector<8x8xf32> to vector<8x8xbf16>
    %40 = arith.truncf %26 : vector<8x16xf32> to vector<8x16xbf16>
    %cst_15 = arith.constant dense<0.000000e+00> : vector<8x16xf32>
    %41 = tpu.matmul %39, %40, %cst_15 {dimension_numbers = #tpu.dot_dimension_numbers<[1], [0], [0], [1], [0, 0, 1, 1], [], []>} : vector<8x8xbf16>, vector<8x16xbf16>, vector<8x16xf32> -> vector<8x16xf32>
    %42 = tpu.reciprocal %38 {approx = true} : vector<8x1xf32> -> vector<8x1xf32>
    %43 = vector.broadcast %42 : vector<8x1xf32> to vector<8x16xf32>
    %44 = arith.mulf %41, %43 : vector<8x16xf32>
    %45 = vector.extract_strided_slice %21 {offsets = [0, 16], sizes = [8, 16], strides = [1, 1]} : vector<8x32xf32> to vector<8x16xf32>
    %46 = vector.extract_strided_slice %22 {offsets = [0, 16], sizes = [8, 16], strides = [1, 1]} : vector<8x32xf32> to vector<8x16xf32>
    %47 = vector.extract_strided_slice %23 {offsets = [0, 16], sizes = [8, 16], strides = [1, 1]} : vector<8x32xf32> to vector<8x16xf32>
    %48 = arith.truncf %45 : vector<8x16xf32> to vector<8x16xbf16>
    %49 = arith.truncf %46 : vector<8x16xf32> to vector<8x16xbf16>
    %cst_16 = arith.constant dense<0.000000e+00> : vector<8x8xf32>
    %50 = tpu.matmul %48, %49, %cst_16 {dimension_numbers = #tpu.dot_dimension_numbers<[1], [1], [0], [0], [0, 0, 1, 0], [], []>} : vector<8x16xbf16>, vector<8x16xbf16>, vector<8x8xf32> -> vector<8x8xf32>
    %cst_17 = arith.constant 2.500000e-01 : f32
    %51 = vector.broadcast %cst_17 : f32 to vector<8x8xf32>
    %52 = arith.mulf %50, %51 : vector<8x8xf32>
    %cst_18 = arith.constant dense<0xFF800000> : vector<8xf32>
    %53 = vector.multi_reduction <maximumf>, %52, %cst_18 [1] : vector<8x8xf32> to vector<8xf32>
    %54 = vector.shape_cast %53 : vector<8xf32> to vector<8x1xf32>
    %55 = vector.broadcast %54 : vector<8x1xf32> to vector<8x8xf32>
    %56 = arith.subf %52, %55 : vector<8x8xf32>
    %57 = math.exp %56 : vector<8x8xf32>
    %cst_19 = arith.constant dense<0.000000e+00> : vector<8xf32>
    %58 = vector.multi_reduction <add>, %57, %cst_19 [1] : vector<8x8xf32> to vector<8xf32>
    %59 = vector.shape_cast %58 : vector<8xf32> to vector<8x1xf32>
    %60 = arith.truncf %57 : vector<8x8xf32> to vector<8x8xbf16>
    %61 = arith.truncf %47 : vector<8x16xf32> to vector<8x16xbf16>
    %cst_20 = arith.constant dense<0.000000e+00> : vector<8x16xf32>
    %62 = tpu.matmul %60, %61, %cst_20 {dimension_numbers = #tpu.dot_dimension_numbers<[1], [0], [0], [1], [0, 0, 1, 1], [], []>} : vector<8x8xbf16>, vector<8x16xbf16>, vector<8x16xf32> -> vector<8x16xf32>
    %63 = tpu.reciprocal %59 {approx = true} : vector<8x1xf32> -> vector<8x1xf32>
    %64 = vector.broadcast %63 : vector<8x1xf32> to vector<8x16xf32>
    %65 = arith.mulf %62, %64 : vector<8x16xf32>
    %66 = tpu.concatenate %44, %65 in 1 : vector<8x16xf32>, vector<8x16xf32> -> vector<8x32xf32>
    %67 = arith.truncf %66 : vector<8x32xf32> to vector<8x32xbf16>
    %c0_21 = arith.constant 0 : index
    %c0_22 = arith.constant 0 : index
    %68 = vector.load %arg5[%c0_21, %c0_22] : memref<32x32xbf16, #tpu.memory_space<vmem>>, vector<32x32xbf16>
    %cst_23 = arith.constant dense<0.000000e+00> : vector<8x32xf32>
    %69 = tpu.matmul %67, %68, %cst_23 {dimension_numbers = #tpu.dot_dimension_numbers<[1], [0], [0], [1], [0, 0, 1, 1], [], []>} : vector<8x32xbf16>, vector<32x32xbf16>, vector<8x32xf32> -> vector<8x32xf32>
    %c0_24 = arith.constant 0 : index
    %c0_25 = arith.constant 0 : index
    %70 = vector.load %arg6[%c0_24, %c0_25] : memref<1x32xf32, #tpu.memory_space<vmem>>, vector<1x32xf32>
    %71 = vector.broadcast %70 : vector<1x32xf32> to vector<8x32xf32>
    %72 = arith.addf %69, %71 : vector<8x32xf32>
    %c0_26 = arith.constant 0 : index
    %c0_27 = arith.constant 0 : index
    %c0_28 = arith.constant 0 : index
    %73 = vector.load %arg7[%c0_26, %c0_27, %c0_28] : memref<1x8x32xf32, #tpu.memory_space<vmem>>, vector<1x8x32xf32>
    %74 = vector.shape_cast %73 : vector<1x8x32xf32> to vector<8x32xf32>
    %75 = vector.shape_cast %72 : vector<8x32xf32> to vector<1x8x32xf32>
    tpu.vector_store %arg7[%c0_26, %c0_27, %c0_28], %75 {strides = array<i32>} : memref<1x8x32xf32, #tpu.memory_space<vmem>>, vector<1x8x32xf32>,
    return
  }
  func.func @transform_0(%arg0: i32) -> (i32, i32, i32) {
    %c0_i32 = arith.constant 0 : i32
    %c0_i32_0 = arith.constant 0 : i32
    %c0_i32_1 = arith.constant 0 : i32
    return %arg0, %c0_i32, %c0_i32_0 : i32, i32, i32
  }
  func.func @transform_1(%arg0: i32) -> (i32, i32) {
    %c0_i32 = arith.constant 0 : i32
    %c0_i32_0 = arith.constant 0 : i32
    %c0_i32_1 = arith.constant 0 : i32
    return %c0_i32, %c0_i32_0 : i32, i32
  }
  func.func @transform_2(%arg0: i32) -> (i32, i32) {
    %c0_i32 = arith.constant 0 : i32
    %c0_i32_0 = arith.constant 0 : i32
    %c0_i32_1 = arith.constant 0 : i32
    return %c0_i32, %c0_i32_0 : i32, i32
  }
  func.func @transform_3(%arg0: i32) -> (i32, i32) {
    %c0_i32 = arith.constant 0 : i32
    %c0_i32_0 = arith.constant 0 : i32
    %c0_i32_1 = arith.constant 0 : i32
    return %c0_i32, %c0_i32_0 : i32, i32
  }
  func.func @transform_4(%arg0: i32) -> (i32, i32) {
    %c0_i32 = arith.constant 0 : i32
    %c0_i32_0 = arith.constant 0 : i32
    %c0_i32_1 = arith.constant 0 : i32
    return %c0_i32, %c0_i32_0 : i32, i32
  }
  func.func @transform_5(%arg0: i32) -> (i32, i32) {
    %c0_i32 = arith.constant 0 : i32
    %c0_i32_0 = arith.constant 0 : i32
    %c0_i32_1 = arith.constant 0 : i32
    return %c0_i32, %c0_i32_0 : i32, i32
  }
  func.func @transform_6(%arg0: i32) -> (i32, i32, i32) {
    %c0_i32 = arith.constant 0 : i32
    %c0_i32_0 = arith.constant 0 : i32
    %c0_i32_1 = arith.constant 0 : i32
    return %arg0, %c0_i32, %c0_i32_0 : i32, i32, i32
  }
}

module attributes {stable_mosaic.version = 11 : i64} {
  func.func @_heavy_attn_kernel(%arg0: i32, %arg1: memref<1x8x32xf32, #tpu.memory_space<vmem>>, %arg2: memref<1x4x8xf32, #tpu.memory_space<vmem>>, %arg3: memref<1x8x4xf32, #tpu.memory_space<vmem>>, %arg4: memref<1x4x8xf32, #tpu.memory_space<vmem>>, %arg5: memref<1x4x1xf32, #tpu.memory_space<vmem>>, %arg6: memref<1x4x1xf32, #tpu.memory_space<vmem>>, %arg7: memref<1x32xf32, #tpu.memory_space<vmem>>, %arg8: memref<32x32xbf16, #tpu.memory_space<vmem>>, %arg9: memref<1x32xf32, #tpu.memory_space<vmem>>, %arg10: memref<32x64xbf16, #tpu.memory_space<vmem>>, %arg11: memref<1x64xf32, #tpu.memory_space<vmem>>, %arg12: memref<32x32xbf16, #tpu.memory_space<vmem>>, %arg13: memref<1x32xf32, #tpu.memory_space<vmem>>, %arg14: memref<2x16xf32, #tpu.memory_space<vmem>>, %arg15: memref<2x16xf32, #tpu.memory_space<vmem>>, %arg16: memref<1x8x32xf32, #tpu.memory_space<vmem>>) attributes {dimension_semantics = [#tpu.dimension_semantics<parallel>], iteration_bounds = array<i64: 2>, scalar_prefetch = 0 : i64, scratch_operands = 0 : i64, tpu.core_type = #tpu.core_type<tc>, window_params = [{transform_indices = @transform_0, window_bounds = array<i64: 1, 8, 32>}, {transform_indices = @transform_1, window_bounds = array<i64: 1, 4, 8>}, {transform_indices = @transform_2, window_bounds = array<i64: 1, 8, 4>}, {transform_indices = @transform_3, window_bounds = array<i64: 1, 4, 8>}, {transform_indices = @transform_4, window_bounds = array<i64: 1, 4, 1>}, {transform_indices = @transform_5, window_bounds = array<i64: 1, 4, 1>}, {pipeline_mode = #tpu.pipeline_mode<synchronous>, transform_indices = @transform_6, window_bounds = array<i64: 1, 32>}, {pipeline_mode = #tpu.pipeline_mode<synchronous>, transform_indices = @transform_7, window_bounds = array<i64: 32, 32>}, {pipeline_mode = #tpu.pipeline_mode<synchronous>, transform_indices = @transform_8, window_bounds = array<i64: 1, 32>}, {pipeline_mode = #tpu.pipeline_mode<synchronous>, transform_indices = @transform_9, window_bounds = array<i64: 32, 64>}, {pipeline_mode = #tpu.pipeline_mode<synchronous>, transform_indices = @transform_10, window_bounds = array<i64: 1, 64>}, {pipeline_mode = #tpu.pipeline_mode<synchronous>, transform_indices = @transform_11, window_bounds = array<i64: 32, 32>}, {pipeline_mode = #tpu.pipeline_mode<synchronous>, transform_indices = @transform_12, window_bounds = array<i64: 1, 32>}, {pipeline_mode = #tpu.pipeline_mode<synchronous>, transform_indices = @transform_13, window_bounds = array<i64: 2, 16>}, {pipeline_mode = #tpu.pipeline_mode<synchronous>, transform_indices = @transform_14, window_bounds = array<i64: 2, 16>}, {transform_indices = @transform_15, window_bounds = array<i64: 1, 8, 32>}]} {
    %c0 = arith.constant 0 : index
    %c0_0 = arith.constant 0 : index
    %c0_1 = arith.constant 0 : index
    %0 = vector.load %arg1[%c0, %c0_0, %c0_1] : memref<1x8x32xf32, #tpu.memory_space<vmem>>, vector<1x8x32xf32>
    %1 = vector.shape_cast %0 : vector<1x8x32xf32> to vector<8x32xf32>
    %c0_2 = arith.constant 0 : index
    %c0_3 = arith.constant 0 : index
    %c0_4 = arith.constant 0 : index
    %2 = vector.load %arg2[%c0_2, %c0_3, %c0_4] : memref<1x4x8xf32, #tpu.memory_space<vmem>>, vector<1x4x8xf32>
    %3 = vector.shape_cast %2 : vector<1x4x8xf32> to vector<4x8xf32>
    %c0_5 = arith.constant 0 : index
    %c0_6 = arith.constant 0 : index
    %c0_7 = arith.constant 0 : index
    %4 = vector.load %arg4[%c0_5, %c0_6, %c0_7] : memref<1x4x8xf32, #tpu.memory_space<vmem>>, vector<1x4x8xf32>
    %5 = vector.shape_cast %4 : vector<1x4x8xf32> to vector<4x8xf32>
    %cst = arith.constant dense<0.000000e+00> : vector<4x32xf32>
    %6 = tpu.matmul %3, %1, %cst {dimension_numbers = #tpu.dot_dimension_numbers<[1], [0], [0], [1], [0, 0, 1, 1], [], []>} : vector<4x8xf32>, vector<8x32xf32>, vector<4x32xf32> -> vector<4x32xf32>
    %cst_8 = arith.constant dense<0.000000e+00> : vector<4x32xf32>
    %7 = tpu.matmul %5, %1, %cst_8 {dimension_numbers = #tpu.dot_dimension_numbers<[1], [0], [0], [1], [0, 0, 1, 1], [], []>} : vector<4x8xf32>, vector<8x32xf32>, vector<4x32xf32> -> vector<4x32xf32>
    %8 = arith.mulf %6, %6 : vector<4x32xf32>
    %cst_9 = arith.constant dense<0.000000e+00> : vector<4xf32>
    %9 = vector.multi_reduction <add>, %8, %cst_9 [1] : vector<4x32xf32> to vector<4xf32>
    %10 = vector.shape_cast %9 : vector<4xf32> to vector<4x1xf32>
    %cst_10 = arith.constant 3.200000e+01 : f32
    %11 = vector.broadcast %cst_10 : f32 to vector<4x1xf32>
    %12 = arith.divf %10, %11 : vector<4x1xf32>
    %cst_11 = arith.constant 9.99999997E-7 : f32
    %13 = vector.broadcast %cst_11 : f32 to vector<4x1xf32>
    %14 = arith.addf %12, %13 : vector<4x1xf32>
    %15 = math.rsqrt %14 : vector<4x1xf32>
    %16 = vector.broadcast %15 : vector<4x1xf32> to vector<4x32xf32>
    %17 = arith.mulf %6, %16 : vector<4x32xf32>
    %c0_12 = arith.constant 0 : index
    %c0_13 = arith.constant 0 : index
    %18 = vector.load %arg7[%c0_12, %c0_13] : memref<1x32xf32, #tpu.memory_space<vmem>>, vector<1x32xf32>
    %19 = vector.broadcast %18 : vector<1x32xf32> to vector<4x32xf32>
    %20 = arith.mulf %17, %19 : vector<4x32xf32>
    %21 = arith.mulf %7, %7 : vector<4x32xf32>
    %cst_14 = arith.constant dense<0.000000e+00> : vector<4xf32>
    %22 = vector.multi_reduction <add>, %21, %cst_14 [1] : vector<4x32xf32> to vector<4xf32>
    %23 = vector.shape_cast %22 : vector<4xf32> to vector<4x1xf32>
    %cst_15 = arith.constant 3.200000e+01 : f32
    %24 = vector.broadcast %cst_15 : f32 to vector<4x1xf32>
    %25 = arith.divf %23, %24 : vector<4x1xf32>
    %cst_16 = arith.constant 9.99999997E-7 : f32
    %26 = vector.broadcast %cst_16 : f32 to vector<4x1xf32>
    %27 = arith.addf %25, %26 : vector<4x1xf32>
    %28 = math.rsqrt %27 : vector<4x1xf32>
    %29 = vector.broadcast %28 : vector<4x1xf32> to vector<4x32xf32>
    %30 = arith.mulf %7, %29 : vector<4x32xf32>
    %c0_17 = arith.constant 0 : index
    %c0_18 = arith.constant 0 : index
    %31 = vector.load %arg7[%c0_17, %c0_18] : memref<1x32xf32, #tpu.memory_space<vmem>>, vector<1x32xf32>
    %32 = vector.broadcast %31 : vector<1x32xf32> to vector<4x32xf32>
    %33 = arith.mulf %30, %32 : vector<4x32xf32>
    %34 = arith.truncf %20 : vector<4x32xf32> to vector<4x32xbf16>
    %c0_19 = arith.constant 0 : index
    %c0_20 = arith.constant 0 : index
    %35 = vector.load %arg8[%c0_19, %c0_20] : memref<32x32xbf16, #tpu.memory_space<vmem>>, vector<32x32xbf16>
    %cst_21 = arith.constant dense<0.000000e+00> : vector<4x32xf32>
    %36 = tpu.matmul %34, %35, %cst_21 {dimension_numbers = #tpu.dot_dimension_numbers<[1], [0], [0], [1], [0, 0, 1, 1], [], []>} : vector<4x32xbf16>, vector<32x32xbf16>, vector<4x32xf32> -> vector<4x32xf32>
    %c0_22 = arith.constant 0 : index
    %c0_23 = arith.constant 0 : index
    %37 = vector.load %arg9[%c0_22, %c0_23] : memref<1x32xf32, #tpu.memory_space<vmem>>, vector<1x32xf32>
    %38 = vector.broadcast %37 : vector<1x32xf32> to vector<4x32xf32>
    %39 = arith.addf %36, %38 : vector<4x32xf32>
    %40 = arith.truncf %33 : vector<4x32xf32> to vector<4x32xbf16>
    %c0_24 = arith.constant 0 : index
    %c0_25 = arith.constant 0 : index
    %41 = vector.load %arg10[%c0_24, %c0_25] : memref<32x64xbf16, #tpu.memory_space<vmem>>, vector<32x64xbf16>
    %cst_26 = arith.constant dense<0.000000e+00> : vector<4x64xf32>
    %42 = tpu.matmul %40, %41, %cst_26 {dimension_numbers = #tpu.dot_dimension_numbers<[1], [0], [0], [1], [0, 0, 1, 1], [], []>} : vector<4x32xbf16>, vector<32x64xbf16>, vector<4x64xf32> -> vector<4x64xf32>
    %c0_27 = arith.constant 0 : index
    %c0_28 = arith.constant 0 : index
    %43 = vector.load %arg11[%c0_27, %c0_28] : memref<1x64xf32, #tpu.memory_space<vmem>>, vector<1x64xf32>
    %44 = vector.broadcast %43 : vector<1x64xf32> to vector<4x64xf32>
    %45 = arith.addf %42, %44 : vector<4x64xf32>
    %46 = vector.extract_strided_slice %45 {offsets = [0, 0], sizes = [4, 32], strides = [1, 1]} : vector<4x64xf32> to vector<4x32xf32>
    %47 = vector.extract_strided_slice %45 {offsets = [0, 32], sizes = [4, 32], strides = [1, 1]} : vector<4x64xf32> to vector<4x32xf32>
    %c0_29 = arith.constant 0 : index
    %c0_30 = arith.constant 0 : index
    %c0_31 = arith.constant 0 : index
    %48 = vector.load %arg6[%c0_29, %c0_30, %c0_31] : memref<1x4x1xf32, #tpu.memory_space<vmem>>, vector<1x4x1xf32>
    %49 = vector.shape_cast %48 : vector<1x4x1xf32> to vector<4x1xf32>
    %50 = vector.broadcast %49 : vector<4x1xf32> to vector<4x32xf32>
    %51 = arith.mulf %47, %50 : vector<4x32xf32>
    %c0_32 = arith.constant 0 : index
    %c0_33 = arith.constant 0 : index
    %52 = vector.load %arg14[%c0_32, %c0_33] : memref<2x16xf32, #tpu.memory_space<vmem>>, vector<2x16xf32>
    %c0_34 = arith.constant 0 : index
    %c0_35 = arith.constant 0 : index
    %53 = vector.load %arg15[%c0_34, %c0_35] : memref<2x16xf32, #tpu.memory_space<vmem>>, vector<2x16xf32>
    %54 = vector.extract_strided_slice %39 {offsets = [0, 0], sizes = [4, 16], strides = [1, 1]} : vector<4x32xf32> to vector<4x16xf32>
    %55 = vector.extract_strided_slice %46 {offsets = [0, 0], sizes = [4, 16], strides = [1, 1]} : vector<4x32xf32> to vector<4x16xf32>
    %56 = vector.extract_strided_slice %51 {offsets = [0, 0], sizes = [4, 16], strides = [1, 1]} : vector<4x32xf32> to vector<4x16xf32>
    %57 = arith.truncf %54 : vector<4x16xf32> to vector<4x16xbf16>
    %58 = arith.truncf %55 : vector<4x16xf32> to vector<4x16xbf16>
    %cst_36 = arith.constant dense<0.000000e+00> : vector<4x4xf32>
    %59 = tpu.matmul %57, %58, %cst_36 {dimension_numbers = #tpu.dot_dimension_numbers<[1], [1], [0], [0], [0, 0, 1, 0], [], []>} : vector<4x16xbf16>, vector<4x16xbf16>, vector<4x4xf32> -> vector<4x4xf32>
    %cst_37 = arith.constant 2.500000e-01 : f32
    %60 = vector.broadcast %cst_37 : f32 to vector<4x4xf32>
    %61 = arith.mulf %59, %60 : vector<4x4xf32>
    %62 = vector.extract_strided_slice %52 {offsets = [0, 0], sizes = [1, 16], strides = [1, 1]} : vector<2x16xf32> to vector<1x16xf32>
    %63 = vector.broadcast %62 : vector<1x16xf32> to vector<4x16xf32>
    %64 = arith.mulf %54, %63 : vector<4x16xf32>
    %cst_38 = arith.constant dense<0.000000e+00> : vector<4xf32>
    %65 = vector.multi_reduction <add>, %64, %cst_38 [1] : vector<4x16xf32> to vector<4xf32>
    %66 = vector.shape_cast %65 : vector<4xf32> to vector<4x1xf32>
    %cst_39 = arith.constant 2.500000e-01 : f32
    %67 = vector.broadcast %cst_39 : f32 to vector<4x1xf32>
    %68 = arith.mulf %66, %67 : vector<4x1xf32>
    %cst_40 = arith.constant dense<0xFF800000> : vector<4xf32>
    %69 = vector.multi_reduction <maximumf>, %61, %cst_40 [1] : vector<4x4xf32> to vector<4xf32>
    %70 = vector.shape_cast %69 : vector<4xf32> to vector<4x1xf32>
    %71 = arith.maximumf %70, %68 : vector<4x1xf32>
    %72 = vector.broadcast %71 : vector<4x1xf32> to vector<4x4xf32>
    %73 = arith.subf %61, %72 : vector<4x4xf32>
    %74 = math.exp %73 : vector<4x4xf32>
    %75 = arith.subf %68, %71 : vector<4x1xf32>
    %76 = math.exp %75 : vector<4x1xf32>
    %cst_41 = arith.constant dense<0.000000e+00> : vector<4xf32>
    %77 = vector.multi_reduction <add>, %74, %cst_41 [1] : vector<4x4xf32> to vector<4xf32>
    %78 = vector.shape_cast %77 : vector<4xf32> to vector<4x1xf32>
    %79 = arith.addf %78, %76 : vector<4x1xf32>
    %80 = arith.truncf %74 : vector<4x4xf32> to vector<4x4xbf16>
    %81 = arith.truncf %56 : vector<4x16xf32> to vector<4x16xbf16>
    %cst_42 = arith.constant dense<0.000000e+00> : vector<4x16xf32>
    %82 = tpu.matmul %80, %81, %cst_42 {dimension_numbers = #tpu.dot_dimension_numbers<[1], [0], [0], [1], [0, 0, 1, 1], [], []>} : vector<4x4xbf16>, vector<4x16xbf16>, vector<4x16xf32> -> vector<4x16xf32>
    %83 = vector.extract_strided_slice %53 {offsets = [0, 0], sizes = [1, 16], strides = [1, 1]} : vector<2x16xf32> to vector<1x16xf32>
    %84 = vector.broadcast %76 : vector<4x1xf32> to vector<4x16xf32>
    %85 = vector.broadcast %83 : vector<1x16xf32> to vector<4x16xf32>
    %86 = arith.mulf %84, %85 : vector<4x16xf32>
    %87 = arith.addf %82, %86 : vector<4x16xf32>
    %88 = tpu.reciprocal %79 {approx = true} : vector<4x1xf32> -> vector<4x1xf32>
    %89 = vector.broadcast %88 : vector<4x1xf32> to vector<4x16xf32>
    %90 = arith.mulf %87, %89 : vector<4x16xf32>
    %91 = vector.extract_strided_slice %39 {offsets = [0, 16], sizes = [4, 16], strides = [1, 1]} : vector<4x32xf32> to vector<4x16xf32>
    %92 = vector.extract_strided_slice %46 {offsets = [0, 16], sizes = [4, 16], strides = [1, 1]} : vector<4x32xf32> to vector<4x16xf32>
    %93 = vector.extract_strided_slice %51 {offsets = [0, 16], sizes = [4, 16], strides = [1, 1]} : vector<4x32xf32> to vector<4x16xf32>
    %94 = arith.truncf %91 : vector<4x16xf32> to vector<4x16xbf16>
    %95 = arith.truncf %92 : vector<4x16xf32> to vector<4x16xbf16>
    %cst_43 = arith.constant dense<0.000000e+00> : vector<4x4xf32>
    %96 = tpu.matmul %94, %95, %cst_43 {dimension_numbers = #tpu.dot_dimension_numbers<[1], [1], [0], [0], [0, 0, 1, 0], [], []>} : vector<4x16xbf16>, vector<4x16xbf16>, vector<4x4xf32> -> vector<4x4xf32>
    %cst_44 = arith.constant 2.500000e-01 : f32
    %97 = vector.broadcast %cst_44 : f32 to vector<4x4xf32>
    %98 = arith.mulf %96, %97 : vector<4x4xf32>
    %99 = vector.extract_strided_slice %52 {offsets = [1, 0], sizes = [1, 16], strides = [1, 1]} : vector<2x16xf32> to vector<1x16xf32>
    %100 = vector.broadcast %99 : vector<1x16xf32> to vector<4x16xf32>
    %101 = arith.mulf %91, %100 : vector<4x16xf32>
    %cst_45 = arith.constant dense<0.000000e+00> : vector<4xf32>
    %102 = vector.multi_reduction <add>, %101, %cst_45 [1] : vector<4x16xf32> to vector<4xf32>
    %103 = vector.shape_cast %102 : vector<4xf32> to vector<4x1xf32>
    %cst_46 = arith.constant 2.500000e-01 : f32
    %104 = vector.broadcast %cst_46 : f32 to vector<4x1xf32>
    %105 = arith.mulf %103, %104 : vector<4x1xf32>
    %cst_47 = arith.constant dense<0xFF800000> : vector<4xf32>
    %106 = vector.multi_reduction <maximumf>, %98, %cst_47 [1] : vector<4x4xf32> to vector<4xf32>
    %107 = vector.shape_cast %106 : vector<4xf32> to vector<4x1xf32>
    %108 = arith.maximumf %107, %105 : vector<4x1xf32>
    %109 = vector.broadcast %108 : vector<4x1xf32> to vector<4x4xf32>
    %110 = arith.subf %98, %109 : vector<4x4xf32>
    %111 = math.exp %110 : vector<4x4xf32>
    %112 = arith.subf %105, %108 : vector<4x1xf32>
    %113 = math.exp %112 : vector<4x1xf32>
    %cst_48 = arith.constant dense<0.000000e+00> : vector<4xf32>
    %114 = vector.multi_reduction <add>, %111, %cst_48 [1] : vector<4x4xf32> to vector<4xf32>
    %115 = vector.shape_cast %114 : vector<4xf32> to vector<4x1xf32>
    %116 = arith.addf %115, %113 : vector<4x1xf32>
    %117 = arith.truncf %111 : vector<4x4xf32> to vector<4x4xbf16>
    %118 = arith.truncf %93 : vector<4x16xf32> to vector<4x16xbf16>
    %cst_49 = arith.constant dense<0.000000e+00> : vector<4x16xf32>
    %119 = tpu.matmul %117, %118, %cst_49 {dimension_numbers = #tpu.dot_dimension_numbers<[1], [0], [0], [1], [0, 0, 1, 1], [], []>} : vector<4x4xbf16>, vector<4x16xbf16>, vector<4x16xf32> -> vector<4x16xf32>
    %120 = vector.extract_strided_slice %53 {offsets = [1, 0], sizes = [1, 16], strides = [1, 1]} : vector<2x16xf32> to vector<1x16xf32>
    %121 = vector.broadcast %113 : vector<4x1xf32> to vector<4x16xf32>
    %122 = vector.broadcast %120 : vector<1x16xf32> to vector<4x16xf32>
    %123 = arith.mulf %121, %122 : vector<4x16xf32>
    %124 = arith.addf %119, %123 : vector<4x16xf32>
    %125 = tpu.reciprocal %116 {approx = true} : vector<4x1xf32> -> vector<4x1xf32>
    %126 = vector.broadcast %125 : vector<4x1xf32> to vector<4x16xf32>
    %127 = arith.mulf %124, %126 : vector<4x16xf32>
    %128 = tpu.concatenate %90, %127 in 1 : vector<4x16xf32>, vector<4x16xf32> -> vector<4x32xf32>
    %129 = arith.truncf %128 : vector<4x32xf32> to vector<4x32xbf16>
    %c0_50 = arith.constant 0 : index
    %c0_51 = arith.constant 0 : index
    %130 = vector.load %arg12[%c0_50, %c0_51] : memref<32x32xbf16, #tpu.memory_space<vmem>>, vector<32x32xbf16>
    %cst_52 = arith.constant dense<0.000000e+00> : vector<4x32xf32>
    %131 = tpu.matmul %129, %130, %cst_52 {dimension_numbers = #tpu.dot_dimension_numbers<[1], [0], [0], [1], [0, 0, 1, 1], [], []>} : vector<4x32xbf16>, vector<32x32xbf16>, vector<4x32xf32> -> vector<4x32xf32>
    %c0_53 = arith.constant 0 : index
    %c0_54 = arith.constant 0 : index
    %132 = vector.load %arg13[%c0_53, %c0_54] : memref<1x32xf32, #tpu.memory_space<vmem>>, vector<1x32xf32>
    %133 = vector.broadcast %132 : vector<1x32xf32> to vector<4x32xf32>
    %134 = arith.addf %131, %133 : vector<4x32xf32>
    %c0_55 = arith.constant 0 : index
    %c0_56 = arith.constant 0 : index
    %c0_57 = arith.constant 0 : index
    %135 = vector.load %arg5[%c0_55, %c0_56, %c0_57] : memref<1x4x1xf32, #tpu.memory_space<vmem>>, vector<1x4x1xf32>
    %136 = vector.shape_cast %135 : vector<1x4x1xf32> to vector<4x1xf32>
    %137 = vector.broadcast %136 : vector<4x1xf32> to vector<4x32xf32>
    %138 = arith.mulf %134, %137 : vector<4x32xf32>
    %c0_58 = arith.constant 0 : index
    %c0_59 = arith.constant 0 : index
    %c0_60 = arith.constant 0 : index
    %139 = vector.load %arg3[%c0_58, %c0_59, %c0_60] : memref<1x8x4xf32, #tpu.memory_space<vmem>>, vector<1x8x4xf32>
    %140 = vector.shape_cast %139 : vector<1x8x4xf32> to vector<8x4xf32>
    %cst_61 = arith.constant dense<0.000000e+00> : vector<8x32xf32>
    %141 = tpu.matmul %140, %138, %cst_61 {dimension_numbers = #tpu.dot_dimension_numbers<[1], [0], [0], [1], [0, 0, 1, 1], [], []>} : vector<8x4xf32>, vector<4x32xf32>, vector<8x32xf32> -> vector<8x32xf32>
    %c0_62 = arith.constant 0 : index
    %c0_63 = arith.constant 0 : index
    %c0_64 = arith.constant 0 : index
    %142 = vector.load %arg16[%c0_62, %c0_63, %c0_64] : memref<1x8x32xf32, #tpu.memory_space<vmem>>, vector<1x8x32xf32>
    %143 = vector.shape_cast %142 : vector<1x8x32xf32> to vector<8x32xf32>
    %144 = vector.shape_cast %141 : vector<8x32xf32> to vector<1x8x32xf32>
    tpu.vector_store %arg16[%c0_62, %c0_63, %c0_64], %144 {strides = array<i32>} : memref<1x8x32xf32, #tpu.memory_space<vmem>>, vector<1x8x32xf32>,
    return
  }
  func.func @transform_0(%arg0: i32) -> (i32, i32, i32) {
    %c0_i32 = arith.constant 0 : i32
    %c0_i32_0 = arith.constant 0 : i32
    %c0_i32_1 = arith.constant 0 : i32
    return %arg0, %c0_i32, %c0_i32_0 : i32, i32, i32
  }
  func.func @transform_1(%arg0: i32) -> (i32, i32, i32) {
    %c0_i32 = arith.constant 0 : i32
    %c0_i32_0 = arith.constant 0 : i32
    %c0_i32_1 = arith.constant 0 : i32
    return %arg0, %c0_i32, %c0_i32_0 : i32, i32, i32
  }
  func.func @transform_2(%arg0: i32) -> (i32, i32, i32) {
    %c0_i32 = arith.constant 0 : i32
    %c0_i32_0 = arith.constant 0 : i32
    %c0_i32_1 = arith.constant 0 : i32
    return %arg0, %c0_i32, %c0_i32_0 : i32, i32, i32
  }
  func.func @transform_3(%arg0: i32) -> (i32, i32, i32) {
    %c0_i32 = arith.constant 0 : i32
    %c0_i32_0 = arith.constant 0 : i32
    %c0_i32_1 = arith.constant 0 : i32
    return %arg0, %c0_i32, %c0_i32_0 : i32, i32, i32
  }
  func.func @transform_4(%arg0: i32) -> (i32, i32, i32) {
    %c0_i32 = arith.constant 0 : i32
    %c0_i32_0 = arith.constant 0 : i32
    %c0_i32_1 = arith.constant 0 : i32
    return %arg0, %c0_i32, %c0_i32_0 : i32, i32, i32
  }
  func.func @transform_5(%arg0: i32) -> (i32, i32, i32) {
    %c0_i32 = arith.constant 0 : i32
    %c0_i32_0 = arith.constant 0 : i32
    %c0_i32_1 = arith.constant 0 : i32
    return %arg0, %c0_i32, %c0_i32_0 : i32, i32, i32
  }
  func.func @transform_6(%arg0: i32) -> (i32, i32) {
    %c0_i32 = arith.constant 0 : i32
    %c0_i32_0 = arith.constant 0 : i32
    %c0_i32_1 = arith.constant 0 : i32
    return %c0_i32, %c0_i32_0 : i32, i32
  }
  func.func @transform_7(%arg0: i32) -> (i32, i32) {
    %c0_i32 = arith.constant 0 : i32
    %c0_i32_0 = arith.constant 0 : i32
    %c0_i32_1 = arith.constant 0 : i32
    return %c0_i32, %c0_i32_0 : i32, i32
  }
  func.func @transform_8(%arg0: i32) -> (i32, i32) {
    %c0_i32 = arith.constant 0 : i32
    %c0_i32_0 = arith.constant 0 : i32
    %c0_i32_1 = arith.constant 0 : i32
    return %c0_i32, %c0_i32_0 : i32, i32
  }
  func.func @transform_9(%arg0: i32) -> (i32, i32) {
    %c0_i32 = arith.constant 0 : i32
    %c0_i32_0 = arith.constant 0 : i32
    %c0_i32_1 = arith.constant 0 : i32
    return %c0_i32, %c0_i32_0 : i32, i32
  }
  func.func @transform_10(%arg0: i32) -> (i32, i32) {
    %c0_i32 = arith.constant 0 : i32
    %c0_i32_0 = arith.constant 0 : i32
    %c0_i32_1 = arith.constant 0 : i32
    return %c0_i32, %c0_i32_0 : i32, i32
  }
  func.func @transform_11(%arg0: i32) -> (i32, i32) {
    %c0_i32 = arith.constant 0 : i32
    %c0_i32_0 = arith.constant 0 : i32
    %c0_i32_1 = arith.constant 0 : i32
    return %c0_i32, %c0_i32_0 : i32, i32
  }
  func.func @transform_12(%arg0: i32) -> (i32, i32) {
    %c0_i32 = arith.constant 0 : i32
    %c0_i32_0 = arith.constant 0 : i32
    %c0_i32_1 = arith.constant 0 : i32
    return %c0_i32, %c0_i32_0 : i32, i32
  }
  func.func @transform_13(%arg0: i32) -> (i32, i32) {
    %c0_i32 = arith.constant 0 : i32
    %c0_i32_0 = arith.constant 0 : i32
    %c0_i32_1 = arith.constant 0 : i32
    return %c0_i32, %c0_i32_0 : i32, i32
  }
  func.func @transform_14(%arg0: i32) -> (i32, i32) {
    %c0_i32 = arith.constant 0 : i32
    %c0_i32_0 = arith.constant 0 : i32
    %c0_i32_1 = arith.constant 0 : i32
    return %c0_i32, %c0_i32_0 : i32, i32
  }
  func.func @transform_15(%arg0: i32) -> (i32, i32, i32) {
    %c0_i32 = arith.constant 0 : i32
    %c0_i32_0 = arith.constant 0 : i32
    %c0_i32_1 = arith.constant 0 : i32
    return %arg0, %c0_i32, %c0_i32_0 : i32, i32, i32
  }
}

module attributes {stable_mosaic.version = 11 : i64} {
  func.func @_cond_ff_kernel(%arg0: i32, %arg1: memref<1x8x32xf32, #tpu.memory_space<vmem>>, %arg2: memref<1x4x8xf32, #tpu.memory_space<vmem>>, %arg3: memref<1x8x4xf32, #tpu.memory_space<vmem>>, %arg4: memref<1x4x1xf32, #tpu.memory_space<vmem>>, %arg5: memref<1x32xf32, #tpu.memory_space<vmem>>, %arg6: memref<32x16xbf16, #tpu.memory_space<vmem>>, %arg7: memref<1x16xf32, #tpu.memory_space<vmem>>, %arg8: memref<16x32xbf16, #tpu.memory_space<vmem>>, %arg9: memref<1x32xf32, #tpu.memory_space<vmem>>, %arg10: memref<1x32xf32, #tpu.memory_space<vmem>>, %arg11: memref<32x128xbf16, #tpu.memory_space<vmem>>, %arg12: memref<1x128xf32, #tpu.memory_space<vmem>>, %arg13: memref<128x32xbf16, #tpu.memory_space<vmem>>, %arg14: memref<1x32xf32, #tpu.memory_space<vmem>>, %arg15: memref<1x8x32xf32, #tpu.memory_space<vmem>>) attributes {dimension_semantics = [#tpu.dimension_semantics<parallel>], iteration_bounds = array<i64: 2>, scalar_prefetch = 0 : i64, scratch_operands = 0 : i64, tpu.core_type = #tpu.core_type<tc>, window_params = [{transform_indices = @transform_0, window_bounds = array<i64: 1, 8, 32>}, {transform_indices = @transform_1, window_bounds = array<i64: 1, 4, 8>}, {transform_indices = @transform_2, window_bounds = array<i64: 1, 8, 4>}, {transform_indices = @transform_3, window_bounds = array<i64: 1, 4, 1>}, {pipeline_mode = #tpu.pipeline_mode<synchronous>, transform_indices = @transform_4, window_bounds = array<i64: 1, 32>}, {pipeline_mode = #tpu.pipeline_mode<synchronous>, transform_indices = @transform_5, window_bounds = array<i64: 32, 16>}, {pipeline_mode = #tpu.pipeline_mode<synchronous>, transform_indices = @transform_6, window_bounds = array<i64: 1, 16>}, {pipeline_mode = #tpu.pipeline_mode<synchronous>, transform_indices = @transform_7, window_bounds = array<i64: 16, 32>}, {pipeline_mode = #tpu.pipeline_mode<synchronous>, transform_indices = @transform_8, window_bounds = array<i64: 1, 32>}, {pipeline_mode = #tpu.pipeline_mode<synchronous>, transform_indices = @transform_9, window_bounds = array<i64: 1, 32>}, {pipeline_mode = #tpu.pipeline_mode<synchronous>, transform_indices = @transform_10, window_bounds = array<i64: 32, 128>}, {pipeline_mode = #tpu.pipeline_mode<synchronous>, transform_indices = @transform_11, window_bounds = array<i64: 1, 128>}, {pipeline_mode = #tpu.pipeline_mode<synchronous>, transform_indices = @transform_12, window_bounds = array<i64: 128, 32>}, {pipeline_mode = #tpu.pipeline_mode<synchronous>, transform_indices = @transform_13, window_bounds = array<i64: 1, 32>}, {transform_indices = @transform_14, window_bounds = array<i64: 1, 8, 32>}]} {
    %c0 = arith.constant 0 : index
    %c0_0 = arith.constant 0 : index
    %c0_1 = arith.constant 0 : index
    %0 = vector.load %arg1[%c0, %c0_0, %c0_1] : memref<1x8x32xf32, #tpu.memory_space<vmem>>, vector<1x8x32xf32>
    %1 = vector.shape_cast %0 : vector<1x8x32xf32> to vector<8x32xf32>
    %c0_2 = arith.constant 0 : index
    %c0_3 = arith.constant 0 : index
    %2 = vector.load %arg5[%c0_2, %c0_3] : memref<1x32xf32, #tpu.memory_space<vmem>>, vector<1x32xf32>
    %c0_4 = arith.constant 0 : index
    %c0_5 = arith.constant 0 : index
    %3 = vector.load %arg7[%c0_4, %c0_5] : memref<1x16xf32, #tpu.memory_space<vmem>>, vector<1x16xf32>
    %c0_6 = arith.constant 0 : index
    %c0_7 = arith.constant 0 : index
    %4 = vector.load %arg9[%c0_6, %c0_7] : memref<1x32xf32, #tpu.memory_space<vmem>>, vector<1x32xf32>
    %5 = arith.mulf %1, %1 : vector<8x32xf32>
    %cst = arith.constant dense<0.000000e+00> : vector<8xf32>
    %6 = vector.multi_reduction <add>, %5, %cst [1] : vector<8x32xf32> to vector<8xf32>
    %7 = vector.shape_cast %6 : vector<8xf32> to vector<8x1xf32>
    %cst_8 = arith.constant 3.200000e+01 : f32
    %8 = vector.broadcast %cst_8 : f32 to vector<8x1xf32>
    %9 = arith.divf %7, %8 : vector<8x1xf32>
    %cst_9 = arith.constant 9.99999997E-7 : f32
    %10 = vector.broadcast %cst_9 : f32 to vector<8x1xf32>
    %11 = arith.addf %9, %10 : vector<8x1xf32>
    %12 = math.rsqrt %11 : vector<8x1xf32>
    %13 = vector.broadcast %12 : vector<8x1xf32> to vector<8x32xf32>
    %14 = arith.mulf %1, %13 : vector<8x32xf32>
    %15 = vector.broadcast %2 : vector<1x32xf32> to vector<8x32xf32>
    %16 = arith.mulf %14, %15 : vector<8x32xf32>
    %17 = arith.truncf %16 : vector<8x32xf32> to vector<8x32xbf16>
    %c0_10 = arith.constant 0 : index
    %c0_11 = arith.constant 0 : index
    %18 = vector.load %arg6[%c0_10, %c0_11] : memref<32x16xbf16, #tpu.memory_space<vmem>>, vector<32x16xbf16>
    %cst_12 = arith.constant dense<0.000000e+00> : vector<8x16xf32>
    %19 = tpu.matmul %17, %18, %cst_12 {dimension_numbers = #tpu.dot_dimension_numbers<[1], [0], [0], [1], [0, 0, 1, 1], [], []>} : vector<8x32xbf16>, vector<32x16xbf16>, vector<8x16xf32> -> vector<8x16xf32>
    %20 = vector.broadcast %3 : vector<1x16xf32> to vector<8x16xf32>
    %21 = arith.addf %19, %20 : vector<8x16xf32>
    %22 = arith.mulf %21, %21 : vector<8x16xf32>
    %23 = arith.mulf %21, %22 : vector<8x16xf32>
    %cst_13 = arith.constant 4.471500e-02 : f32
    %24 = vector.broadcast %cst_13 : f32 to vector<8x16xf32>
    %25 = arith.mulf %24, %23 : vector<8x16xf32>
    %26 = arith.addf %21, %25 : vector<8x16xf32>
    %cst_14 = arith.constant 0.797884583 : f32
    %27 = vector.broadcast %cst_14 : f32 to vector<8x16xf32>
    %28 = arith.mulf %27, %26 : vector<8x16xf32>
    %29 = math.tanh %28 : vector<8x16xf32>
    %cst_15 = arith.constant 1.000000e+00 : f32
    %30 = vector.broadcast %cst_15 : f32 to vector<8x16xf32>
    %31 = arith.addf %30, %29 : vector<8x16xf32>
    %cst_16 = arith.constant 5.000000e-01 : f32
    %32 = vector.broadcast %cst_16 : f32 to vector<8x16xf32>
    %33 = arith.mulf %32, %31 : vector<8x16xf32>
    %34 = arith.mulf %21, %33 : vector<8x16xf32>
    %35 = arith.truncf %34 : vector<8x16xf32> to vector<8x16xbf16>
    %c0_17 = arith.constant 0 : index
    %c0_18 = arith.constant 0 : index
    %36 = vector.load %arg8[%c0_17, %c0_18] : memref<16x32xbf16, #tpu.memory_space<vmem>>, vector<16x32xbf16>
    %cst_19 = arith.constant dense<0.000000e+00> : vector<8x32xf32>
    %37 = tpu.matmul %35, %36, %cst_19 {dimension_numbers = #tpu.dot_dimension_numbers<[1], [0], [0], [1], [0, 0, 1, 1], [], []>} : vector<8x16xbf16>, vector<16x32xbf16>, vector<8x32xf32> -> vector<8x32xf32>
    %38 = vector.broadcast %4 : vector<1x32xf32> to vector<8x32xf32>
    %39 = arith.addf %37, %38 : vector<8x32xf32>
    %c0_20 = arith.constant 0 : index
    %c0_21 = arith.constant 0 : index
    %c0_22 = arith.constant 0 : index
    %40 = vector.load %arg2[%c0_20, %c0_21, %c0_22] : memref<1x4x8xf32, #tpu.memory_space<vmem>>, vector<1x4x8xf32>
    %41 = vector.shape_cast %40 : vector<1x4x8xf32> to vector<4x8xf32>
    %cst_23 = arith.constant dense<0.000000e+00> : vector<4x32xf32>
    %42 = tpu.matmul %41, %1, %cst_23 {dimension_numbers = #tpu.dot_dimension_numbers<[1], [0], [0], [1], [0, 0, 1, 1], [], []>} : vector<4x8xf32>, vector<8x32xf32>, vector<4x32xf32> -> vector<4x32xf32>
    %c0_24 = arith.constant 0 : index
    %c0_25 = arith.constant 0 : index
    %43 = vector.load %arg10[%c0_24, %c0_25] : memref<1x32xf32, #tpu.memory_space<vmem>>, vector<1x32xf32>
    %c0_26 = arith.constant 0 : index
    %c0_27 = arith.constant 0 : index
    %44 = vector.load %arg12[%c0_26, %c0_27] : memref<1x128xf32, #tpu.memory_space<vmem>>, vector<1x128xf32>
    %c0_28 = arith.constant 0 : index
    %c0_29 = arith.constant 0 : index
    %45 = vector.load %arg14[%c0_28, %c0_29] : memref<1x32xf32, #tpu.memory_space<vmem>>, vector<1x32xf32>
    %46 = arith.mulf %42, %42 : vector<4x32xf32>
    %cst_30 = arith.constant dense<0.000000e+00> : vector<4xf32>
    %47 = vector.multi_reduction <add>, %46, %cst_30 [1] : vector<4x32xf32> to vector<4xf32>
    %48 = vector.shape_cast %47 : vector<4xf32> to vector<4x1xf32>
    %cst_31 = arith.constant 3.200000e+01 : f32
    %49 = vector.broadcast %cst_31 : f32 to vector<4x1xf32>
    %50 = arith.divf %48, %49 : vector<4x1xf32>
    %cst_32 = arith.constant 9.99999997E-7 : f32
    %51 = vector.broadcast %cst_32 : f32 to vector<4x1xf32>
    %52 = arith.addf %50, %51 : vector<4x1xf32>
    %53 = math.rsqrt %52 : vector<4x1xf32>
    %54 = vector.broadcast %53 : vector<4x1xf32> to vector<4x32xf32>
    %55 = arith.mulf %42, %54 : vector<4x32xf32>
    %56 = vector.broadcast %43 : vector<1x32xf32> to vector<4x32xf32>
    %57 = arith.mulf %55, %56 : vector<4x32xf32>
    %58 = arith.truncf %57 : vector<4x32xf32> to vector<4x32xbf16>
    %c0_33 = arith.constant 0 : index
    %c0_34 = arith.constant 0 : index
    %59 = vector.load %arg11[%c0_33, %c0_34] : memref<32x128xbf16, #tpu.memory_space<vmem>>, vector<32x128xbf16>
    %cst_35 = arith.constant dense<0.000000e+00> : vector<4x128xf32>
    %60 = tpu.matmul %58, %59, %cst_35 {dimension_numbers = #tpu.dot_dimension_numbers<[1], [0], [0], [1], [0, 0, 1, 1], [], []>} : vector<4x32xbf16>, vector<32x128xbf16>, vector<4x128xf32> -> vector<4x128xf32>
    %61 = vector.broadcast %44 : vector<1x128xf32> to vector<4x128xf32>
    %62 = arith.addf %60, %61 : vector<4x128xf32>
    %63 = arith.mulf %62, %62 : vector<4x128xf32>
    %64 = arith.mulf %62, %63 : vector<4x128xf32>
    %cst_36 = arith.constant 4.471500e-02 : f32
    %65 = vector.broadcast %cst_36 : f32 to vector<4x128xf32>
    %66 = arith.mulf %65, %64 : vector<4x128xf32>
    %67 = arith.addf %62, %66 : vector<4x128xf32>
    %cst_37 = arith.constant 0.797884583 : f32
    %68 = vector.broadcast %cst_37 : f32 to vector<4x128xf32>
    %69 = arith.mulf %68, %67 : vector<4x128xf32>
    %70 = math.tanh %69 : vector<4x128xf32>
    %cst_38 = arith.constant 1.000000e+00 : f32
    %71 = vector.broadcast %cst_38 : f32 to vector<4x128xf32>
    %72 = arith.addf %71, %70 : vector<4x128xf32>
    %cst_39 = arith.constant 5.000000e-01 : f32
    %73 = vector.broadcast %cst_39 : f32 to vector<4x128xf32>
    %74 = arith.mulf %73, %72 : vector<4x128xf32>
    %75 = arith.mulf %62, %74 : vector<4x128xf32>
    %76 = arith.truncf %75 : vector<4x128xf32> to vector<4x128xbf16>
    %c0_40 = arith.constant 0 : index
    %c0_41 = arith.constant 0 : index
    %77 = vector.load %arg13[%c0_40, %c0_41] : memref<128x32xbf16, #tpu.memory_space<vmem>>, vector<128x32xbf16>
    %cst_42 = arith.constant dense<0.000000e+00> : vector<4x32xf32>
    %78 = tpu.matmul %76, %77, %cst_42 {dimension_numbers = #tpu.dot_dimension_numbers<[1], [0], [0], [1], [0, 0, 1, 1], [], []>} : vector<4x128xbf16>, vector<128x32xbf16>, vector<4x32xf32> -> vector<4x32xf32>
    %79 = vector.broadcast %45 : vector<1x32xf32> to vector<4x32xf32>
    %80 = arith.addf %78, %79 : vector<4x32xf32>
    %c0_43 = arith.constant 0 : index
    %c0_44 = arith.constant 0 : index
    %c0_45 = arith.constant 0 : index
    %81 = vector.load %arg4[%c0_43, %c0_44, %c0_45] : memref<1x4x1xf32, #tpu.memory_space<vmem>>, vector<1x4x1xf32>
    %82 = vector.shape_cast %81 : vector<1x4x1xf32> to vector<4x1xf32>
    %83 = vector.broadcast %82 : vector<4x1xf32> to vector<4x32xf32>
    %84 = arith.mulf %80, %83 : vector<4x32xf32>
    %c0_46 = arith.constant 0 : index
    %c0_47 = arith.constant 0 : index
    %c0_48 = arith.constant 0 : index
    %85 = vector.load %arg3[%c0_46, %c0_47, %c0_48] : memref<1x8x4xf32, #tpu.memory_space<vmem>>, vector<1x8x4xf32>
    %86 = vector.shape_cast %85 : vector<1x8x4xf32> to vector<8x4xf32>
    %cst_49 = arith.constant dense<0.000000e+00> : vector<8x32xf32>
    %87 = tpu.matmul %86, %84, %cst_49 {dimension_numbers = #tpu.dot_dimension_numbers<[1], [0], [0], [1], [0, 0, 1, 1], [], []>} : vector<8x4xf32>, vector<4x32xf32>, vector<8x32xf32> -> vector<8x32xf32>
    %88 = arith.addf %39, %87 : vector<8x32xf32>
    %c0_50 = arith.constant 0 : index
    %c0_51 = arith.constant 0 : index
    %c0_52 = arith.constant 0 : index
    %89 = vector.load %arg15[%c0_50, %c0_51, %c0_52] : memref<1x8x32xf32, #tpu.memory_space<vmem>>, vector<1x8x32xf32>
    %90 = vector.shape_cast %89 : vector<1x8x32xf32> to vector<8x32xf32>
    %91 = vector.shape_cast %88 : vector<8x32xf32> to vector<1x8x32xf32>
    tpu.vector_store %arg15[%c0_50, %c0_51, %c0_52], %91 {strides = array<i32>} : memref<1x8x32xf32, #tpu.memory_space<vmem>>, vector<1x8x32xf32>,
    return
  }
  func.func @transform_0(%arg0: i32) -> (i32, i32, i32) {
    %c0_i32 = arith.constant 0 : i32
    %c0_i32_0 = arith.constant 0 : i32
    %c0_i32_1 = arith.constant 0 : i32
    return %arg0, %c0_i32, %c0_i32_0 : i32, i32, i32
  }
  func.func @transform_1(%arg0: i32) -> (i32, i32, i32) {
    %c0_i32 = arith.constant 0 : i32
    %c0_i32_0 = arith.constant 0 : i32
    %c0_i32_1 = arith.constant 0 : i32
    return %arg0, %c0_i32, %c0_i32_0 : i32, i32, i32
  }
  func.func @transform_2(%arg0: i32) -> (i32, i32, i32) {
    %c0_i32 = arith.constant 0 : i32
    %c0_i32_0 = arith.constant 0 : i32
    %c0_i32_1 = arith.constant 0 : i32
    return %arg0, %c0_i32, %c0_i32_0 : i32, i32, i32
  }
  func.func @transform_3(%arg0: i32) -> (i32, i32, i32) {
    %c0_i32 = arith.constant 0 : i32
    %c0_i32_0 = arith.constant 0 : i32
    %c0_i32_1 = arith.constant 0 : i32
    return %arg0, %c0_i32, %c0_i32_0 : i32, i32, i32
  }
  func.func @transform_4(%arg0: i32) -> (i32, i32) {
    %c0_i32 = arith.constant 0 : i32
    %c0_i32_0 = arith.constant 0 : i32
    %c0_i32_1 = arith.constant 0 : i32
    return %c0_i32, %c0_i32_0 : i32, i32
  }
  func.func @transform_5(%arg0: i32) -> (i32, i32) {
    %c0_i32 = arith.constant 0 : i32
    %c0_i32_0 = arith.constant 0 : i32
    %c0_i32_1 = arith.constant 0 : i32
    return %c0_i32, %c0_i32_0 : i32, i32
  }
  func.func @transform_6(%arg0: i32) -> (i32, i32) {
    %c0_i32 = arith.constant 0 : i32
    %c0_i32_0 = arith.constant 0 : i32
    %c0_i32_1 = arith.constant 0 : i32
    return %c0_i32, %c0_i32_0 : i32, i32
  }
  func.func @transform_7(%arg0: i32) -> (i32, i32) {
    %c0_i32 = arith.constant 0 : i32
    %c0_i32_0 = arith.constant 0 : i32
    %c0_i32_1 = arith.constant 0 : i32
    return %c0_i32, %c0_i32_0 : i32, i32
  }
  func.func @transform_8(%arg0: i32) -> (i32, i32) {
    %c0_i32 = arith.constant 0 : i32
    %c0_i32_0 = arith.constant 0 : i32
    %c0_i32_1 = arith.constant 0 : i32
    return %c0_i32, %c0_i32_0 : i32, i32
  }
  func.func @transform_9(%arg0: i32) -> (i32, i32) {
    %c0_i32 = arith.constant 0 : i32
    %c0_i32_0 = arith.constant 0 : i32
    %c0_i32_1 = arith.constant 0 : i32
    return %c0_i32, %c0_i32_0 : i32, i32
  }
  func.func @transform_10(%arg0: i32) -> (i32, i32) {
    %c0_i32 = arith.constant 0 : i32
    %c0_i32_0 = arith.constant 0 : i32
    %c0_i32_1 = arith.constant 0 : i32
    return %c0_i32, %c0_i32_0 : i32, i32
  }
  func.func @transform_11(%arg0: i32) -> (i32, i32) {
    %c0_i32 = arith.constant 0 : i32
    %c0_i32_0 = arith.constant 0 : i32
    %c0_i32_1 = arith.constant 0 : i32
    return %c0_i32, %c0_i32_0 : i32, i32
  }
  func.func @transform_12(%arg0: i32) -> (i32, i32) {
    %c0_i32 = arith.constant 0 : i32
    %c0_i32_0 = arith.constant 0 : i32
    %c0_i32_1 = arith.constant 0 : i32
    return %c0_i32, %c0_i32_0 : i32, i32
  }
  func.func @transform_13(%arg0: i32) -> (i32, i32) {
    %c0_i32 = arith.constant 0 : i32
    %c0_i32_0 = arith.constant 0 : i32
    %c0_i32_1 = arith.constant 0 : i32
    return %c0_i32, %c0_i32_0 : i32, i32
  }
  func.func @transform_14(%arg0: i32) -> (i32, i32, i32) {
    %c0_i32 = arith.constant 0 : i32
    %c0_i32_0 = arith.constant 0 : i32
    %c0_i32_1 = arith.constant 0 : i32
    return %arg0, %c0_i32, %c0_i32_0 : i32, i32, i32
  }
}

module attributes {stable_mosaic.version = 11 : i64} {
  func.func @_cond_ff_kernel(%arg0: i32, %arg1: memref<1x8x32xf32, #tpu.memory_space<vmem>>, %arg2: memref<1x4x8xf32, #tpu.memory_space<vmem>>, %arg3: memref<1x8x4xf32, #tpu.memory_space<vmem>>, %arg4: memref<1x4x1xf32, #tpu.memory_space<vmem>>, %arg5: memref<1x32xf32, #tpu.memory_space<vmem>>, %arg6: memref<32x16xbf16, #tpu.memory_space<vmem>>, %arg7: memref<1x16xf32, #tpu.memory_space<vmem>>, %arg8: memref<16x32xbf16, #tpu.memory_space<vmem>>, %arg9: memref<1x32xf32, #tpu.memory_space<vmem>>, %arg10: memref<1x32xf32, #tpu.memory_space<vmem>>, %arg11: memref<32x128xbf16, #tpu.memory_space<vmem>>, %arg12: memref<1x128xf32, #tpu.memory_space<vmem>>, %arg13: memref<128x32xbf16, #tpu.memory_space<vmem>>, %arg14: memref<1x32xf32, #tpu.memory_space<vmem>>, %arg15: memref<1x8x32xf32, #tpu.memory_space<vmem>>) attributes {dimension_semantics = [#tpu.dimension_semantics<parallel>], iteration_bounds = array<i64: 2>, scalar_prefetch = 0 : i64, scratch_operands = 0 : i64, tpu.core_type = #tpu.core_type<tc>, window_params = [{transform_indices = @transform_0, window_bounds = array<i64: 1, 8, 32>}, {transform_indices = @transform_1, window_bounds = array<i64: 1, 4, 8>}, {transform_indices = @transform_2, window_bounds = array<i64: 1, 8, 4>}, {transform_indices = @transform_3, window_bounds = array<i64: 1, 4, 1>}, {pipeline_mode = #tpu.pipeline_mode<synchronous>, transform_indices = @transform_4, window_bounds = array<i64: 1, 32>}, {pipeline_mode = #tpu.pipeline_mode<synchronous>, transform_indices = @transform_5, window_bounds = array<i64: 32, 16>}, {pipeline_mode = #tpu.pipeline_mode<synchronous>, transform_indices = @transform_6, window_bounds = array<i64: 1, 16>}, {pipeline_mode = #tpu.pipeline_mode<synchronous>, transform_indices = @transform_7, window_bounds = array<i64: 16, 32>}, {pipeline_mode = #tpu.pipeline_mode<synchronous>, transform_indices = @transform_8, window_bounds = array<i64: 1, 32>}, {pipeline_mode = #tpu.pipeline_mode<synchronous>, transform_indices = @transform_9, window_bounds = array<i64: 1, 32>}, {pipeline_mode = #tpu.pipeline_mode<synchronous>, transform_indices = @transform_10, window_bounds = array<i64: 32, 128>}, {pipeline_mode = #tpu.pipeline_mode<synchronous>, transform_indices = @transform_11, window_bounds = array<i64: 1, 128>}, {pipeline_mode = #tpu.pipeline_mode<synchronous>, transform_indices = @transform_12, window_bounds = array<i64: 128, 32>}, {pipeline_mode = #tpu.pipeline_mode<synchronous>, transform_indices = @transform_13, window_bounds = array<i64: 1, 32>}, {transform_indices = @transform_14, window_bounds = array<i64: 1, 8, 32>}]} {
    %c0 = arith.constant 0 : index
    %c0_0 = arith.constant 0 : index
    %c0_1 = arith.constant 0 : index
    %0 = vector.load %arg1[%c0, %c0_0, %c0_1] : memref<1x8x32xf32, #tpu.memory_space<vmem>>, vector<1x8x32xf32>
    %1 = vector.shape_cast %0 : vector<1x8x32xf32> to vector<8x32xf32>
    %c0_2 = arith.constant 0 : index
    %c0_3 = arith.constant 0 : index
    %2 = vector.load %arg5[%c0_2, %c0_3] : memref<1x32xf32, #tpu.memory_space<vmem>>, vector<1x32xf32>
    %c0_4 = arith.constant 0 : index
    %c0_5 = arith.constant 0 : index
    %3 = vector.load %arg7[%c0_4, %c0_5] : memref<1x16xf32, #tpu.memory_space<vmem>>, vector<1x16xf32>
    %c0_6 = arith.constant 0 : index
    %c0_7 = arith.constant 0 : index
    %4 = vector.load %arg9[%c0_6, %c0_7] : memref<1x32xf32, #tpu.memory_space<vmem>>, vector<1x32xf32>
    %5 = arith.mulf %1, %1 : vector<8x32xf32>
    %cst = arith.constant dense<0.000000e+00> : vector<8xf32>
    %6 = vector.multi_reduction <add>, %5, %cst [1] : vector<8x32xf32> to vector<8xf32>
    %7 = vector.shape_cast %6 : vector<8xf32> to vector<8x1xf32>
    %cst_8 = arith.constant 3.200000e+01 : f32
    %8 = vector.broadcast %cst_8 : f32 to vector<8x1xf32>
    %9 = arith.divf %7, %8 : vector<8x1xf32>
    %cst_9 = arith.constant 9.99999997E-7 : f32
    %10 = vector.broadcast %cst_9 : f32 to vector<8x1xf32>
    %11 = arith.addf %9, %10 : vector<8x1xf32>
    %12 = math.rsqrt %11 : vector<8x1xf32>
    %13 = vector.broadcast %12 : vector<8x1xf32> to vector<8x32xf32>
    %14 = arith.mulf %1, %13 : vector<8x32xf32>
    %15 = vector.broadcast %2 : vector<1x32xf32> to vector<8x32xf32>
    %16 = arith.mulf %14, %15 : vector<8x32xf32>
    %17 = arith.truncf %16 : vector<8x32xf32> to vector<8x32xbf16>
    %c0_10 = arith.constant 0 : index
    %c0_11 = arith.constant 0 : index
    %18 = vector.load %arg6[%c0_10, %c0_11] : memref<32x16xbf16, #tpu.memory_space<vmem>>, vector<32x16xbf16>
    %cst_12 = arith.constant dense<0.000000e+00> : vector<8x16xf32>
    %19 = tpu.matmul %17, %18, %cst_12 {dimension_numbers = #tpu.dot_dimension_numbers<[1], [0], [0], [1], [0, 0, 1, 1], [], []>} : vector<8x32xbf16>, vector<32x16xbf16>, vector<8x16xf32> -> vector<8x16xf32>
    %20 = vector.broadcast %3 : vector<1x16xf32> to vector<8x16xf32>
    %21 = arith.addf %19, %20 : vector<8x16xf32>
    %22 = arith.mulf %21, %21 : vector<8x16xf32>
    %23 = arith.mulf %21, %22 : vector<8x16xf32>
    %cst_13 = arith.constant 4.471500e-02 : f32
    %24 = vector.broadcast %cst_13 : f32 to vector<8x16xf32>
    %25 = arith.mulf %24, %23 : vector<8x16xf32>
    %26 = arith.addf %21, %25 : vector<8x16xf32>
    %cst_14 = arith.constant 0.797884583 : f32
    %27 = vector.broadcast %cst_14 : f32 to vector<8x16xf32>
    %28 = arith.mulf %27, %26 : vector<8x16xf32>
    %29 = math.tanh %28 : vector<8x16xf32>
    %cst_15 = arith.constant 1.000000e+00 : f32
    %30 = vector.broadcast %cst_15 : f32 to vector<8x16xf32>
    %31 = arith.addf %30, %29 : vector<8x16xf32>
    %cst_16 = arith.constant 5.000000e-01 : f32
    %32 = vector.broadcast %cst_16 : f32 to vector<8x16xf32>
    %33 = arith.mulf %32, %31 : vector<8x16xf32>
    %34 = arith.mulf %21, %33 : vector<8x16xf32>
    %35 = arith.truncf %34 : vector<8x16xf32> to vector<8x16xbf16>
    %c0_17 = arith.constant 0 : index
    %c0_18 = arith.constant 0 : index
    %36 = vector.load %arg8[%c0_17, %c0_18] : memref<16x32xbf16, #tpu.memory_space<vmem>>, vector<16x32xbf16>
    %cst_19 = arith.constant dense<0.000000e+00> : vector<8x32xf32>
    %37 = tpu.matmul %35, %36, %cst_19 {dimension_numbers = #tpu.dot_dimension_numbers<[1], [0], [0], [1], [0, 0, 1, 1], [], []>} : vector<8x16xbf16>, vector<16x32xbf16>, vector<8x32xf32> -> vector<8x32xf32>
    %38 = vector.broadcast %4 : vector<1x32xf32> to vector<8x32xf32>
    %39 = arith.addf %37, %38 : vector<8x32xf32>
    %c0_20 = arith.constant 0 : index
    %c0_21 = arith.constant 0 : index
    %c0_22 = arith.constant 0 : index
    %40 = vector.load %arg2[%c0_20, %c0_21, %c0_22] : memref<1x4x8xf32, #tpu.memory_space<vmem>>, vector<1x4x8xf32>
    %41 = vector.shape_cast %40 : vector<1x4x8xf32> to vector<4x8xf32>
    %cst_23 = arith.constant dense<0.000000e+00> : vector<4x32xf32>
    %42 = tpu.matmul %41, %1, %cst_23 {dimension_numbers = #tpu.dot_dimension_numbers<[1], [0], [0], [1], [0, 0, 1, 1], [], []>} : vector<4x8xf32>, vector<8x32xf32>, vector<4x32xf32> -> vector<4x32xf32>
    %c0_24 = arith.constant 0 : index
    %c0_25 = arith.constant 0 : index
    %43 = vector.load %arg10[%c0_24, %c0_25] : memref<1x32xf32, #tpu.memory_space<vmem>>, vector<1x32xf32>
    %c0_26 = arith.constant 0 : index
    %c0_27 = arith.constant 0 : index
    %44 = vector.load %arg12[%c0_26, %c0_27] : memref<1x128xf32, #tpu.memory_space<vmem>>, vector<1x128xf32>
    %c0_28 = arith.constant 0 : index
    %c0_29 = arith.constant 0 : index
    %45 = vector.load %arg14[%c0_28, %c0_29] : memref<1x32xf32, #tpu.memory_space<vmem>>, vector<1x32xf32>
    %46 = arith.mulf %42, %42 : vector<4x32xf32>
    %cst_30 = arith.constant dense<0.000000e+00> : vector<4xf32>
    %47 = vector.multi_reduction <add>, %46, %cst_30 [1] : vector<4x32xf32> to vector<4xf32>
    %48 = vector.shape_cast %47 : vector<4xf32> to vector<4x1xf32>
    %cst_31 = arith.constant 3.200000e+01 : f32
    %49 = vector.broadcast %cst_31 : f32 to vector<4x1xf32>
    %50 = arith.divf %48, %49 : vector<4x1xf32>
    %cst_32 = arith.constant 9.99999997E-7 : f32
    %51 = vector.broadcast %cst_32 : f32 to vector<4x1xf32>
    %52 = arith.addf %50, %51 : vector<4x1xf32>
    %53 = math.rsqrt %52 : vector<4x1xf32>
    %54 = vector.broadcast %53 : vector<4x1xf32> to vector<4x32xf32>
    %55 = arith.mulf %42, %54 : vector<4x32xf32>
    %56 = vector.broadcast %43 : vector<1x32xf32> to vector<4x32xf32>
    %57 = arith.mulf %55, %56 : vector<4x32xf32>
    %58 = arith.truncf %57 : vector<4x32xf32> to vector<4x32xbf16>
    %c0_33 = arith.constant 0 : index
    %c0_34 = arith.constant 0 : index
    %59 = vector.load %arg11[%c0_33, %c0_34] : memref<32x128xbf16, #tpu.memory_space<vmem>>, vector<32x128xbf16>
    %cst_35 = arith.constant dense<0.000000e+00> : vector<4x128xf32>
    %60 = tpu.matmul %58, %59, %cst_35 {dimension_numbers = #tpu.dot_dimension_numbers<[1], [0], [0], [1], [0, 0, 1, 1], [], []>} : vector<4x32xbf16>, vector<32x128xbf16>, vector<4x128xf32> -> vector<4x128xf32>
    %61 = vector.broadcast %44 : vector<1x128xf32> to vector<4x128xf32>
    %62 = arith.addf %60, %61 : vector<4x128xf32>
    %63 = arith.mulf %62, %62 : vector<4x128xf32>
    %64 = arith.mulf %62, %63 : vector<4x128xf32>
    %cst_36 = arith.constant 4.471500e-02 : f32
    %65 = vector.broadcast %cst_36 : f32 to vector<4x128xf32>
    %66 = arith.mulf %65, %64 : vector<4x128xf32>
    %67 = arith.addf %62, %66 : vector<4x128xf32>
    %cst_37 = arith.constant 0.797884583 : f32
    %68 = vector.broadcast %cst_37 : f32 to vector<4x128xf32>
    %69 = arith.mulf %68, %67 : vector<4x128xf32>
    %70 = math.tanh %69 : vector<4x128xf32>
    %cst_38 = arith.constant 1.000000e+00 : f32
    %71 = vector.broadcast %cst_38 : f32 to vector<4x128xf32>
    %72 = arith.addf %71, %70 : vector<4x128xf32>
    %cst_39 = arith.constant 5.000000e-01 : f32
    %73 = vector.broadcast %cst_39 : f32 to vector<4x128xf32>
    %74 = arith.mulf %73, %72 : vector<4x128xf32>
    %75 = arith.mulf %62, %74 : vector<4x128xf32>
    %76 = arith.truncf %75 : vector<4x128xf32> to vector<4x128xbf16>
    %c0_40 = arith.constant 0 : index
    %c0_41 = arith.constant 0 : index
    %77 = vector.load %arg13[%c0_40, %c0_41] : memref<128x32xbf16, #tpu.memory_space<vmem>>, vector<128x32xbf16>
    %cst_42 = arith.constant dense<0.000000e+00> : vector<4x32xf32>
    %78 = tpu.matmul %76, %77, %cst_42 {dimension_numbers = #tpu.dot_dimension_numbers<[1], [0], [0], [1], [0, 0, 1, 1], [], []>} : vector<4x128xbf16>, vector<128x32xbf16>, vector<4x32xf32> -> vector<4x32xf32>
    %79 = vector.broadcast %45 : vector<1x32xf32> to vector<4x32xf32>
    %80 = arith.addf %78, %79 : vector<4x32xf32>
    %c0_43 = arith.constant 0 : index
    %c0_44 = arith.constant 0 : index
    %c0_45 = arith.constant 0 : index
    %81 = vector.load %arg4[%c0_43, %c0_44, %c0_45] : memref<1x4x1xf32, #tpu.memory_space<vmem>>, vector<1x4x1xf32>
    %82 = vector.shape_cast %81 : vector<1x4x1xf32> to vector<4x1xf32>
    %83 = vector.broadcast %82 : vector<4x1xf32> to vector<4x32xf32>
    %84 = arith.mulf %80, %83 : vector<4x32xf32>
    %c0_46 = arith.constant 0 : index
    %c0_47 = arith.constant 0 : index
    %c0_48 = arith.constant 0 : index
    %85 = vector.load %arg3[%c0_46, %c0_47, %c0_48] : memref<1x8x4xf32, #tpu.memory_space<vmem>>, vector<1x8x4xf32>
    %86 = vector.shape_cast %85 : vector<1x8x4xf32> to vector<8x4xf32>
    %cst_49 = arith.constant dense<0.000000e+00> : vector<8x32xf32>
    %87 = tpu.matmul %86, %84, %cst_49 {dimension_numbers = #tpu.dot_dimension_numbers<[1], [0], [0], [1], [0, 0, 1, 1], [], []>} : vector<8x4xf32>, vector<4x32xf32>, vector<8x32xf32> -> vector<8x32xf32>
    %88 = arith.addf %39, %87 : vector<8x32xf32>
    %c0_50 = arith.constant 0 : index
    %c0_51 = arith.constant 0 : index
    %c0_52 = arith.constant 0 : index
    %89 = vector.load %arg15[%c0_50, %c0_51, %c0_52] : memref<1x8x32xf32, #tpu.memory_space<vmem>>, vector<1x8x32xf32>
    %90 = vector.shape_cast %89 : vector<1x8x32xf32> to vector<8x32xf32>
    %91 = vector.shape_cast %88 : vector<8x32xf32> to vector<1x8x32xf32>
    tpu.vector_store %arg15[%c0_50, %c0_51, %c0_52], %91 {strides = array<i32>} : memref<1x8x32xf32, #tpu.memory_space<vmem>>, vector<1x8x32xf32>,
    return
  }
  func.func @transform_0(%arg0: i32) -> (i32, i32, i32) {
    %c0_i32 = arith.constant 0 : i32
    %c0_i32_0 = arith.constant 0 : i32
    %c0_i32_1 = arith.constant 0 : i32
    return %arg0, %c0_i32, %c0_i32_0 : i32, i32, i32
  }
  func.func @transform_1(%arg0: i32) -> (i32, i32, i32) {
    %c0_i32 = arith.constant 0 : i32
    %c0_i32_0 = arith.constant 0 : i32
    %c0_i32_1 = arith.constant 0 : i32
    return %arg0, %c0_i32, %c0_i32_0 : i32, i32, i32
  }
  func.func @transform_2(%arg0: i32) -> (i32, i32, i32) {
    %c0_i32 = arith.constant 0 : i32
    %c0_i32_0 = arith.constant 0 : i32
    %c0_i32_1 = arith.constant 0 : i32
    return %arg0, %c0_i32, %c0_i32_0 : i32, i32, i32
  }
  func.func @transform_3(%arg0: i32) -> (i32, i32, i32) {
    %c0_i32 = arith.constant 0 : i32
    %c0_i32_0 = arith.constant 0 : i32
    %c0_i32_1 = arith.constant 0 : i32
    return %arg0, %c0_i32, %c0_i32_0 : i32, i32, i32
  }
  func.func @transform_4(%arg0: i32) -> (i32, i32) {
    %c0_i32 = arith.constant 0 : i32
    %c0_i32_0 = arith.constant 0 : i32
    %c0_i32_1 = arith.constant 0 : i32
    return %c0_i32, %c0_i32_0 : i32, i32
  }
  func.func @transform_5(%arg0: i32) -> (i32, i32) {
    %c0_i32 = arith.constant 0 : i32
    %c0_i32_0 = arith.constant 0 : i32
    %c0_i32_1 = arith.constant 0 : i32
    return %c0_i32, %c0_i32_0 : i32, i32
  }
  func.func @transform_6(%arg0: i32) -> (i32, i32) {
    %c0_i32 = arith.constant 0 : i32
    %c0_i32_0 = arith.constant 0 : i32
    %c0_i32_1 = arith.constant 0 : i32
    return %c0_i32, %c0_i32_0 : i32, i32
  }
  func.func @transform_7(%arg0: i32) -> (i32, i32) {
    %c0_i32 = arith.constant 0 : i32
    %c0_i32_0 = arith.constant 0 : i32
    %c0_i32_1 = arith.constant 0 : i32
    return %c0_i32, %c0_i32_0 : i32, i32
  }
  func.func @transform_8(%arg0: i32) -> (i32, i32) {
    %c0_i32 = arith.constant 0 : i32
    %c0_i32_0 = arith.constant 0 : i32
    %c0_i32_1 = arith.constant 0 : i32
    return %c0_i32, %c0_i32_0 : i32, i32
  }
  func.func @transform_9(%arg0: i32) -> (i32, i32) {
    %c0_i32 = arith.constant 0 : i32
    %c0_i32_0 = arith.constant 0 : i32
    %c0_i32_1 = arith.constant 0 : i32
    return %c0_i32, %c0_i32_0 : i32, i32
  }
  func.func @transform_10(%arg0: i32) -> (i32, i32) {
    %c0_i32 = arith.constant 0 : i32
    %c0_i32_0 = arith.constant 0 : i32
    %c0_i32_1 = arith.constant 0 : i32
    return %c0_i32, %c0_i32_0 : i32, i32
  }
  func.func @transform_11(%arg0: i32) -> (i32, i32) {
    %c0_i32 = arith.constant 0 : i32
    %c0_i32_0 = arith.constant 0 : i32
    %c0_i32_1 = arith.constant 0 : i32
    return %c0_i32, %c0_i32_0 : i32, i32
  }
  func.func @transform_12(%arg0: i32) -> (i32, i32) {
    %c0_i32 = arith.constant 0 : i32
    %c0_i32_0 = arith.constant 0 : i32
    %c0_i32_1 = arith.constant 0 : i32
    return %c0_i32, %c0_i32_0 : i32, i32
  }
  func.func @transform_13(%arg0: i32) -> (i32, i32) {
    %c0_i32 = arith.constant 0 : i32
    %c0_i32_0 = arith.constant 0 : i32
    %c0_i32_1 = arith.constant 0 : i32
    return %c0_i32, %c0_i32_0 : i32, i32
  }
  func.func @transform_14(%arg0: i32) -> (i32, i32, i32) {
    %c0_i32 = arith.constant 0 : i32
    %c0_i32_0 = arith.constant 0 : i32
    %c0_i32_1 = arith.constant 0 : i32
    return %arg0, %c0_i32, %c0_i32_0 : i32, i32, i32
  }
}

module attributes {stable_mosaic.version = 11 : i64} {
  func.func @_light_attn_kernel(%arg0: i32, %arg1: memref<1x8x32xf32, #tpu.memory_space<vmem>>, %arg2: memref<1x32xf32, #tpu.memory_space<vmem>>, %arg3: memref<32x96xbf16, #tpu.memory_space<vmem>>, %arg4: memref<1x96xf32, #tpu.memory_space<vmem>>, %arg5: memref<32x32xbf16, #tpu.memory_space<vmem>>, %arg6: memref<1x32xf32, #tpu.memory_space<vmem>>, %arg7: memref<1x8x32xf32, #tpu.memory_space<vmem>>) attributes {dimension_semantics = [#tpu.dimension_semantics<parallel>], iteration_bounds = array<i64: 2>, scalar_prefetch = 0 : i64, scratch_operands = 0 : i64, tpu.core_type = #tpu.core_type<tc>, window_params = [{transform_indices = @transform_0, window_bounds = array<i64: 1, 8, 32>}, {pipeline_mode = #tpu.pipeline_mode<synchronous>, transform_indices = @transform_1, window_bounds = array<i64: 1, 32>}, {pipeline_mode = #tpu.pipeline_mode<synchronous>, transform_indices = @transform_2, window_bounds = array<i64: 32, 96>}, {pipeline_mode = #tpu.pipeline_mode<synchronous>, transform_indices = @transform_3, window_bounds = array<i64: 1, 96>}, {pipeline_mode = #tpu.pipeline_mode<synchronous>, transform_indices = @transform_4, window_bounds = array<i64: 32, 32>}, {pipeline_mode = #tpu.pipeline_mode<synchronous>, transform_indices = @transform_5, window_bounds = array<i64: 1, 32>}, {transform_indices = @transform_6, window_bounds = array<i64: 1, 8, 32>}]} {
    %c0 = arith.constant 0 : index
    %c0_0 = arith.constant 0 : index
    %c0_1 = arith.constant 0 : index
    %0 = vector.load %arg1[%c0, %c0_0, %c0_1] : memref<1x8x32xf32, #tpu.memory_space<vmem>>, vector<1x8x32xf32>
    %1 = vector.shape_cast %0 : vector<1x8x32xf32> to vector<8x32xf32>
    %2 = arith.mulf %1, %1 : vector<8x32xf32>
    %cst = arith.constant dense<0.000000e+00> : vector<8xf32>
    %3 = vector.multi_reduction <add>, %2, %cst [1] : vector<8x32xf32> to vector<8xf32>
    %4 = vector.shape_cast %3 : vector<8xf32> to vector<8x1xf32>
    %cst_2 = arith.constant 3.200000e+01 : f32
    %5 = vector.broadcast %cst_2 : f32 to vector<8x1xf32>
    %6 = arith.divf %4, %5 : vector<8x1xf32>
    %cst_3 = arith.constant 9.99999997E-7 : f32
    %7 = vector.broadcast %cst_3 : f32 to vector<8x1xf32>
    %8 = arith.addf %6, %7 : vector<8x1xf32>
    %9 = math.rsqrt %8 : vector<8x1xf32>
    %10 = vector.broadcast %9 : vector<8x1xf32> to vector<8x32xf32>
    %11 = arith.mulf %1, %10 : vector<8x32xf32>
    %c0_4 = arith.constant 0 : index
    %c0_5 = arith.constant 0 : index
    %12 = vector.load %arg2[%c0_4, %c0_5] : memref<1x32xf32, #tpu.memory_space<vmem>>, vector<1x32xf32>
    %13 = vector.broadcast %12 : vector<1x32xf32> to vector<8x32xf32>
    %14 = arith.mulf %11, %13 : vector<8x32xf32>
    %15 = arith.truncf %14 : vector<8x32xf32> to vector<8x32xbf16>
    %c0_6 = arith.constant 0 : index
    %c0_7 = arith.constant 0 : index
    %16 = vector.load %arg3[%c0_6, %c0_7] : memref<32x96xbf16, #tpu.memory_space<vmem>>, vector<32x96xbf16>
    %cst_8 = arith.constant dense<0.000000e+00> : vector<8x96xf32>
    %17 = tpu.matmul %15, %16, %cst_8 {dimension_numbers = #tpu.dot_dimension_numbers<[1], [0], [0], [1], [0, 0, 1, 1], [], []>} : vector<8x32xbf16>, vector<32x96xbf16>, vector<8x96xf32> -> vector<8x96xf32>
    %c0_9 = arith.constant 0 : index
    %c0_10 = arith.constant 0 : index
    %18 = vector.load %arg4[%c0_9, %c0_10] : memref<1x96xf32, #tpu.memory_space<vmem>>, vector<1x96xf32>
    %19 = vector.broadcast %18 : vector<1x96xf32> to vector<8x96xf32>
    %20 = arith.addf %17, %19 : vector<8x96xf32>
    %21 = vector.extract_strided_slice %20 {offsets = [0, 0], sizes = [8, 32], strides = [1, 1]} : vector<8x96xf32> to vector<8x32xf32>
    %22 = vector.extract_strided_slice %20 {offsets = [0, 32], sizes = [8, 32], strides = [1, 1]} : vector<8x96xf32> to vector<8x32xf32>
    %23 = vector.extract_strided_slice %20 {offsets = [0, 64], sizes = [8, 32], strides = [1, 1]} : vector<8x96xf32> to vector<8x32xf32>
    %24 = vector.extract_strided_slice %21 {offsets = [0, 0], sizes = [8, 16], strides = [1, 1]} : vector<8x32xf32> to vector<8x16xf32>
    %25 = vector.extract_strided_slice %22 {offsets = [0, 0], sizes = [8, 16], strides = [1, 1]} : vector<8x32xf32> to vector<8x16xf32>
    %26 = vector.extract_strided_slice %23 {offsets = [0, 0], sizes = [8, 16], strides = [1, 1]} : vector<8x32xf32> to vector<8x16xf32>
    %27 = arith.truncf %24 : vector<8x16xf32> to vector<8x16xbf16>
    %28 = arith.truncf %25 : vector<8x16xf32> to vector<8x16xbf16>
    %cst_11 = arith.constant dense<0.000000e+00> : vector<8x8xf32>
    %29 = tpu.matmul %27, %28, %cst_11 {dimension_numbers = #tpu.dot_dimension_numbers<[1], [1], [0], [0], [0, 0, 1, 0], [], []>} : vector<8x16xbf16>, vector<8x16xbf16>, vector<8x8xf32> -> vector<8x8xf32>
    %cst_12 = arith.constant 2.500000e-01 : f32
    %30 = vector.broadcast %cst_12 : f32 to vector<8x8xf32>
    %31 = arith.mulf %29, %30 : vector<8x8xf32>
    %cst_13 = arith.constant dense<0xFF800000> : vector<8xf32>
    %32 = vector.multi_reduction <maximumf>, %31, %cst_13 [1] : vector<8x8xf32> to vector<8xf32>
    %33 = vector.shape_cast %32 : vector<8xf32> to vector<8x1xf32>
    %34 = vector.broadcast %33 : vector<8x1xf32> to vector<8x8xf32>
    %35 = arith.subf %31, %34 : vector<8x8xf32>
    %36 = math.exp %35 : vector<8x8xf32>
    %cst_14 = arith.constant dense<0.000000e+00> : vector<8xf32>
    %37 = vector.multi_reduction <add>, %36, %cst_14 [1] : vector<8x8xf32> to vector<8xf32>
    %38 = vector.shape_cast %37 : vector<8xf32> to vector<8x1xf32>
    %39 = arith.truncf %36 : vector<8x8xf32> to vector<8x8xbf16>
    %40 = arith.truncf %26 : vector<8x16xf32> to vector<8x16xbf16>
    %cst_15 = arith.constant dense<0.000000e+00> : vector<8x16xf32>
    %41 = tpu.matmul %39, %40, %cst_15 {dimension_numbers = #tpu.dot_dimension_numbers<[1], [0], [0], [1], [0, 0, 1, 1], [], []>} : vector<8x8xbf16>, vector<8x16xbf16>, vector<8x16xf32> -> vector<8x16xf32>
    %42 = tpu.reciprocal %38 {approx = true} : vector<8x1xf32> -> vector<8x1xf32>
    %43 = vector.broadcast %42 : vector<8x1xf32> to vector<8x16xf32>
    %44 = arith.mulf %41, %43 : vector<8x16xf32>
    %45 = vector.extract_strided_slice %21 {offsets = [0, 16], sizes = [8, 16], strides = [1, 1]} : vector<8x32xf32> to vector<8x16xf32>
    %46 = vector.extract_strided_slice %22 {offsets = [0, 16], sizes = [8, 16], strides = [1, 1]} : vector<8x32xf32> to vector<8x16xf32>
    %47 = vector.extract_strided_slice %23 {offsets = [0, 16], sizes = [8, 16], strides = [1, 1]} : vector<8x32xf32> to vector<8x16xf32>
    %48 = arith.truncf %45 : vector<8x16xf32> to vector<8x16xbf16>
    %49 = arith.truncf %46 : vector<8x16xf32> to vector<8x16xbf16>
    %cst_16 = arith.constant dense<0.000000e+00> : vector<8x8xf32>
    %50 = tpu.matmul %48, %49, %cst_16 {dimension_numbers = #tpu.dot_dimension_numbers<[1], [1], [0], [0], [0, 0, 1, 0], [], []>} : vector<8x16xbf16>, vector<8x16xbf16>, vector<8x8xf32> -> vector<8x8xf32>
    %cst_17 = arith.constant 2.500000e-01 : f32
    %51 = vector.broadcast %cst_17 : f32 to vector<8x8xf32>
    %52 = arith.mulf %50, %51 : vector<8x8xf32>
    %cst_18 = arith.constant dense<0xFF800000> : vector<8xf32>
    %53 = vector.multi_reduction <maximumf>, %52, %cst_18 [1] : vector<8x8xf32> to vector<8xf32>
    %54 = vector.shape_cast %53 : vector<8xf32> to vector<8x1xf32>
    %55 = vector.broadcast %54 : vector<8x1xf32> to vector<8x8xf32>
    %56 = arith.subf %52, %55 : vector<8x8xf32>
    %57 = math.exp %56 : vector<8x8xf32>
    %cst_19 = arith.constant dense<0.000000e+00> : vector<8xf32>
    %58 = vector.multi_reduction <add>, %57, %cst_19 [1] : vector<8x8xf32> to vector<8xf32>
    %59 = vector.shape_cast %58 : vector<8xf32> to vector<8x1xf32>
    %60 = arith.truncf %57 : vector<8x8xf32> to vector<8x8xbf16>
    %61 = arith.truncf %47 : vector<8x16xf32> to vector<8x16xbf16>
    %cst_20 = arith.constant dense<0.000000e+00> : vector<8x16xf32>
    %62 = tpu.matmul %60, %61, %cst_20 {dimension_numbers = #tpu.dot_dimension_numbers<[1], [0], [0], [1], [0, 0, 1, 1], [], []>} : vector<8x8xbf16>, vector<8x16xbf16>, vector<8x16xf32> -> vector<8x16xf32>
    %63 = tpu.reciprocal %59 {approx = true} : vector<8x1xf32> -> vector<8x1xf32>
    %64 = vector.broadcast %63 : vector<8x1xf32> to vector<8x16xf32>
    %65 = arith.mulf %62, %64 : vector<8x16xf32>
    %66 = tpu.concatenate %44, %65 in 1 : vector<8x16xf32>, vector<8x16xf32> -> vector<8x32xf32>
    %67 = arith.truncf %66 : vector<8x32xf32> to vector<8x32xbf16>
    %c0_21 = arith.constant 0 : index
    %c0_22 = arith.constant 0 : index
    %68 = vector.load %arg5[%c0_21, %c0_22] : memref<32x32xbf16, #tpu.memory_space<vmem>>, vector<32x32xbf16>
    %cst_23 = arith.constant dense<0.000000e+00> : vector<8x32xf32>
    %69 = tpu.matmul %67, %68, %cst_23 {dimension_numbers = #tpu.dot_dimension_numbers<[1], [0], [0], [1], [0, 0, 1, 1], [], []>} : vector<8x32xbf16>, vector<32x32xbf16>, vector<8x32xf32> -> vector<8x32xf32>
    %c0_24 = arith.constant 0 : index
    %c0_25 = arith.constant 0 : index
    %70 = vector.load %arg6[%c0_24, %c0_25] : memref<1x32xf32, #tpu.memory_space<vmem>>, vector<1x32xf32>
    %71 = vector.broadcast %70 : vector<1x32xf32> to vector<8x32xf32>
    %72 = arith.addf %69, %71 : vector<8x32xf32>
    %c0_26 = arith.constant 0 : index
    %c0_27 = arith.constant 0 : index
    %c0_28 = arith.constant 0 : index
    %73 = vector.load %arg7[%c0_26, %c0_27, %c0_28] : memref<1x8x32xf32, #tpu.memory_space<vmem>>, vector<1x8x32xf32>
    %74 = vector.shape_cast %73 : vector<1x8x32xf32> to vector<8x32xf32>
    %75 = vector.shape_cast %72 : vector<8x32xf32> to vector<1x8x32xf32>
    tpu.vector_store %arg7[%c0_26, %c0_27, %c0_28], %75 {strides = array<i32>} : memref<1x8x32xf32, #tpu.memory_space<vmem>>, vector<1x8x32xf32>,
    return
  }
  func.func @transform_0(%arg0: i32) -> (i32, i32, i32) {
    %c0_i32 = arith.constant 0 : i32
    %c0_i32_0 = arith.constant 0 : i32
    %c0_i32_1 = arith.constant 0 : i32
    return %arg0, %c0_i32, %c0_i32_0 : i32, i32, i32
  }
  func.func @transform_1(%arg0: i32) -> (i32, i32) {
    %c0_i32 = arith.constant 0 : i32
    %c0_i32_0 = arith.constant 0 : i32
    %c0_i32_1 = arith.constant 0 : i32
    return %c0_i32, %c0_i32_0 : i32, i32
  }
  func.func @transform_2(%arg0: i32) -> (i32, i32) {
    %c0_i32 = arith.constant 0 : i32
    %c0_i32_0 = arith.constant 0 : i32
    %c0_i32_1 = arith.constant 0 : i32
    return %c0_i32, %c0_i32_0 : i32, i32
  }
  func.func @transform_3(%arg0: i32) -> (i32, i32) {
    %c0_i32 = arith.constant 0 : i32
    %c0_i32_0 = arith.constant 0 : i32
    %c0_i32_1 = arith.constant 0 : i32
    return %c0_i32, %c0_i32_0 : i32, i32
  }
  func.func @transform_4(%arg0: i32) -> (i32, i32) {
    %c0_i32 = arith.constant 0 : i32
    %c0_i32_0 = arith.constant 0 : i32
    %c0_i32_1 = arith.constant 0 : i32
    return %c0_i32, %c0_i32_0 : i32, i32
  }
  func.func @transform_5(%arg0: i32) -> (i32, i32) {
    %c0_i32 = arith.constant 0 : i32
    %c0_i32_0 = arith.constant 0 : i32
    %c0_i32_1 = arith.constant 0 : i32
    return %c0_i32, %c0_i32_0 : i32, i32
  }
  func.func @transform_6(%arg0: i32) -> (i32, i32, i32) {
    %c0_i32 = arith.constant 0 : i32
    %c0_i32_0 = arith.constant 0 : i32
    %c0_i32_1 = arith.constant 0 : i32
    return %arg0, %c0_i32, %c0_i32_0 : i32, i32, i32
  }
}

</mosaic_0001>

<llo_original>
// kernel: colt5_encoder_forward.6
$region0: #{colt5_encoder_forward.6}
  #allocation0 [shape = 'u32[]', space=smem, size = 0x4, offset = 0x4, fixed_abs, tag = 'smem constant byte address 0x4 - core index']
  #allocation1 [shape = 'u32[144,128]{1,0:T(1,128)}', space=vmem, size = 0x12000, scoped, tag = 'internal scratch']
  %s0 = inlined_call_operand.vmem [shape: f32[2,8,32], index: 0, kind: input, shape index: {}]
  %s1 = inlined_call_operand.vmem [shape: f32[1,32], index: 1, kind: input, shape index: {}]
  %s2 = inlined_call_operand.vmem [shape: bf16[32,96], index: 2, kind: input, shape index: {}]
  %s3 = inlined_call_operand.vmem [shape: f32[1,96], index: 3, kind: input, shape index: {}]
  %s4 = inlined_call_operand.vmem [shape: bf16[32,32], index: 4, kind: input, shape index: {}]
  %s5 = inlined_call_operand.vmem [shape: f32[1,32], index: 5, kind: input, shape index: {}]
  %s6 = inlined_call_operand.vmem [shape: f32[2,8,32], index: 6, kind: output, shape index: {}]
  %s7 = sld [smem:[#allocation0]]
  $region57: #{colt5_encoder_forward.6} parent=0
    _
  %s9 = ssub.s32 1, %s7
  %s10 = scalar_select 0, %s9, %s7
  loop: start=0, step=1, limit=4
  $region2: #{colt5_encoder_forward.6} parent=0 // loop_pre_header
    _
  $region3: #{colt5_encoder_forward.6} parent=0 // loop_header
    %s12 = sphi 0, %s16
    %p13 = scmp.ge.s32.totalorder %s12, 4
    %s22 = sphi 0, %s24
    %s25 = sphi 0, %s22
    %s26 = sphi 0, %s25
    %s42 = sphi 0, %s26
    %s46 = sphi 0, %s46
    %s48 = sphi 0, %s46
    %s49 = sphi 0, %s48
    %s63 = sphi 0, %s49
    %s67 = sphi 0, %s67
    %s69 = sphi 0, %s67
    %s70 = sphi 0, %s69
    %s84 = sphi 0, %s70
    %s88 = sphi 0, %s88
    %s90 = sphi 0, %s88
    %s91 = sphi 0, %s90
    %s105 = sphi 0, %s91
    %s109 = sphi 0, %s109
    %s111 = sphi 0, %s109
    %s112 = sphi 0, %s111
    %s126 = sphi 0, %s112
    %s130 = sphi 0, %s130
    %s132 = sphi 0, %s130
    %s133 = sphi 0, %s132
    %s147 = sphi 0, %s133
    %s153 = sphi 0, %s155
    %s156 = sphi 0, %s153
    %s157 = sphi 0, %s156
    %s173 = sphi 0, %s157
  $region4: #{colt5_encoder_forward.6} parent=0 // loop_header_branch
    %15 = sbr.rel (%p13) target = $region8
  $region5: #{colt5_encoder_forward.6} parent=0 // loop_body
    %s17 = ssub.s32 %s12, 1
    %s18 = ssub.s32 %s12, 2
    %s19 = sadd.s32 %s12, 1
    %s20 = ssub.s32 %s12, %s19
    %p21 = scmp.eq.s32.totalorder %s20, 0
    %s23 = sadd.s32 %s22, 1
    %s24 = scalar_select %p21, %s22, %s23
    %p27 = pneg %p21
    %p28 = scmp.eq.s32.totalorder %s12, 1
    %p29 = por %p27, %p28
    %p30 = scmp.ne.s32.totalorder %s22, %s25
    %p31 = scmp.eq.s32.totalorder %s12, 0
    %p32 = por %p30, %p31
    %p33 = scmp.ne.s32.totalorder %s22, %s25
    %p34 = scmp.eq.s32.totalorder %s17, 1
    %p35 = por %p33, %p34
    %p36 = scmp.ne.s32.totalorder %s25, %s26
    %p37 = scmp.eq.s32.totalorder %s17, 0
    %p38 = por %p36, %p37
    %p39 = scmp.ne.s32.totalorder %s25, %s26
    %p40 = scmp.eq.s32.totalorder %s18, 1
    %p41 = por %p39, %p40
    %p43 = scmp.ne.s32.totalorder %s26, %s42
    %p44 = scmp.eq.s32.totalorder %s18, 0
    %p45 = por %p43, %p44
    %s47 = sadd.s32 %s46, 1
    %p50 = scmp.eq.s32.totalorder %s12, 1
    %p51 = scmp.ne.s32.totalorder %s46, %s48
    %p52 = scmp.eq.s32.totalorder %s12, 0
    %p53 = por %p51, %p52
    %p54 = scmp.ne.s32.totalorder %s46, %s48
    %p55 = scmp.eq.s32.totalorder %s17, 1
    %p56 = por %p54, %p55
    %p57 = scmp.ne.s32.totalorder %s48, %s49
    %p58 = scmp.eq.s32.totalorder %s17, 0
    %p59 = por %p57, %p58
    %p60 = scmp.ne.s32.totalorder %s48, %s49
    %p61 = scmp.eq.s32.totalorder %s18, 1
    %p62 = por %p60, %p61
    %p64 = scmp.ne.s32.totalorder %s49, %s63
    %p65 = scmp.eq.s32.totalorder %s18, 0
    %p66 = por %p64, %p65
    %s68 = sadd.s32 %s67, 1
    %p71 = scmp.eq.s32.totalorder %s12, 1
    %p72 = scmp.ne.s32.totalorder %s67, %s69
    %p73 = scmp.eq.s32.totalorder %s12, 0
    %p74 = por %p72, %p73
    %p75 = scmp.ne.s32.totalorder %s67, %s69
    %p76 = scmp.eq.s32.totalorder %s17, 1
    %p77 = por %p75, %p76
    %p78 = scmp.ne.s32.totalorder %s69, %s70
    %p79 = scmp.eq.s32.totalorder %s17, 0
    %p80 = por %p78, %p79
    %p81 = scmp.ne.s32.totalorder %s69, %s70
    %p82 = scmp.eq.s32.totalorder %s18, 1
    %p83 = por %p81, %p82
    %p85 = scmp.ne.s32.totalorder %s70, %s84
    %p86 = scmp.eq.s32.totalorder %s18, 0
    %p87 = por %p85, %p86
    %s89 = sadd.s32 %s88, 1
    %p92 = scmp.eq.s32.totalorder %s12, 1
    %p93 = scmp.ne.s32.totalorder %s88, %s90
    %p94 = scmp.eq.s32.totalorder %s12, 0
    %p95 = por %p93, %p94
    %p96 = scmp.ne.s32.totalorder %s88, %s90
    %p97 = scmp.eq.s32.totalorder %s17, 1
    %p98 = por %p96, %p97
    %p99 = scmp.ne.s32.totalorder %s90, %s91
    %p100 = scmp.eq.s32.totalorder %s17, 0
    %p101 = por %p99, %p100
    %p102 = scmp.ne.s32.totalorder %s90, %s91
    %p103 = scmp.eq.s32.totalorder %s18, 1
    %p104 = por %p102, %p103
    %p106 = scmp.ne.s32.totalorder %s91, %s105
    %p107 = scmp.eq.s32.totalorder %s18, 0
    %p108 = por %p106, %p107
    %s110 = sadd.s32 %s109, 1
    %p113 = scmp.eq.s32.totalorder %s12, 1
    %p114 = scmp.ne.s32.totalorder %s109, %s111
    %p115 = scmp.eq.s32.totalorder %s12, 0
    %p116 = por %p114, %p115
    %p117 = scmp.ne.s32.totalorder %s109, %s111
    %p118 = scmp.eq.s32.totalorder %s17, 1
    %p119 = por %p117, %p118
    %p120 = scmp.ne.s32.totalorder %s111, %s112
    %p121 = scmp.eq.s32.totalorder %s17, 0
    %p122 = por %p120, %p121
    %p123 = scmp.ne.s32.totalorder %s111, %s112
    %p124 = scmp.eq.s32.totalorder %s18, 1
    %p125 = por %p123, %p124
    %p127 = scmp.ne.s32.totalorder %s112, %s126
    %p128 = scmp.eq.s32.totalorder %s18, 0
    %p129 = por %p127, %p128
    %s131 = sadd.s32 %s130, 1
    %p134 = scmp.eq.s32.totalorder %s12, 1
    %p135 = scmp.ne.s32.totalorder %s130, %s132
    %p136 = scmp.eq.s32.totalorder %s12, 0
    %p137 = por %p135, %p136
    %p138 = scmp.ne.s32.totalorder %s130, %s132
    %p139 = scmp.eq.s32.totalorder %s17, 1
    %p140 = por %p138, %p139
    %p141 = scmp.ne.s32.totalorder %s132, %s133
    %p142 = scmp.eq.s32.totalorder %s17, 0
    %p143 = por %p141, %p142
    %p144 = scmp.ne.s32.totalorder %s132, %s133
    %p145 = scmp.eq.s32.totalorder %s18, 1
    %p146 = por %p144, %p145
    %p148 = scmp.ne.s32.totalorder %s133, %s147
    %p149 = scmp.eq.s32.totalorder %s18, 0
    %p150 = por %p148, %p149
    %s151 = ssub.s32 %s12, %s19
    %p152 = scmp.eq.s32.totalorder %s151, 0
    %s154 = sadd.s32 %s153, 1
    %s155 = scalar_select %p152, %s153, %s154
    %p158 = pneg %p152
    %p159 = scmp.eq.s32.totalorder %s12, 1
    %p160 = por %p158, %p159
    %p161 = scmp.ne.s32.totalorder %s153, %s156
    %p162 = scmp.eq.s32.totalorder %s12, 0
    %p163 = por %p161, %p162
    %p164 = scmp.ne.s32.totalorder %s153, %s156
    %p165 = scmp.eq.s32.totalorder %s17, 1
    %p166 = por %p164, %p165
    %p167 = scmp.ne.s32.totalorder %s156, %s157
    %p168 = scmp.eq.s32.totalorder %s17, 0
    %p169 = por %p167, %p168
    %p170 = scmp.ne.s32.totalorder %s156, %s157
    %p171 = scmp.eq.s32.totalorder %s18, 1
    %p172 = por %p170, %p171
    %p174 = scmp.ne.s32.totalorder %s157, %s173
    %p175 = scmp.eq.s32.totalorder %s18, 0
    %p176 = por %p174, %p175
    %p177 = scmp.le.s32.totalorder 1, %s12
    %p178 = scmp.lt.s32.totalorder %s12, 3
    %p179 = pnand %p177, %p178
    %p180 = pneg %p179
    // Predicated region
    $region9: #{colt5_encoder_forward.6} parent=5 // pred_check
      _
    $region10: #{colt5_encoder_forward.6} parent=5 // pred_check_branch
      %182 = sbr.rel (%p179) target = $region12
    $region11: #{colt5_encoder_forward.6} parent=5 // pred_region
      %s183 = ssub.s32 %s12, 1
      // Predicated region
      $region13: #{colt5_encoder_forward.6} parent=11 // pred_check
        %p184 = pneg %p59
      $region14: #{colt5_encoder_forward.6} parent=11 // pred_check_branch
        %186 = sbr.rel (%p184) target = $region16
      $region15: #{colt5_encoder_forward.6} parent=11 // pred_region
        _
      $region16: #{colt5_encoder_forward.6} parent=11 // pred_fallthru
        _
      // Predicated region
      $region17: #{colt5_encoder_forward.6} parent=11 // pred_check
        %p187 = pneg %p80
      $region18: #{colt5_encoder_forward.6} parent=11 // pred_check_branch
        %189 = sbr.rel (%p187) target = $region20
      $region19: #{colt5_encoder_forward.6} parent=11 // pred_region
        _
      $region20: #{colt5_encoder_forward.6} parent=11 // pred_fallthru
        _
      // Predicated region
      $region21: #{colt5_encoder_forward.6} parent=11 // pred_check
        %p190 = pneg %p101
      $region22: #{colt5_encoder_forward.6} parent=11 // pred_check_branch
        %192 = sbr.rel (%p190) target = $region24
      $region23: #{colt5_encoder_forward.6} parent=11 // pred_region
        _
      $region24: #{colt5_encoder_forward.6} parent=11 // pred_fallthru
        _
      // Predicated region
      $region25: #{colt5_encoder_forward.6} parent=11 // pred_check
        %p193 = pneg %p122
      $region26: #{colt5_encoder_forward.6} parent=11 // pred_check_branch
        %195 = sbr.rel (%p193) target = $region28
      $region27: #{colt5_encoder_forward.6} parent=11 // pred_region
        _
      $region28: #{colt5_encoder_forward.6} parent=11 // pred_fallthru
        _
      // Predicated region
      $region29: #{colt5_encoder_forward.6} parent=11 // pred_check
        %p196 = pneg %p143
      $region30: #{colt5_encoder_forward.6} parent=11 // pred_check_branch
        %198 = sbr.rel (%p196) target = $region32
      $region31: #{colt5_encoder_forward.6} parent=11 // pred_region
        _
      $region32: #{colt5_encoder_forward.6} parent=11 // pred_fallthru
        _
    $region12: #{colt5_encoder_forward.6} parent=5 // pred_fallthru
      _
    %p199 = scmp.lt.s32.totalorder %s12, 2
    // Predicated region
    $region33: #{colt5_encoder_forward.6} parent=5 // pred_check
      %p200 = pneg %p199
    $region34: #{colt5_encoder_forward.6} parent=5 // pred_check_branch
      %202 = sbr.rel (%p200) target = $region36
    $region35: #{colt5_encoder_forward.6} parent=5 // pred_region
      // Predicated region
      $region37: #{colt5_encoder_forward.6} parent=35 // pred_check
        %p203 = pneg %p32
      $region38: #{colt5_encoder_forward.6} parent=35 // pred_check_branch
        %205 = sbr.rel (%p203) target = $region40
      $region39: #{colt5_encoder_forward.6} parent=35 // pred_region
        %p206 = scmp.lt.s32.totalorder %s12, 1
        %s207 = scalar_select %p206, %s12, 1
        %s208 = smul.addr %s207, 8
        %s209 = scalar_lea.vmem %s0, %s208
      $region40: #{colt5_encoder_forward.6} parent=35 // pred_fallthru
        _
    $region36: #{colt5_encoder_forward.6} parent=5 // pred_fallthru
      _
    %p210 = scmp.le.s32.totalorder 1, %s12
    %p211 = scmp.lt.s32.totalorder %s12, 3
    %p212 = pnand %p210, %p211
    %p213 = pneg %p212
    // Predicated region
    $region41: #{colt5_encoder_forward.6} parent=5 // pred_check
      _
    $region42: #{colt5_encoder_forward.6} parent=5 // pred_check_branch
      %215 = sbr.rel (%p212) target = $region44
    $region43: #{colt5_encoder_forward.6} parent=5 // pred_region
      %s216 = ssub.s32 %s12, 1
      %p217 = scmp.lt.s32.totalorder %s17, 1
      %s218 = scalar_select %p217, %s17, 1
      %s219 = smul.addr %s218, 8
      %s220 = scalar_lea.vmem %s0, %s219
      %p221 = pneg %p38
      %p222 = pneg %p35
      %p223 = pneg %p59
      %p224 = pneg %p56
      %p225 = pneg %p80
      %p226 = pneg %p77
      %p227 = pneg %p101
      %p228 = pneg %p98
      %p229 = pneg %p122
      %p230 = pneg %p119
      %p231 = pneg %p143
      %p232 = pneg %p140
      %p233 = pneg %p169
      %p234 = pneg %p166
      %p235 = scmp.lt.s32.totalorder %s17, 1
      %s236 = scalar_select %p235, %s17, 1
      %s237 = smul.addr %s236, 8
      %s238 = scalar_lea.vmem %s6, %s237
      %p239 = scmp.lt.s32.totalorder %s17, 1
      %s240 = scalar_select %p239, %s17, 1
      %s241 = smul.addr %s240, 8
      %s242 = scalar_lea.vmem %s0, %s241
      %p243 = scmp.lt.s32.totalorder %s17, 1
      %s244 = scalar_select %p243, %s17, 1
      %s245 = smul.addr %s244, 8
      %s246 = scalar_lea.vmem %s6, %s245
      %v248 = vld [vmem:[%s242] sm:$0xff]
      %v249 = vmul.f32 %v248, %v248
      %vm250 = vcmask 261120
      %v251 = vsel %vm250, %v249, 0.0
      %252 = vadd.xlane.f32.xlu0 %v251
      %v253 = vpop.xlane.xlu0 %252
      %v254 = vrcp.pop 32.0
      %v255 = vmul.f32 %v253, %v254
      %v256 = vadd.f32 %v255, 1e-06
      %v257 = vrsqrt.pop %v256
      %v258 = vmul.f32 %v248, %v257
      %v259 = vld [vmem:[%s1] sm:$0x1]
      %v261 = vlaneseq
      %v262 = vshrl.u32 %v261, 7
      %v263 = vsub.s32 0, %v262
      %v264 = vrot.slane %v259, %v263
      %v266 = vmul.f32 %v258, %v264
      %v267 = vpack.c.bf16 %v266, %v266
      %v268 = vld [vmem:[%s2] sm:$0xf]
      %v269 = vld [vmem:[%s2 + $0x4] sm:$0xf]
      %v270 = vld [vmem:[%s2 + $0x8] sm:$0xf]
      %v271 = vld [vmem:[%s2 + $0xc] sm:$0xf]
      %v272 = vld [vmem:[%s3] sm:$0x1]
      %v274 = vlaneseq
      %v275 = vshrl.u32 %v274, 7
      %v276 = vsub.s32 0, %v275
      %v277 = vrot.slane %v272, %v276
      %v283 = vunpack.c.l.b16 %v268
      %v284 = vunpack.c.l.b16 %v269
      %v285 = vunpack.c.l.b16 %v270
      %v286 = vunpack.c.l.b16 %v271
      %v287 = vpack.c.b16 %v284, %v283
      %v288 = vpack.c.b16 %v286, %v285
      %v292 = vsel %vm250, %v267, 0
      %294 = vmatprep.subr.bf16.mxu0 0
      %295 = vmatpush1.bf16.msra.mxu0 %v287
      %296 = vmatprep.subr.bf16.mxu0 0
      %297 = vmatpush1.bf16.msra.mxu0 %v288
      %298 = vmatprep.subr.bf16.mxu0 0
      %299 = vmatpush1.bf16.msra.mxu0 0
      %300 = vmatprep.subr.bf16.mxu0 0
      %301 = vmatpush1.bf16.msra.mxu0 0
      %302 = vmatprep.subr.bf16.mxu0 0
      %303 = vmatpush1.bf16.msra.mxu0 0
      %304 = vmatprep.subr.bf16.mxu0 0
      %305 = vmatpush1.bf16.msra.mxu0 0
      %306 = vmatprep.subr.bf16.mxu0 0
      %307 = vmatpush1.bf16.msra.mxu0 0
      %308 = vmatprep.subr.bf16.mxu0 0
      %309 = vmatpush1.bf16.msra.mxu0 0
      %310 = vmatprep.subr.bf16.mxu0 0
      %311 = vmatpush1.bf16.msra.mxu0 0
      %312 = vmatprep.subr.bf16.mxu0 0
      %313 = vmatpush1.bf16.msra.mxu0 0
      %314 = vmatprep.subr.bf16.mxu0 0
      %315 = vmatpush1.bf16.msra.mxu0 0
      %316 = vmatprep.subr.bf16.mxu0 0
      %317 = vmatpush1.bf16.msra.mxu0 0
      %318 = vmatprep.subr.bf16.mxu0 0
      %319 = vmatpush1.bf16.msra.mxu0 0
      %320 = vmatprep.subr.bf16.mxu0 0
      %321 = vmatpush1.bf16.msra.mxu0 0
      %322 = vmatprep.subr.bf16.mxu0 0
      %323 = vmatpush1.bf16.msra.mxu0 0
      %324 = vmatprep.subr.bf16.mxu0 0
      %325 = vmatpush1.bf16.msra.mxu0 0
      %326 = vmatprep.mubr.bf16.mxu0 0
      %327 = vmatmul.mubr.bf16.gmra.mrb[0].mxu0 %v292
      %v328 = vpop.f32.mrb[0].mxu0
      %v329 = vadd.f32 %v277, %v328
      %v330 = vpop.f32.mrb[0].mxu0
      %v331 = vpop.f32.mrb[0].mxu0
      %v332 = vpop.f32.mrb[0].mxu0
      %333 = vdwg.mxu0
      %v334 = vpack.c.bf16 %v329, %v329
      %336 = vrot.lane.b32.xlu0 %v334, 96
      %v337 = vpop.permute.xlu0 %336
      %vm338 = vcmask 130048
      %v340 = vsel %vm338, %v334, 0
      %v343 = vsel %vm338, %v337, 0
      %345 = vmatprep.subr.bf16.mxu0 0
      %346 = vmatpush1.bf16.xpose.msra.mxu0 %v343
      %347 = vmatprep.subr.bf16.mxu0 0
      %348 = vmatpush1.bf16.xpose.msra.mxu0 0
      %349 = vmatprep.subr.bf16.mxu0 0
      %350 = vmatpush1.bf16.xpose.msra.mxu0 0
      %351 = vmatprep.subr.bf16.mxu0 0
      %352 = vmatpush1.bf16.xpose.msra.mxu0 0
      %353 = vmatprep.subr.bf16.mxu0 0
      %354 = vmatpush1.bf16.xpose.msra.mxu0 0
      %355 = vmatprep.subr.bf16.mxu0 0
      %356 = vmatpush1.bf16.xpose.msra.mxu0 0
      %357 = vmatprep.subr.bf16.mxu0 0
      %358 = vmatpush1.bf16.xpose.msra.mxu0 0
      %359 = vmatprep.subr.bf16.mxu0 0
      %360 = vmatpush1.bf16.xpose.msra.mxu0 0
      %361 = vmatprep.subr.bf16.mxu0 0
      %362 = vmatpush1.bf16.xpose.msra.mxu0 0
      %363 = vmatprep.subr.bf16.mxu0 0
      %364 = vmatpush1.bf16.xpose.msra.mxu0 0
      %365 = vmatprep.subr.bf16.mxu0 0
      %366 = vmatpush1.bf16.xpose.msra.mxu0 0
      %367 = vmatprep.subr.bf16.mxu0 0
      %368 = vmatpush1.bf16.xpose.msra.mxu0 0
      %369 = vmatprep.subr.bf16.mxu0 0
      %370 = vmatpush1.bf16.xpose.msra.mxu0 0
      %371 = vmatprep.subr.bf16.mxu0 0
      %372 = vmatpush1.bf16.xpose.msra.mxu0 0
      %373 = vmatprep.subr.bf16.mxu0 0
      %374 = vmatpush1.bf16.xpose.msra.mxu0 0
      %375 = vmatprep.subr.bf16.mxu0 0
      %376 = vmatpush1.bf16.xpose.msra.mxu0 0
      %377 = vmatprep.mubr.bf16.mxu0 0
      %378 = vmatmul.mubr.bf16.gmra.mrb[0].mxu0 %v340
      %v379 = vpop.f32.mrb[0].mxu0
      %v380 = vadd.f32 0.0, %v379
      %v381 = vpop.f32.mrb[0].mxu0
      %v382 = vpop.f32.mrb[0].mxu0
      %v383 = vpop.f32.mrb[0].mxu0
      %384 = vdwg.mxu0
      %v385 = vmul.f32 %v380, 0.25
      %vm386 = vcmask 64512
      %v387 = vsel %vm386, %v385, -inf
      %388 = vmax.xlane.f32.xlu0 %v387
      %v389 = vpop.xlane.xlu0 %388
      %v390 = vsub.f32 %v385, %v389
      %v391 = vmul.f32 %v390, 1.442695
      %v392 = vpow.pop %v391
      %v393 = vsel %vm386, %v392, 0.0
      %394 = vadd.xlane.f32.xlu0 %v393
      %v395 = vpop.xlane.xlu0 %394
      %v396 = vpack.c.bf16 %v392, %v392
      %397 = vrot.lane.b32.xlu0 %v334, 64
      %v398 = vpop.permute.xlu0 %397
      %v400 = vsel %vm386, %v396, 0
      %vm402 = vcmask 1043456
      %v404 = vsel %vm402, %v398, 0
      %406 = vmatprep.subr.bf16.mxu0 0
      %407 = vmatpush1.bf16.msra.mxu0 %v404
      %408 = vmatprep.subr.bf16.mxu0 0
      %409 = vmatpush1.bf16.msra.mxu0 0
      %410 = vmatprep.subr.bf16.mxu0 0
      %411 = vmatpush1.bf16.msra.mxu0 0
      %412 = vmatprep.subr.bf16.mxu0 0
      %413 = vmatpush1.bf16.msra.mxu0 0
      %414 = vmatprep.subr.bf16.mxu0 0
      %415 = vmatpush1.bf16.msra.mxu0 0
      %416 = vmatprep.subr.bf16.mxu0 0
      %417 = vmatpush1.bf16.msra.mxu0 0
      %418 = vmatprep.subr.bf16.mxu0 0
      %419 = vmatpush1.bf16.msra.mxu0 0
      %420 = vmatprep.subr.bf16.mxu0 0
      %421 = vmatpush1.bf16.msra.mxu0 0
      %422 = vmatprep.subr.bf16.mxu0 0
      %423 = vmatpush1.bf16.msra.mxu0 0
      %424 = vmatprep.subr.bf16.mxu0 0
      %425 = vmatpush1.bf16.msra.mxu0 0
      %426 = vmatprep.subr.bf16.mxu0 0
      %427 = vmatpush1.bf16.msra.mxu0 0
      %428 = vmatprep.subr.bf16.mxu0 0
      %429 = vmatpush1.bf16.msra.mxu0 0
      %430 = vmatprep.subr.bf16.mxu0 0
      %431 = vmatpush1.bf16.msra.mxu0 0
      %432 = vmatprep.subr.bf16.mxu0 0
      %433 = vmatpush1.bf16.msra.mxu0 0
      %434 = vmatprep.subr.bf16.mxu0 0
      %435 = vmatpush1.bf16.msra.mxu0 0
      %436 = vmatprep.subr.bf16.mxu0 0
      %437 = vmatpush1.bf16.msra.mxu0 0
      %438 = vmatprep.mubr.bf16.mxu0 0
      %439 = vmatmul.mubr.bf16.gmra.mrb[0].mxu0 %v400
      %v440 = vpop.f32.mrb[0].mxu0
      %v441 = vadd.f32 0.0, %v440
      %v442 = vpop.f32.mrb[0].mxu0
      %v443 = vpop.f32.mrb[0].mxu0
      %v444 = vpop.f32.mrb[0].mxu0
      %445 = vdwg.mxu0
      %v446 = vrcp.pop %v395
      %v447 = vmul.f32 %v441, %v446
      %448 = vrot.lane.b32.xlu0 %v334, 112
      %v449 = vpop.permute.xlu0 %448
      %450 = vrot.lane.b32.xlu0 %v334, 80
      %v451 = vpop.permute.xlu0 %450
      %v453 = vsel %vm338, %v449, 0
      %v456 = vsel %vm338, %v451, 0
      %458 = vmatprep.subr.bf16.mxu0 0
      %459 = vmatpush1.bf16.xpose.msra.mxu0 %v456
      %460 = vmatprep.subr.bf16.mxu0 0
      %461 = vmatpush1.bf16.xpose.msra.mxu0 0
      %462 = vmatprep.subr.bf16.mxu0 0
      %463 = vmatpush1.bf16.xpose.msra.mxu0 0
      %464 = vmatprep.subr.bf16.mxu0 0
      %465 = vmatpush1.bf16.xpose.msra.mxu0 0
      %466 = vmatprep.subr.bf16.mxu0 0
      %467 = vmatpush1.bf16.xpose.msra.mxu0 0
      %468 = vmatprep.subr.bf16.mxu0 0
      %469 = vmatpush1.bf16.xpose.msra.mxu0 0
      %470 = vmatprep.subr.bf16.mxu0 0
      %471 = vmatpush1.bf16.xpose.msra.mxu0 0
      %472 = vmatprep.subr.bf16.mxu0 0
      %473 = vmatpush1.bf16.xpose.msra.mxu0 0
      %474 = vmatprep.subr.bf16.mxu0 0
      %475 = vmatpush1.bf16.xpose.msra.mxu0 0
      %476 = vmatprep.subr.bf16.mxu0 0
      %477 = vmatpush1.bf16.xpose.msra.mxu0 0
      %478 = vmatprep.subr.bf16.mxu0 0
      %479 = vmatpush1.bf16.xpose.msra.mxu0 0
      %480 = vmatprep.subr.bf16.mxu0 0
      %481 = vmatpush1.bf16.xpose.msra.mxu0 0
      %482 = vmatprep.subr.bf16.mxu0 0
      %483 = vmatpush1.bf16.xpose.msra.mxu0 0
      %484 = vmatprep.subr.bf16.mxu0 0
      %485 = vmatpush1.bf16.xpose.msra.mxu0 0
      %486 = vmatprep.subr.bf16.mxu0 0
      %487 = vmatpush1.bf16.xpose.msra.mxu0 0
      %488 = vmatprep.subr.bf16.mxu0 0
      %489 = vmatpush1.bf16.xpose.msra.mxu0 0
      %490 = vmatprep.mubr.bf16.mxu0 0
      %491 = vmatmul.mubr.bf16.gmra.mrb[0].mxu0 %v453
      %v492 = vpop.f32.mrb[0].mxu0
      %v493 = vadd.f32 0.0, %v492
      %v494 = vpop.f32.mrb[0].mxu0
      %v495 = vpop.f32.mrb[0].mxu0
      %v496 = vpop.f32.mrb[0].mxu0
      %497 = vdwg.mxu0
      %v498 = vmul.f32 %v493, 0.25
      %v499 = vsel %vm386, %v498, -inf
      %500 = vmax.xlane.f32.xlu0 %v499
      %v501 = vpop.xlane.xlu0 %500
      %v502 = vsub.f32 %v498, %v501
      %v503 = vmul.f32 %v502, 1.442695
      %v504 = vpow.pop %v503
      %v505 = vsel %vm386, %v504, 0.0
      %506 = vadd.xlane.f32.xlu0 %v505
      %v507 = vpop.xlane.xlu0 %506
      %v508 = vpack.c.bf16 %v504, %v504
      %509 = vrot.lane.b32.xlu0 %v334, 48
      %v510 = vpop.permute.xlu0 %509
      %v512 = vsel %vm386, %v508, 0
      %v515 = vsel %vm402, %v510, 0
      %517 = vmatprep.subr.bf16.mxu0 0
      %518 = vmatpush1.bf16.msra.mxu0 %v515
      %519 = vmatprep.subr.bf16.mxu0 0
      %520 = vmatpush1.bf16.msra.mxu0 0
      %521 = vmatprep.subr.bf16.mxu0 0
      %522 = vmatpush1.bf16.msra.mxu0 0
      %523 = vmatprep.subr.bf16.mxu0 0
      %524 = vmatpush1.bf16.msra.mxu0 0
      %525 = vmatprep.subr.bf16.mxu0 0
      %526 = vmatpush1.bf16.msra.mxu0 0
      %527 = vmatprep.subr.bf16.mxu0 0
      %528 = vmatpush1.bf16.msra.mxu0 0
      %529 = vmatprep.subr.bf16.mxu0 0
      %530 = vmatpush1.bf16.msra.mxu0 0
      %531 = vmatprep.subr.bf16.mxu0 0
      %532 = vmatpush1.bf16.msra.mxu0 0
      %533 = vmatprep.subr.bf16.mxu0 0
      %534 = vmatpush1.bf16.msra.mxu0 0
      %535 = vmatprep.subr.bf16.mxu0 0
      %536 = vmatpush1.bf16.msra.mxu0 0
      %537 = vmatprep.subr.bf16.mxu0 0
      %538 = vmatpush1.bf16.msra.mxu0 0
      %539 = vmatprep.subr.bf16.mxu0 0
      %540 = vmatpush1.bf16.msra.mxu0 0
      %541 = vmatprep.subr.bf16.mxu0 0
      %542 = vmatpush1.bf16.msra.mxu0 0
      %543 = vmatprep.subr.bf16.mxu0 0
      %544 = vmatpush1.bf16.msra.mxu0 0
      %545 = vmatprep.subr.bf16.mxu0 0
      %546 = vmatpush1.bf16.msra.mxu0 0
      %547 = vmatprep.subr.bf16.mxu0 0
      %548 = vmatpush1.bf16.msra.mxu0 0
      %549 = vmatprep.mubr.bf16.mxu0 0
      %550 = vmatmul.mubr.bf16.gmra.mrb[0].mxu0 %v512
      %v551 = vpop.f32.mrb[0].mxu0
      %v552 = vadd.f32 0.0, %v551
      %v553 = vpop.f32.mrb[0].mxu0
      %v554 = vpop.f32.mrb[0].mxu0
      %v555 = vpop.f32.mrb[0].mxu0
      %556 = vdwg.mxu0
      %v557 = vrcp.pop %v507
      %v558 = vmul.f32 %v552, %v557
      %560 = vrot.lane.b32.xlu0 %v558, 16
      %v561 = vpop.permute.xlu0 %560
      %v563 = vsel %vm338, %v447, %v561
      %v564 = vpack.c.bf16 %v563, %v563
      %v565 = vld [vmem:[%s4] sm:$0xf]
      %v566 = vld [vmem:[%s4 + $0x4] sm:$0xf]
      %v567 = vld [vmem:[%s4 + $0x8] sm:$0xf]
      %v568 = vld [vmem:[%s4 + $0xc] sm:$0xf]
      %v569 = vld [vmem:[%s5] sm:$0x1]
      %v571 = vlaneseq
      %v572 = vshrl.u32 %v571, 7
      %v573 = vsub.s32 0, %v572
      %v574 = vrot.slane %v569, %v573
      %v580 = vunpack.c.l.b16 %v565
      %v581 = vunpack.c.l.b16 %v566
      %v582 = vunpack.c.l.b16 %v567
      %v583 = vunpack.c.l.b16 %v568
      %v584 = vpack.c.b16 %v581, %v580
      %v585 = vpack.c.b16 %v583, %v582
      %v589 = vsel %vm250, %v564, 0
      %591 = vmatprep.subr.bf16.mxu0 0
      %592 = vmatpush1.bf16.msra.mxu0 %v584
      %593 = vmatprep.subr.bf16.mxu0 0
      %594 = vmatpush1.bf16.msra.mxu0 %v585
      %595 = vmatprep.subr.bf16.mxu0 0
      %596 = vmatpush1.bf16.msra.mxu0 0
      %597 = vmatprep.subr.bf16.mxu0 0
      %598 = vmatpush1.bf16.msra.mxu0 0
      %599 = vmatprep.subr.bf16.mxu0 0
      %600 = vmatpush1.bf16.msra.mxu0 0
      %601 = vmatprep.subr.bf16.mxu0 0
      %602 = vmatpush1.bf16.msra.mxu0 0
      %603 = vmatprep.subr.bf16.mxu0 0
      %604 = vmatpush1.bf16.msra.mxu0 0
      %605 = vmatprep.subr.bf16.mxu0 0
      %606 = vmatpush1.bf16.msra.mxu0 0
      %607 = vmatprep.subr.bf16.mxu0 0
      %608 = vmatpush1.bf16.msra.mxu0 0
      %609 = vmatprep.subr.bf16.mxu0 0
      %610 = vmatpush1.bf16.msra.mxu0 0
      %611 = vmatprep.subr.bf16.mxu0 0
      %612 = vmatpush1.bf16.msra.mxu0 0
      %613 = vmatprep.subr.bf16.mxu0 0
      %614 = vmatpush1.bf16.msra.mxu0 0
      %615 = vmatprep.subr.bf16.mxu0 0
      %616 = vmatpush1.bf16.msra.mxu0 0
      %617 = vmatprep.subr.bf16.mxu0 0
      %618 = vmatpush1.bf16.msra.mxu0 0
      %619 = vmatprep.subr.bf16.mxu0 0
      %620 = vmatpush1.bf16.msra.mxu0 0
      %621 = vmatprep.subr.bf16.mxu0 0
      %622 = vmatpush1.bf16.msra.mxu0 0
      %623 = vmatprep.mubr.bf16.mxu0 0
      %624 = vmatmul.mubr.bf16.gmra.mrb[0].mxu0 %v589
      %v625 = vpop.f32.mrb[0].mxu0
      %v626 = vadd.f32 %v574, %v625
      %v627 = vpop.f32.mrb[0].mxu0
      %v628 = vpop.f32.mrb[0].mxu0
      %v629 = vpop.f32.mrb[0].mxu0
      %630 = vdwg.mxu0
      %631 = vst.msk [vmem:[%s246] sm:$0xff] %vm250, %v626
      %p632 = scmp.lt.s32.totalorder %s17, 1
      %s633 = scalar_select %p632, %s17, 1
      %s634 = smul.addr %s633, 8
      %s635 = scalar_lea.vmem %s6, %s634
      // Predicated region
      $region45: #{colt5_encoder_forward.6} parent=43 // pred_check
        %p636 = pneg %p166
      $region46: #{colt5_encoder_forward.6} parent=43 // pred_check_branch
        %638 = sbr.rel (%p636) target = $region48
      $region47: #{colt5_encoder_forward.6} parent=43 // pred_region
        _
      $region48: #{colt5_encoder_forward.6} parent=43 // pred_fallthru
        _
    $region44: #{colt5_encoder_forward.6} parent=5 // pred_fallthru
      _
    %p639 = scmp.le.s32.totalorder 2, %s12
    // Predicated region
    $region49: #{colt5_encoder_forward.6} parent=5 // pred_check
      %p640 = pneg %p639
    $region50: #{colt5_encoder_forward.6} parent=5 // pred_check_branch
      %642 = sbr.rel (%p640) target = $region52
    $region51: #{colt5_encoder_forward.6} parent=5 // pred_region
      %s643 = ssub.s32 %s12, 2
      // Predicated region
      $region53: #{colt5_encoder_forward.6} parent=51 // pred_check
        %p644 = pneg %p172
      $region54: #{colt5_encoder_forward.6} parent=51 // pred_check_branch
        %646 = sbr.rel (%p644) target = $region56
      $region55: #{colt5_encoder_forward.6} parent=51 // pred_region
        %p647 = scmp.lt.s32.totalorder %s18, 1
        %s648 = scalar_select %p647, %s18, 1
        %s649 = smul.addr %s648, 8
        %s650 = scalar_lea.vmem %s6, %s649
      $region56: #{colt5_encoder_forward.6} parent=51 // pred_fallthru
        _
    $region52: #{colt5_encoder_forward.6} parent=5 // pred_fallthru
      _
  $region6: #{colt5_encoder_forward.6} parent=0 // loop_footer
    %s16 = sadd.s32 1, %s12
  $region7: #{colt5_encoder_forward.6} parent=0 // loop_footer_branch
    %11 = sbr.rel target = $region3
  $region8: #{colt5_encoder_forward.6} parent=0 // loop_exit
    _

// kernel: colt5_encoder_forward.7
$region0: #{colt5_encoder_forward.7}
  #allocation0 [shape = 'u32[]', space=smem, size = 0x4, offset = 0x4, fixed_abs, tag = 'smem constant byte address 0x4 - core index']
  #allocation1 [shape = 'u32[144,128]{1,0:T(1,128)}', space=vmem, size = 0x12000, scoped, tag = 'internal scratch']
  %s0 = inlined_call_operand.vmem [shape: f32[2,8,32], index: 0, kind: input, shape index: {}]
  %s1 = inlined_call_operand.vmem [shape: f32[2,4,8], index: 1, kind: input, shape index: {}]
  %s2 = inlined_call_operand.vmem [shape: f32[2,8,4], index: 2, kind: input, shape index: {}]
  %s3 = inlined_call_operand.vmem [shape: f32[2,4,8], index: 3, kind: input, shape index: {}]
  %s4 = inlined_call_operand.vmem [shape: f32[2,4,1], index: 4, kind: input, shape index: {}]
  %s5 = inlined_call_operand.vmem [shape: f32[2,4,1], index: 5, kind: input, shape index: {}]
  %s6 = inlined_call_operand.vmem [shape: f32[1,32], index: 6, kind: input, shape index: {}]
  %s7 = inlined_call_operand.vmem [shape: bf16[32,32], index: 7, kind: input, shape index: {}]
  %s8 = inlined_call_operand.vmem [shape: f32[1,32], index: 8, kind: input, shape index: {}]
  %s9 = inlined_call_operand.vmem [shape: bf16[32,64], index: 9, kind: input, shape index: {}]
  %s10 = inlined_call_operand.vmem [shape: f32[1,64], index: 10, kind: input, shape index: {}]
  %s11 = inlined_call_operand.vmem [shape: bf16[32,32], index: 11, kind: input, shape index: {}]
  %s12 = inlined_call_operand.vmem [shape: f32[1,32], index: 12, kind: input, shape index: {}]
  %s13 = inlined_call_operand.vmem [shape: f32[2,16], index: 13, kind: input, shape index: {}]
  %s14 = inlined_call_operand.vmem [shape: f32[2,16], index: 14, kind: input, shape index: {}]
  %s15 = inlined_call_operand.vmem [shape: f32[2,8,32], index: 15, kind: output, shape index: {}]
  %s16 = sld [smem:[#allocation0]]
  $region93: #{colt5_encoder_forward.7} parent=0
    _
  %s18 = ssub.s32 1, %s16
  %s19 = scalar_select 0, %s18, %s16
  loop: start=0, step=1, limit=4
  $region2: #{colt5_encoder_forward.7} parent=0 // loop_pre_header
    _
  $region3: #{colt5_encoder_forward.7} parent=0 // loop_header
    %s21 = sphi 0, %s25
    %p22 = scmp.ge.s32.totalorder %s21, 4
    %s31 = sphi 0, %s33
    %s34 = sphi 0, %s31
    %s35 = sphi 0, %s34
    %s51 = sphi 0, %s35
    %s57 = sphi 0, %s59
    %s60 = sphi 0, %s57
    %s61 = sphi 0, %s60
    %s77 = sphi 0, %s61
    %s83 = sphi 0, %s85
    %s86 = sphi 0, %s83
    %s87 = sphi 0, %s86
    %s103 = sphi 0, %s87
    %s109 = sphi 0, %s111
    %s112 = sphi 0, %s109
    %s113 = sphi 0, %s112
    %s129 = sphi 0, %s113
    %s135 = sphi 0, %s137
    %s138 = sphi 0, %s135
    %s139 = sphi 0, %s138
    %s155 = sphi 0, %s139
    %s161 = sphi 0, %s163
    %s164 = sphi 0, %s161
    %s165 = sphi 0, %s164
    %s181 = sphi 0, %s165
    %s185 = sphi 0, %s185
    %s187 = sphi 0, %s185
    %s188 = sphi 0, %s187
    %s202 = sphi 0, %s188
    %s206 = sphi 0, %s206
    %s208 = sphi 0, %s206
    %s209 = sphi 0, %s208
    %s223 = sphi 0, %s209
    %s227 = sphi 0, %s227
    %s229 = sphi 0, %s227
    %s230 = sphi 0, %s229
    %s244 = sphi 0, %s230
    %s248 = sphi 0, %s248
    %s250 = sphi 0, %s248
    %s251 = sphi 0, %s250
    %s265 = sphi 0, %s251
    %s269 = sphi 0, %s269
    %s271 = sphi 0, %s269
    %s272 = sphi 0, %s271
    %s286 = sphi 0, %s272
    %s290 = sphi 0, %s290
    %s292 = sphi 0, %s290
    %s293 = sphi 0, %s292
    %s307 = sphi 0, %s293
    %s311 = sphi 0, %s311
    %s313 = sphi 0, %s311
    %s314 = sphi 0, %s313
    %s328 = sphi 0, %s314
    %s332 = sphi 0, %s332
    %s334 = sphi 0, %s332
    %s335 = sphi 0, %s334
    %s349 = sphi 0, %s335
    %s353 = sphi 0, %s353
    %s355 = sphi 0, %s353
    %s356 = sphi 0, %s355
    %s370 = sphi 0, %s356
    %s376 = sphi 0, %s378
    %s379 = sphi 0, %s376
    %s380 = sphi 0, %s379
    %s396 = sphi 0, %s380
  $region4: #{colt5_encoder_forward.7} parent=0 // loop_header_branch
    %24 = sbr.rel (%p22) target = $region8
  $region5: #{colt5_encoder_forward.7} parent=0 // loop_body
    %s26 = ssub.s32 %s21, 1
    %s27 = ssub.s32 %s21, 2
    %s28 = sadd.s32 %s21, 1
    %s29 = ssub.s32 %s21, %s28
    %p30 = scmp.eq.s32.totalorder %s29, 0
    %s32 = sadd.s32 %s31, 1
    %s33 = scalar_select %p30, %s31, %s32
    %p36 = pneg %p30
    %p37 = scmp.eq.s32.totalorder %s21, 1
    %p38 = por %p36, %p37
    %p39 = scmp.ne.s32.totalorder %s31, %s34
    %p40 = scmp.eq.s32.totalorder %s21, 0
    %p41 = por %p39, %p40
    %p42 = scmp.ne.s32.totalorder %s31, %s34
    %p43 = scmp.eq.s32.totalorder %s26, 1
    %p44 = por %p42, %p43
    %p45 = scmp.ne.s32.totalorder %s34, %s35
    %p46 = scmp.eq.s32.totalorder %s26, 0
    %p47 = por %p45, %p46
    %p48 = scmp.ne.s32.totalorder %s34, %s35
    %p49 = scmp.eq.s32.totalorder %s27, 1
    %p50 = por %p48, %p49
    %p52 = scmp.ne.s32.totalorder %s35, %s51
    %p53 = scmp.eq.s32.totalorder %s27, 0
    %p54 = por %p52, %p53
    %s55 = ssub.s32 %s21, %s28
    %p56 = scmp.eq.s32.totalorder %s55, 0
    %s58 = sadd.s32 %s57, 1
    %s59 = scalar_select %p56, %s57, %s58
    %p62 = pneg %p56
    %p63 = scmp.eq.s32.totalorder %s21, 1
    %p64 = por %p62, %p63
    %p65 = scmp.ne.s32.totalorder %s57, %s60
    %p66 = scmp.eq.s32.totalorder %s21, 0
    %p67 = por %p65, %p66
    %p68 = scmp.ne.s32.totalorder %s57, %s60
    %p69 = scmp.eq.s32.totalorder %s26, 1
    %p70 = por %p68, %p69
    %p71 = scmp.ne.s32.totalorder %s60, %s61
    %p72 = scmp.eq.s32.totalorder %s26, 0
    %p73 = por %p71, %p72
    %p74 = scmp.ne.s32.totalorder %s60, %s61
    %p75 = scmp.eq.s32.totalorder %s27, 1
    %p76 = por %p74, %p75
    %p78 = scmp.ne.s32.totalorder %s61, %s77
    %p79 = scmp.eq.s32.totalorder %s27, 0
    %p80 = por %p78, %p79
    %s81 = ssub.s32 %s21, %s28
    %p82 = scmp.eq.s32.totalorder %s81, 0
    %s84 = sadd.s32 %s83, 1
    %s85 = scalar_select %p82, %s83, %s84
    %p88 = pneg %p82
    %p89 = scmp.eq.s32.totalorder %s21, 1
    %p90 = por %p88, %p89
    %p91 = scmp.ne.s32.totalorder %s83, %s86
    %p92 = scmp.eq.s32.totalorder %s21, 0
    %p93 = por %p91, %p92
    %p94 = scmp.ne.s32.totalorder %s83, %s86
    %p95 = scmp.eq.s32.totalorder %s26, 1
    %p96 = por %p94, %p95
    %p97 = scmp.ne.s32.totalorder %s86, %s87
    %p98 = scmp.eq.s32.totalorder %s26, 0
    %p99 = por %p97, %p98
    %p100 = scmp.ne.s32.totalorder %s86, %s87
    %p101 = scmp.eq.s32.totalorder %s27, 1
    %p102 = por %p100, %p101
    %p104 = scmp.ne.s32.totalorder %s87, %s103
    %p105 = scmp.eq.s32.totalorder %s27, 0
    %p106 = por %p104, %p105
    %s107 = ssub.s32 %s21, %s28
    %p108 = scmp.eq.s32.totalorder %s107, 0
    %s110 = sadd.s32 %s109, 1
    %s111 = scalar_select %p108, %s109, %s110
    %p114 = pneg %p108
    %p115 = scmp.eq.s32.totalorder %s21, 1
    %p116 = por %p114, %p115
    %p117 = scmp.ne.s32.totalorder %s109, %s112
    %p118 = scmp.eq.s32.totalorder %s21, 0
    %p119 = por %p117, %p118
    %p120 = scmp.ne.s32.totalorder %s109, %s112
    %p121 = scmp.eq.s32.totalorder %s26, 1
    %p122 = por %p120, %p121
    %p123 = scmp.ne.s32.totalorder %s112, %s113
    %p124 = scmp.eq.s32.totalorder %s26, 0
    %p125 = por %p123, %p124
    %p126 = scmp.ne.s32.totalorder %s112, %s113
    %p127 = scmp.eq.s32.totalorder %s27, 1
    %p128 = por %p126, %p127
    %p130 = scmp.ne.s32.totalorder %s113, %s129
    %p131 = scmp.eq.s32.totalorder %s27, 0
    %p132 = por %p130, %p131
    %s133 = ssub.s32 %s21, %s28
    %p134 = scmp.eq.s32.totalorder %s133, 0
    %s136 = sadd.s32 %s135, 1
    %s137 = scalar_select %p134, %s135, %s136
    %p140 = pneg %p134
    %p141 = scmp.eq.s32.totalorder %s21, 1
    %p142 = por %p140, %p141
    %p143 = scmp.ne.s32.totalorder %s135, %s138
    %p144 = scmp.eq.s32.totalorder %s21, 0
    %p145 = por %p143, %p144
    %p146 = scmp.ne.s32.totalorder %s135, %s138
    %p147 = scmp.eq.s32.totalorder %s26, 1
    %p148 = por %p146, %p147
    %p149 = scmp.ne.s32.totalorder %s138, %s139
    %p150 = scmp.eq.s32.totalorder %s26, 0
    %p151 = por %p149, %p150
    %p152 = scmp.ne.s32.totalorder %s138, %s139
    %p153 = scmp.eq.s32.totalorder %s27, 1
    %p154 = por %p152, %p153
    %p156 = scmp.ne.s32.totalorder %s139, %s155
    %p157 = scmp.eq.s32.totalorder %s27, 0
    %p158 = por %p156, %p157
    %s159 = ssub.s32 %s21, %s28
    %p160 = scmp.eq.s32.totalorder %s159, 0
    %s162 = sadd.s32 %s161, 1
    %s163 = scalar_select %p160, %s161, %s162
    %p166 = pneg %p160
    %p167 = scmp.eq.s32.totalorder %s21, 1
    %p168 = por %p166, %p167
    %p169 = scmp.ne.s32.totalorder %s161, %s164
    %p170 = scmp.eq.s32.totalorder %s21, 0
    %p171 = por %p169, %p170
    %p172 = scmp.ne.s32.totalorder %s161, %s164
    %p173 = scmp.eq.s32.totalorder %s26, 1
    %p174 = por %p172, %p173
    %p175 = scmp.ne.s32.totalorder %s164, %s165
    %p176 = scmp.eq.s32.totalorder %s26, 0
    %p177 = por %p175, %p176
    %p178 = scmp.ne.s32.totalorder %s164, %s165
    %p179 = scmp.eq.s32.totalorder %s27, 1
    %p180 = por %p178, %p179
    %p182 = scmp.ne.s32.totalorder %s165, %s181
    %p183 = scmp.eq.s32.totalorder %s27, 0
    %p184 = por %p182, %p183
    %s186 = sadd.s32 %s185, 1
    %p189 = scmp.eq.s32.totalorder %s21, 1
    %p190 = scmp.ne.s32.totalorder %s185, %s187
    %p191 = scmp.eq.s32.totalorder %s21, 0
    %p192 = por %p190, %p191
    %p193 = scmp.ne.s32.totalorder %s185, %s187
    %p194 = scmp.eq.s32.totalorder %s26, 1
    %p195 = por %p193, %p194
    %p196 = scmp.ne.s32.totalorder %s187, %s188
    %p197 = scmp.eq.s32.totalorder %s26, 0
    %p198 = por %p196, %p197
    %p199 = scmp.ne.s32.totalorder %s187, %s188
    %p200 = scmp.eq.s32.totalorder %s27, 1
    %p201 = por %p199, %p200
    %p203 = scmp.ne.s32.totalorder %s188, %s202
    %p204 = scmp.eq.s32.totalorder %s27, 0
    %p205 = por %p203, %p204
    %s207 = sadd.s32 %s206, 1
    %p210 = scmp.eq.s32.totalorder %s21, 1
    %p211 = scmp.ne.s32.totalorder %s206, %s208
    %p212 = scmp.eq.s32.totalorder %s21, 0
    %p213 = por %p211, %p212
    %p214 = scmp.ne.s32.totalorder %s206, %s208
    %p215 = scmp.eq.s32.totalorder %s26, 1
    %p216 = por %p214, %p215
    %p217 = scmp.ne.s32.totalorder %s208, %s209
    %p218 = scmp.eq.s32.totalorder %s26, 0
    %p219 = por %p217, %p218
    %p220 = scmp.ne.s32.totalorder %s208, %s209
    %p221 = scmp.eq.s32.totalorder %s27, 1
    %p222 = por %p220, %p221
    %p224 = scmp.ne.s32.totalorder %s209, %s223
    %p225 = scmp.eq.s32.totalorder %s27, 0
    %p226 = por %p224, %p225
    %s228 = sadd.s32 %s227, 1
    %p231 = scmp.eq.s32.totalorder %s21, 1
    %p232 = scmp.ne.s32.totalorder %s227, %s229
    %p233 = scmp.eq.s32.totalorder %s21, 0
    %p234 = por %p232, %p233
    %p235 = scmp.ne.s32.totalorder %s227, %s229
    %p236 = scmp.eq.s32.totalorder %s26, 1
    %p237 = por %p235, %p236
    %p238 = scmp.ne.s32.totalorder %s229, %s230
    %p239 = scmp.eq.s32.totalorder %s26, 0
    %p240 = por %p238, %p239
    %p241 = scmp.ne.s32.totalorder %s229, %s230
    %p242 = scmp.eq.s32.totalorder %s27, 1
    %p243 = por %p241, %p242
    %p245 = scmp.ne.s32.totalorder %s230, %s244
    %p246 = scmp.eq.s32.totalorder %s27, 0
    %p247 = por %p245, %p246
    %s249 = sadd.s32 %s248, 1
    %p252 = scmp.eq.s32.totalorder %s21, 1
    %p253 = scmp.ne.s32.totalorder %s248, %s250
    %p254 = scmp.eq.s32.totalorder %s21, 0
    %p255 = por %p253, %p254
    %p256 = scmp.ne.s32.totalorder %s248, %s250
    %p257 = scmp.eq.s32.totalorder %s26, 1
    %p258 = por %p256, %p257
    %p259 = scmp.ne.s32.totalorder %s250, %s251
    %p260 = scmp.eq.s32.totalorder %s26, 0
    %p261 = por %p259, %p260
    %p262 = scmp.ne.s32.totalorder %s250, %s251
    %p263 = scmp.eq.s32.totalorder %s27, 1
    %p264 = por %p262, %p263
    %p266 = scmp.ne.s32.totalorder %s251, %s265
    %p267 = scmp.eq.s32.totalorder %s27, 0
    %p268 = por %p266, %p267
    %s270 = sadd.s32 %s269, 1
    %p273 = scmp.eq.s32.totalorder %s21, 1
    %p274 = scmp.ne.s32.totalorder %s269, %s271
    %p275 = scmp.eq.s32.totalorder %s21, 0
    %p276 = por %p274, %p275
    %p277 = scmp.ne.s32.totalorder %s269, %s271
    %p278 = scmp.eq.s32.totalorder %s26, 1
    %p279 = por %p277, %p278
    %p280 = scmp.ne.s32.totalorder %s271, %s272
    %p281 = scmp.eq.s32.totalorder %s26, 0
    %p282 = por %p280, %p281
    %p283 = scmp.ne.s32.totalorder %s271, %s272
    %p284 = scmp.eq.s32.totalorder %s27, 1
    %p285 = por %p283, %p284
    %p287 = scmp.ne.s32.totalorder %s272, %s286
    %p288 = scmp.eq.s32.totalorder %s27, 0
    %p289 = por %p287, %p288
    %s291 = sadd.s32 %s290, 1
    %p294 = scmp.eq.s32.totalorder %s21, 1
    %p295 = scmp.ne.s32.totalorder %s290, %s292
    %p296 = scmp.eq.s32.totalorder %s21, 0
    %p297 = por %p295, %p296
    %p298 = scmp.ne.s32.totalorder %s290, %s292
    %p299 = scmp.eq.s32.totalorder %s26, 1
    %p300 = por %p298, %p299
    %p301 = scmp.ne.s32.totalorder %s292, %s293
    %p302 = scmp.eq.s32.totalorder %s26, 0
    %p303 = por %p301, %p302
    %p304 = scmp.ne.s32.totalorder %s292, %s293
    %p305 = scmp.eq.s32.totalorder %s27, 1
    %p306 = por %p304, %p305
    %p308 = scmp.ne.s32.totalorder %s293, %s307
    %p309 = scmp.eq.s32.totalorder %s27, 0
    %p310 = por %p308, %p309
    %s312 = sadd.s32 %s311, 1
    %p315 = scmp.eq.s32.totalorder %s21, 1
    %p316 = scmp.ne.s32.totalorder %s311, %s313
    %p317 = scmp.eq.s32.totalorder %s21, 0
    %p318 = por %p316, %p317
    %p319 = scmp.ne.s32.totalorder %s311, %s313
    %p320 = scmp.eq.s32.totalorder %s26, 1
    %p321 = por %p319, %p320
    %p322 = scmp.ne.s32.totalorder %s313, %s314
    %p323 = scmp.eq.s32.totalorder %s26, 0
    %p324 = por %p322, %p323
    %p325 = scmp.ne.s32.totalorder %s313, %s314
    %p326 = scmp.eq.s32.totalorder %s27, 1
    %p327 = por %p325, %p326
    %p329 = scmp.ne.s32.totalorder %s314, %s328
    %p330 = scmp.eq.s32.totalorder %s27, 0
    %p331 = por %p329, %p330
    %s333 = sadd.s32 %s332, 1
    %p336 = scmp.eq.s32.totalorder %s21, 1
    %p337 = scmp.ne.s32.totalorder %s332, %s334
    %p338 = scmp.eq.s32.totalorder %s21, 0
    %p339 = por %p337, %p338
    %p340 = scmp.ne.s32.totalorder %s332, %s334
    %p341 = scmp.eq.s32.totalorder %s26, 1
    %p342 = por %p340, %p341
    %p343 = scmp.ne.s32.totalorder %s334, %s335
    %p344 = scmp.eq.s32.totalorder %s26, 0
    %p345 = por %p343, %p344
    %p346 = scmp.ne.s32.totalorder %s334, %s335
    %p347 = scmp.eq.s32.totalorder %s27, 1
    %p348 = por %p346, %p347
    %p350 = scmp.ne.s32.totalorder %s335, %s349
    %p351 = scmp.eq.s32.totalorder %s27, 0
    %p352 = por %p350, %p351
    %s354 = sadd.s32 %s353, 1
    %p357 = scmp.eq.s32.totalorder %s21, 1
    %p358 = scmp.ne.s32.totalorder %s353, %s355
    %p359 = scmp.eq.s32.totalorder %s21, 0
    %p360 = por %p358, %p359
    %p361 = scmp.ne.s32.totalorder %s353, %s355
    %p362 = scmp.eq.s32.totalorder %s26, 1
    %p363 = por %p361, %p362
    %p364 = scmp.ne.s32.totalorder %s355, %s356
    %p365 = scmp.eq.s32.totalorder %s26, 0
    %p366 = por %p364, %p365
    %p367 = scmp.ne.s32.totalorder %s355, %s356
    %p368 = scmp.eq.s32.totalorder %s27, 1
    %p369 = por %p367, %p368
    %p371 = scmp.ne.s32.totalorder %s356, %s370
    %p372 = scmp.eq.s32.totalorder %s27, 0
    %p373 = por %p371, %p372
    %s374 = ssub.s32 %s21, %s28
    %p375 = scmp.eq.s32.totalorder %s374, 0
    %s377 = sadd.s32 %s376, 1
    %s378 = scalar_select %p375, %s376, %s377
    %p381 = pneg %p375
    %p382 = scmp.eq.s32.totalorder %s21, 1
    %p383 = por %p381, %p382
    %p384 = scmp.ne.s32.totalorder %s376, %s379
    %p385 = scmp.eq.s32.totalorder %s21, 0
    %p386 = por %p384, %p385
    %p387 = scmp.ne.s32.totalorder %s376, %s379
    %p388 = scmp.eq.s32.totalorder %s26, 1
    %p389 = por %p387, %p388
    %p390 = scmp.ne.s32.totalorder %s379, %s380
    %p391 = scmp.eq.s32.totalorder %s26, 0
    %p392 = por %p390, %p391
    %p393 = scmp.ne.s32.totalorder %s379, %s380
    %p394 = scmp.eq.s32.totalorder %s27, 1
    %p395 = por %p393, %p394
    %p397 = scmp.ne.s32.totalorder %s380, %s396
    %p398 = scmp.eq.s32.totalorder %s27, 0
    %p399 = por %p397, %p398
    %p400 = scmp.le.s32.totalorder 1, %s21
    %p401 = scmp.lt.s32.totalorder %s21, 3
    %p402 = pnand %p400, %p401
    %p403 = pneg %p402
    // Predicated region
    $region9: #{colt5_encoder_forward.7} parent=5 // pred_check
      _
    $region10: #{colt5_encoder_forward.7} parent=5 // pred_check_branch
      %405 = sbr.rel (%p402) target = $region12
    $region11: #{colt5_encoder_forward.7} parent=5 // pred_region
      %s406 = ssub.s32 %s21, 1
      // Predicated region
      $region13: #{colt5_encoder_forward.7} parent=11 // pred_check
        %p407 = pneg %p198
      $region14: #{colt5_encoder_forward.7} parent=11 // pred_check_branch
        %409 = sbr.rel (%p407) target = $region16
      $region15: #{colt5_encoder_forward.7} parent=11 // pred_region
        _
      $region16: #{colt5_encoder_forward.7} parent=11 // pred_fallthru
        _
      // Predicated region
      $region17: #{colt5_encoder_forward.7} parent=11 // pred_check
        %p410 = pneg %p219
      $region18: #{colt5_encoder_forward.7} parent=11 // pred_check_branch
        %412 = sbr.rel (%p410) target = $region20
      $region19: #{colt5_encoder_forward.7} parent=11 // pred_region
        _
      $region20: #{colt5_encoder_forward.7} parent=11 // pred_fallthru
        _
      // Predicated region
      $region21: #{colt5_encoder_forward.7} parent=11 // pred_check
        %p413 = pneg %p240
      $region22: #{colt5_encoder_forward.7} parent=11 // pred_check_branch
        %415 = sbr.rel (%p413) target = $region24
      $region23: #{colt5_encoder_forward.7} parent=11 // pred_region
        _
      $region24: #{colt5_encoder_forward.7} parent=11 // pred_fallthru
        _
      // Predicated region
      $region25: #{colt5_encoder_forward.7} parent=11 // pred_check
        %p416 = pneg %p261
      $region26: #{colt5_encoder_forward.7} parent=11 // pred_check_branch
        %418 = sbr.rel (%p416) target = $region28
      $region27: #{colt5_encoder_forward.7} parent=11 // pred_region
        _
      $region28: #{colt5_encoder_forward.7} parent=11 // pred_fallthru
        _
      // Predicated region
      $region29: #{colt5_encoder_forward.7} parent=11 // pred_check
        %p419 = pneg %p282
      $region30: #{colt5_encoder_forward.7} parent=11 // pred_check_branch
        %421 = sbr.rel (%p419) target = $region32
      $region31: #{colt5_encoder_forward.7} parent=11 // pred_region
        _
      $region32: #{colt5_encoder_forward.7} parent=11 // pred_fallthru
        _
      // Predicated region
      $region33: #{colt5_encoder_forward.7} parent=11 // pred_check
        %p422 = pneg %p303
      $region34: #{colt5_encoder_forward.7} parent=11 // pred_check_branch
        %424 = sbr.rel (%p422) target = $region36
      $region35: #{colt5_encoder_forward.7} parent=11 // pred_region
        _
      $region36: #{colt5_encoder_forward.7} parent=11 // pred_fallthru
        _
      // Predicated region
      $region37: #{colt5_encoder_forward.7} parent=11 // pred_check
        %p425 = pneg %p324
      $region38: #{colt5_encoder_forward.7} parent=11 // pred_check_branch
        %427 = sbr.rel (%p425) target = $region40
      $region39: #{colt5_encoder_forward.7} parent=11 // pred_region
        _
      $region40: #{colt5_encoder_forward.7} parent=11 // pred_fallthru
        _
      // Predicated region
      $region41: #{colt5_encoder_forward.7} parent=11 // pred_check
        %p428 = pneg %p345
      $region42: #{colt5_encoder_forward.7} parent=11 // pred_check_branch
        %430 = sbr.rel (%p428) target = $region44
      $region43: #{colt5_encoder_forward.7} parent=11 // pred_region
        _
      $region44: #{colt5_encoder_forward.7} parent=11 // pred_fallthru
        _
      // Predicated region
      $region45: #{colt5_encoder_forward.7} parent=11 // pred_check
        %p431 = pneg %p366
      $region46: #{colt5_encoder_forward.7} parent=11 // pred_check_branch
        %433 = sbr.rel (%p431) target = $region48
      $region47: #{colt5_encoder_forward.7} parent=11 // pred_region
        _
      $region48: #{colt5_encoder_forward.7} parent=11 // pred_fallthru
        _
    $region12: #{colt5_encoder_forward.7} parent=5 // pred_fallthru
      _
    %p434 = scmp.lt.s32.totalorder %s21, 2
    // Predicated region
    $region49: #{colt5_encoder_forward.7} parent=5 // pred_check
      %p435 = pneg %p434
    $region50: #{colt5_encoder_forward.7} parent=5 // pred_check_branch
      %437 = sbr.rel (%p435) target = $region52
    $region51: #{colt5_encoder_forward.7} parent=5 // pred_region
      // Predicated region
      $region53: #{colt5_encoder_forward.7} parent=51 // pred_check
        %p438 = pneg %p41
      $region54: #{colt5_encoder_forward.7} parent=51 // pred_check_branch
        %440 = sbr.rel (%p438) target = $region56
      $region55: #{colt5_encoder_forward.7} parent=51 // pred_region
        %p441 = scmp.lt.s32.totalorder %s21, 1
        %s442 = scalar_select %p441, %s21, 1
        %s443 = smul.addr %s442, 8
        %s444 = scalar_lea.vmem %s0, %s443
      $region56: #{colt5_encoder_forward.7} parent=51 // pred_fallthru
        _
      // Predicated region
      $region57: #{colt5_encoder_forward.7} parent=51 // pred_check
        %p445 = pneg %p67
      $region58: #{colt5_encoder_forward.7} parent=51 // pred_check_branch
        %447 = sbr.rel (%p445) target = $region60
      $region59: #{colt5_encoder_forward.7} parent=51 // pred_region
        %p448 = scmp.lt.s32.totalorder %s21, 1
        %s449 = scalar_select %p448, %s21, 1
        %s450 = smul.addr %s449, 4
        %s451 = scalar_lea.vmem %s1, %s450
      $region60: #{colt5_encoder_forward.7} parent=51 // pred_fallthru
        _
      // Predicated region
      $region61: #{colt5_encoder_forward.7} parent=51 // pred_check
        %p452 = pneg %p93
      $region62: #{colt5_encoder_forward.7} parent=51 // pred_check_branch
        %454 = sbr.rel (%p452) target = $region64
      $region63: #{colt5_encoder_forward.7} parent=51 // pred_region
        %p455 = scmp.lt.s32.totalorder %s21, 1
        %s456 = scalar_select %p455, %s21, 1
        %s457 = smul.addr %s456, 8
        %s458 = scalar_lea.vmem %s2, %s457
      $region64: #{colt5_encoder_forward.7} parent=51 // pred_fallthru
        _
      // Predicated region
      $region65: #{colt5_encoder_forward.7} parent=51 // pred_check
        %p459 = pneg %p119
      $region66: #{colt5_encoder_forward.7} parent=51 // pred_check_branch
        %461 = sbr.rel (%p459) target = $region68
      $region67: #{colt5_encoder_forward.7} parent=51 // pred_region
        %p462 = scmp.lt.s32.totalorder %s21, 1
        %s463 = scalar_select %p462, %s21, 1
        %s464 = smul.addr %s463, 4
        %s465 = scalar_lea.vmem %s3, %s464
      $region68: #{colt5_encoder_forward.7} parent=51 // pred_fallthru
        _
      // Predicated region
      $region69: #{colt5_encoder_forward.7} parent=51 // pred_check
        %p466 = pneg %p145
      $region70: #{colt5_encoder_forward.7} parent=51 // pred_check_branch
        %468 = sbr.rel (%p466) target = $region72
      $region71: #{colt5_encoder_forward.7} parent=51 // pred_region
        %p469 = scmp.lt.s32.totalorder %s21, 1
        %s470 = scalar_select %p469, %s21, 1
        %s471 = smul.addr %s470, 4
        %s472 = scalar_lea.vmem %s4, %s471
      $region72: #{colt5_encoder_forward.7} parent=51 // pred_fallthru
        _
      // Predicated region
      $region73: #{colt5_encoder_forward.7} parent=51 // pred_check
        %p473 = pneg %p171
      $region74: #{colt5_encoder_forward.7} parent=51 // pred_check_branch
        %475 = sbr.rel (%p473) target = $region76
      $region75: #{colt5_encoder_forward.7} parent=51 // pred_region
        %p476 = scmp.lt.s32.totalorder %s21, 1
        %s477 = scalar_select %p476, %s21, 1
        %s478 = smul.addr %s477, 4
        %s479 = scalar_lea.vmem %s5, %s478
      $region76: #{colt5_encoder_forward.7} parent=51 // pred_fallthru
        _
    $region52: #{colt5_encoder_forward.7} parent=5 // pred_fallthru
      _
    %p480 = scmp.le.s32.totalorder 1, %s21
    %p481 = scmp.lt.s32.totalorder %s21, 3
    %p482 = pnand %p480, %p481
    %p483 = pneg %p482
    // Predicated region
    $region77: #{colt5_encoder_forward.7} parent=5 // pred_check
      _
    $region78: #{colt5_encoder_forward.7} parent=5 // pred_check_branch
      %485 = sbr.rel (%p482) target = $region80
    $region79: #{colt5_encoder_forward.7} parent=5 // pred_region
      %s486 = ssub.s32 %s21, 1
      %p487 = scmp.lt.s32.totalorder %s26, 1
      %s488 = scalar_select %p487, %s26, 1
      %s489 = smul.addr %s488, 8
      %s490 = scalar_lea.vmem %s0, %s489
      %p491 = pneg %p47
      %p492 = pneg %p44
      %p493 = scmp.lt.s32.totalorder %s26, 1
      %s494 = scalar_select %p493, %s26, 1
      %s495 = smul.addr %s494, 4
      %s496 = scalar_lea.vmem %s1, %s495
      %p497 = pneg %p73
      %p498 = pneg %p70
      %p499 = scmp.lt.s32.totalorder %s26, 1
      %s500 = scalar_select %p499, %s26, 1
      %s501 = smul.addr %s500, 8
      %s502 = scalar_lea.vmem %s2, %s501
      %p503 = pneg %p99
      %p504 = pneg %p96
      %p505 = scmp.lt.s32.totalorder %s26, 1
      %s506 = scalar_select %p505, %s26, 1
      %s507 = smul.addr %s506, 4
      %s508 = scalar_lea.vmem %s3, %s507
      %p509 = pneg %p125
      %p510 = pneg %p122
      %p511 = scmp.lt.s32.totalorder %s26, 1
      %s512 = scalar_select %p511, %s26, 1
      %s513 = smul.addr %s512, 4
      %s514 = scalar_lea.vmem %s4, %s513
      %p515 = pneg %p151
      %p516 = pneg %p148
      %p517 = scmp.lt.s32.totalorder %s26, 1
      %s518 = scalar_select %p517, %s26, 1
      %s519 = smul.addr %s518, 4
      %s520 = scalar_lea.vmem %s5, %s519
      %p521 = pneg %p177
      %p522 = pneg %p174
      %p523 = pneg %p198
      %p524 = pneg %p195
      %p525 = pneg %p219
      %p526 = pneg %p216
      %p527 = pneg %p240
      %p528 = pneg %p237
      %p529 = pneg %p261
      %p530 = pneg %p258
      %p531 = pneg %p282
      %p532 = pneg %p279
      %p533 = pneg %p303
      %p534 = pneg %p300
      %p535 = pneg %p324
      %p536 = pneg %p321
      %p537 = pneg %p345
      %p538 = pneg %p342
      %p539 = pneg %p366
      %p540 = pneg %p363
      %p541 = pneg %p392
      %p542 = pneg %p389
      %p543 = scmp.lt.s32.totalorder %s26, 1
      %s544 = scalar_select %p543, %s26, 1
      %s545 = smul.addr %s544, 8
      %s546 = scalar_lea.vmem %s15, %s545
      %p547 = scmp.lt.s32.totalorder %s26, 1
      %s548 = scalar_select %p547, %s26, 1
      %s549 = smul.addr %s548, 8
      %s550 = scalar_lea.vmem %s0, %s549
      %p551 = scmp.lt.s32.totalorder %s26, 1
      %s552 = scalar_select %p551, %s26, 1
      %s553 = smul.addr %s552, 4
      %s554 = scalar_lea.vmem %s1, %s553
      %p555 = scmp.lt.s32.totalorder %s26, 1
      %s556 = scalar_select %p555, %s26, 1
      %s557 = smul.addr %s556, 8
      %s558 = scalar_lea.vmem %s2, %s557
      %p559 = scmp.lt.s32.totalorder %s26, 1
      %s560 = scalar_select %p559, %s26, 1
      %s561 = smul.addr %s560, 4
      %s562 = scalar_lea.vmem %s3, %s561
      %p563 = scmp.lt.s32.totalorder %s26, 1
      %s564 = scalar_select %p563, %s26, 1
      %s565 = smul.addr %s564, 4
      %s566 = scalar_lea.vmem %s4, %s565
      %p567 = scmp.lt.s32.totalorder %s26, 1
      %s568 = scalar_select %p567, %s26, 1
      %s569 = smul.addr %s568, 4
      %s570 = scalar_lea.vmem %s5, %s569
      %p571 = scmp.lt.s32.totalorder %s26, 1
      %s572 = scalar_select %p571, %s26, 1
      %s573 = smul.addr %s572, 8
      %s574 = scalar_lea.vmem %s15, %s573
      %v576 = vld [vmem:[%s550] sm:$0xff]
      %v577 = vld [vmem:[%s554] sm:$0xf]
      %v578 = vld [vmem:[%s562] sm:$0xf]
      %vm579 = vcmask 64512
      %v581 = vsel %vm579, %v577, 0
      %583 = vmatprep.subr.mxu0 0.0
      %584 = vmatpush1.msra.mxu0 %v576
      %585 = vmatprep.subr.mxu0 0.0
      %586 = vmatpush1.msra.mxu0 0.0
      %587 = vmatprep.subr.mxu0 0.0
      %588 = vmatpush1.msra.mxu0 0.0
      %589 = vmatprep.subr.mxu0 0.0
      %590 = vmatpush1.msra.mxu0 0.0
      %591 = vmatprep.subr.mxu0 0.0
      %592 = vmatpush1.msra.mxu0 0.0
      %593 = vmatprep.subr.mxu0 0.0
      %594 = vmatpush1.msra.mxu0 0.0
      %595 = vmatprep.subr.mxu0 0.0
      %596 = vmatpush1.msra.mxu0 0.0
      %597 = vmatprep.subr.mxu0 0.0
      %598 = vmatpush1.msra.mxu0 0.0
      %599 = vmatprep.subr.mxu0 0.0
      %600 = vmatpush1.msra.mxu0 0.0
      %601 = vmatprep.subr.mxu0 0.0
      %602 = vmatpush1.msra.mxu0 0.0
      %603 = vmatprep.subr.mxu0 0.0
      %604 = vmatpush1.msra.mxu0 0.0
      %605 = vmatprep.subr.mxu0 0.0
      %606 = vmatpush1.msra.mxu0 0.0
      %607 = vmatprep.subr.mxu0 0.0
      %608 = vmatpush1.msra.mxu0 0.0
      %609 = vmatprep.subr.mxu0 0.0
      %610 = vmatpush1.msra.mxu0 0.0
      %611 = vmatprep.subr.mxu0 0.0
      %612 = vmatpush1.msra.mxu0 0.0
      %613 = vmatprep.subr.mxu0 0.0
      %614 = vmatpush1.msra.mxu0 0.0
      %615 = vmatprep.subr.mxu0 0.0
      %616 = vmatpush1.msra.mxu0 0.0
      %617 = vmatprep.subr.mxu0 0.0
      %618 = vmatpush1.msra.mxu0 0.0
      %619 = vmatprep.subr.mxu0 0.0
      %620 = vmatpush1.msra.mxu0 0.0
      %621 = vmatprep.subr.mxu0 0.0
      %622 = vmatpush1.msra.mxu0 0.0
      %623 = vmatprep.subr.mxu0 0.0
      %624 = vmatpush1.msra.mxu0 0.0
      %625 = vmatprep.subr.mxu0 0.0
      %626 = vmatpush1.msra.mxu0 0.0
      %627 = vmatprep.subr.mxu0 0.0
      %628 = vmatpush1.msra.mxu0 0.0
      %629 = vmatprep.subr.mxu0 0.0
      %630 = vmatpush1.msra.mxu0 0.0
      %631 = vmatprep.subr.mxu0 0.0
      %632 = vmatpush1.msra.mxu0 0.0
      %633 = vmatprep.subr.mxu0 0.0
      %634 = vmatpush1.msra.mxu0 0.0
      %635 = vmatprep.subr.mxu0 0.0
      %636 = vmatpush1.msra.mxu0 0.0
      %637 = vmatprep.subr.mxu0 0.0
      %638 = vmatpush1.msra.mxu0 0.0
      %639 = vmatprep.subr.mxu0 0.0
      %640 = vmatpush1.msra.mxu0 0.0
      %641 = vmatprep.subr.mxu0 0.0
      %642 = vmatpush1.msra.mxu0 0.0
      %643 = vmatprep.subr.mxu0 0.0
      %644 = vmatpush1.msra.mxu0 0.0
      %645 = vmatprep.subr.mxu0 0.0
      %646 = vmatpush1.msra.mxu0 0.0
      %647 = vmatprep.mubr.f32.mxu0 0.0
      %648 = vmatmul.mubr.f32.gmra.mrb[0].mxu0 %v581
      %v649 = vpop.f32.mrb[0].mxu0
      %v650 = vadd.f32 0.0, %v649
      %v651 = vpop.f32.mrb[0].mxu0
      %652 = vdwg.mxu0
      %v654 = vsel %vm579, %v578, 0
      %656 = vmatprep.subr.mxu0 0.0
      %657 = vmatpush1.msra.mxu0 %v576
      %658 = vmatprep.subr.mxu0 0.0
      %659 = vmatpush1.msra.mxu0 0.0
      %660 = vmatprep.subr.mxu0 0.0
      %661 = vmatpush1.msra.mxu0 0.0
      %662 = vmatprep.subr.mxu0 0.0
      %663 = vmatpush1.msra.mxu0 0.0
      %664 = vmatprep.subr.mxu0 0.0
      %665 = vmatpush1.msra.mxu0 0.0
      %666 = vmatprep.subr.mxu0 0.0
      %667 = vmatpush1.msra.mxu0 0.0
      %668 = vmatprep.subr.mxu0 0.0
      %669 = vmatpush1.msra.mxu0 0.0
      %670 = vmatprep.subr.mxu0 0.0
      %671 = vmatpush1.msra.mxu0 0.0
      %672 = vmatprep.subr.mxu0 0.0
      %673 = vmatpush1.msra.mxu0 0.0
      %674 = vmatprep.subr.mxu0 0.0
      %675 = vmatpush1.msra.mxu0 0.0
      %676 = vmatprep.subr.mxu0 0.0
      %677 = vmatpush1.msra.mxu0 0.0
      %678 = vmatprep.subr.mxu0 0.0
      %679 = vmatpush1.msra.mxu0 0.0
      %680 = vmatprep.subr.mxu0 0.0
      %681 = vmatpush1.msra.mxu0 0.0
      %682 = vmatprep.subr.mxu0 0.0
      %683 = vmatpush1.msra.mxu0 0.0
      %684 = vmatprep.subr.mxu0 0.0
      %685 = vmatpush1.msra.mxu0 0.0
      %686 = vmatprep.subr.mxu0 0.0
      %687 = vmatpush1.msra.mxu0 0.0
      %688 = vmatprep.subr.mxu0 0.0
      %689 = vmatpush1.msra.mxu0 0.0
      %690 = vmatprep.subr.mxu0 0.0
      %691 = vmatpush1.msra.mxu0 0.0
      %692 = vmatprep.subr.mxu0 0.0
      %693 = vmatpush1.msra.mxu0 0.0
      %694 = vmatprep.subr.mxu0 0.0
      %695 = vmatpush1.msra.mxu0 0.0
      %696 = vmatprep.subr.mxu0 0.0
      %697 = vmatpush1.msra.mxu0 0.0
      %698 = vmatprep.subr.mxu0 0.0
      %699 = vmatpush1.msra.mxu0 0.0
      %700 = vmatprep.subr.mxu0 0.0
      %701 = vmatpush1.msra.mxu0 0.0
      %702 = vmatprep.subr.mxu0 0.0
      %703 = vmatpush1.msra.mxu0 0.0
      %704 = vmatprep.subr.mxu0 0.0
      %705 = vmatpush1.msra.mxu0 0.0
      %706 = vmatprep.subr.mxu0 0.0
      %707 = vmatpush1.msra.mxu0 0.0
      %708 = vmatprep.subr.mxu0 0.0
      %709 = vmatpush1.msra.mxu0 0.0
      %710 = vmatprep.subr.mxu0 0.0
      %711 = vmatpush1.msra.mxu0 0.0
      %712 = vmatprep.subr.mxu0 0.0
      %713 = vmatpush1.msra.mxu0 0.0
      %714 = vmatprep.subr.mxu0 0.0
      %715 = vmatpush1.msra.mxu0 0.0
      %716 = vmatprep.subr.mxu0 0.0
      %717 = vmatpush1.msra.mxu0 0.0
      %718 = vmatprep.subr.mxu0 0.0
      %719 = vmatpush1.msra.mxu0 0.0
      %720 = vmatprep.mubr.f32.mxu0 0.0
      %721 = vmatmul.mubr.f32.gmra.mrb[0].mxu0 %v654
      %v722 = vpop.f32.mrb[0].mxu0
      %v723 = vadd.f32 0.0, %v722
      %v724 = vpop.f32.mrb[0].mxu0
      %725 = vdwg.mxu0
      %v726 = vmul.f32 %v650, %v650
      %vm727 = vcmask 257024
      %v728 = vsel %vm727, %v726, 0.0
      %729 = vadd.xlane.f32.xlu0 %v728
      %v730 = vpop.xlane.xlu0 %729
      %v731 = vrcp.pop 32.0
      %v732 = vmul.f32 %v730, %v731
      %v733 = vadd.f32 %v732, 1e-06
      %v734 = vrsqrt.pop %v733
      %v735 = vmul.f32 %v650, %v734
      %v736 = vld [vmem:[%s6] sm:$0x1]
      %v738 = vlaneseq
      %v739 = vshrl.u32 %v738, 7
      %v740 = vsub.s32 0, %v739
      %v741 = vrot.slane %v736, %v740
      %v743 = vmul.f32 %v735, %v741
      %v744 = vmul.f32 %v723, %v723
      %v745 = vsel %vm727, %v744, 0.0
      %746 = vadd.xlane.f32.xlu0 %v745
      %v747 = vpop.xlane.xlu0 %746
      %v748 = vmul.f32 %v747, %v731
      %v749 = vadd.f32 %v748, 1e-06
      %v750 = vrsqrt.pop %v749
      %v751 = vmul.f32 %v723, %v750
      %v752 = vmul.f32 %v751, %v741
      %v753 = vpack.c.bf16 %v743, %v743
      %v754 = vld [vmem:[%s7] sm:$0xf]
      %v755 = vld [vmem:[%s7 + $0x4] sm:$0xf]
      %v756 = vld [vmem:[%s7 + $0x8] sm:$0xf]
      %v757 = vld [vmem:[%s7 + $0xc] sm:$0xf]
      %v758 = vld [vmem:[%s8] sm:$0x1]
      %v760 = vlaneseq
      %v761 = vshrl.u32 %v760, 7
      %v762 = vsub.s32 0, %v761
      %v763 = vrot.slane %v758, %v762
      %v769 = vunpack.c.l.b16 %v754
      %v770 = vunpack.c.l.b16 %v755
      %v771 = vunpack.c.l.b16 %v756
      %v772 = vunpack.c.l.b16 %v757
      %v773 = vpack.c.b16 %v770, %v769
      %v774 = vpack.c.b16 %v772, %v771
      %vm777 = vcmask 261120
      %v779 = vsel %vm777, %v753, 0
      %781 = vmatprep.subr.bf16.mxu0 0
      %782 = vmatpush1.bf16.msra.mxu0 %v773
      %783 = vmatprep.subr.bf16.mxu0 0
      %784 = vmatpush1.bf16.msra.mxu0 %v774
      %785 = vmatprep.subr.bf16.mxu0 0
      %786 = vmatpush1.bf16.msra.mxu0 0
      %787 = vmatprep.subr.bf16.mxu0 0
      %788 = vmatpush1.bf16.msra.mxu0 0
      %789 = vmatprep.subr.bf16.mxu0 0
      %790 = vmatpush1.bf16.msra.mxu0 0
      %791 = vmatprep.subr.bf16.mxu0 0
      %792 = vmatpush1.bf16.msra.mxu0 0
      %793 = vmatprep.subr.bf16.mxu0 0
      %794 = vmatpush1.bf16.msra.mxu0 0
      %795 = vmatprep.subr.bf16.mxu0 0
      %796 = vmatpush1.bf16.msra.mxu0 0
      %797 = vmatprep.subr.bf16.mxu0 0
      %798 = vmatpush1.bf16.msra.mxu0 0
      %799 = vmatprep.subr.bf16.mxu0 0
      %800 = vmatpush1.bf16.msra.mxu0 0
      %801 = vmatprep.subr.bf16.mxu0 0
      %802 = vmatpush1.bf16.msra.mxu0 0
      %803 = vmatprep.subr.bf16.mxu0 0
      %804 = vmatpush1.bf16.msra.mxu0 0
      %805 = vmatprep.subr.bf16.mxu0 0
      %806 = vmatpush1.bf16.msra.mxu0 0
      %807 = vmatprep.subr.bf16.mxu0 0
      %808 = vmatpush1.bf16.msra.mxu0 0
      %809 = vmatprep.subr.bf16.mxu0 0
      %810 = vmatpush1.bf16.msra.mxu0 0
      %811 = vmatprep.subr.bf16.mxu0 0
      %812 = vmatpush1.bf16.msra.mxu0 0
      %813 = vmatprep.mubr.bf16.mxu0 0
      %814 = vmatmul.mubr.bf16.gmra.mrb[0].mxu0 %v779
      %v815 = vpop.f32.mrb[0].mxu0
      %v816 = vadd.f32 %v763, %v815
      %v817 = vpop.f32.mrb[0].mxu0
      %v818 = vpop.f32.mrb[0].mxu0
      %v819 = vpop.f32.mrb[0].mxu0
      %820 = vdwg.mxu0
      %v821 = vpack.c.bf16 %v752, %v752
      %v822 = vld [vmem:[%s9] sm:$0xf]
      %v823 = vld [vmem:[%s9 + $0x4] sm:$0xf]
      %v824 = vld [vmem:[%s9 + $0x8] sm:$0xf]
      %v825 = vld [vmem:[%s9 + $0xc] sm:$0xf]
      %v826 = vld [vmem:[%s10] sm:$0x1]
      %v828 = vlaneseq
      %v829 = vshrl.u32 %v828, 7
      %v830 = vsub.s32 0, %v829
      %v831 = vrot.slane %v826, %v830
      %v837 = vunpack.c.l.b16 %v822
      %v838 = vunpack.c.l.b16 %v823
      %v839 = vunpack.c.l.b16 %v824
      %v840 = vunpack.c.l.b16 %v825
      %v841 = vpack.c.b16 %v838, %v837
      %v842 = vpack.c.b16 %v840, %v839
      %v846 = vsel %vm777, %v821, 0
      %848 = vmatprep.subr.bf16.mxu0 0
      %849 = vmatpush1.bf16.msra.mxu0 %v841
      %850 = vmatprep.subr.bf16.mxu0 0
      %851 = vmatpush1.bf16.msra.mxu0 %v842
      %852 = vmatprep.subr.bf16.mxu0 0
      %853 = vmatpush1.bf16.msra.mxu0 0
      %854 = vmatprep.subr.bf16.mxu0 0
      %855 = vmatpush1.bf16.msra.mxu0 0
      %856 = vmatprep.subr.bf16.mxu0 0
      %857 = vmatpush1.bf16.msra.mxu0 0
      %858 = vmatprep.subr.bf16.mxu0 0
      %859 = vmatpush1.bf16.msra.mxu0 0
      %860 = vmatprep.subr.bf16.mxu0 0
      %861 = vmatpush1.bf16.msra.mxu0 0
      %862 = vmatprep.subr.bf16.mxu0 0
      %863 = vmatpush1.bf16.msra.mxu0 0
      %864 = vmatprep.subr.bf16.mxu0 0
      %865 = vmatpush1.bf16.msra.mxu0 0
      %866 = vmatprep.subr.bf16.mxu0 0
      %867 = vmatpush1.bf16.msra.mxu0 0
      %868 = vmatprep.subr.bf16.mxu0 0
      %869 = vmatpush1.bf16.msra.mxu0 0
      %870 = vmatprep.subr.bf16.mxu0 0
      %871 = vmatpush1.bf16.msra.mxu0 0
      %872 = vmatprep.subr.bf16.mxu0 0
      %873 = vmatpush1.bf16.msra.mxu0 0
      %874 = vmatprep.subr.bf16.mxu0 0
      %875 = vmatpush1.bf16.msra.mxu0 0
      %876 = vmatprep.subr.bf16.mxu0 0
      %877 = vmatpush1.bf16.msra.mxu0 0
      %878 = vmatprep.subr.bf16.mxu0 0
      %879 = vmatpush1.bf16.msra.mxu0 0
      %880 = vmatprep.mubr.bf16.mxu0 0
      %881 = vmatmul.mubr.bf16.gmra.mrb[0].mxu0 %v846
      %v882 = vpop.f32.mrb[0].mxu0
      %v883 = vadd.f32 %v831, %v882
      %v884 = vpop.f32.mrb[0].mxu0
      %v885 = vpop.f32.mrb[0].mxu0
      %v886 = vpop.f32.mrb[0].mxu0
      %887 = vdwg.mxu0
      %v888 = vld [vmem:[%s570] sm:$0xf]
      %890 = vset.pattern.permute.xlu0 0
      %891 = vperm.xlu0 %890, %v888
      %v892 = vpop.permute.xlu0 %891
      %v894 = vmul.f32 %v883, %v892
      %v895 = vld [vmem:[%s13] sm:$0x3]
      %v896 = vld [vmem:[%s14] sm:$0x3]
      %v897 = vpack.c.bf16 %v816, %v816
      %v898 = vpack.c.bf16 %v883, %v883
      %vm899 = vcmask 130048
      %v901 = vsel %vm899, %v897, 0
      %v904 = vsel %vm899, %v898, 0
      %906 = vmatprep.subr.bf16.mxu0 0
      %907 = vmatpush1.bf16.xpose.msra.mxu0 %v904
      %908 = vmatprep.subr.bf16.mxu0 0
      %909 = vmatpush1.bf16.xpose.msra.mxu0 0
      %910 = vmatprep.subr.bf16.mxu0 0
      %911 = vmatpush1.bf16.xpose.msra.mxu0 0
      %912 = vmatprep.subr.bf16.mxu0 0
      %913 = vmatpush1.bf16.xpose.msra.mxu0 0
      %914 = vmatprep.subr.bf16.mxu0 0
      %915 = vmatpush1.bf16.xpose.msra.mxu0 0
      %916 = vmatprep.subr.bf16.mxu0 0
      %917 = vmatpush1.bf16.xpose.msra.mxu0 0
      %918 = vmatprep.subr.bf16.mxu0 0
      %919 = vmatpush1.bf16.xpose.msra.mxu0 0
      %920 = vmatprep.subr.bf16.mxu0 0
      %921 = vmatpush1.bf16.xpose.msra.mxu0 0
      %922 = vmatprep.subr.bf16.mxu0 0
      %923 = vmatpush1.bf16.xpose.msra.mxu0 0
      %924 = vmatprep.subr.bf16.mxu0 0
      %925 = vmatpush1.bf16.xpose.msra.mxu0 0
      %926 = vmatprep.subr.bf16.mxu0 0
      %927 = vmatpush1.bf16.xpose.msra.mxu0 0
      %928 = vmatprep.subr.bf16.mxu0 0
      %929 = vmatpush1.bf16.xpose.msra.mxu0 0
      %930 = vmatprep.subr.bf16.mxu0 0
      %931 = vmatpush1.bf16.xpose.msra.mxu0 0
      %932 = vmatprep.subr.bf16.mxu0 0
      %933 = vmatpush1.bf16.xpose.msra.mxu0 0
      %934 = vmatprep.subr.bf16.mxu0 0
      %935 = vmatpush1.bf16.xpose.msra.mxu0 0
      %936 = vmatprep.subr.bf16.mxu0 0
      %937 = vmatpush1.bf16.xpose.msra.mxu0 0
      %938 = vmatprep.mubr.bf16.mxu0 0
      %939 = vmatmul.mubr.bf16.gmra.mrb[0].mxu0 %v901
      %v940 = vpop.f32.mrb[0].mxu0
      %v941 = vadd.f32 0.0, %v940
      %v942 = vpop.f32.mrb[0].mxu0
      %v943 = vpop.f32.mrb[0].mxu0
      %v944 = vpop.f32.mrb[0].mxu0
      %945 = vdwg.mxu0
      %v946 = vmul.f32 %v941, 0.25
      %v947 = vlaneseq
      %v948 = vshrl.u32 %v947, 7
      %v949 = vsub.s32 0, %v948
      %v950 = vrot.slane %v895, %v949
      %v951 = vmul.f32 %v816, %v950
      %vm952 = vcmask 125952
      %v953 = vsel %vm952, %v951, 0.0
      %954 = vadd.xlane.f32.xlu0 %v953
      %v955 = vpop.xlane.xlu0 %954
      %v956 = vmul.f32 %v955, 0.25
      %vm957 = vcmask 27648
      %v958 = vsel %vm957, %v946, -inf
      %959 = vmax.xlane.f32.xlu0 %v958
      %v960 = vpop.xlane.xlu0 %959
      %v961 = vmax.f32 %v960, %v956
      %v962 = vsub.f32 %v946, %v961
      %v963 = vmul.f32 %v962, 1.442695
      %v964 = vpow.pop %v963
      %v965 = vsub.f32 %v956, %v961
      %v966 = vmul.f32 %v965, 1.442695
      %v967 = vpow.pop %v966
      %v968 = vsel %vm957, %v964, 0.0
      %969 = vadd.xlane.f32.xlu0 %v968
      %v970 = vpop.xlane.xlu0 %969
      %v971 = vadd.f32 %v970, %v967
      %v972 = vpack.c.bf16 %v964, %v964
      %v973 = vpack.c.bf16 %v894, %v894
      %v974 = vlaneseq
      %v975 = vshrl.u32 %v974, 7
      %v976 = vsub.s32 0, %v975
      %v977 = vrot.slane %v896, %v976
      %v978 = vmul.f32 %v967, %v977
      %980 = vrot.lane.b32.xlu0 %v973, 96
      %v981 = vpop.permute.xlu0 %980
      %vm982 = vcmask 31744
      %v984 = vsel %vm982, %v972, 0
      %vm986 = vcmask 1041408
      %v988 = vsel %vm986, %v981, 0
      %990 = vmatprep.subr.bf16.mxu0 0
      %991 = vmatpush1.bf16.msra.mxu0 %v988
      %992 = vmatprep.subr.bf16.mxu0 0
      %993 = vmatpush1.bf16.msra.mxu0 0
      %994 = vmatprep.subr.bf16.mxu0 0
      %995 = vmatpush1.bf16.msra.mxu0 0
      %996 = vmatprep.subr.bf16.mxu0 0
      %997 = vmatpush1.bf16.msra.mxu0 0
      %998 = vmatprep.subr.bf16.mxu0 0
      %999 = vmatpush1.bf16.msra.mxu0 0
      %1000 = vmatprep.subr.bf16.mxu0 0
      %1001 = vmatpush1.bf16.msra.mxu0 0
      %1002 = vmatprep.subr.bf16.mxu0 0
      %1003 = vmatpush1.bf16.msra.mxu0 0
      %1004 = vmatprep.subr.bf16.mxu0 0
      %1005 = vmatpush1.bf16.msra.mxu0 0
      %1006 = vmatprep.subr.bf16.mxu0 0
      %1007 = vmatpush1.bf16.msra.mxu0 0
      %1008 = vmatprep.subr.bf16.mxu0 0
      %1009 = vmatpush1.bf16.msra.mxu0 0
      %1010 = vmatprep.subr.bf16.mxu0 0
      %1011 = vmatpush1.bf16.msra.mxu0 0
      %1012 = vmatprep.subr.bf16.mxu0 0
      %1013 = vmatpush1.bf16.msra.mxu0 0
      %1014 = vmatprep.subr.bf16.mxu0 0
      %1015 = vmatpush1.bf16.msra.mxu0 0
      %1016 = vmatprep.subr.bf16.mxu0 0
      %1017 = vmatpush1.bf16.msra.mxu0 0
      %1018 = vmatprep.subr.bf16.mxu0 0
      %1019 = vmatpush1.bf16.msra.mxu0 0
      %1020 = vmatprep.subr.bf16.mxu0 0
      %1021 = vmatpush1.bf16.msra.mxu0 0
      %1022 = vmatprep.mubr.bf16.mxu0 0
      %1023 = vmatmul.mubr.bf16.gmra.mrb[0].mxu0 %v984
      %v1024 = vpop.f32.mrb[0].mxu0
      %v1025 = vadd.f32 %v978, %v1024
      %v1026 = vpop.f32.mrb[0].mxu0
      %v1027 = vpop.f32.mrb[0].mxu0
      %v1028 = vpop.f32.mrb[0].mxu0
      %1029 = vdwg.mxu0
      %v1030 = vrcp.pop %v971
      %v1031 = vmul.f32 %v1025, %v1030
      %1033 = vrot.lane.b32.xlu0 %v897, 112
      %v1034 = vpop.permute.xlu0 %1033
      %1036 = vrot.lane.b32.xlu0 %v898, 112
      %v1037 = vpop.permute.xlu0 %1036
      %v1039 = vsel %vm899, %v1034, 0
      %v1042 = vsel %vm899, %v1037, 0
      %1044 = vmatprep.subr.bf16.mxu0 0
      %1045 = vmatpush1.bf16.xpose.msra.mxu0 %v1042
      %1046 = vmatprep.subr.bf16.mxu0 0
      %1047 = vmatpush1.bf16.xpose.msra.mxu0 0
      %1048 = vmatprep.subr.bf16.mxu0 0
      %1049 = vmatpush1.bf16.xpose.msra.mxu0 0
      %1050 = vmatprep.subr.bf16.mxu0 0
      %1051 = vmatpush1.bf16.xpose.msra.mxu0 0
      %1052 = vmatprep.subr.bf16.mxu0 0
      %1053 = vmatpush1.bf16.xpose.msra.mxu0 0
      %1054 = vmatprep.subr.bf16.mxu0 0
      %1055 = vmatpush1.bf16.xpose.msra.mxu0 0
      %1056 = vmatprep.subr.bf16.mxu0 0
      %1057 = vmatpush1.bf16.xpose.msra.mxu0 0
      %1058 = vmatprep.subr.bf16.mxu0 0
      %1059 = vmatpush1.bf16.xpose.msra.mxu0 0
      %1060 = vmatprep.subr.bf16.mxu0 0
      %1061 = vmatpush1.bf16.xpose.msra.mxu0 0
      %1062 = vmatprep.subr.bf16.mxu0 0
      %1063 = vmatpush1.bf16.xpose.msra.mxu0 0
      %1064 = vmatprep.subr.bf16.mxu0 0
      %1065 = vmatpush1.bf16.xpose.msra.mxu0 0
      %1066 = vmatprep.subr.bf16.mxu0 0
      %1067 = vmatpush1.bf16.xpose.msra.mxu0 0
      %1068 = vmatprep.subr.bf16.mxu0 0
      %1069 = vmatpush1.bf16.xpose.msra.mxu0 0
      %1070 = vmatprep.subr.bf16.mxu0 0
      %1071 = vmatpush1.bf16.xpose.msra.mxu0 0
      %1072 = vmatprep.subr.bf16.mxu0 0
      %1073 = vmatpush1.bf16.xpose.msra.mxu0 0
      %1074 = vmatprep.subr.bf16.mxu0 0
      %1075 = vmatpush1.bf16.xpose.msra.mxu0 0
      %1076 = vmatprep.mubr.bf16.mxu0 0
      %1077 = vmatmul.mubr.bf16.gmra.mrb[0].mxu0 %v1039
      %v1078 = vpop.f32.mrb[0].mxu0
      %v1079 = vadd.f32 0.0, %v1078
      %v1080 = vpop.f32.mrb[0].mxu0
      %v1081 = vpop.f32.mrb[0].mxu0
      %v1082 = vpop.f32.mrb[0].mxu0
      %1083 = vdwg.mxu0
      %v1084 = vmul.f32 %v1079, 0.25
      %v1085 = vlaneseq
      %v1086 = vshrl.u32 %v1085, 7
      %v1087 = vsub.s32 1, %v1086
      %v1088 = vrot.slane %v895, %v1087
      %1090 = vrot.lane.b32.xlu0 %v1088, 16
      %v1091 = vpop.permute.xlu0 %1090
      %v1093 = vmul.f32 %v816, %v1091
      %1095 = vrot.lane.b32.xlu0 %v1093, 112
      %v1096 = vpop.permute.xlu0 %1095
      %v1098 = vsel %vm952, %v1096, 0.0
      %1099 = vadd.xlane.f32.xlu0 %v1098
      %v1100 = vpop.xlane.xlu0 %1099
      %v1101 = vmul.f32 %v1100, 0.25
      %v1102 = vsel %vm957, %v1084, -inf
      %1103 = vmax.xlane.f32.xlu0 %v1102
      %v1104 = vpop.xlane.xlu0 %1103
      %v1105 = vmax.f32 %v1104, %v1101
      %v1106 = vsub.f32 %v1084, %v1105
      %v1107 = vmul.f32 %v1106, 1.442695
      %v1108 = vpow.pop %v1107
      %v1109 = vsub.f32 %v1101, %v1105
      %v1110 = vmul.f32 %v1109, 1.442695
      %v1111 = vpow.pop %v1110
      %v1112 = vsel %vm957, %v1108, 0.0
      %1113 = vadd.xlane.f32.xlu0 %v1112
      %v1114 = vpop.xlane.xlu0 %1113
      %v1115 = vadd.f32 %v1114, %v1111
      %v1116 = vpack.c.bf16 %v1108, %v1108
      %v1117 = vlaneseq
      %v1118 = vshrl.u32 %v1117, 7
      %v1119 = vsub.s32 1, %v1118
      %v1120 = vrot.slane %v896, %v1119
      %v1121 = vmul.f32 %v1111, %v1120
      %1122 = vrot.lane.b32.xlu0 %v973, 80
      %v1123 = vpop.permute.xlu0 %1122
      %v1125 = vsel %vm982, %v1116, 0
      %v1128 = vsel %vm986, %v1123, 0
      %1130 = vmatprep.subr.bf16.mxu0 0
      %1131 = vmatpush1.bf16.msra.mxu0 %v1128
      %1132 = vmatprep.subr.bf16.mxu0 0
      %1133 = vmatpush1.bf16.msra.mxu0 0
      %1134 = vmatprep.subr.bf16.mxu0 0
      %1135 = vmatpush1.bf16.msra.mxu0 0
      %1136 = vmatprep.subr.bf16.mxu0 0
      %1137 = vmatpush1.bf16.msra.mxu0 0
      %1138 = vmatprep.subr.bf16.mxu0 0
      %1139 = vmatpush1.bf16.msra.mxu0 0
      %1140 = vmatprep.subr.bf16.mxu0 0
      %1141 = vmatpush1.bf16.msra.mxu0 0
      %1142 = vmatprep.subr.bf16.mxu0 0
      %1143 = vmatpush1.bf16.msra.mxu0 0
      %1144 = vmatprep.subr.bf16.mxu0 0
      %1145 = vmatpush1.bf16.msra.mxu0 0
      %1146 = vmatprep.subr.bf16.mxu0 0
      %1147 = vmatpush1.bf16.msra.mxu0 0
      %1148 = vmatprep.subr.bf16.mxu0 0
      %1149 = vmatpush1.bf16.msra.mxu0 0
      %1150 = vmatprep.subr.bf16.mxu0 0
      %1151 = vmatpush1.bf16.msra.mxu0 0
      %1152 = vmatprep.subr.bf16.mxu0 0
      %1153 = vmatpush1.bf16.msra.mxu0 0
      %1154 = vmatprep.subr.bf16.mxu0 0
      %1155 = vmatpush1.bf16.msra.mxu0 0
      %1156 = vmatprep.subr.bf16.mxu0 0
      %1157 = vmatpush1.bf16.msra.mxu0 0
      %1158 = vmatprep.subr.bf16.mxu0 0
      %1159 = vmatpush1.bf16.msra.mxu0 0
      %1160 = vmatprep.subr.bf16.mxu0 0
      %1161 = vmatpush1.bf16.msra.mxu0 0
      %1162 = vmatprep.mubr.bf16.mxu0 0
      %1163 = vmatmul.mubr.bf16.gmra.mrb[0].mxu0 %v1125
      %v1164 = vpop.f32.mrb[0].mxu0
      %v1165 = vadd.f32 %v1121, %v1164
      %v1166 = vpop.f32.mrb[0].mxu0
      %v1167 = vpop.f32.mrb[0].mxu0
      %v1168 = vpop.f32.mrb[0].mxu0
      %1169 = vdwg.mxu0
      %v1170 = vrcp.pop %v1115
      %v1171 = vmul.f32 %v1165, %v1170
      %1173 = vrot.lane.b32.xlu0 %v1171, 16
      %v1174 = vpop.permute.xlu0 %1173
      %v1176 = vsel %vm899, %v1031, %v1174
      %v1177 = vpack.c.bf16 %v1176, %v1176
      %v1178 = vld [vmem:[%s11] sm:$0xf]
      %v1179 = vld [vmem:[%s11 + $0x4] sm:$0xf]
      %v1180 = vld [vmem:[%s11 + $0x8] sm:$0xf]
      %v1181 = vld [vmem:[%s11 + $0xc] sm:$0xf]
      %v1182 = vld [vmem:[%s12] sm:$0x1]
      %v1184 = vlaneseq
      %v1185 = vshrl.u32 %v1184, 7
      %v1186 = vsub.s32 0, %v1185
      %v1187 = vrot.slane %v1182, %v1186
      %v1193 = vunpack.c.l.b16 %v1178
      %v1194 = vunpack.c.l.b16 %v1179
      %v1195 = vunpack.c.l.b16 %v1180
      %v1196 = vunpack.c.l.b16 %v1181
      %v1197 = vpack.c.b16 %v1194, %v1193
      %v1198 = vpack.c.b16 %v1196, %v1195
      %v1202 = vsel %vm777, %v1177, 0
      %1204 = vmatprep.subr.bf16.mxu0 0
      %1205 = vmatpush1.bf16.msra.mxu0 %v1197
      %1206 = vmatprep.subr.bf16.mxu0 0
      %1207 = vmatpush1.bf16.msra.mxu0 %v1198
      %1208 = vmatprep.subr.bf16.mxu0 0
      %1209 = vmatpush1.bf16.msra.mxu0 0
      %1210 = vmatprep.subr.bf16.mxu0 0
      %1211 = vmatpush1.bf16.msra.mxu0 0
      %1212 = vmatprep.subr.bf16.mxu0 0
      %1213 = vmatpush1.bf16.msra.mxu0 0
      %1214 = vmatprep.subr.bf16.mxu0 0
      %1215 = vmatpush1.bf16.msra.mxu0 0
      %1216 = vmatprep.subr.bf16.mxu0 0
      %1217 = vmatpush1.bf16.msra.mxu0 0
      %1218 = vmatprep.subr.bf16.mxu0 0
      %1219 = vmatpush1.bf16.msra.mxu0 0
      %1220 = vmatprep.subr.bf16.mxu0 0
      %1221 = vmatpush1.bf16.msra.mxu0 0
      %1222 = vmatprep.subr.bf16.mxu0 0
      %1223 = vmatpush1.bf16.msra.mxu0 0
      %1224 = vmatprep.subr.bf16.mxu0 0
      %1225 = vmatpush1.bf16.msra.mxu0 0
      %1226 = vmatprep.subr.bf16.mxu0 0
      %1227 = vmatpush1.bf16.msra.mxu0 0
      %1228 = vmatprep.subr.bf16.mxu0 0
      %1229 = vmatpush1.bf16.msra.mxu0 0
      %1230 = vmatprep.subr.bf16.mxu0 0
      %1231 = vmatpush1.bf16.msra.mxu0 0
      %1232 = vmatprep.subr.bf16.mxu0 0
      %1233 = vmatpush1.bf16.msra.mxu0 0
      %1234 = vmatprep.subr.bf16.mxu0 0
      %1235 = vmatpush1.bf16.msra.mxu0 0
      %1236 = vmatprep.mubr.bf16.mxu0 0
      %1237 = vmatmul.mubr.bf16.gmra.mrb[0].mxu0 %v1202
      %v1238 = vpop.f32.mrb[0].mxu0
      %v1239 = vadd.f32 %v1187, %v1238
      %v1240 = vpop.f32.mrb[0].mxu0
      %v1241 = vpop.f32.mrb[0].mxu0
      %v1242 = vpop.f32.mrb[0].mxu0
      %1243 = vdwg.mxu0
      %v1244 = vld [vmem:[%s566] sm:$0xf]
      %1246 = vset.pattern.permute.xlu0 0
      %1247 = vperm.xlu0 %1246, %v1244
      %v1248 = vpop.permute.xlu0 %1247
      %v1250 = vmul.f32 %v1239, %v1248
      %v1251 = vld [vmem:[%s558] sm:$0xff]
      %v1253 = vsel %vm982, %v1251, 0
      %vm1255 = vcmask 1043456
      %v1257 = vsel %vm1255, %v1250, 0
      %1259 = vmatprep.subr.mxu0 0.0
      %1260 = vmatpush1.msra.mxu0 %v1257
      %1261 = vmatprep.subr.mxu0 0.0
      %1262 = vmatpush1.msra.mxu0 0.0
      %1263 = vmatprep.subr.mxu0 0.0
      %1264 = vmatpush1.msra.mxu0 0.0
      %1265 = vmatprep.subr.mxu0 0.0
      %1266 = vmatpush1.msra.mxu0 0.0
      %1267 = vmatprep.subr.mxu0 0.0
      %1268 = vmatpush1.msra.mxu0 0.0
      %1269 = vmatprep.subr.mxu0 0.0
      %1270 = vmatpush1.msra.mxu0 0.0
      %1271 = vmatprep.subr.mxu0 0.0
      %1272 = vmatpush1.msra.mxu0 0.0
      %1273 = vmatprep.subr.mxu0 0.0
      %1274 = vmatpush1.msra.mxu0 0.0
      %1275 = vmatprep.subr.mxu0 0.0
      %1276 = vmatpush1.msra.mxu0 0.0
      %1277 = vmatprep.subr.mxu0 0.0
      %1278 = vmatpush1.msra.mxu0 0.0
      %1279 = vmatprep.subr.mxu0 0.0
      %1280 = vmatpush1.msra.mxu0 0.0
      %1281 = vmatprep.subr.mxu0 0.0
      %1282 = vmatpush1.msra.mxu0 0.0
      %1283 = vmatprep.subr.mxu0 0.0
      %1284 = vmatpush1.msra.mxu0 0.0
      %1285 = vmatprep.subr.mxu0 0.0
      %1286 = vmatpush1.msra.mxu0 0.0
      %1287 = vmatprep.subr.mxu0 0.0
      %1288 = vmatpush1.msra.mxu0 0.0
      %1289 = vmatprep.subr.mxu0 0.0
      %1290 = vmatpush1.msra.mxu0 0.0
      %1291 = vmatprep.subr.mxu0 0.0
      %1292 = vmatpush1.msra.mxu0 0.0
      %1293 = vmatprep.subr.mxu0 0.0
      %1294 = vmatpush1.msra.mxu0 0.0
      %1295 = vmatprep.subr.mxu0 0.0
      %1296 = vmatpush1.msra.mxu0 0.0
      %1297 = vmatprep.subr.mxu0 0.0
      %1298 = vmatpush1.msra.mxu0 0.0
      %1299 = vmatprep.subr.mxu0 0.0
      %1300 = vmatpush1.msra.mxu0 0.0
      %1301 = vmatprep.subr.mxu0 0.0
      %1302 = vmatpush1.msra.mxu0 0.0
      %1303 = vmatprep.subr.mxu0 0.0
      %1304 = vmatpush1.msra.mxu0 0.0
      %1305 = vmatprep.subr.mxu0 0.0
      %1306 = vmatpush1.msra.mxu0 0.0
      %1307 = vmatprep.subr.mxu0 0.0
      %1308 = vmatpush1.msra.mxu0 0.0
      %1309 = vmatprep.subr.mxu0 0.0
      %1310 = vmatpush1.msra.mxu0 0.0
      %1311 = vmatprep.subr.mxu0 0.0
      %1312 = vmatpush1.msra.mxu0 0.0
      %1313 = vmatprep.subr.mxu0 0.0
      %1314 = vmatpush1.msra.mxu0 0.0
      %1315 = vmatprep.subr.mxu0 0.0
      %1316 = vmatpush1.msra.mxu0 0.0
      %1317 = vmatprep.subr.mxu0 0.0
      %1318 = vmatpush1.msra.mxu0 0.0
      %1319 = vmatprep.subr.mxu0 0.0
      %1320 = vmatpush1.msra.mxu0 0.0
      %1321 = vmatprep.subr.mxu0 0.0
      %1322 = vmatpush1.msra.mxu0 0.0
      %1323 = vmatprep.mubr.f32.mxu0 0.0
      %1324 = vmatmul.mubr.f32.gmra.mrb[0].mxu0 %v1253
      %v1325 = vpop.f32.mrb[0].mxu0
      %v1326 = vadd.f32 0.0, %v1325
      %v1327 = vpop.f32.mrb[0].mxu0
      %1328 = vdwg.mxu0
      %1329 = vst.msk [vmem:[%s574] sm:$0xff] %vm777, %v1326
      %p1330 = scmp.lt.s32.totalorder %s26, 1
      %s1331 = scalar_select %p1330, %s26, 1
      %s1332 = smul.addr %s1331, 8
      %s1333 = scalar_lea.vmem %s15, %s1332
      // Predicated region
      $region81: #{colt5_encoder_forward.7} parent=79 // pred_check
        %p1334 = pneg %p389
      $region82: #{colt5_encoder_forward.7} parent=79 // pred_check_branch
        %1336 = sbr.rel (%p1334) target = $region84
      $region83: #{colt5_encoder_forward.7} parent=79 // pred_region
        _
      $region84: #{colt5_encoder_forward.7} parent=79 // pred_fallthru
        _
    $region80: #{colt5_encoder_forward.7} parent=5 // pred_fallthru
      _
    %p1337 = scmp.le.s32.totalorder 2, %s21
    // Predicated region
    $region85: #{colt5_encoder_forward.7} parent=5 // pred_check
      %p1338 = pneg %p1337
    $region86: #{colt5_encoder_forward.7} parent=5 // pred_check_branch
      %1340 = sbr.rel (%p1338) target = $region88
    $region87: #{colt5_encoder_forward.7} parent=5 // pred_region
      %s1341 = ssub.s32 %s21, 2
      // Predicated region
      $region89: #{colt5_encoder_forward.7} parent=87 // pred_check
        %p1342 = pneg %p395
      $region90: #{colt5_encoder_forward.7} parent=87 // pred_check_branch
        %1344 = sbr.rel (%p1342) target = $region92
      $region91: #{colt5_encoder_forward.7} parent=87 // pred_region
        %p1345 = scmp.lt.s32.totalorder %s27, 1
        %s1346 = scalar_select %p1345, %s27, 1
        %s1347 = smul.addr %s1346, 8
        %s1348 = scalar_lea.vmem %s15, %s1347
      $region92: #{colt5_encoder_forward.7} parent=87 // pred_fallthru
        _
    $region88: #{colt5_encoder_forward.7} parent=5 // pred_fallthru
      _
  $region6: #{colt5_encoder_forward.7} parent=0 // loop_footer
    %s25 = sadd.s32 1, %s21
  $region7: #{colt5_encoder_forward.7} parent=0 // loop_footer_branch
    %20 = sbr.rel target = $region3
  $region8: #{colt5_encoder_forward.7} parent=0 // loop_exit
    _

// kernel: colt5_encoder_forward.8
$region0: #{colt5_encoder_forward.8}
  #allocation0 [shape = 'u32[]', space=smem, size = 0x4, offset = 0x4, fixed_abs, tag = 'smem constant byte address 0x4 - core index']
  #allocation1 [shape = 'u32[144,128]{1,0:T(1,128)}', space=vmem, size = 0x12000, scoped, tag = 'internal scratch']
  %s0 = inlined_call_operand.vmem [shape: f32[2,8,32], index: 0, kind: input, shape index: {}]
  %s1 = inlined_call_operand.vmem [shape: f32[2,4,8], index: 1, kind: input, shape index: {}]
  %s2 = inlined_call_operand.vmem [shape: f32[2,8,4], index: 2, kind: input, shape index: {}]
  %s3 = inlined_call_operand.vmem [shape: f32[2,4,1], index: 3, kind: input, shape index: {}]
  %s4 = inlined_call_operand.vmem [shape: f32[1,32], index: 4, kind: input, shape index: {}]
  %s5 = inlined_call_operand.vmem [shape: bf16[32,16], index: 5, kind: input, shape index: {}]
  %s6 = inlined_call_operand.vmem [shape: f32[1,16], index: 6, kind: input, shape index: {}]
  %s7 = inlined_call_operand.vmem [shape: bf16[16,32], index: 7, kind: input, shape index: {}]
  %s8 = inlined_call_operand.vmem [shape: f32[1,32], index: 8, kind: input, shape index: {}]
  %s9 = inlined_call_operand.vmem [shape: f32[1,32], index: 9, kind: input, shape index: {}]
  %s10 = inlined_call_operand.vmem [shape: bf16[32,128], index: 10, kind: input, shape index: {}]
  %s11 = inlined_call_operand.vmem [shape: f32[1,128], index: 11, kind: input, shape index: {}]
  %s12 = inlined_call_operand.vmem [shape: bf16[128,32], index: 12, kind: input, shape index: {}]
  %s13 = inlined_call_operand.vmem [shape: f32[1,32], index: 13, kind: input, shape index: {}]
  %s14 = inlined_call_operand.vmem [shape: f32[2,8,32], index: 14, kind: output, shape index: {}]
  %s15 = sld [smem:[#allocation0]]
  $region89: #{colt5_encoder_forward.8} parent=0
    _
  %s17 = ssub.s32 1, %s15
  %s18 = scalar_select 0, %s17, %s15
  loop: start=0, step=1, limit=4
  $region2: #{colt5_encoder_forward.8} parent=0 // loop_pre_header
    _
  $region3: #{colt5_encoder_forward.8} parent=0 // loop_header
    %s20 = sphi 0, %s24
    %p21 = scmp.ge.s32.totalorder %s20, 4
    %s30 = sphi 0, %s32
    %s33 = sphi 0, %s30
    %s34 = sphi 0, %s33
    %s50 = sphi 0, %s34
    %s56 = sphi 0, %s58
    %s59 = sphi 0, %s56
    %s60 = sphi 0, %s59
    %s76 = sphi 0, %s60
    %s82 = sphi 0, %s84
    %s85 = sphi 0, %s82
    %s86 = sphi 0, %s85
    %s102 = sphi 0, %s86
    %s108 = sphi 0, %s110
    %s111 = sphi 0, %s108
    %s112 = sphi 0, %s111
    %s128 = sphi 0, %s112
    %s132 = sphi 0, %s132
    %s134 = sphi 0, %s132
    %s135 = sphi 0, %s134
    %s149 = sphi 0, %s135
    %s153 = sphi 0, %s153
    %s155 = sphi 0, %s153
    %s156 = sphi 0, %s155
    %s170 = sphi 0, %s156
    %s174 = sphi 0, %s174
    %s176 = sphi 0, %s174
    %s177 = sphi 0, %s176
    %s191 = sphi 0, %s177
    %s195 = sphi 0, %s195
    %s197 = sphi 0, %s195
    %s198 = sphi 0, %s197
    %s212 = sphi 0, %s198
    %s216 = sphi 0, %s216
    %s218 = sphi 0, %s216
    %s219 = sphi 0, %s218
    %s233 = sphi 0, %s219
    %s237 = sphi 0, %s237
    %s239 = sphi 0, %s237
    %s240 = sphi 0, %s239
    %s254 = sphi 0, %s240
    %s258 = sphi 0, %s258
    %s260 = sphi 0, %s258
    %s261 = sphi 0, %s260
    %s275 = sphi 0, %s261
    %s279 = sphi 0, %s279
    %s281 = sphi 0, %s279
    %s282 = sphi 0, %s281
    %s296 = sphi 0, %s282
    %s300 = sphi 0, %s300
    %s302 = sphi 0, %s300
    %s303 = sphi 0, %s302
    %s317 = sphi 0, %s303
    %s321 = sphi 0, %s321
    %s323 = sphi 0, %s321
    %s324 = sphi 0, %s323
    %s338 = sphi 0, %s324
    %s344 = sphi 0, %s346
    %s347 = sphi 0, %s344
    %s348 = sphi 0, %s347
    %s364 = sphi 0, %s348
  $region4: #{colt5_encoder_forward.8} parent=0 // loop_header_branch
    %23 = sbr.rel (%p21) target = $region8
  $region5: #{colt5_encoder_forward.8} parent=0 // loop_body
    %s25 = ssub.s32 %s20, 1
    %s26 = ssub.s32 %s20, 2
    %s27 = sadd.s32 %s20, 1
    %s28 = ssub.s32 %s20, %s27
    %p29 = scmp.eq.s32.totalorder %s28, 0
    %s31 = sadd.s32 %s30, 1
    %s32 = scalar_select %p29, %s30, %s31
    %p35 = pneg %p29
    %p36 = scmp.eq.s32.totalorder %s20, 1
    %p37 = por %p35, %p36
    %p38 = scmp.ne.s32.totalorder %s30, %s33
    %p39 = scmp.eq.s32.totalorder %s20, 0
    %p40 = por %p38, %p39
    %p41 = scmp.ne.s32.totalorder %s30, %s33
    %p42 = scmp.eq.s32.totalorder %s25, 1
    %p43 = por %p41, %p42
    %p44 = scmp.ne.s32.totalorder %s33, %s34
    %p45 = scmp.eq.s32.totalorder %s25, 0
    %p46 = por %p44, %p45
    %p47 = scmp.ne.s32.totalorder %s33, %s34
    %p48 = scmp.eq.s32.totalorder %s26, 1
    %p49 = por %p47, %p48
    %p51 = scmp.ne.s32.totalorder %s34, %s50
    %p52 = scmp.eq.s32.totalorder %s26, 0
    %p53 = por %p51, %p52
    %s54 = ssub.s32 %s20, %s27
    %p55 = scmp.eq.s32.totalorder %s54, 0
    %s57 = sadd.s32 %s56, 1
    %s58 = scalar_select %p55, %s56, %s57
    %p61 = pneg %p55
    %p62 = scmp.eq.s32.totalorder %s20, 1
    %p63 = por %p61, %p62
    %p64 = scmp.ne.s32.totalorder %s56, %s59
    %p65 = scmp.eq.s32.totalorder %s20, 0
    %p66 = por %p64, %p65
    %p67 = scmp.ne.s32.totalorder %s56, %s59
    %p68 = scmp.eq.s32.totalorder %s25, 1
    %p69 = por %p67, %p68
    %p70 = scmp.ne.s32.totalorder %s59, %s60
    %p71 = scmp.eq.s32.totalorder %s25, 0
    %p72 = por %p70, %p71
    %p73 = scmp.ne.s32.totalorder %s59, %s60
    %p74 = scmp.eq.s32.totalorder %s26, 1
    %p75 = por %p73, %p74
    %p77 = scmp.ne.s32.totalorder %s60, %s76
    %p78 = scmp.eq.s32.totalorder %s26, 0
    %p79 = por %p77, %p78
    %s80 = ssub.s32 %s20, %s27
    %p81 = scmp.eq.s32.totalorder %s80, 0
    %s83 = sadd.s32 %s82, 1
    %s84 = scalar_select %p81, %s82, %s83
    %p87 = pneg %p81
    %p88 = scmp.eq.s32.totalorder %s20, 1
    %p89 = por %p87, %p88
    %p90 = scmp.ne.s32.totalorder %s82, %s85
    %p91 = scmp.eq.s32.totalorder %s20, 0
    %p92 = por %p90, %p91
    %p93 = scmp.ne.s32.totalorder %s82, %s85
    %p94 = scmp.eq.s32.totalorder %s25, 1
    %p95 = por %p93, %p94
    %p96 = scmp.ne.s32.totalorder %s85, %s86
    %p97 = scmp.eq.s32.totalorder %s25, 0
    %p98 = por %p96, %p97
    %p99 = scmp.ne.s32.totalorder %s85, %s86
    %p100 = scmp.eq.s32.totalorder %s26, 1
    %p101 = por %p99, %p100
    %p103 = scmp.ne.s32.totalorder %s86, %s102
    %p104 = scmp.eq.s32.totalorder %s26, 0
    %p105 = por %p103, %p104
    %s106 = ssub.s32 %s20, %s27
    %p107 = scmp.eq.s32.totalorder %s106, 0
    %s109 = sadd.s32 %s108, 1
    %s110 = scalar_select %p107, %s108, %s109
    %p113 = pneg %p107
    %p114 = scmp.eq.s32.totalorder %s20, 1
    %p115 = por %p113, %p114
    %p116 = scmp.ne.s32.totalorder %s108, %s111
    %p117 = scmp.eq.s32.totalorder %s20, 0
    %p118 = por %p116, %p117
    %p119 = scmp.ne.s32.totalorder %s108, %s111
    %p120 = scmp.eq.s32.totalorder %s25, 1
    %p121 = por %p119, %p120
    %p122 = scmp.ne.s32.totalorder %s111, %s112
    %p123 = scmp.eq.s32.totalorder %s25, 0
    %p124 = por %p122, %p123
    %p125 = scmp.ne.s32.totalorder %s111, %s112
    %p126 = scmp.eq.s32.totalorder %s26, 1
    %p127 = por %p125, %p126
    %p129 = scmp.ne.s32.totalorder %s112, %s128
    %p130 = scmp.eq.s32.totalorder %s26, 0
    %p131 = por %p129, %p130
    %s133 = sadd.s32 %s132, 1
    %p136 = scmp.eq.s32.totalorder %s20, 1
    %p137 = scmp.ne.s32.totalorder %s132, %s134
    %p138 = scmp.eq.s32.totalorder %s20, 0
    %p139 = por %p137, %p138
    %p140 = scmp.ne.s32.totalorder %s132, %s134
    %p141 = scmp.eq.s32.totalorder %s25, 1
    %p142 = por %p140, %p141
    %p143 = scmp.ne.s32.totalorder %s134, %s135
    %p144 = scmp.eq.s32.totalorder %s25, 0
    %p145 = por %p143, %p144
    %p146 = scmp.ne.s32.totalorder %s134, %s135
    %p147 = scmp.eq.s32.totalorder %s26, 1
    %p148 = por %p146, %p147
    %p150 = scmp.ne.s32.totalorder %s135, %s149
    %p151 = scmp.eq.s32.totalorder %s26, 0
    %p152 = por %p150, %p151
    %s154 = sadd.s32 %s153, 1
    %p157 = scmp.eq.s32.totalorder %s20, 1
    %p158 = scmp.ne.s32.totalorder %s153, %s155
    %p159 = scmp.eq.s32.totalorder %s20, 0
    %p160 = por %p158, %p159
    %p161 = scmp.ne.s32.totalorder %s153, %s155
    %p162 = scmp.eq.s32.totalorder %s25, 1
    %p163 = por %p161, %p162
    %p164 = scmp.ne.s32.totalorder %s155, %s156
    %p165 = scmp.eq.s32.totalorder %s25, 0
    %p166 = por %p164, %p165
    %p167 = scmp.ne.s32.totalorder %s155, %s156
    %p168 = scmp.eq.s32.totalorder %s26, 1
    %p169 = por %p167, %p168
    %p171 = scmp.ne.s32.totalorder %s156, %s170
    %p172 = scmp.eq.s32.totalorder %s26, 0
    %p173 = por %p171, %p172
    %s175 = sadd.s32 %s174, 1
    %p178 = scmp.eq.s32.totalorder %s20, 1
    %p179 = scmp.ne.s32.totalorder %s174, %s176
    %p180 = scmp.eq.s32.totalorder %s20, 0
    %p181 = por %p179, %p180
    %p182 = scmp.ne.s32.totalorder %s174, %s176
    %p183 = scmp.eq.s32.totalorder %s25, 1
    %p184 = por %p182, %p183
    %p185 = scmp.ne.s32.totalorder %s176, %s177
    %p186 = scmp.eq.s32.totalorder %s25, 0
    %p187 = por %p185, %p186
    %p188 = scmp.ne.s32.totalorder %s176, %s177
    %p189 = scmp.eq.s32.totalorder %s26, 1
    %p190 = por %p188, %p189
    %p192 = scmp.ne.s32.totalorder %s177, %s191
    %p193 = scmp.eq.s32.totalorder %s26, 0
    %p194 = por %p192, %p193
    %s196 = sadd.s32 %s195, 1
    %p199 = scmp.eq.s32.totalorder %s20, 1
    %p200 = scmp.ne.s32.totalorder %s195, %s197
    %p201 = scmp.eq.s32.totalorder %s20, 0
    %p202 = por %p200, %p201
    %p203 = scmp.ne.s32.totalorder %s195, %s197
    %p204 = scmp.eq.s32.totalorder %s25, 1
    %p205 = por %p203, %p204
    %p206 = scmp.ne.s32.totalorder %s197, %s198
    %p207 = scmp.eq.s32.totalorder %s25, 0
    %p208 = por %p206, %p207
    %p209 = scmp.ne.s32.totalorder %s197, %s198
    %p210 = scmp.eq.s32.totalorder %s26, 1
    %p211 = por %p209, %p210
    %p213 = scmp.ne.s32.totalorder %s198, %s212
    %p214 = scmp.eq.s32.totalorder %s26, 0
    %p215 = por %p213, %p214
    %s217 = sadd.s32 %s216, 1
    %p220 = scmp.eq.s32.totalorder %s20, 1
    %p221 = scmp.ne.s32.totalorder %s216, %s218
    %p222 = scmp.eq.s32.totalorder %s20, 0
    %p223 = por %p221, %p222
    %p224 = scmp.ne.s32.totalorder %s216, %s218
    %p225 = scmp.eq.s32.totalorder %s25, 1
    %p226 = por %p224, %p225
    %p227 = scmp.ne.s32.totalorder %s218, %s219
    %p228 = scmp.eq.s32.totalorder %s25, 0
    %p229 = por %p227, %p228
    %p230 = scmp.ne.s32.totalorder %s218, %s219
    %p231 = scmp.eq.s32.totalorder %s26, 1
    %p232 = por %p230, %p231
    %p234 = scmp.ne.s32.totalorder %s219, %s233
    %p235 = scmp.eq.s32.totalorder %s26, 0
    %p236 = por %p234, %p235
    %s238 = sadd.s32 %s237, 1
    %p241 = scmp.eq.s32.totalorder %s20, 1
    %p242 = scmp.ne.s32.totalorder %s237, %s239
    %p243 = scmp.eq.s32.totalorder %s20, 0
    %p244 = por %p242, %p243
    %p245 = scmp.ne.s32.totalorder %s237, %s239
    %p246 = scmp.eq.s32.totalorder %s25, 1
    %p247 = por %p245, %p246
    %p248 = scmp.ne.s32.totalorder %s239, %s240
    %p249 = scmp.eq.s32.totalorder %s25, 0
    %p250 = por %p248, %p249
    %p251 = scmp.ne.s32.totalorder %s239, %s240
    %p252 = scmp.eq.s32.totalorder %s26, 1
    %p253 = por %p251, %p252
    %p255 = scmp.ne.s32.totalorder %s240, %s254
    %p256 = scmp.eq.s32.totalorder %s26, 0
    %p257 = por %p255, %p256
    %s259 = sadd.s32 %s258, 1
    %p262 = scmp.eq.s32.totalorder %s20, 1
    %p263 = scmp.ne.s32.totalorder %s258, %s260
    %p264 = scmp.eq.s32.totalorder %s20, 0
    %p265 = por %p263, %p264
    %p266 = scmp.ne.s32.totalorder %s258, %s260
    %p267 = scmp.eq.s32.totalorder %s25, 1
    %p268 = por %p266, %p267
    %p269 = scmp.ne.s32.totalorder %s260, %s261
    %p270 = scmp.eq.s32.totalorder %s25, 0
    %p271 = por %p269, %p270
    %p272 = scmp.ne.s32.totalorder %s260, %s261
    %p273 = scmp.eq.s32.totalorder %s26, 1
    %p274 = por %p272, %p273
    %p276 = scmp.ne.s32.totalorder %s261, %s275
    %p277 = scmp.eq.s32.totalorder %s26, 0
    %p278 = por %p276, %p277
    %s280 = sadd.s32 %s279, 1
    %p283 = scmp.eq.s32.totalorder %s20, 1
    %p284 = scmp.ne.s32.totalorder %s279, %s281
    %p285 = scmp.eq.s32.totalorder %s20, 0
    %p286 = por %p284, %p285
    %p287 = scmp.ne.s32.totalorder %s279, %s281
    %p288 = scmp.eq.s32.totalorder %s25, 1
    %p289 = por %p287, %p288
    %p290 = scmp.ne.s32.totalorder %s281, %s282
    %p291 = scmp.eq.s32.totalorder %s25, 0
    %p292 = por %p290, %p291
    %p293 = scmp.ne.s32.totalorder %s281, %s282
    %p294 = scmp.eq.s32.totalorder %s26, 1
    %p295 = por %p293, %p294
    %p297 = scmp.ne.s32.totalorder %s282, %s296
    %p298 = scmp.eq.s32.totalorder %s26, 0
    %p299 = por %p297, %p298
    %s301 = sadd.s32 %s300, 1
    %p304 = scmp.eq.s32.totalorder %s20, 1
    %p305 = scmp.ne.s32.totalorder %s300, %s302
    %p306 = scmp.eq.s32.totalorder %s20, 0
    %p307 = por %p305, %p306
    %p308 = scmp.ne.s32.totalorder %s300, %s302
    %p309 = scmp.eq.s32.totalorder %s25, 1
    %p310 = por %p308, %p309
    %p311 = scmp.ne.s32.totalorder %s302, %s303
    %p312 = scmp.eq.s32.totalorder %s25, 0
    %p313 = por %p311, %p312
    %p314 = scmp.ne.s32.totalorder %s302, %s303
    %p315 = scmp.eq.s32.totalorder %s26, 1
    %p316 = por %p314, %p315
    %p318 = scmp.ne.s32.totalorder %s303, %s317
    %p319 = scmp.eq.s32.totalorder %s26, 0
    %p320 = por %p318, %p319
    %s322 = sadd.s32 %s321, 1
    %p325 = scmp.eq.s32.totalorder %s20, 1
    %p326 = scmp.ne.s32.totalorder %s321, %s323
    %p327 = scmp.eq.s32.totalorder %s20, 0
    %p328 = por %p326, %p327
    %p329 = scmp.ne.s32.totalorder %s321, %s323
    %p330 = scmp.eq.s32.totalorder %s25, 1
    %p331 = por %p329, %p330
    %p332 = scmp.ne.s32.totalorder %s323, %s324
    %p333 = scmp.eq.s32.totalorder %s25, 0
    %p334 = por %p332, %p333
    %p335 = scmp.ne.s32.totalorder %s323, %s324
    %p336 = scmp.eq.s32.totalorder %s26, 1
    %p337 = por %p335, %p336
    %p339 = scmp.ne.s32.totalorder %s324, %s338
    %p340 = scmp.eq.s32.totalorder %s26, 0
    %p341 = por %p339, %p340
    %s342 = ssub.s32 %s20, %s27
    %p343 = scmp.eq.s32.totalorder %s342, 0
    %s345 = sadd.s32 %s344, 1
    %s346 = scalar_select %p343, %s344, %s345
    %p349 = pneg %p343
    %p350 = scmp.eq.s32.totalorder %s20, 1
    %p351 = por %p349, %p350
    %p352 = scmp.ne.s32.totalorder %s344, %s347
    %p353 = scmp.eq.s32.totalorder %s20, 0
    %p354 = por %p352, %p353
    %p355 = scmp.ne.s32.totalorder %s344, %s347
    %p356 = scmp.eq.s32.totalorder %s25, 1
    %p357 = por %p355, %p356
    %p358 = scmp.ne.s32.totalorder %s347, %s348
    %p359 = scmp.eq.s32.totalorder %s25, 0
    %p360 = por %p358, %p359
    %p361 = scmp.ne.s32.totalorder %s347, %s348
    %p362 = scmp.eq.s32.totalorder %s26, 1
    %p363 = por %p361, %p362
    %p365 = scmp.ne.s32.totalorder %s348, %s364
    %p366 = scmp.eq.s32.totalorder %s26, 0
    %p367 = por %p365, %p366
    %p368 = scmp.le.s32.totalorder 1, %s20
    %p369 = scmp.lt.s32.totalorder %s20, 3
    %p370 = pnand %p368, %p369
    %p371 = pneg %p370
    // Predicated region
    $region9: #{colt5_encoder_forward.8} parent=5 // pred_check
      _
    $region10: #{colt5_encoder_forward.8} parent=5 // pred_check_branch
      %373 = sbr.rel (%p370) target = $region12
    $region11: #{colt5_encoder_forward.8} parent=5 // pred_region
      %s374 = ssub.s32 %s20, 1
      // Predicated region
      $region13: #{colt5_encoder_forward.8} parent=11 // pred_check
        %p375 = pneg %p145
      $region14: #{colt5_encoder_forward.8} parent=11 // pred_check_branch
        %377 = sbr.rel (%p375) target = $region16
      $region15: #{colt5_encoder_forward.8} parent=11 // pred_region
        _
      $region16: #{colt5_encoder_forward.8} parent=11 // pred_fallthru
        _
      // Predicated region
      $region17: #{colt5_encoder_forward.8} parent=11 // pred_check
        %p378 = pneg %p166
      $region18: #{colt5_encoder_forward.8} parent=11 // pred_check_branch
        %380 = sbr.rel (%p378) target = $region20
      $region19: #{colt5_encoder_forward.8} parent=11 // pred_region
        _
      $region20: #{colt5_encoder_forward.8} parent=11 // pred_fallthru
        _
      // Predicated region
      $region21: #{colt5_encoder_forward.8} parent=11 // pred_check
        %p381 = pneg %p187
      $region22: #{colt5_encoder_forward.8} parent=11 // pred_check_branch
        %383 = sbr.rel (%p381) target = $region24
      $region23: #{colt5_encoder_forward.8} parent=11 // pred_region
        _
      $region24: #{colt5_encoder_forward.8} parent=11 // pred_fallthru
        _
      // Predicated region
      $region25: #{colt5_encoder_forward.8} parent=11 // pred_check
        %p384 = pneg %p208
      $region26: #{colt5_encoder_forward.8} parent=11 // pred_check_branch
        %386 = sbr.rel (%p384) target = $region28
      $region27: #{colt5_encoder_forward.8} parent=11 // pred_region
        _
      $region28: #{colt5_encoder_forward.8} parent=11 // pred_fallthru
        _
      // Predicated region
      $region29: #{colt5_encoder_forward.8} parent=11 // pred_check
        %p387 = pneg %p229
      $region30: #{colt5_encoder_forward.8} parent=11 // pred_check_branch
        %389 = sbr.rel (%p387) target = $region32
      $region31: #{colt5_encoder_forward.8} parent=11 // pred_region
        _
      $region32: #{colt5_encoder_forward.8} parent=11 // pred_fallthru
        _
      // Predicated region
      $region33: #{colt5_encoder_forward.8} parent=11 // pred_check
        %p390 = pneg %p250
      $region34: #{colt5_encoder_forward.8} parent=11 // pred_check_branch
        %392 = sbr.rel (%p390) target = $region36
      $region35: #{colt5_encoder_forward.8} parent=11 // pred_region
        _
      $region36: #{colt5_encoder_forward.8} parent=11 // pred_fallthru
        _
      // Predicated region
      $region37: #{colt5_encoder_forward.8} parent=11 // pred_check
        %p393 = pneg %p271
      $region38: #{colt5_encoder_forward.8} parent=11 // pred_check_branch
        %395 = sbr.rel (%p393) target = $region40
      $region39: #{colt5_encoder_forward.8} parent=11 // pred_region
        _
      $region40: #{colt5_encoder_forward.8} parent=11 // pred_fallthru
        _
      // Predicated region
      $region41: #{colt5_encoder_forward.8} parent=11 // pred_check
        %p396 = pneg %p292
      $region42: #{colt5_encoder_forward.8} parent=11 // pred_check_branch
        %398 = sbr.rel (%p396) target = $region44
      $region43: #{colt5_encoder_forward.8} parent=11 // pred_region
        _
      $region44: #{colt5_encoder_forward.8} parent=11 // pred_fallthru
        _
      // Predicated region
      $region45: #{colt5_encoder_forward.8} parent=11 // pred_check
        %p399 = pneg %p313
      $region46: #{colt5_encoder_forward.8} parent=11 // pred_check_branch
        %401 = sbr.rel (%p399) target = $region48
      $region47: #{colt5_encoder_forward.8} parent=11 // pred_region
        _
      $region48: #{colt5_encoder_forward.8} parent=11 // pred_fallthru
        _
      // Predicated region
      $region49: #{colt5_encoder_forward.8} parent=11 // pred_check
        %p402 = pneg %p334
      $region50: #{colt5_encoder_forward.8} parent=11 // pred_check_branch
        %404 = sbr.rel (%p402) target = $region52
      $region51: #{colt5_encoder_forward.8} parent=11 // pred_region
        _
      $region52: #{colt5_encoder_forward.8} parent=11 // pred_fallthru
        _
    $region12: #{colt5_encoder_forward.8} parent=5 // pred_fallthru
      _
    %p405 = scmp.lt.s32.totalorder %s20, 2
    // Predicated region
    $region53: #{colt5_encoder_forward.8} parent=5 // pred_check
      %p406 = pneg %p405
    $region54: #{colt5_encoder_forward.8} parent=5 // pred_check_branch
      %408 = sbr.rel (%p406) target = $region56
    $region55: #{colt5_encoder_forward.8} parent=5 // pred_region
      // Predicated region
      $region57: #{colt5_encoder_forward.8} parent=55 // pred_check
        %p409 = pneg %p40
      $region58: #{colt5_encoder_forward.8} parent=55 // pred_check_branch
        %411 = sbr.rel (%p409) target = $region60
      $region59: #{colt5_encoder_forward.8} parent=55 // pred_region
        %p412 = scmp.lt.s32.totalorder %s20, 1
        %s413 = scalar_select %p412, %s20, 1
        %s414 = smul.addr %s413, 8
        %s415 = scalar_lea.vmem %s0, %s414
      $region60: #{colt5_encoder_forward.8} parent=55 // pred_fallthru
        _
      // Predicated region
      $region61: #{colt5_encoder_forward.8} parent=55 // pred_check
        %p416 = pneg %p66
      $region62: #{colt5_encoder_forward.8} parent=55 // pred_check_branch
        %418 = sbr.rel (%p416) target = $region64
      $region63: #{colt5_encoder_forward.8} parent=55 // pred_region
        %p419 = scmp.lt.s32.totalorder %s20, 1
        %s420 = scalar_select %p419, %s20, 1
        %s421 = smul.addr %s420, 4
        %s422 = scalar_lea.vmem %s1, %s421
      $region64: #{colt5_encoder_forward.8} parent=55 // pred_fallthru
        _
      // Predicated region
      $region65: #{colt5_encoder_forward.8} parent=55 // pred_check
        %p423 = pneg %p92
      $region66: #{colt5_encoder_forward.8} parent=55 // pred_check_branch
        %425 = sbr.rel (%p423) target = $region68
      $region67: #{colt5_encoder_forward.8} parent=55 // pred_region
        %p426 = scmp.lt.s32.totalorder %s20, 1
        %s427 = scalar_select %p426, %s20, 1
        %s428 = smul.addr %s427, 8
        %s429 = scalar_lea.vmem %s2, %s428
      $region68: #{colt5_encoder_forward.8} parent=55 // pred_fallthru
        _
      // Predicated region
      $region69: #{colt5_encoder_forward.8} parent=55 // pred_check
        %p430 = pneg %p118
      $region70: #{colt5_encoder_forward.8} parent=55 // pred_check_branch
        %432 = sbr.rel (%p430) target = $region72
      $region71: #{colt5_encoder_forward.8} parent=55 // pred_region
        %p433 = scmp.lt.s32.totalorder %s20, 1
        %s434 = scalar_select %p433, %s20, 1
        %s435 = smul.addr %s434, 4
        %s436 = scalar_lea.vmem %s3, %s435
      $region72: #{colt5_encoder_forward.8} parent=55 // pred_fallthru
        _
    $region56: #{colt5_encoder_forward.8} parent=5 // pred_fallthru
      _
    %p437 = scmp.le.s32.totalorder 1, %s20
    %p438 = scmp.lt.s32.totalorder %s20, 3
    %p439 = pnand %p437, %p438
    %p440 = pneg %p439
    // Predicated region
    $region73: #{colt5_encoder_forward.8} parent=5 // pred_check
      _
    $region74: #{colt5_encoder_forward.8} parent=5 // pred_check_branch
      %442 = sbr.rel (%p439) target = $region76
    $region75: #{colt5_encoder_forward.8} parent=5 // pred_region
      %s443 = ssub.s32 %s20, 1
      %p444 = scmp.lt.s32.totalorder %s25, 1
      %s445 = scalar_select %p444, %s25, 1
      %s446 = smul.addr %s445, 8
      %s447 = scalar_lea.vmem %s0, %s446
      %p448 = pneg %p46
      %p449 = pneg %p43
      %p450 = scmp.lt.s32.totalorder %s25, 1
      %s451 = scalar_select %p450, %s25, 1
      %s452 = smul.addr %s451, 4
      %s453 = scalar_lea.vmem %s1, %s452
      %p454 = pneg %p72
      %p455 = pneg %p69
      %p456 = scmp.lt.s32.totalorder %s25, 1
      %s457 = scalar_select %p456, %s25, 1
      %s458 = smul.addr %s457, 8
      %s459 = scalar_lea.vmem %s2, %s458
      %p460 = pneg %p98
      %p461 = pneg %p95
      %p462 = scmp.lt.s32.totalorder %s25, 1
      %s463 = scalar_select %p462, %s25, 1
      %s464 = smul.addr %s463, 4
      %s465 = scalar_lea.vmem %s3, %s464
      %p466 = pneg %p124
      %p467 = pneg %p121
      %p468 = pneg %p145
      %p469 = pneg %p142
      %p470 = pneg %p166
      %p471 = pneg %p163
      %p472 = pneg %p187
      %p473 = pneg %p184
      %p474 = pneg %p208
      %p475 = pneg %p205
      %p476 = pneg %p229
      %p477 = pneg %p226
      %p478 = pneg %p250
      %p479 = pneg %p247
      %p480 = pneg %p271
      %p481 = pneg %p268
      %p482 = pneg %p292
      %p483 = pneg %p289
      %p484 = pneg %p313
      %p485 = pneg %p310
      %p486 = pneg %p334
      %p487 = pneg %p331
      %p488 = pneg %p360
      %p489 = pneg %p357
      %p490 = scmp.lt.s32.totalorder %s25, 1
      %s491 = scalar_select %p490, %s25, 1
      %s492 = smul.addr %s491, 8
      %s493 = scalar_lea.vmem %s14, %s492
      %p494 = scmp.lt.s32.totalorder %s25, 1
      %s495 = scalar_select %p494, %s25, 1
      %s496 = smul.addr %s495, 8
      %s497 = scalar_lea.vmem %s0, %s496
      %p498 = scmp.lt.s32.totalorder %s25, 1
      %s499 = scalar_select %p498, %s25, 1
      %s500 = smul.addr %s499, 4
      %s501 = scalar_lea.vmem %s1, %s500
      %p502 = scmp.lt.s32.totalorder %s25, 1
      %s503 = scalar_select %p502, %s25, 1
      %s504 = smul.addr %s503, 8
      %s505 = scalar_lea.vmem %s2, %s504
      %p506 = scmp.lt.s32.totalorder %s25, 1
      %s507 = scalar_select %p506, %s25, 1
      %s508 = smul.addr %s507, 4
      %s509 = scalar_lea.vmem %s3, %s508
      %p510 = scmp.lt.s32.totalorder %s25, 1
      %s511 = scalar_select %p510, %s25, 1
      %s512 = smul.addr %s511, 8
      %s513 = scalar_lea.vmem %s14, %s512
      %v515 = vld [vmem:[%s497] sm:$0xff]
      %v516 = vld [vmem:[%s4] sm:$0x1]
      %v517 = vld [vmem:[%s6] sm:$0x1]
      %v518 = vld [vmem:[%s8] sm:$0x1]
      %v519 = vmul.f32 %v515, %v515
      %vm520 = vcmask 261120
      %v521 = vsel %vm520, %v519, 0.0
      %522 = vadd.xlane.f32.xlu0 %v521
      %v523 = vpop.xlane.xlu0 %522
      %v524 = vrcp.pop 32.0
      %v525 = vmul.f32 %v523, %v524
      %v526 = vadd.f32 %v525, 1e-06
      %v527 = vrsqrt.pop %v526
      %v528 = vmul.f32 %v515, %v527
      %v530 = vlaneseq
      %v531 = vshrl.u32 %v530, 7
      %v532 = vsub.s32 0, %v531
      %v533 = vrot.slane %v516, %v532
      %v535 = vmul.f32 %v528, %v533
      %v536 = vpack.c.bf16 %v535, %v535
      %v537 = vld [vmem:[%s5] sm:$0xf]
      %v538 = vld [vmem:[%s5 + $0x4] sm:$0xf]
      %v539 = vld [vmem:[%s5 + $0x8] sm:$0xf]
      %v540 = vld [vmem:[%s5 + $0xc] sm:$0xf]
      %v542 = vlaneseq
      %v543 = vshrl.u32 %v542, 7
      %v544 = vsub.s32 0, %v543
      %v545 = vrot.slane %v517, %v544
      %v551 = vunpack.c.l.b16 %v537
      %v552 = vunpack.c.l.b16 %v538
      %v553 = vunpack.c.l.b16 %v539
      %v554 = vunpack.c.l.b16 %v540
      %v555 = vpack.c.b16 %v552, %v551
      %v556 = vpack.c.b16 %v554, %v553
      %v560 = vsel %vm520, %v536, 0
      %562 = vmatprep.subr.bf16.mxu0 0
      %563 = vmatpush1.bf16.msra.mxu0 %v555
      %564 = vmatprep.subr.bf16.mxu0 0
      %565 = vmatpush1.bf16.msra.mxu0 %v556
      %566 = vmatprep.subr.bf16.mxu0 0
      %567 = vmatpush1.bf16.msra.mxu0 0
      %568 = vmatprep.subr.bf16.mxu0 0
      %569 = vmatpush1.bf16.msra.mxu0 0
      %570 = vmatprep.subr.bf16.mxu0 0
      %571 = vmatpush1.bf16.msra.mxu0 0
      %572 = vmatprep.subr.bf16.mxu0 0
      %573 = vmatpush1.bf16.msra.mxu0 0
      %574 = vmatprep.subr.bf16.mxu0 0
      %575 = vmatpush1.bf16.msra.mxu0 0
      %576 = vmatprep.subr.bf16.mxu0 0
      %577 = vmatpush1.bf16.msra.mxu0 0
      %578 = vmatprep.subr.bf16.mxu0 0
      %579 = vmatpush1.bf16.msra.mxu0 0
      %580 = vmatprep.subr.bf16.mxu0 0
      %581 = vmatpush1.bf16.msra.mxu0 0
      %582 = vmatprep.subr.bf16.mxu0 0
      %583 = vmatpush1.bf16.msra.mxu0 0
      %584 = vmatprep.subr.bf16.mxu0 0
      %585 = vmatpush1.bf16.msra.mxu0 0
      %586 = vmatprep.subr.bf16.mxu0 0
      %587 = vmatpush1.bf16.msra.mxu0 0
      %588 = vmatprep.subr.bf16.mxu0 0
      %589 = vmatpush1.bf16.msra.mxu0 0
      %590 = vmatprep.subr.bf16.mxu0 0
      %591 = vmatpush1.bf16.msra.mxu0 0
      %592 = vmatprep.subr.bf16.mxu0 0
      %593 = vmatpush1.bf16.msra.mxu0 0
      %594 = vmatprep.mubr.bf16.mxu0 0
      %595 = vmatmul.mubr.bf16.gmra.mrb[0].mxu0 %v560
      %v596 = vpop.f32.mrb[0].mxu0
      %v597 = vadd.f32 %v545, %v596
      %v598 = vpop.f32.mrb[0].mxu0
      %v599 = vpop.f32.mrb[0].mxu0
      %v600 = vpop.f32.mrb[0].mxu0
      %601 = vdwg.mxu0
      %v602 = vmul.f32 %v597, %v597
      %v603 = vmul.f32 %v597, %v602
      %v604 = vmul.f32 %v603, 0.044715
      %v605 = vadd.f32 %v597, %v604
      %v606 = vmul.f32 %v605, 0.7978846
      %v607 = vtanh.pop %v606
      %v608 = vadd.f32 %v607, 1.0
      %v609 = vmul.f32 %v608, 0.5
      %v610 = vmul.f32 %v597, %v609
      %v611 = vpack.c.bf16 %v610, %v610
      %v612 = vld [vmem:[%s7] sm:$0xf]
      %v613 = vld [vmem:[%s7 + $0x4] sm:$0xf]
      %v615 = vlaneseq
      %v616 = vshrl.u32 %v615, 7
      %v617 = vsub.s32 0, %v616
      %v618 = vrot.slane %v518, %v617
      %v622 = vunpack.c.l.b16 %v612
      %v623 = vunpack.c.l.b16 %v613
      %v624 = vpack.c.b16 %v623, %v622
      %vm626 = vcmask 130048
      %v628 = vsel %vm626, %v611, 0
      %630 = vmatprep.subr.bf16.mxu0 0
      %631 = vmatpush1.bf16.msra.mxu0 %v624
      %632 = vmatprep.subr.bf16.mxu0 0
      %633 = vmatpush1.bf16.msra.mxu0 0
      %634 = vmatprep.subr.bf16.mxu0 0
      %635 = vmatpush1.bf16.msra.mxu0 0
      %636 = vmatprep.subr.bf16.mxu0 0
      %637 = vmatpush1.bf16.msra.mxu0 0
      %638 = vmatprep.subr.bf16.mxu0 0
      %639 = vmatpush1.bf16.msra.mxu0 0
      %640 = vmatprep.subr.bf16.mxu0 0
      %641 = vmatpush1.bf16.msra.mxu0 0
      %642 = vmatprep.subr.bf16.mxu0 0
      %643 = vmatpush1.bf16.msra.mxu0 0
      %644 = vmatprep.subr.bf16.mxu0 0
      %645 = vmatpush1.bf16.msra.mxu0 0
      %646 = vmatprep.subr.bf16.mxu0 0
      %647 = vmatpush1.bf16.msra.mxu0 0
      %648 = vmatprep.subr.bf16.mxu0 0
      %649 = vmatpush1.bf16.msra.mxu0 0
      %650 = vmatprep.subr.bf16.mxu0 0
      %651 = vmatpush1.bf16.msra.mxu0 0
      %652 = vmatprep.subr.bf16.mxu0 0
      %653 = vmatpush1.bf16.msra.mxu0 0
      %654 = vmatprep.subr.bf16.mxu0 0
      %655 = vmatpush1.bf16.msra.mxu0 0
      %656 = vmatprep.subr.bf16.mxu0 0
      %657 = vmatpush1.bf16.msra.mxu0 0
      %658 = vmatprep.subr.bf16.mxu0 0
      %659 = vmatpush1.bf16.msra.mxu0 0
      %660 = vmatprep.subr.bf16.mxu0 0
      %661 = vmatpush1.bf16.msra.mxu0 0
      %662 = vmatprep.mubr.bf16.mxu0 0
      %663 = vmatmul.mubr.bf16.gmra.mrb[0].mxu0 %v628
      %v664 = vpop.f32.mrb[0].mxu0
      %v665 = vadd.f32 %v618, %v664
      %v666 = vpop.f32.mrb[0].mxu0
      %v667 = vpop.f32.mrb[0].mxu0
      %v668 = vpop.f32.mrb[0].mxu0
      %669 = vdwg.mxu0
      %v670 = vld [vmem:[%s501] sm:$0xf]
      %vm671 = vcmask 64512
      %v673 = vsel %vm671, %v670, 0
      %675 = vmatprep.subr.mxu0 0.0
      %676 = vmatpush1.msra.mxu0 %v515
      %677 = vmatprep.subr.mxu0 0.0
      %678 = vmatpush1.msra.mxu0 0.0
      %679 = vmatprep.subr.mxu0 0.0
      %680 = vmatpush1.msra.mxu0 0.0
      %681 = vmatprep.subr.mxu0 0.0
      %682 = vmatpush1.msra.mxu0 0.0
      %683 = vmatprep.subr.mxu0 0.0
      %684 = vmatpush1.msra.mxu0 0.0
      %685 = vmatprep.subr.mxu0 0.0
      %686 = vmatpush1.msra.mxu0 0.0
      %687 = vmatprep.subr.mxu0 0.0
      %688 = vmatpush1.msra.mxu0 0.0
      %689 = vmatprep.subr.mxu0 0.0
      %690 = vmatpush1.msra.mxu0 0.0
      %691 = vmatprep.subr.mxu0 0.0
      %692 = vmatpush1.msra.mxu0 0.0
      %693 = vmatprep.subr.mxu0 0.0
      %694 = vmatpush1.msra.mxu0 0.0
      %695 = vmatprep.subr.mxu0 0.0
      %696 = vmatpush1.msra.mxu0 0.0
      %697 = vmatprep.subr.mxu0 0.0
      %698 = vmatpush1.msra.mxu0 0.0
      %699 = vmatprep.subr.mxu0 0.0
      %700 = vmatpush1.msra.mxu0 0.0
      %701 = vmatprep.subr.mxu0 0.0
      %702 = vmatpush1.msra.mxu0 0.0
      %703 = vmatprep.subr.mxu0 0.0
      %704 = vmatpush1.msra.mxu0 0.0
      %705 = vmatprep.subr.mxu0 0.0
      %706 = vmatpush1.msra.mxu0 0.0
      %707 = vmatprep.subr.mxu0 0.0
      %708 = vmatpush1.msra.mxu0 0.0
      %709 = vmatprep.subr.mxu0 0.0
      %710 = vmatpush1.msra.mxu0 0.0
      %711 = vmatprep.subr.mxu0 0.0
      %712 = vmatpush1.msra.mxu0 0.0
      %713 = vmatprep.subr.mxu0 0.0
      %714 = vmatpush1.msra.mxu0 0.0
      %715 = vmatprep.subr.mxu0 0.0
      %716 = vmatpush1.msra.mxu0 0.0
      %717 = vmatprep.subr.mxu0 0.0
      %718 = vmatpush1.msra.mxu0 0.0
      %719 = vmatprep.subr.mxu0 0.0
      %720 = vmatpush1.msra.mxu0 0.0
      %721 = vmatprep.subr.mxu0 0.0
      %722 = vmatpush1.msra.mxu0 0.0
      %723 = vmatprep.subr.mxu0 0.0
      %724 = vmatpush1.msra.mxu0 0.0
      %725 = vmatprep.subr.mxu0 0.0
      %726 = vmatpush1.msra.mxu0 0.0
      %727 = vmatprep.subr.mxu0 0.0
      %728 = vmatpush1.msra.mxu0 0.0
      %729 = vmatprep.subr.mxu0 0.0
      %730 = vmatpush1.msra.mxu0 0.0
      %731 = vmatprep.subr.mxu0 0.0
      %732 = vmatpush1.msra.mxu0 0.0
      %733 = vmatprep.subr.mxu0 0.0
      %734 = vmatpush1.msra.mxu0 0.0
      %735 = vmatprep.subr.mxu0 0.0
      %736 = vmatpush1.msra.mxu0 0.0
      %737 = vmatprep.subr.mxu0 0.0
      %738 = vmatpush1.msra.mxu0 0.0
      %739 = vmatprep.mubr.f32.mxu0 0.0
      %740 = vmatmul.mubr.f32.gmra.mrb[0].mxu0 %v673
      %v741 = vpop.f32.mrb[0].mxu0
      %v742 = vadd.f32 0.0, %v741
      %v743 = vpop.f32.mrb[0].mxu0
      %744 = vdwg.mxu0
      %v745 = vld [vmem:[%s9] sm:$0x1]
      %v746 = vld [vmem:[%s11] sm:$0x1]
      %v747 = vld [vmem:[%s13] sm:$0x1]
      %v748 = vmul.f32 %v742, %v742
      %vm749 = vcmask 257024
      %v750 = vsel %vm749, %v748, 0.0
      %751 = vadd.xlane.f32.xlu0 %v750
      %v752 = vpop.xlane.xlu0 %751
      %v753 = vmul.f32 %v752, %v524
      %v754 = vadd.f32 %v753, 1e-06
      %v755 = vrsqrt.pop %v754
      %v756 = vmul.f32 %v742, %v755
      %v758 = vlaneseq
      %v759 = vshrl.u32 %v758, 7
      %v760 = vsub.s32 0, %v759
      %v761 = vrot.slane %v745, %v760
      %v763 = vmul.f32 %v756, %v761
      %v764 = vpack.c.bf16 %v763, %v763
      %v765 = vld [vmem:[%s10] sm:$0xf]
      %v766 = vld [vmem:[%s10 + $0x4] sm:$0xf]
      %v767 = vld [vmem:[%s10 + $0x8] sm:$0xf]
      %v768 = vld [vmem:[%s10 + $0xc] sm:$0xf]
      %v770 = vlaneseq
      %v771 = vshrl.u32 %v770, 7
      %v772 = vsub.s32 0, %v771
      %v773 = vrot.slane %v746, %v772
      %v779 = vunpack.c.l.b16 %v765
      %v780 = vunpack.c.l.b16 %v766
      %v781 = vunpack.c.l.b16 %v767
      %v782 = vunpack.c.l.b16 %v768
      %v783 = vpack.c.b16 %v780, %v779
      %v784 = vpack.c.b16 %v782, %v781
      %v788 = vsel %vm520, %v764, 0
      %790 = vmatprep.subr.bf16.mxu0 0
      %791 = vmatpush1.bf16.msra.mxu0 %v783
      %792 = vmatprep.subr.bf16.mxu0 0
      %793 = vmatpush1.bf16.msra.mxu0 %v784
      %794 = vmatprep.subr.bf16.mxu0 0
      %795 = vmatpush1.bf16.msra.mxu0 0
      %796 = vmatprep.subr.bf16.mxu0 0
      %797 = vmatpush1.bf16.msra.mxu0 0
      %798 = vmatprep.subr.bf16.mxu0 0
      %799 = vmatpush1.bf16.msra.mxu0 0
      %800 = vmatprep.subr.bf16.mxu0 0
      %801 = vmatpush1.bf16.msra.mxu0 0
      %802 = vmatprep.subr.bf16.mxu0 0
      %803 = vmatpush1.bf16.msra.mxu0 0
      %804 = vmatprep.subr.bf16.mxu0 0
      %805 = vmatpush1.bf16.msra.mxu0 0
      %806 = vmatprep.subr.bf16.mxu0 0
      %807 = vmatpush1.bf16.msra.mxu0 0
      %808 = vmatprep.subr.bf16.mxu0 0
      %809 = vmatpush1.bf16.msra.mxu0 0
      %810 = vmatprep.subr.bf16.mxu0 0
      %811 = vmatpush1.bf16.msra.mxu0 0
      %812 = vmatprep.subr.bf16.mxu0 0
      %813 = vmatpush1.bf16.msra.mxu0 0
      %814 = vmatprep.subr.bf16.mxu0 0
      %815 = vmatpush1.bf16.msra.mxu0 0
      %816 = vmatprep.subr.bf16.mxu0 0
      %817 = vmatpush1.bf16.msra.mxu0 0
      %818 = vmatprep.subr.bf16.mxu0 0
      %819 = vmatpush1.bf16.msra.mxu0 0
      %820 = vmatprep.subr.bf16.mxu0 0
      %821 = vmatpush1.bf16.msra.mxu0 0
      %822 = vmatprep.mubr.bf16.mxu0 0
      %823 = vmatmul.mubr.bf16.gmra.mrb[0].mxu0 %v788
      %v824 = vpop.f32.mrb[0].mxu0
      %v825 = vadd.f32 %v773, %v824
      %v826 = vpop.f32.mrb[0].mxu0
      %v827 = vpop.f32.mrb[0].mxu0
      %v828 = vpop.f32.mrb[0].mxu0
      %829 = vdwg.mxu0
      %v830 = vmul.f32 %v825, %v825
      %v831 = vmul.f32 %v825, %v830
      %v832 = vmul.f32 %v831, 0.044715
      %v833 = vadd.f32 %v825, %v832
      %v834 = vmul.f32 %v833, 0.7978846
      %v835 = vtanh.pop %v834
      %v836 = vadd.f32 %v835, 1.0
      %v837 = vmul.f32 %v836, 0.5
      %v838 = vmul.f32 %v825, %v837
      %v839 = vpack.c.bf16 %v838, %v838
      %v840 = vld [vmem:[%s12] sm:$0xf]
      %v841 = vld [vmem:[%s12 + $0x4] sm:$0xf]
      %v842 = vld [vmem:[%s12 + $0x8] sm:$0xf]
      %v843 = vld [vmem:[%s12 + $0xc] sm:$0xf]
      %v844 = vld [vmem:[%s12 + $0x10] sm:$0xf]
      %v845 = vld [vmem:[%s12 + $0x14] sm:$0xf]
      %v846 = vld [vmem:[%s12 + $0x18] sm:$0xf]
      %v847 = vld [vmem:[%s12 + $0x1c] sm:$0xf]
      %v848 = vld [vmem:[%s12 + $0x20] sm:$0xf]
      %v849 = vld [vmem:[%s12 + $0x24] sm:$0xf]
      %v850 = vld [vmem:[%s12 + $0x28] sm:$0xf]
      %v851 = vld [vmem:[%s12 + $0x2c] sm:$0xf]
      %v852 = vld [vmem:[%s12 + $0x30] sm:$0xf]
      %v853 = vld [vmem:[%s12 + $0x34] sm:$0xf]
      %v854 = vld [vmem:[%s12 + $0x38] sm:$0xf]
      %v855 = vld [vmem:[%s12 + $0x3c] sm:$0xf]
      %v857 = vlaneseq
      %v858 = vshrl.u32 %v857, 7
      %v859 = vsub.s32 0, %v858
      %v860 = vrot.slane %v747, %v859
      %v878 = vunpack.c.l.b16 %v840
      %v879 = vunpack.c.l.b16 %v841
      %v880 = vunpack.c.l.b16 %v842
      %v881 = vunpack.c.l.b16 %v843
      %v882 = vunpack.c.l.b16 %v844
      %v883 = vunpack.c.l.b16 %v845
      %v884 = vunpack.c.l.b16 %v846
      %v885 = vunpack.c.l.b16 %v847
      %v886 = vunpack.c.l.b16 %v848
      %v887 = vunpack.c.l.b16 %v849
      %v888 = vunpack.c.l.b16 %v850
      %v889 = vunpack.c.l.b16 %v851
      %v890 = vunpack.c.l.b16 %v852
      %v891 = vunpack.c.l.b16 %v853
      %v892 = vunpack.c.l.b16 %v854
      %v893 = vunpack.c.l.b16 %v855
      %v894 = vpack.c.b16 %v879, %v878
      %v895 = vpack.c.b16 %v881, %v880
      %v896 = vpack.c.b16 %v883, %v882
      %v897 = vpack.c.b16 %v885, %v884
      %v898 = vpack.c.b16 %v887, %v886
      %v899 = vpack.c.b16 %v889, %v888
      %v900 = vpack.c.b16 %v891, %v890
      %v901 = vpack.c.b16 %v893, %v892
      %910 = vmatprep.subr.bf16.mxu0 0
      %911 = vmatpush1.bf16.msra.mxu0 %v894
      %912 = vmatprep.subr.bf16.mxu0 0
      %913 = vmatpush1.bf16.msra.mxu0 %v895
      %914 = vmatprep.subr.bf16.mxu0 0
      %915 = vmatpush1.bf16.msra.mxu0 %v896
      %916 = vmatprep.subr.bf16.mxu0 0
      %917 = vmatpush1.bf16.msra.mxu0 %v897
      %918 = vmatprep.subr.bf16.mxu0 0
      %919 = vmatpush1.bf16.msra.mxu0 %v898
      %920 = vmatprep.subr.bf16.mxu0 0
      %921 = vmatpush1.bf16.msra.mxu0 %v899
      %922 = vmatprep.subr.bf16.mxu0 0
      %923 = vmatpush1.bf16.msra.mxu0 %v900
      %924 = vmatprep.subr.bf16.mxu0 0
      %925 = vmatpush1.bf16.msra.mxu0 %v901
      %926 = vmatprep.subr.bf16.mxu0 0
      %927 = vmatpush1.bf16.msra.mxu0 0
      %928 = vmatprep.subr.bf16.mxu0 0
      %929 = vmatpush1.bf16.msra.mxu0 0
      %930 = vmatprep.subr.bf16.mxu0 0
      %931 = vmatpush1.bf16.msra.mxu0 0
      %932 = vmatprep.subr.bf16.mxu0 0
      %933 = vmatpush1.bf16.msra.mxu0 0
      %934 = vmatprep.subr.bf16.mxu0 0
      %935 = vmatpush1.bf16.msra.mxu0 0
      %936 = vmatprep.subr.bf16.mxu0 0
      %937 = vmatpush1.bf16.msra.mxu0 0
      %938 = vmatprep.subr.bf16.mxu0 0
      %939 = vmatpush1.bf16.msra.mxu0 0
      %940 = vmatprep.subr.bf16.mxu0 0
      %941 = vmatpush1.bf16.msra.mxu0 0
      %942 = vmatprep.mubr.bf16.mxu0 0
      %943 = vmatmul.mubr.bf16.gmra.mrb[0].mxu0 %v839
      %v944 = vpop.f32.mrb[0].mxu0
      %v945 = vadd.f32 %v860, %v944
      %v946 = vpop.f32.mrb[0].mxu0
      %v947 = vpop.f32.mrb[0].mxu0
      %v948 = vpop.f32.mrb[0].mxu0
      %949 = vdwg.mxu0
      %v950 = vld [vmem:[%s509] sm:$0xf]
      %952 = vset.pattern.permute.xlu0 0
      %953 = vperm.xlu0 %952, %v950
      %v954 = vpop.permute.xlu0 %953
      %v956 = vmul.f32 %v945, %v954
      %v957 = vld [vmem:[%s505] sm:$0xff]
      %vm958 = vcmask 31744
      %v960 = vsel %vm958, %v957, 0
      %vm962 = vcmask 1043456
      %v964 = vsel %vm962, %v956, 0
      %966 = vmatprep.subr.mxu0 0.0
      %967 = vmatpush1.msra.mxu0 %v964
      %968 = vmatprep.subr.mxu0 0.0
      %969 = vmatpush1.msra.mxu0 0.0
      %970 = vmatprep.subr.mxu0 0.0
      %971 = vmatpush1.msra.mxu0 0.0
      %972 = vmatprep.subr.mxu0 0.0
      %973 = vmatpush1.msra.mxu0 0.0
      %974 = vmatprep.subr.mxu0 0.0
      %975 = vmatpush1.msra.mxu0 0.0
      %976 = vmatprep.subr.mxu0 0.0
      %977 = vmatpush1.msra.mxu0 0.0
      %978 = vmatprep.subr.mxu0 0.0
      %979 = vmatpush1.msra.mxu0 0.0
      %980 = vmatprep.subr.mxu0 0.0
      %981 = vmatpush1.msra.mxu0 0.0
      %982 = vmatprep.subr.mxu0 0.0
      %983 = vmatpush1.msra.mxu0 0.0
      %984 = vmatprep.subr.mxu0 0.0
      %985 = vmatpush1.msra.mxu0 0.0
      %986 = vmatprep.subr.mxu0 0.0
      %987 = vmatpush1.msra.mxu0 0.0
      %988 = vmatprep.subr.mxu0 0.0
      %989 = vmatpush1.msra.mxu0 0.0
      %990 = vmatprep.subr.mxu0 0.0
      %991 = vmatpush1.msra.mxu0 0.0
      %992 = vmatprep.subr.mxu0 0.0
      %993 = vmatpush1.msra.mxu0 0.0
      %994 = vmatprep.subr.mxu0 0.0
      %995 = vmatpush1.msra.mxu0 0.0
      %996 = vmatprep.subr.mxu0 0.0
      %997 = vmatpush1.msra.mxu0 0.0
      %998 = vmatprep.subr.mxu0 0.0
      %999 = vmatpush1.msra.mxu0 0.0
      %1000 = vmatprep.subr.mxu0 0.0
      %1001 = vmatpush1.msra.mxu0 0.0
      %1002 = vmatprep.subr.mxu0 0.0
      %1003 = vmatpush1.msra.mxu0 0.0
      %1004 = vmatprep.subr.mxu0 0.0
      %1005 = vmatpush1.msra.mxu0 0.0
      %1006 = vmatprep.subr.mxu0 0.0
      %1007 = vmatpush1.msra.mxu0 0.0
      %1008 = vmatprep.subr.mxu0 0.0
      %1009 = vmatpush1.msra.mxu0 0.0
      %1010 = vmatprep.subr.mxu0 0.0
      %1011 = vmatpush1.msra.mxu0 0.0
      %1012 = vmatprep.subr.mxu0 0.0
      %1013 = vmatpush1.msra.mxu0 0.0
      %1014 = vmatprep.subr.mxu0 0.0
      %1015 = vmatpush1.msra.mxu0 0.0
      %1016 = vmatprep.subr.mxu0 0.0
      %1017 = vmatpush1.msra.mxu0 0.0
      %1018 = vmatprep.subr.mxu0 0.0
      %1019 = vmatpush1.msra.mxu0 0.0
      %1020 = vmatprep.subr.mxu0 0.0
      %1021 = vmatpush1.msra.mxu0 0.0
      %1022 = vmatprep.subr.mxu0 0.0
      %1023 = vmatpush1.msra.mxu0 0.0
      %1024 = vmatprep.subr.mxu0 0.0
      %1025 = vmatpush1.msra.mxu0 0.0
      %1026 = vmatprep.subr.mxu0 0.0
      %1027 = vmatpush1.msra.mxu0 0.0
      %1028 = vmatprep.subr.mxu0 0.0
      %1029 = vmatpush1.msra.mxu0 0.0
      %1030 = vmatprep.mubr.f32.mxu0 0.0
      %1031 = vmatmul.mubr.f32.gmra.mrb[0].mxu0 %v960
      %v1032 = vpop.f32.mrb[0].mxu0
      %v1033 = vadd.f32 0.0, %v1032
      %v1034 = vpop.f32.mrb[0].mxu0
      %1035 = vdwg.mxu0
      %v1036 = vadd.f32 %v665, %v1033
      %1037 = vst.msk [vmem:[%s513] sm:$0xff] %vm520, %v1036
      %p1038 = scmp.lt.s32.totalorder %s25, 1
      %s1039 = scalar_select %p1038, %s25, 1
      %s1040 = smul.addr %s1039, 8
      %s1041 = scalar_lea.vmem %s14, %s1040
      // Predicated region
      $region77: #{colt5_encoder_forward.8} parent=75 // pred_check
        %p1042 = pneg %p357
      $region78: #{colt5_encoder_forward.8} parent=75 // pred_check_branch
        %1044 = sbr.rel (%p1042) target = $region80
      $region79: #{colt5_encoder_forward.8} parent=75 // pred_region
        _
      $region80: #{colt5_encoder_forward.8} parent=75 // pred_fallthru
        _
    $region76: #{colt5_encoder_forward.8} parent=5 // pred_fallthru
      _
    %p1045 = scmp.le.s32.totalorder 2, %s20
    // Predicated region
    $region81: #{colt5_encoder_forward.8} parent=5 // pred_check
      %p1046 = pneg %p1045
    $region82: #{colt5_encoder_forward.8} parent=5 // pred_check_branch
      %1048 = sbr.rel (%p1046) target = $region84
    $region83: #{colt5_encoder_forward.8} parent=5 // pred_region
      %s1049 = ssub.s32 %s20, 2
      // Predicated region
      $region85: #{colt5_encoder_forward.8} parent=83 // pred_check
        %p1050 = pneg %p363
      $region86: #{colt5_encoder_forward.8} parent=83 // pred_check_branch
        %1052 = sbr.rel (%p1050) target = $region88
      $region87: #{colt5_encoder_forward.8} parent=83 // pred_region
        %p1053 = scmp.lt.s32.totalorder %s26, 1
        %s1054 = scalar_select %p1053, %s26, 1
        %s1055 = smul.addr %s1054, 8
        %s1056 = scalar_lea.vmem %s14, %s1055
      $region88: #{colt5_encoder_forward.8} parent=83 // pred_fallthru
        _
    $region84: #{colt5_encoder_forward.8} parent=5 // pred_fallthru
      _
  $region6: #{colt5_encoder_forward.8} parent=0 // loop_footer
    %s24 = sadd.s32 1, %s20
  $region7: #{colt5_encoder_forward.8} parent=0 // loop_footer_branch
    %19 = sbr.rel target = $region3
  $region8: #{colt5_encoder_forward.8} parent=0 // loop_exit
    _

// kernel: colt5_encoder_forward.11
$region0: #{colt5_encoder_forward.11}
  #allocation0 [shape = 'u32[]', space=smem, size = 0x4, offset = 0x4, fixed_abs, tag = 'smem constant byte address 0x4 - core index']
  #allocation1 [shape = 'u32[144,128]{1,0:T(1,128)}', space=vmem, size = 0x12000, scoped, tag = 'internal scratch']
  %s0 = inlined_call_operand.vmem [shape: f32[2,8,32], index: 0, kind: input, shape index: {}]
  %s1 = inlined_call_operand.vmem [shape: f32[2,4,8], index: 1, kind: input, shape index: {}]
  %s2 = inlined_call_operand.vmem [shape: f32[2,8,4], index: 2, kind: input, shape index: {}]
  %s3 = inlined_call_operand.vmem [shape: f32[2,4,1], index: 3, kind: input, shape index: {}]
  %s4 = inlined_call_operand.hbm [shape: f32[1,32], index: 4, kind: input, shape index: {}]
  %s5 = inlined_call_operand.vmem [shape: bf16[32,16], index: 5, kind: input, shape index: {}]
  %s6 = inlined_call_operand.hbm [shape: f32[1,16], index: 6, kind: input, shape index: {}]
  %s7 = inlined_call_operand.vmem [shape: bf16[16,32], index: 7, kind: input, shape index: {}]
  %s8 = inlined_call_operand.hbm [shape: f32[1,32], index: 8, kind: input, shape index: {}]
  %s9 = inlined_call_operand.hbm [shape: f32[1,32], index: 9, kind: input, shape index: {}]
  %s10 = inlined_call_operand.vmem [shape: bf16[32,128], index: 10, kind: input, shape index: {}]
  %s11 = inlined_call_operand.hbm [shape: f32[1,128], index: 11, kind: input, shape index: {}]
  %s12 = inlined_call_operand.vmem [shape: bf16[128,32], index: 12, kind: input, shape index: {}]
  %s13 = inlined_call_operand.hbm [shape: f32[1,32], index: 13, kind: input, shape index: {}]
  %s14 = inlined_call_operand.vmem [shape: f32[2,8,32], index: 14, kind: output, shape index: {}]
  %s15 = sld [smem:[#allocation0]]
  $region113: #{colt5_encoder_forward.11} parent=0
    _
  %s17 = ssub.s32 1, %s15
  %s18 = scalar_select 0, %s17, %s15
  $region1: #{colt5_encoder_forward.11} parent=0
    #allocation2 [shape = 'u8[512]{0}', space=vmem, size = 0x400, scoped, tag = 'input window, operand 4, single buffered']
    #allocation3 [shape = 's32[2]{0}', space=sflag, size = 0x8, scoped, tag = 'scoped memory for colt5_encoder_forward.11']
    #allocation4 [shape = 'u8[512]{0}', space=vmem, size = 0x400, scoped, tag = 'input window, operand 6, single buffered']
    #allocation5 [shape = 's32[1]{0}', space=sflag, size = 0x4, scoped, tag = 'scoped memory for colt5_encoder_forward.11']
    #allocation6 [shape = 'u8[512]{0}', space=vmem, size = 0x400, scoped, tag = 'input window, operand 8, single buffered']
    #allocation7 [shape = 'u8[512]{0}', space=vmem, size = 0x400, scoped, tag = 'input window, operand 9, single buffered']
    #allocation8 [shape = 's32[1]{0}', space=sflag, size = 0x4, scoped, tag = 'scoped memory for colt5_encoder_forward.11']
    #allocation9 [shape = 'u8[512]{0}', space=vmem, size = 0x400, scoped, tag = 'input window, operand 11, single buffered']
    #allocation10 [shape = 'u8[512]{0}', space=vmem, size = 0x400, scoped, tag = 'input window, operand 13, single buffered']
    #allocation11 [shape = 's32[1]{0}', space=sflag, size = 0x4, scoped, tag = 'scoped memory for colt5_encoder_forward.11']
    %19 = vsyncpa [#allocation3], 0
    %20 = vsyncpa [#allocation5], 0
    %21 = vsyncpa [#allocation8], 0
    %22 = vsyncpa [#allocation11], 0
    loop: start=0, step=1, limit=4
    $region2: #{colt5_encoder_forward.11} parent=1 // loop_pre_header
      _
    $region3: #{colt5_encoder_forward.11} parent=1 // loop_header
      %s24 = sphi 0, %s28
      %p25 = scmp.ge.s32.totalorder %s24, 4
      %s34 = sphi 0, %s36
      %s37 = sphi 0, %s34
      %s38 = sphi 0, %s37
      %s54 = sphi 0, %s38
      %s60 = sphi 0, %s62
      %s63 = sphi 0, %s60
      %s64 = sphi 0, %s63
      %s80 = sphi 0, %s64
      %s86 = sphi 0, %s88
      %s89 = sphi 0, %s86
      %s90 = sphi 0, %s89
      %s106 = sphi 0, %s90
      %s112 = sphi 0, %s114
      %s115 = sphi 0, %s112
      %s116 = sphi 0, %s115
      %s132 = sphi 0, %s116
      %s136 = sphi 0, %s136
      %s138 = sphi 0, %s136
      %s139 = sphi 0, %s138
      %s153 = sphi 0, %s139
      %s157 = sphi 0, %s157
      %s159 = sphi 0, %s157
      %s160 = sphi 0, %s159
      %s174 = sphi 0, %s160
      %s178 = sphi 0, %s178
      %s180 = sphi 0, %s178
      %s181 = sphi 0, %s180
      %s195 = sphi 0, %s181
      %s199 = sphi 0, %s199
      %s201 = sphi 0, %s199
      %s202 = sphi 0, %s201
      %s216 = sphi 0, %s202
      %s220 = sphi 0, %s220
      %s222 = sphi 0, %s220
      %s223 = sphi 0, %s222
      %s237 = sphi 0, %s223
      %s241 = sphi 0, %s241
      %s243 = sphi 0, %s241
      %s244 = sphi 0, %s243
      %s258 = sphi 0, %s244
      %s262 = sphi 0, %s262
      %s264 = sphi 0, %s262
      %s265 = sphi 0, %s264
      %s279 = sphi 0, %s265
      %s283 = sphi 0, %s283
      %s285 = sphi 0, %s283
      %s286 = sphi 0, %s285
      %s300 = sphi 0, %s286
      %s304 = sphi 0, %s304
      %s306 = sphi 0, %s304
      %s307 = sphi 0, %s306
      %s321 = sphi 0, %s307
      %s325 = sphi 0, %s325
      %s327 = sphi 0, %s325
      %s328 = sphi 0, %s327
      %s342 = sphi 0, %s328
      %s348 = sphi 0, %s350
      %s351 = sphi 0, %s348
      %s352 = sphi 0, %s351
      %s368 = sphi 0, %s352
    $region4: #{colt5_encoder_forward.11} parent=1 // loop_header_branch
      %27 = sbr.rel (%p25) target = $region8
    $region5: #{colt5_encoder_forward.11} parent=1 // loop_body
      %s29 = ssub.s32 %s24, 1
      %s30 = ssub.s32 %s24, 2
      %s31 = sadd.s32 %s24, 1
      %s32 = ssub.s32 %s24, %s31
      %p33 = scmp.eq.s32.totalorder %s32, 0
      %s35 = sadd.s32 %s34, 1
      %s36 = scalar_select %p33, %s34, %s35
      %p39 = pneg %p33
      %p40 = scmp.eq.s32.totalorder %s24, 1
      %p41 = por %p39, %p40
      %p42 = scmp.ne.s32.totalorder %s34, %s37
      %p43 = scmp.eq.s32.totalorder %s24, 0
      %p44 = por %p42, %p43
      %p45 = scmp.ne.s32.totalorder %s34, %s37
      %p46 = scmp.eq.s32.totalorder %s29, 1
      %p47 = por %p45, %p46
      %p48 = scmp.ne.s32.totalorder %s37, %s38
      %p49 = scmp.eq.s32.totalorder %s29, 0
      %p50 = por %p48, %p49
      %p51 = scmp.ne.s32.totalorder %s37, %s38
      %p52 = scmp.eq.s32.totalorder %s30, 1
      %p53 = por %p51, %p52
      %p55 = scmp.ne.s32.totalorder %s38, %s54
      %p56 = scmp.eq.s32.totalorder %s30, 0
      %p57 = por %p55, %p56
      %s58 = ssub.s32 %s24, %s31
      %p59 = scmp.eq.s32.totalorder %s58, 0
      %s61 = sadd.s32 %s60, 1
      %s62 = scalar_select %p59, %s60, %s61
      %p65 = pneg %p59
      %p66 = scmp.eq.s32.totalorder %s24, 1
      %p67 = por %p65, %p66
      %p68 = scmp.ne.s32.totalorder %s60, %s63
      %p69 = scmp.eq.s32.totalorder %s24, 0
      %p70 = por %p68, %p69
      %p71 = scmp.ne.s32.totalorder %s60, %s63
      %p72 = scmp.eq.s32.totalorder %s29, 1
      %p73 = por %p71, %p72
      %p74 = scmp.ne.s32.totalorder %s63, %s64
      %p75 = scmp.eq.s32.totalorder %s29, 0
      %p76 = por %p74, %p75
      %p77 = scmp.ne.s32.totalorder %s63, %s64
      %p78 = scmp.eq.s32.totalorder %s30, 1
      %p79 = por %p77, %p78
      %p81 = scmp.ne.s32.totalorder %s64, %s80
      %p82 = scmp.eq.s32.totalorder %s30, 0
      %p83 = por %p81, %p82
      %s84 = ssub.s32 %s24, %s31
      %p85 = scmp.eq.s32.totalorder %s84, 0
      %s87 = sadd.s32 %s86, 1
      %s88 = scalar_select %p85, %s86, %s87
      %p91 = pneg %p85
      %p92 = scmp.eq.s32.totalorder %s24, 1
      %p93 = por %p91, %p92
      %p94 = scmp.ne.s32.totalorder %s86, %s89
      %p95 = scmp.eq.s32.totalorder %s24, 0
      %p96 = por %p94, %p95
      %p97 = scmp.ne.s32.totalorder %s86, %s89
      %p98 = scmp.eq.s32.totalorder %s29, 1
      %p99 = por %p97, %p98
      %p100 = scmp.ne.s32.totalorder %s89, %s90
      %p101 = scmp.eq.s32.totalorder %s29, 0
      %p102 = por %p100, %p101
      %p103 = scmp.ne.s32.totalorder %s89, %s90
      %p104 = scmp.eq.s32.totalorder %s30, 1
      %p105 = por %p103, %p104
      %p107 = scmp.ne.s32.totalorder %s90, %s106
      %p108 = scmp.eq.s32.totalorder %s30, 0
      %p109 = por %p107, %p108
      %s110 = ssub.s32 %s24, %s31
      %p111 = scmp.eq.s32.totalorder %s110, 0
      %s113 = sadd.s32 %s112, 1
      %s114 = scalar_select %p111, %s112, %s113
      %p117 = pneg %p111
      %p118 = scmp.eq.s32.totalorder %s24, 1
      %p119 = por %p117, %p118
      %p120 = scmp.ne.s32.totalorder %s112, %s115
      %p121 = scmp.eq.s32.totalorder %s24, 0
      %p122 = por %p120, %p121
      %p123 = scmp.ne.s32.totalorder %s112, %s115
      %p124 = scmp.eq.s32.totalorder %s29, 1
      %p125 = por %p123, %p124
      %p126 = scmp.ne.s32.totalorder %s115, %s116
      %p127 = scmp.eq.s32.totalorder %s29, 0
      %p128 = por %p126, %p127
      %p129 = scmp.ne.s32.totalorder %s115, %s116
      %p130 = scmp.eq.s32.totalorder %s30, 1
      %p131 = por %p129, %p130
      %p133 = scmp.ne.s32.totalorder %s116, %s132
      %p134 = scmp.eq.s32.totalorder %s30, 0
      %p135 = por %p133, %p134
      %s137 = sadd.s32 %s136, 1
      %p140 = scmp.eq.s32.totalorder %s24, 1
      %p141 = scmp.ne.s32.totalorder %s136, %s138
      %p142 = scmp.eq.s32.totalorder %s24, 0
      %p143 = por %p141, %p142
      %p144 = scmp.ne.s32.totalorder %s136, %s138
      %p145 = scmp.eq.s32.totalorder %s29, 1
      %p146 = por %p144, %p145
      %p147 = scmp.ne.s32.totalorder %s138, %s139
      %p148 = scmp.eq.s32.totalorder %s29, 0
      %p149 = por %p147, %p148
      %p150 = scmp.ne.s32.totalorder %s138, %s139
      %p151 = scmp.eq.s32.totalorder %s30, 1
      %p152 = por %p150, %p151
      %p154 = scmp.ne.s32.totalorder %s139, %s153
      %p155 = scmp.eq.s32.totalorder %s30, 0
      %p156 = por %p154, %p155
      %s158 = sadd.s32 %s157, 1
      %p161 = scmp.eq.s32.totalorder %s24, 1
      %p162 = scmp.ne.s32.totalorder %s157, %s159
      %p163 = scmp.eq.s32.totalorder %s24, 0
      %p164 = por %p162, %p163
      %p165 = scmp.ne.s32.totalorder %s157, %s159
      %p166 = scmp.eq.s32.totalorder %s29, 1
      %p167 = por %p165, %p166
      %p168 = scmp.ne.s32.totalorder %s159, %s160
      %p169 = scmp.eq.s32.totalorder %s29, 0
      %p170 = por %p168, %p169
      %p171 = scmp.ne.s32.totalorder %s159, %s160
      %p172 = scmp.eq.s32.totalorder %s30, 1
      %p173 = por %p171, %p172
      %p175 = scmp.ne.s32.totalorder %s160, %s174
      %p176 = scmp.eq.s32.totalorder %s30, 0
      %p177 = por %p175, %p176
      %s179 = sadd.s32 %s178, 1
      %p182 = scmp.eq.s32.totalorder %s24, 1
      %p183 = scmp.ne.s32.totalorder %s178, %s180
      %p184 = scmp.eq.s32.totalorder %s24, 0
      %p185 = por %p183, %p184
      %p186 = scmp.ne.s32.totalorder %s178, %s180
      %p187 = scmp.eq.s32.totalorder %s29, 1
      %p188 = por %p186, %p187
      %p189 = scmp.ne.s32.totalorder %s180, %s181
      %p190 = scmp.eq.s32.totalorder %s29, 0
      %p191 = por %p189, %p190
      %p192 = scmp.ne.s32.totalorder %s180, %s181
      %p193 = scmp.eq.s32.totalorder %s30, 1
      %p194 = por %p192, %p193
      %p196 = scmp.ne.s32.totalorder %s181, %s195
      %p197 = scmp.eq.s32.totalorder %s30, 0
      %p198 = por %p196, %p197
      %s200 = sadd.s32 %s199, 1
      %p203 = scmp.eq.s32.totalorder %s24, 1
      %p204 = scmp.ne.s32.totalorder %s199, %s201
      %p205 = scmp.eq.s32.totalorder %s24, 0
      %p206 = por %p204, %p205
      %p207 = scmp.ne.s32.totalorder %s199, %s201
      %p208 = scmp.eq.s32.totalorder %s29, 1
      %p209 = por %p207, %p208
      %p210 = scmp.ne.s32.totalorder %s201, %s202
      %p211 = scmp.eq.s32.totalorder %s29, 0
      %p212 = por %p210, %p211
      %p213 = scmp.ne.s32.totalorder %s201, %s202
      %p214 = scmp.eq.s32.totalorder %s30, 1
      %p215 = por %p213, %p214
      %p217 = scmp.ne.s32.totalorder %s202, %s216
      %p218 = scmp.eq.s32.totalorder %s30, 0
      %p219 = por %p217, %p218
      %s221 = sadd.s32 %s220, 1
      %p224 = scmp.eq.s32.totalorder %s24, 1
      %p225 = scmp.ne.s32.totalorder %s220, %s222
      %p226 = scmp.eq.s32.totalorder %s24, 0
      %p227 = por %p225, %p226
      %p228 = scmp.ne.s32.totalorder %s220, %s222
      %p229 = scmp.eq.s32.totalorder %s29, 1
      %p230 = por %p228, %p229
      %p231 = scmp.ne.s32.totalorder %s222, %s223
      %p232 = scmp.eq.s32.totalorder %s29, 0
      %p233 = por %p231, %p232
      %p234 = scmp.ne.s32.totalorder %s222, %s223
      %p235 = scmp.eq.s32.totalorder %s30, 1
      %p236 = por %p234, %p235
      %p238 = scmp.ne.s32.totalorder %s223, %s237
      %p239 = scmp.eq.s32.totalorder %s30, 0
      %p240 = por %p238, %p239
      %s242 = sadd.s32 %s241, 1
      %p245 = scmp.eq.s32.totalorder %s24, 1
      %p246 = scmp.ne.s32.totalorder %s241, %s243
      %p247 = scmp.eq.s32.totalorder %s24, 0
      %p248 = por %p246, %p247
      %p249 = scmp.ne.s32.totalorder %s241, %s243
      %p250 = scmp.eq.s32.totalorder %s29, 1
      %p251 = por %p249, %p250
      %p252 = scmp.ne.s32.totalorder %s243, %s244
      %p253 = scmp.eq.s32.totalorder %s29, 0
      %p254 = por %p252, %p253
      %p255 = scmp.ne.s32.totalorder %s243, %s244
      %p256 = scmp.eq.s32.totalorder %s30, 1
      %p257 = por %p255, %p256
      %p259 = scmp.ne.s32.totalorder %s244, %s258
      %p260 = scmp.eq.s32.totalorder %s30, 0
      %p261 = por %p259, %p260
      %s263 = sadd.s32 %s262, 1
      %p266 = scmp.eq.s32.totalorder %s24, 1
      %p267 = scmp.ne.s32.totalorder %s262, %s264
      %p268 = scmp.eq.s32.totalorder %s24, 0
      %p269 = por %p267, %p268
      %p270 = scmp.ne.s32.totalorder %s262, %s264
      %p271 = scmp.eq.s32.totalorder %s29, 1
      %p272 = por %p270, %p271
      %p273 = scmp.ne.s32.totalorder %s264, %s265
      %p274 = scmp.eq.s32.totalorder %s29, 0
      %p275 = por %p273, %p274
      %p276 = scmp.ne.s32.totalorder %s264, %s265
      %p277 = scmp.eq.s32.totalorder %s30, 1
      %p278 = por %p276, %p277
      %p280 = scmp.ne.s32.totalorder %s265, %s279
      %p281 = scmp.eq.s32.totalorder %s30, 0
      %p282 = por %p280, %p281
      %s284 = sadd.s32 %s283, 1
      %p287 = scmp.eq.s32.totalorder %s24, 1
      %p288 = scmp.ne.s32.totalorder %s283, %s285
      %p289 = scmp.eq.s32.totalorder %s24, 0
      %p290 = por %p288, %p289
      %p291 = scmp.ne.s32.totalorder %s283, %s285
      %p292 = scmp.eq.s32.totalorder %s29, 1
      %p293 = por %p291, %p292
      %p294 = scmp.ne.s32.totalorder %s285, %s286
      %p295 = scmp.eq.s32.totalorder %s29, 0
      %p296 = por %p294, %p295
      %p297 = scmp.ne.s32.totalorder %s285, %s286
      %p298 = scmp.eq.s32.totalorder %s30, 1
      %p299 = por %p297, %p298
      %p301 = scmp.ne.s32.totalorder %s286, %s300
      %p302 = scmp.eq.s32.totalorder %s30, 0
      %p303 = por %p301, %p302
      %s305 = sadd.s32 %s304, 1
      %p308 = scmp.eq.s32.totalorder %s24, 1
      %p309 = scmp.ne.s32.totalorder %s304, %s306
      %p310 = scmp.eq.s32.totalorder %s24, 0
      %p311 = por %p309, %p310
      %p312 = scmp.ne.s32.totalorder %s304, %s306
      %p313 = scmp.eq.s32.totalorder %s29, 1
      %p314 = por %p312, %p313
      %p315 = scmp.ne.s32.totalorder %s306, %s307
      %p316 = scmp.eq.s32.totalorder %s29, 0
      %p317 = por %p315, %p316
      %p318 = scmp.ne.s32.totalorder %s306, %s307
      %p319 = scmp.eq.s32.totalorder %s30, 1
      %p320 = por %p318, %p319
      %p322 = scmp.ne.s32.totalorder %s307, %s321
      %p323 = scmp.eq.s32.totalorder %s30, 0
      %p324 = por %p322, %p323
      %s326 = sadd.s32 %s325, 1
      %p329 = scmp.eq.s32.totalorder %s24, 1
      %p330 = scmp.ne.s32.totalorder %s325, %s327
      %p331 = scmp.eq.s32.totalorder %s24, 0
      %p332 = por %p330, %p331
      %p333 = scmp.ne.s32.totalorder %s325, %s327
      %p334 = scmp.eq.s32.totalorder %s29, 1
      %p335 = por %p333, %p334
      %p336 = scmp.ne.s32.totalorder %s327, %s328
      %p337 = scmp.eq.s32.totalorder %s29, 0
      %p338 = por %p336, %p337
      %p339 = scmp.ne.s32.totalorder %s327, %s328
      %p340 = scmp.eq.s32.totalorder %s30, 1
      %p341 = por %p339, %p340
      %p343 = scmp.ne.s32.totalorder %s328, %s342
      %p344 = scmp.eq.s32.totalorder %s30, 0
      %p345 = por %p343, %p344
      %s346 = ssub.s32 %s24, %s31
      %p347 = scmp.eq.s32.totalorder %s346, 0
      %s349 = sadd.s32 %s348, 1
      %s350 = scalar_select %p347, %s348, %s349
      %p353 = pneg %p347
      %p354 = scmp.eq.s32.totalorder %s24, 1
      %p355 = por %p353, %p354
      %p356 = scmp.ne.s32.totalorder %s348, %s351
      %p357 = scmp.eq.s32.totalorder %s24, 0
      %p358 = por %p356, %p357
      %p359 = scmp.ne.s32.totalorder %s348, %s351
      %p360 = scmp.eq.s32.totalorder %s29, 1
      %p361 = por %p359, %p360
      %p362 = scmp.ne.s32.totalorder %s351, %s352
      %p363 = scmp.eq.s32.totalorder %s29, 0
      %p364 = por %p362, %p363
      %p365 = scmp.ne.s32.totalorder %s351, %s352
      %p366 = scmp.eq.s32.totalorder %s30, 1
      %p367 = por %p365, %p366
      %p369 = scmp.ne.s32.totalorder %s352, %s368
      %p370 = scmp.eq.s32.totalorder %s30, 0
      %p371 = por %p369, %p370
      %p372 = scmp.le.s32.totalorder 1, %s24
      %p373 = scmp.lt.s32.totalorder %s24, 3
      %p374 = pnand %p372, %p373
      %p375 = pneg %p374
      // Predicated region
      $region9: #{colt5_encoder_forward.11} parent=5 // pred_check
        _
      $region10: #{colt5_encoder_forward.11} parent=5 // pred_check_branch
        %377 = sbr.rel (%p374) target = $region12
      $region11: #{colt5_encoder_forward.11} parent=5 // pred_region
        %s378 = ssub.s32 %s24, 1
        // Predicated region
        $region13: #{colt5_encoder_forward.11} parent=11 // pred_check
          %p379 = pneg %p149
        $region14: #{colt5_encoder_forward.11} parent=11 // pred_check_branch
          %381 = sbr.rel (%p379) target = $region16
        $region15: #{colt5_encoder_forward.11} parent=11 // pred_region
          %s383 = ssub.s32 16, 16
          %384 = vsyncadd [#allocation3], %s383
          %s386 = sshll.u32 [#allocation2], 4
          %s387 = int_to_ptr.vmem [resolvable:$true] %s386
          %389 = dma.hbm_to_vmem [thread:$0]  %s4, 16, %s387, [#allocation3]
        $region16: #{colt5_encoder_forward.11} parent=11 // pred_fallthru
          _
        // Predicated region
        $region17: #{colt5_encoder_forward.11} parent=11 // pred_check
          %p390 = pneg %p170
        $region18: #{colt5_encoder_forward.11} parent=11 // pred_check_branch
          %392 = sbr.rel (%p390) target = $region20
        $region19: #{colt5_encoder_forward.11} parent=11 // pred_region
          _
        $region20: #{colt5_encoder_forward.11} parent=11 // pred_fallthru
          _
        // Predicated region
        $region21: #{colt5_encoder_forward.11} parent=11 // pred_check
          %p393 = pneg %p191
        $region22: #{colt5_encoder_forward.11} parent=11 // pred_check_branch
          %395 = sbr.rel (%p393) target = $region24
        $region23: #{colt5_encoder_forward.11} parent=11 // pred_region
          %s397 = ssub.s32 16, 16
          %398 = vsyncadd [#allocation5], %s397
          %s400 = sshll.u32 [#allocation4], 4
          %s401 = int_to_ptr.vmem [resolvable:$true] %s400
          %403 = dma.hbm_to_vmem [thread:$0]  %s6, 16, %s401, [#allocation5]
        $region24: #{colt5_encoder_forward.11} parent=11 // pred_fallthru
          _
        // Predicated region
        $region25: #{colt5_encoder_forward.11} parent=11 // pred_check
          %p404 = pneg %p212
        $region26: #{colt5_encoder_forward.11} parent=11 // pred_check_branch
          %406 = sbr.rel (%p404) target = $region28
        $region27: #{colt5_encoder_forward.11} parent=11 // pred_region
          _
        $region28: #{colt5_encoder_forward.11} parent=11 // pred_fallthru
          _
        // Predicated region
        $region29: #{colt5_encoder_forward.11} parent=11 // pred_check
          %p407 = pneg %p233
        $region30: #{colt5_encoder_forward.11} parent=11 // pred_check_branch
          %409 = sbr.rel (%p407) target = $region32
        $region31: #{colt5_encoder_forward.11} parent=11 // pred_region
          %s411 = ssub.s32 16, 16
          %412 = vsyncadd [#allocation5], %s411
          %s414 = sshll.u32 [#allocation6], 4
          %s415 = int_to_ptr.vmem [resolvable:$true] %s414
          %417 = dma.hbm_to_vmem [thread:$0]  %s8, 16, %s415, [#allocation5]
        $region32: #{colt5_encoder_forward.11} parent=11 // pred_fallthru
          _
        // Predicated region
        $region33: #{colt5_encoder_forward.11} parent=11 // pred_check
          %p418 = pneg %p254
        $region34: #{colt5_encoder_forward.11} parent=11 // pred_check_branch
          %420 = sbr.rel (%p418) target = $region36
        $region35: #{colt5_encoder_forward.11} parent=11 // pred_region
          %s422 = ssub.s32 16, 16
          %423 = vsyncadd [#allocation8], %s422
          %s425 = sshll.u32 [#allocation7], 4
          %s426 = int_to_ptr.vmem [resolvable:$true] %s425
          %428 = dma.hbm_to_vmem [thread:$0]  %s9, 16, %s426, [#allocation8]
        $region36: #{colt5_encoder_forward.11} parent=11 // pred_fallthru
          _
        // Predicated region
        $region37: #{colt5_encoder_forward.11} parent=11 // pred_check
          %p429 = pneg %p275
        $region38: #{colt5_encoder_forward.11} parent=11 // pred_check_branch
          %431 = sbr.rel (%p429) target = $region40
        $region39: #{colt5_encoder_forward.11} parent=11 // pred_region
          _
        $region40: #{colt5_encoder_forward.11} parent=11 // pred_fallthru
          _
        // Predicated region
        $region41: #{colt5_encoder_forward.11} parent=11 // pred_check
          %p432 = pneg %p296
        $region42: #{colt5_encoder_forward.11} parent=11 // pred_check_branch
          %434 = sbr.rel (%p432) target = $region44
        $region43: #{colt5_encoder_forward.11} parent=11 // pred_region
          %s436 = ssub.s32 16, 16
          %437 = vsyncadd [#allocation8], %s436
          %s439 = sshll.u32 [#allocation9], 4
          %s440 = int_to_ptr.vmem [resolvable:$true] %s439
          %442 = dma.hbm_to_vmem [thread:$0]  %s11, 16, %s440, [#allocation8]
        $region44: #{colt5_encoder_forward.11} parent=11 // pred_fallthru
          _
        // Predicated region
        $region45: #{colt5_encoder_forward.11} parent=11 // pred_check
          %p443 = pneg %p317
        $region46: #{colt5_encoder_forward.11} parent=11 // pred_check_branch
          %445 = sbr.rel (%p443) target = $region48
        $region47: #{colt5_encoder_forward.11} parent=11 // pred_region
          _
        $region48: #{colt5_encoder_forward.11} parent=11 // pred_fallthru
          _
        // Predicated region
        $region49: #{colt5_encoder_forward.11} parent=11 // pred_check
          %p446 = pneg %p338
        $region50: #{colt5_encoder_forward.11} parent=11 // pred_check_branch
          %448 = sbr.rel (%p446) target = $region52
        $region51: #{colt5_encoder_forward.11} parent=11 // pred_region
          %s450 = ssub.s32 16, 16
          %451 = vsyncadd [#allocation11], %s450
          %s453 = sshll.u32 [#allocation10], 4
          %s454 = int_to_ptr.vmem [resolvable:$true] %s453
          %456 = dma.hbm_to_vmem [thread:$0]  %s13, 16, %s454, [#allocation11]
        $region52: #{colt5_encoder_forward.11} parent=11 // pred_fallthru
          _
      $region12: #{colt5_encoder_forward.11} parent=5 // pred_fallthru
        _
      %p457 = scmp.lt.s32.totalorder %s24, 2
      // Predicated region
      $region53: #{colt5_encoder_forward.11} parent=5 // pred_check
        %p458 = pneg %p457
      $region54: #{colt5_encoder_forward.11} parent=5 // pred_check_branch
        %460 = sbr.rel (%p458) target = $region56
      $region55: #{colt5_encoder_forward.11} parent=5 // pred_region
        // Predicated region
        $region57: #{colt5_encoder_forward.11} parent=55 // pred_check
          %p461 = pneg %p44
        $region58: #{colt5_encoder_forward.11} parent=55 // pred_check_branch
          %463 = sbr.rel (%p461) target = $region60
        $region59: #{colt5_encoder_forward.11} parent=55 // pred_region
          %p464 = scmp.lt.s32.totalorder %s24, 1
          %s465 = scalar_select %p464, %s24, 1
          %s466 = smul.addr %s465, 8
          %s467 = scalar_lea.vmem %s0, %s466
        $region60: #{colt5_encoder_forward.11} parent=55 // pred_fallthru
          _
        // Predicated region
        $region61: #{colt5_encoder_forward.11} parent=55 // pred_check
          %p468 = pneg %p70
        $region62: #{colt5_encoder_forward.11} parent=55 // pred_check_branch
          %470 = sbr.rel (%p468) target = $region64
        $region63: #{colt5_encoder_forward.11} parent=55 // pred_region
          %p471 = scmp.lt.s32.totalorder %s24, 1
          %s472 = scalar_select %p471, %s24, 1
          %s473 = smul.addr %s472, 4
          %s474 = scalar_lea.vmem %s1, %s473
        $region64: #{colt5_encoder_forward.11} parent=55 // pred_fallthru
          _
        // Predicated region
        $region65: #{colt5_encoder_forward.11} parent=55 // pred_check
          %p475 = pneg %p96
        $region66: #{colt5_encoder_forward.11} parent=55 // pred_check_branch
          %477 = sbr.rel (%p475) target = $region68
        $region67: #{colt5_encoder_forward.11} parent=55 // pred_region
          %p478 = scmp.lt.s32.totalorder %s24, 1
          %s479 = scalar_select %p478, %s24, 1
          %s480 = smul.addr %s479, 8
          %s481 = scalar_lea.vmem %s2, %s480
        $region68: #{colt5_encoder_forward.11} parent=55 // pred_fallthru
          _
        // Predicated region
        $region69: #{colt5_encoder_forward.11} parent=55 // pred_check
          %p482 = pneg %p122
        $region70: #{colt5_encoder_forward.11} parent=55 // pred_check_branch
          %484 = sbr.rel (%p482) target = $region72
        $region71: #{colt5_encoder_forward.11} parent=55 // pred_region
          %p485 = scmp.lt.s32.totalorder %s24, 1
          %s486 = scalar_select %p485, %s24, 1
          %s487 = smul.addr %s486, 4
          %s488 = scalar_lea.vmem %s3, %s487
        $region72: #{colt5_encoder_forward.11} parent=55 // pred_fallthru
          _
      $region56: #{colt5_encoder_forward.11} parent=5 // pred_fallthru
        _
      %p489 = scmp.le.s32.totalorder 1, %s24
      %p490 = scmp.lt.s32.totalorder %s24, 3
      %p491 = pnand %p489, %p490
      %p492 = pneg %p491
      // Predicated region
      $region73: #{colt5_encoder_forward.11} parent=5 // pred_check
        _
      $region74: #{colt5_encoder_forward.11} parent=5 // pred_check_branch
        %494 = sbr.rel (%p491) target = $region76
      $region75: #{colt5_encoder_forward.11} parent=5 // pred_region
        %s495 = ssub.s32 %s24, 1
        // Predicated region
        $region77: #{colt5_encoder_forward.11} parent=75 // pred_check
          %p496 = pneg %p149
        $region78: #{colt5_encoder_forward.11} parent=75 // pred_check_branch
          %498 = sbr.rel (%p496) target = $region80
        $region79: #{colt5_encoder_forward.11} parent=75 // pred_region
          %499 = dma.done [#allocation3], 16
        $region80: #{colt5_encoder_forward.11} parent=75 // pred_fallthru
          _
        // Predicated region
        $region81: #{colt5_encoder_forward.11} parent=75 // pred_check
          %p500 = pneg %p191
        $region82: #{colt5_encoder_forward.11} parent=75 // pred_check_branch
          %502 = sbr.rel (%p500) target = $region84
        $region83: #{colt5_encoder_forward.11} parent=75 // pred_region
          %503 = dma.done [#allocation5], 16
        $region84: #{colt5_encoder_forward.11} parent=75 // pred_fallthru
          _
        // Predicated region
        $region85: #{colt5_encoder_forward.11} parent=75 // pred_check
          %p504 = pneg %p233
        $region86: #{colt5_encoder_forward.11} parent=75 // pred_check_branch
          %506 = sbr.rel (%p504) target = $region88
        $region87: #{colt5_encoder_forward.11} parent=75 // pred_region
          %507 = dma.done [#allocation5], 16
        $region88: #{colt5_encoder_forward.11} parent=75 // pred_fallthru
          _
        // Predicated region
        $region89: #{colt5_encoder_forward.11} parent=75 // pred_check
          %p508 = pneg %p254
        $region90: #{colt5_encoder_forward.11} parent=75 // pred_check_branch
          %510 = sbr.rel (%p508) target = $region92
        $region91: #{colt5_encoder_forward.11} parent=75 // pred_region
          %511 = dma.done [#allocation8], 16
        $region92: #{colt5_encoder_forward.11} parent=75 // pred_fallthru
          _
        // Predicated region
        $region93: #{colt5_encoder_forward.11} parent=75 // pred_check
          %p512 = pneg %p296
        $region94: #{colt5_encoder_forward.11} parent=75 // pred_check_branch
          %514 = sbr.rel (%p512) target = $region96
        $region95: #{colt5_encoder_forward.11} parent=75 // pred_region
          %515 = dma.done [#allocation8], 16
        $region96: #{colt5_encoder_forward.11} parent=75 // pred_fallthru
          _
        // Predicated region
        $region97: #{colt5_encoder_forward.11} parent=75 // pred_check
          %p516 = pneg %p338
        $region98: #{colt5_encoder_forward.11} parent=75 // pred_check_branch
          %518 = sbr.rel (%p516) target = $region100
        $region99: #{colt5_encoder_forward.11} parent=75 // pred_region
          %519 = dma.done [#allocation11], 16
        $region100: #{colt5_encoder_forward.11} parent=75 // pred_fallthru
          _
        %p520 = scmp.lt.s32.totalorder %s29, 1
        %s521 = scalar_select %p520, %s29, 1
        %s522 = smul.addr %s521, 8
        %s523 = scalar_lea.vmem %s0, %s522
        %p524 = pneg %p50
        %p525 = pneg %p47
        %p526 = scmp.lt.s32.totalorder %s29, 1
        %s527 = scalar_select %p526, %s29, 1
        %s528 = smul.addr %s527, 4
        %s529 = scalar_lea.vmem %s1, %s528
        %p530 = pneg %p76
        %p531 = pneg %p73
        %p532 = scmp.lt.s32.totalorder %s29, 1
        %s533 = scalar_select %p532, %s29, 1
        %s534 = smul.addr %s533, 8
        %s535 = scalar_lea.vmem %s2, %s534
        %p536 = pneg %p102
        %p537 = pneg %p99
        %p538 = scmp.lt.s32.totalorder %s29, 1
        %s539 = scalar_select %p538, %s29, 1
        %s540 = smul.addr %s539, 4
        %s541 = scalar_lea.vmem %s3, %s540
        %p542 = pneg %p128
        %p543 = pneg %p125
        %p544 = pneg %p149
        %p545 = pneg %p146
        %p546 = pneg %p170
        %p547 = pneg %p167
        %p548 = pneg %p191
        %p549 = pneg %p188
        %p550 = pneg %p212
        %p551 = pneg %p209
        %p552 = pneg %p233
        %p553 = pneg %p230
        %p554 = pneg %p254
        %p555 = pneg %p251
        %p556 = pneg %p275
        %p557 = pneg %p272
        %p558 = pneg %p296
        %p559 = pneg %p293
        %p560 = pneg %p317
        %p561 = pneg %p314
        %p562 = pneg %p338
        %p563 = pneg %p335
        %p564 = pneg %p364
        %p565 = pneg %p361
        %p566 = scmp.lt.s32.totalorder %s29, 1
        %s567 = scalar_select %p566, %s29, 1
        %s568 = smul.addr %s567, 8
        %s569 = scalar_lea.vmem %s14, %s568
        %p570 = scmp.lt.s32.totalorder %s29, 1
        %s571 = scalar_select %p570, %s29, 1
        %s572 = smul.addr %s571, 8
        %s573 = scalar_lea.vmem %s0, %s572
        %p574 = scmp.lt.s32.totalorder %s29, 1
        %s575 = scalar_select %p574, %s29, 1
        %s576 = smul.addr %s575, 4
        %s577 = scalar_lea.vmem %s1, %s576
        %p578 = scmp.lt.s32.totalorder %s29, 1
        %s579 = scalar_select %p578, %s29, 1
        %s580 = smul.addr %s579, 8
        %s581 = scalar_lea.vmem %s2, %s580
        %p582 = scmp.lt.s32.totalorder %s29, 1
        %s583 = scalar_select %p582, %s29, 1
        %s584 = smul.addr %s583, 4
        %s585 = scalar_lea.vmem %s3, %s584
        %p586 = scmp.lt.s32.totalorder %s29, 1
        %s587 = scalar_select %p586, %s29, 1
        %s588 = smul.addr %s587, 8
        %s589 = scalar_lea.vmem %s14, %s588
        %v591 = vld [vmem:[%s573] sm:$0xff]
        %v592 = vld [vmem:[#allocation2] sm:$0x1]
        %v593 = vld [vmem:[#allocation4] sm:$0x1]
        %v594 = vld [vmem:[#allocation6] sm:$0x1]
        %v595 = vmul.f32 %v591, %v591
        %vm596 = vcmask 261120
        %v597 = vsel %vm596, %v595, 0.0
        %598 = vadd.xlane.f32.xlu0 %v597
        %v599 = vpop.xlane.xlu0 %598
        %v600 = vrcp.pop 32.0
        %v601 = vmul.f32 %v599, %v600
        %v602 = vadd.f32 %v601, 1e-06
        %v603 = vrsqrt.pop %v602
        %v604 = vmul.f32 %v591, %v603
        %v606 = vlaneseq
        %v607 = vshrl.u32 %v606, 7
        %v608 = vsub.s32 0, %v607
        %v609 = vrot.slane %v592, %v608
        %v611 = vmul.f32 %v604, %v609
        %v612 = vpack.c.bf16 %v611, %v611
        %v613 = vld [vmem:[%s5] sm:$0xf]
        %v614 = vld [vmem:[%s5 + $0x4] sm:$0xf]
        %v615 = vld [vmem:[%s5 + $0x8] sm:$0xf]
        %v616 = vld [vmem:[%s5 + $0xc] sm:$0xf]
        %v618 = vlaneseq
        %v619 = vshrl.u32 %v618, 7
        %v620 = vsub.s32 0, %v619
        %v621 = vrot.slane %v593, %v620
        %v627 = vunpack.c.l.b16 %v613
        %v628 = vunpack.c.l.b16 %v614
        %v629 = vunpack.c.l.b16 %v615
        %v630 = vunpack.c.l.b16 %v616
        %v631 = vpack.c.b16 %v628, %v627
        %v632 = vpack.c.b16 %v630, %v629
        %v636 = vsel %vm596, %v612, 0
        %638 = vmatprep.subr.bf16.mxu0 0
        %639 = vmatpush1.bf16.msra.mxu0 %v631
        %640 = vmatprep.subr.bf16.mxu0 0
        %641 = vmatpush1.bf16.msra.mxu0 %v632
        %642 = vmatprep.subr.bf16.mxu0 0
        %643 = vmatpush1.bf16.msra.mxu0 0
        %644 = vmatprep.subr.bf16.mxu0 0
        %645 = vmatpush1.bf16.msra.mxu0 0
        %646 = vmatprep.subr.bf16.mxu0 0
        %647 = vmatpush1.bf16.msra.mxu0 0
        %648 = vmatprep.subr.bf16.mxu0 0
        %649 = vmatpush1.bf16.msra.mxu0 0
        %650 = vmatprep.subr.bf16.mxu0 0
        %651 = vmatpush1.bf16.msra.mxu0 0
        %652 = vmatprep.subr.bf16.mxu0 0
        %653 = vmatpush1.bf16.msra.mxu0 0
        %654 = vmatprep.subr.bf16.mxu0 0
        %655 = vmatpush1.bf16.msra.mxu0 0
        %656 = vmatprep.subr.bf16.mxu0 0
        %657 = vmatpush1.bf16.msra.mxu0 0
        %658 = vmatprep.subr.bf16.mxu0 0
        %659 = vmatpush1.bf16.msra.mxu0 0
        %660 = vmatprep.subr.bf16.mxu0 0
        %661 = vmatpush1.bf16.msra.mxu0 0
        %662 = vmatprep.subr.bf16.mxu0 0
        %663 = vmatpush1.bf16.msra.mxu0 0
        %664 = vmatprep.subr.bf16.mxu0 0
        %665 = vmatpush1.bf16.msra.mxu0 0
        %666 = vmatprep.subr.bf16.mxu0 0
        %667 = vmatpush1.bf16.msra.mxu0 0
        %668 = vmatprep.subr.bf16.mxu0 0
        %669 = vmatpush1.bf16.msra.mxu0 0
        %670 = vmatprep.mubr.bf16.mxu0 0
        %671 = vmatmul.mubr.bf16.gmra.mrb[0].mxu0 %v636
        %v672 = vpop.f32.mrb[0].mxu0
        %v673 = vadd.f32 %v621, %v672
        %v674 = vpop.f32.mrb[0].mxu0
        %v675 = vpop.f32.mrb[0].mxu0
        %v676 = vpop.f32.mrb[0].mxu0
        %677 = vdwg.mxu0
        %v678 = vmul.f32 %v673, %v673
        %v679 = vmul.f32 %v673, %v678
        %v680 = vmul.f32 %v679, 0.044715
        %v681 = vadd.f32 %v673, %v680
        %v682 = vmul.f32 %v681, 0.7978846
        %v683 = vtanh.pop %v682
        %v684 = vadd.f32 %v683, 1.0
        %v685 = vmul.f32 %v684, 0.5
        %v686 = vmul.f32 %v673, %v685
        %v687 = vpack.c.bf16 %v686, %v686
        %v688 = vld [vmem:[%s7] sm:$0xf]
        %v689 = vld [vmem:[%s7 + $0x4] sm:$0xf]
        %v691 = vlaneseq
        %v692 = vshrl.u32 %v691, 7
        %v693 = vsub.s32 0, %v692
        %v694 = vrot.slane %v594, %v693
        %v698 = vunpack.c.l.b16 %v688
        %v699 = vunpack.c.l.b16 %v689
        %v700 = vpack.c.b16 %v699, %v698
        %vm702 = vcmask 130048
        %v704 = vsel %vm702, %v687, 0
        %706 = vmatprep.subr.bf16.mxu0 0
        %707 = vmatpush1.bf16.msra.mxu0 %v700
        %708 = vmatprep.subr.bf16.mxu0 0
        %709 = vmatpush1.bf16.msra.mxu0 0
        %710 = vmatprep.subr.bf16.mxu0 0
        %711 = vmatpush1.bf16.msra.mxu0 0
        %712 = vmatprep.subr.bf16.mxu0 0
        %713 = vmatpush1.bf16.msra.mxu0 0
        %714 = vmatprep.subr.bf16.mxu0 0
        %715 = vmatpush1.bf16.msra.mxu0 0
        %716 = vmatprep.subr.bf16.mxu0 0
        %717 = vmatpush1.bf16.msra.mxu0 0
        %718 = vmatprep.subr.bf16.mxu0 0
        %719 = vmatpush1.bf16.msra.mxu0 0
        %720 = vmatprep.subr.bf16.mxu0 0
        %721 = vmatpush1.bf16.msra.mxu0 0
        %722 = vmatprep.subr.bf16.mxu0 0
        %723 = vmatpush1.bf16.msra.mxu0 0
        %724 = vmatprep.subr.bf16.mxu0 0
        %725 = vmatpush1.bf16.msra.mxu0 0
        %726 = vmatprep.subr.bf16.mxu0 0
        %727 = vmatpush1.bf16.msra.mxu0 0
        %728 = vmatprep.subr.bf16.mxu0 0
        %729 = vmatpush1.bf16.msra.mxu0 0
        %730 = vmatprep.subr.bf16.mxu0 0
        %731 = vmatpush1.bf16.msra.mxu0 0
        %732 = vmatprep.subr.bf16.mxu0 0
        %733 = vmatpush1.bf16.msra.mxu0 0
        %734 = vmatprep.subr.bf16.mxu0 0
        %735 = vmatpush1.bf16.msra.mxu0 0
        %736 = vmatprep.subr.bf16.mxu0 0
        %737 = vmatpush1.bf16.msra.mxu0 0
        %738 = vmatprep.mubr.bf16.mxu0 0
        %739 = vmatmul.mubr.bf16.gmra.mrb[0].mxu0 %v704
        %v740 = vpop.f32.mrb[0].mxu0
        %v741 = vadd.f32 %v694, %v740
        %v742 = vpop.f32.mrb[0].mxu0
        %v743 = vpop.f32.mrb[0].mxu0
        %v744 = vpop.f32.mrb[0].mxu0
        %745 = vdwg.mxu0
        %v746 = vld [vmem:[%s577] sm:$0xf]
        %vm747 = vcmask 64512
        %v749 = vsel %vm747, %v746, 0
        %751 = vmatprep.subr.mxu0 0.0
        %752 = vmatpush1.msra.mxu0 %v591
        %753 = vmatprep.subr.mxu0 0.0
        %754 = vmatpush1.msra.mxu0 0.0
        %755 = vmatprep.subr.mxu0 0.0
        %756 = vmatpush1.msra.mxu0 0.0
        %757 = vmatprep.subr.mxu0 0.0
        %758 = vmatpush1.msra.mxu0 0.0
        %759 = vmatprep.subr.mxu0 0.0
        %760 = vmatpush1.msra.mxu0 0.0
        %761 = vmatprep.subr.mxu0 0.0
        %762 = vmatpush1.msra.mxu0 0.0
        %763 = vmatprep.subr.mxu0 0.0
        %764 = vmatpush1.msra.mxu0 0.0
        %765 = vmatprep.subr.mxu0 0.0
        %766 = vmatpush1.msra.mxu0 0.0
        %767 = vmatprep.subr.mxu0 0.0
        %768 = vmatpush1.msra.mxu0 0.0
        %769 = vmatprep.subr.mxu0 0.0
        %770 = vmatpush1.msra.mxu0 0.0
        %771 = vmatprep.subr.mxu0 0.0
        %772 = vmatpush1.msra.mxu0 0.0
        %773 = vmatprep.subr.mxu0 0.0
        %774 = vmatpush1.msra.mxu0 0.0
        %775 = vmatprep.subr.mxu0 0.0
        %776 = vmatpush1.msra.mxu0 0.0
        %777 = vmatprep.subr.mxu0 0.0
        %778 = vmatpush1.msra.mxu0 0.0
        %779 = vmatprep.subr.mxu0 0.0
        %780 = vmatpush1.msra.mxu0 0.0
        %781 = vmatprep.subr.mxu0 0.0
        %782 = vmatpush1.msra.mxu0 0.0
        %783 = vmatprep.subr.mxu0 0.0
        %784 = vmatpush1.msra.mxu0 0.0
        %785 = vmatprep.subr.mxu0 0.0
        %786 = vmatpush1.msra.mxu0 0.0
        %787 = vmatprep.subr.mxu0 0.0
        %788 = vmatpush1.msra.mxu0 0.0
        %789 = vmatprep.subr.mxu0 0.0
        %790 = vmatpush1.msra.mxu0 0.0
        %791 = vmatprep.subr.mxu0 0.0
        %792 = vmatpush1.msra.mxu0 0.0
        %793 = vmatprep.subr.mxu0 0.0
        %794 = vmatpush1.msra.mxu0 0.0
        %795 = vmatprep.subr.mxu0 0.0
        %796 = vmatpush1.msra.mxu0 0.0
        %797 = vmatprep.subr.mxu0 0.0
        %798 = vmatpush1.msra.mxu0 0.0
        %799 = vmatprep.subr.mxu0 0.0
        %800 = vmatpush1.msra.mxu0 0.0
        %801 = vmatprep.subr.mxu0 0.0
        %802 = vmatpush1.msra.mxu0 0.0
        %803 = vmatprep.subr.mxu0 0.0
        %804 = vmatpush1.msra.mxu0 0.0
        %805 = vmatprep.subr.mxu0 0.0
        %806 = vmatpush1.msra.mxu0 0.0
        %807 = vmatprep.subr.mxu0 0.0
        %808 = vmatpush1.msra.mxu0 0.0
        %809 = vmatprep.subr.mxu0 0.0
        %810 = vmatpush1.msra.mxu0 0.0
        %811 = vmatprep.subr.mxu0 0.0
        %812 = vmatpush1.msra.mxu0 0.0
        %813 = vmatprep.subr.mxu0 0.0
        %814 = vmatpush1.msra.mxu0 0.0
        %815 = vmatprep.mubr.f32.mxu0 0.0
        %816 = vmatmul.mubr.f32.gmra.mrb[0].mxu0 %v749
        %v817 = vpop.f32.mrb[0].mxu0
        %v818 = vadd.f32 0.0, %v817
        %v819 = vpop.f32.mrb[0].mxu0
        %820 = vdwg.mxu0
        %v821 = vld [vmem:[#allocation7] sm:$0x1]
        %v822 = vld [vmem:[#allocation9] sm:$0x1]
        %v823 = vld [vmem:[#allocation10] sm:$0x1]
        %v824 = vmul.f32 %v818, %v818
        %vm825 = vcmask 257024
        %v826 = vsel %vm825, %v824, 0.0
        %827 = vadd.xlane.f32.xlu0 %v826
        %v828 = vpop.xlane.xlu0 %827
        %v829 = vmul.f32 %v828, %v600
        %v830 = vadd.f32 %v829, 1e-06
        %v831 = vrsqrt.pop %v830
        %v832 = vmul.f32 %v818, %v831
        %v834 = vlaneseq
        %v835 = vshrl.u32 %v834, 7
        %v836 = vsub.s32 0, %v835
        %v837 = vrot.slane %v821, %v836
        %v839 = vmul.f32 %v832, %v837
        %v840 = vpack.c.bf16 %v839, %v839
        %v841 = vld [vmem:[%s10] sm:$0xf]
        %v842 = vld [vmem:[%s10 + $0x4] sm:$0xf]
        %v843 = vld [vmem:[%s10 + $0x8] sm:$0xf]
        %v844 = vld [vmem:[%s10 + $0xc] sm:$0xf]
        %v846 = vlaneseq
        %v847 = vshrl.u32 %v846, 7
        %v848 = vsub.s32 0, %v847
        %v849 = vrot.slane %v822, %v848
        %v855 = vunpack.c.l.b16 %v841
        %v856 = vunpack.c.l.b16 %v842
        %v857 = vunpack.c.l.b16 %v843
        %v858 = vunpack.c.l.b16 %v844
        %v859 = vpack.c.b16 %v856, %v855
        %v860 = vpack.c.b16 %v858, %v857
        %v864 = vsel %vm596, %v840, 0
        %866 = vmatprep.subr.bf16.mxu0 0
        %867 = vmatpush1.bf16.msra.mxu0 %v859
        %868 = vmatprep.subr.bf16.mxu0 0
        %869 = vmatpush1.bf16.msra.mxu0 %v860
        %870 = vmatprep.subr.bf16.mxu0 0
        %871 = vmatpush1.bf16.msra.mxu0 0
        %872 = vmatprep.subr.bf16.mxu0 0
        %873 = vmatpush1.bf16.msra.mxu0 0
        %874 = vmatprep.subr.bf16.mxu0 0
        %875 = vmatpush1.bf16.msra.mxu0 0
        %876 = vmatprep.subr.bf16.mxu0 0
        %877 = vmatpush1.bf16.msra.mxu0 0
        %878 = vmatprep.subr.bf16.mxu0 0
        %879 = vmatpush1.bf16.msra.mxu0 0
        %880 = vmatprep.subr.bf16.mxu0 0
        %881 = vmatpush1.bf16.msra.mxu0 0
        %882 = vmatprep.subr.bf16.mxu0 0
        %883 = vmatpush1.bf16.msra.mxu0 0
        %884 = vmatprep.subr.bf16.mxu0 0
        %885 = vmatpush1.bf16.msra.mxu0 0
        %886 = vmatprep.subr.bf16.mxu0 0
        %887 = vmatpush1.bf16.msra.mxu0 0
        %888 = vmatprep.subr.bf16.mxu0 0
        %889 = vmatpush1.bf16.msra.mxu0 0
        %890 = vmatprep.subr.bf16.mxu0 0
        %891 = vmatpush1.bf16.msra.mxu0 0
        %892 = vmatprep.subr.bf16.mxu0 0
        %893 = vmatpush1.bf16.msra.mxu0 0
        %894 = vmatprep.subr.bf16.mxu0 0
        %895 = vmatpush1.bf16.msra.mxu0 0
        %896 = vmatprep.subr.bf16.mxu0 0
        %897 = vmatpush1.bf16.msra.mxu0 0
        %898 = vmatprep.mubr.bf16.mxu0 0
        %899 = vmatmul.mubr.bf16.gmra.mrb[0].mxu0 %v864
        %v900 = vpop.f32.mrb[0].mxu0
        %v901 = vadd.f32 %v849, %v900
        %v902 = vpop.f32.mrb[0].mxu0
        %v903 = vpop.f32.mrb[0].mxu0
        %v904 = vpop.f32.mrb[0].mxu0
        %905 = vdwg.mxu0
        %v906 = vmul.f32 %v901, %v901
        %v907 = vmul.f32 %v901, %v906
        %v908 = vmul.f32 %v907, 0.044715
        %v909 = vadd.f32 %v901, %v908
        %v910 = vmul.f32 %v909, 0.7978846
        %v911 = vtanh.pop %v910
        %v912 = vadd.f32 %v911, 1.0
        %v913 = vmul.f32 %v912, 0.5
        %v914 = vmul.f32 %v901, %v913
        %v915 = vpack.c.bf16 %v914, %v914
        %v916 = vld [vmem:[%s12] sm:$0xf]
        %v917 = vld [vmem:[%s12 + $0x4] sm:$0xf]
        %v918 = vld [vmem:[%s12 + $0x8] sm:$0xf]
        %v919 = vld [vmem:[%s12 + $0xc] sm:$0xf]
        %v920 = vld [vmem:[%s12 + $0x10] sm:$0xf]
        %v921 = vld [vmem:[%s12 + $0x14] sm:$0xf]
        %v922 = vld [vmem:[%s12 + $0x18] sm:$0xf]
        %v923 = vld [vmem:[%s12 + $0x1c] sm:$0xf]
        %v924 = vld [vmem:[%s12 + $0x20] sm:$0xf]
        %v925 = vld [vmem:[%s12 + $0x24] sm:$0xf]
        %v926 = vld [vmem:[%s12 + $0x28] sm:$0xf]
        %v927 = vld [vmem:[%s12 + $0x2c] sm:$0xf]
        %v928 = vld [vmem:[%s12 + $0x30] sm:$0xf]
        %v929 = vld [vmem:[%s12 + $0x34] sm:$0xf]
        %v930 = vld [vmem:[%s12 + $0x38] sm:$0xf]
        %v931 = vld [vmem:[%s12 + $0x3c] sm:$0xf]
        %v933 = vlaneseq
        %v934 = vshrl.u32 %v933, 7
        %v935 = vsub.s32 0, %v934
        %v936 = vrot.slane %v823, %v935
        %v954 = vunpack.c.l.b16 %v916
        %v955 = vunpack.c.l.b16 %v917
        %v956 = vunpack.c.l.b16 %v918
        %v957 = vunpack.c.l.b16 %v919
        %v958 = vunpack.c.l.b16 %v920
        %v959 = vunpack.c.l.b16 %v921
        %v960 = vunpack.c.l.b16 %v922
        %v961 = vunpack.c.l.b16 %v923
        %v962 = vunpack.c.l.b16 %v924
        %v963 = vunpack.c.l.b16 %v925
        %v964 = vunpack.c.l.b16 %v926
        %v965 = vunpack.c.l.b16 %v927
        %v966 = vunpack.c.l.b16 %v928
        %v967 = vunpack.c.l.b16 %v929
        %v968 = vunpack.c.l.b16 %v930
        %v969 = vunpack.c.l.b16 %v931
        %v970 = vpack.c.b16 %v955, %v954
        %v971 = vpack.c.b16 %v957, %v956
        %v972 = vpack.c.b16 %v959, %v958
        %v973 = vpack.c.b16 %v961, %v960
        %v974 = vpack.c.b16 %v963, %v962
        %v975 = vpack.c.b16 %v965, %v964
        %v976 = vpack.c.b16 %v967, %v966
        %v977 = vpack.c.b16 %v969, %v968
        %986 = vmatprep.subr.bf16.mxu0 0
        %987 = vmatpush1.bf16.msra.mxu0 %v970
        %988 = vmatprep.subr.bf16.mxu0 0
        %989 = vmatpush1.bf16.msra.mxu0 %v971
        %990 = vmatprep.subr.bf16.mxu0 0
        %991 = vmatpush1.bf16.msra.mxu0 %v972
        %992 = vmatprep.subr.bf16.mxu0 0
        %993 = vmatpush1.bf16.msra.mxu0 %v973
        %994 = vmatprep.subr.bf16.mxu0 0
        %995 = vmatpush1.bf16.msra.mxu0 %v974
        %996 = vmatprep.subr.bf16.mxu0 0
        %997 = vmatpush1.bf16.msra.mxu0 %v975
        %998 = vmatprep.subr.bf16.mxu0 0
        %999 = vmatpush1.bf16.msra.mxu0 %v976
        %1000 = vmatprep.subr.bf16.mxu0 0
        %1001 = vmatpush1.bf16.msra.mxu0 %v977
        %1002 = vmatprep.subr.bf16.mxu0 0
        %1003 = vmatpush1.bf16.msra.mxu0 0
        %1004 = vmatprep.subr.bf16.mxu0 0
        %1005 = vmatpush1.bf16.msra.mxu0 0
        %1006 = vmatprep.subr.bf16.mxu0 0
        %1007 = vmatpush1.bf16.msra.mxu0 0
        %1008 = vmatprep.subr.bf16.mxu0 0
        %1009 = vmatpush1.bf16.msra.mxu0 0
        %1010 = vmatprep.subr.bf16.mxu0 0
        %1011 = vmatpush1.bf16.msra.mxu0 0
        %1012 = vmatprep.subr.bf16.mxu0 0
        %1013 = vmatpush1.bf16.msra.mxu0 0
        %1014 = vmatprep.subr.bf16.mxu0 0
        %1015 = vmatpush1.bf16.msra.mxu0 0
        %1016 = vmatprep.subr.bf16.mxu0 0
        %1017 = vmatpush1.bf16.msra.mxu0 0
        %1018 = vmatprep.mubr.bf16.mxu0 0
        %1019 = vmatmul.mubr.bf16.gmra.mrb[0].mxu0 %v915
        %v1020 = vpop.f32.mrb[0].mxu0
        %v1021 = vadd.f32 %v936, %v1020
        %v1022 = vpop.f32.mrb[0].mxu0
        %v1023 = vpop.f32.mrb[0].mxu0
        %v1024 = vpop.f32.mrb[0].mxu0
        %1025 = vdwg.mxu0
        %v1026 = vld [vmem:[%s585] sm:$0xf]
        %1028 = vset.pattern.permute.xlu0 0
        %1029 = vperm.xlu0 %1028, %v1026
        %v1030 = vpop.permute.xlu0 %1029
        %v1032 = vmul.f32 %v1021, %v1030
        %v1033 = vld [vmem:[%s581] sm:$0xff]
        %vm1034 = vcmask 31744
        %v1036 = vsel %vm1034, %v1033, 0
        %vm1038 = vcmask 1043456
        %v1040 = vsel %vm1038, %v1032, 0
        %1042 = vmatprep.subr.mxu0 0.0
        %1043 = vmatpush1.msra.mxu0 %v1040
        %1044 = vmatprep.subr.mxu0 0.0
        %1045 = vmatpush1.msra.mxu0 0.0
        %1046 = vmatprep.subr.mxu0 0.0
        %1047 = vmatpush1.msra.mxu0 0.0
        %1048 = vmatprep.subr.mxu0 0.0
        %1049 = vmatpush1.msra.mxu0 0.0
        %1050 = vmatprep.subr.mxu0 0.0
        %1051 = vmatpush1.msra.mxu0 0.0
        %1052 = vmatprep.subr.mxu0 0.0
        %1053 = vmatpush1.msra.mxu0 0.0
        %1054 = vmatprep.subr.mxu0 0.0
        %1055 = vmatpush1.msra.mxu0 0.0
        %1056 = vmatprep.subr.mxu0 0.0
        %1057 = vmatpush1.msra.mxu0 0.0
        %1058 = vmatprep.subr.mxu0 0.0
        %1059 = vmatpush1.msra.mxu0 0.0
        %1060 = vmatprep.subr.mxu0 0.0
        %1061 = vmatpush1.msra.mxu0 0.0
        %1062 = vmatprep.subr.mxu0 0.0
        %1063 = vmatpush1.msra.mxu0 0.0
        %1064 = vmatprep.subr.mxu0 0.0
        %1065 = vmatpush1.msra.mxu0 0.0
        %1066 = vmatprep.subr.mxu0 0.0
        %1067 = vmatpush1.msra.mxu0 0.0
        %1068 = vmatprep.subr.mxu0 0.0
        %1069 = vmatpush1.msra.mxu0 0.0
        %1070 = vmatprep.subr.mxu0 0.0
        %1071 = vmatpush1.msra.mxu0 0.0
        %1072 = vmatprep.subr.mxu0 0.0
        %1073 = vmatpush1.msra.mxu0 0.0
        %1074 = vmatprep.subr.mxu0 0.0
        %1075 = vmatpush1.msra.mxu0 0.0
        %1076 = vmatprep.subr.mxu0 0.0
        %1077 = vmatpush1.msra.mxu0 0.0
        %1078 = vmatprep.subr.mxu0 0.0
        %1079 = vmatpush1.msra.mxu0 0.0
        %1080 = vmatprep.subr.mxu0 0.0
        %1081 = vmatpush1.msra.mxu0 0.0
        %1082 = vmatprep.subr.mxu0 0.0
        %1083 = vmatpush1.msra.mxu0 0.0
        %1084 = vmatprep.subr.mxu0 0.0
        %1085 = vmatpush1.msra.mxu0 0.0
        %1086 = vmatprep.subr.mxu0 0.0
        %1087 = vmatpush1.msra.mxu0 0.0
        %1088 = vmatprep.subr.mxu0 0.0
        %1089 = vmatpush1.msra.mxu0 0.0
        %1090 = vmatprep.subr.mxu0 0.0
        %1091 = vmatpush1.msra.mxu0 0.0
        %1092 = vmatprep.subr.mxu0 0.0
        %1093 = vmatpush1.msra.mxu0 0.0
        %1094 = vmatprep.subr.mxu0 0.0
        %1095 = vmatpush1.msra.mxu0 0.0
        %1096 = vmatprep.subr.mxu0 0.0
        %1097 = vmatpush1.msra.mxu0 0.0
        %1098 = vmatprep.subr.mxu0 0.0
        %1099 = vmatpush1.msra.mxu0 0.0
        %1100 = vmatprep.subr.mxu0 0.0
        %1101 = vmatpush1.msra.mxu0 0.0
        %1102 = vmatprep.subr.mxu0 0.0
        %1103 = vmatpush1.msra.mxu0 0.0
        %1104 = vmatprep.subr.mxu0 0.0
        %1105 = vmatpush1.msra.mxu0 0.0
        %1106 = vmatprep.mubr.f32.mxu0 0.0
        %1107 = vmatmul.mubr.f32.gmra.mrb[0].mxu0 %v1036
        %v1108 = vpop.f32.mrb[0].mxu0
        %v1109 = vadd.f32 0.0, %v1108
        %v1110 = vpop.f32.mrb[0].mxu0
        %1111 = vdwg.mxu0
        %v1112 = vadd.f32 %v741, %v1109
        %1113 = vst.msk [vmem:[%s589] sm:$0xff] %vm596, %v1112
        %p1114 = scmp.lt.s32.totalorder %s29, 1
        %s1115 = scalar_select %p1114, %s29, 1
        %s1116 = smul.addr %s1115, 8
        %s1117 = scalar_lea.vmem %s14, %s1116
        // Predicated region
        $region101: #{colt5_encoder_forward.11} parent=75 // pred_check
          %p1118 = pneg %p361
        $region102: #{colt5_encoder_forward.11} parent=75 // pred_check_branch
          %1120 = sbr.rel (%p1118) target = $region104
        $region103: #{colt5_encoder_forward.11} parent=75 // pred_region
          _
        $region104: #{colt5_encoder_forward.11} parent=75 // pred_fallthru
          _
      $region76: #{colt5_encoder_forward.11} parent=5 // pred_fallthru
        _
      %p1121 = scmp.le.s32.totalorder 2, %s24
      // Predicated region
      $region105: #{colt5_encoder_forward.11} parent=5 // pred_check
        %p1122 = pneg %p1121
      $region106: #{colt5_encoder_forward.11} parent=5 // pred_check_branch
        %1124 = sbr.rel (%p1122) target = $region108
      $region107: #{colt5_encoder_forward.11} parent=5 // pred_region
        %s1125 = ssub.s32 %s24, 2
        // Predicated region
        $region109: #{colt5_encoder_forward.11} parent=107 // pred_check
          %p1126 = pneg %p367
        $region110: #{colt5_encoder_forward.11} parent=107 // pred_check_branch
          %1128 = sbr.rel (%p1126) target = $region112
        $region111: #{colt5_encoder_forward.11} parent=107 // pred_region
          %p1129 = scmp.lt.s32.totalorder %s30, 1
          %s1130 = scalar_select %p1129, %s30, 1
          %s1131 = smul.addr %s1130, 8
          %s1132 = scalar_lea.vmem %s14, %s1131
        $region112: #{colt5_encoder_forward.11} parent=107 // pred_fallthru
          _
      $region108: #{colt5_encoder_forward.11} parent=5 // pred_fallthru
        _
    $region6: #{colt5_encoder_forward.11} parent=1 // loop_footer
      %s28 = sadd.s32 1, %s24
    $region7: #{colt5_encoder_forward.11} parent=1 // loop_footer_branch
      %23 = sbr.rel target = $region3
    $region8: #{colt5_encoder_forward.11} parent=1 // loop_exit
      _
    %1133 = vsyncpa [#allocation3], 1
    %s1134 = scalar_lea.sflag [#allocation3], 1
    %1135 = vsyncpa %s1134, 1
    %1136 = vsyncpa [#allocation5], 1
    %1137 = vsyncpa [#allocation8], 1
    %1138 = vsyncpa [#allocation11], 1

// kernel: colt5_encoder_forward.9
$region0: #{colt5_encoder_forward.9}
  #allocation0 [shape = 'u32[]', space=smem, size = 0x4, offset = 0x4, fixed_abs, tag = 'smem constant byte address 0x4 - core index']
  #allocation1 [shape = 'u32[144,128]{1,0:T(1,128)}', space=vmem, size = 0x12000, scoped, tag = 'internal scratch']
  %s0 = inlined_call_operand.vmem [shape: f32[2,8,32], index: 0, kind: input, shape index: {}]
  %s1 = inlined_call_operand.hbm [shape: f32[1,32], index: 1, kind: input, shape index: {}]
  %s2 = inlined_call_operand.vmem [shape: bf16[32,96], index: 2, kind: input, shape index: {}]
  %s3 = inlined_call_operand.hbm [shape: f32[1,96], index: 3, kind: input, shape index: {}]
  %s4 = inlined_call_operand.vmem [shape: bf16[32,32], index: 4, kind: input, shape index: {}]
  %s5 = inlined_call_operand.hbm [shape: f32[1,32], index: 5, kind: input, shape index: {}]
  %s6 = inlined_call_operand.vmem [shape: f32[2,8,32], index: 6, kind: output, shape index: {}]
  %s7 = sld [smem:[#allocation0]]
  $region69: #{colt5_encoder_forward.9} parent=0
    _
  %s9 = ssub.s32 1, %s7
  %s10 = scalar_select 0, %s9, %s7
  $region1: #{colt5_encoder_forward.9} parent=0
    #allocation2 [shape = 'u8[512]{0}', space=vmem, size = 0x400, scoped, tag = 'input window, operand 1, single buffered']
    #allocation3 [shape = 's32[2]{0}', space=sflag, size = 0x8, scoped, tag = 'scoped memory for colt5_encoder_forward.9']
    #allocation4 [shape = 'u8[512]{0}', space=vmem, size = 0x400, scoped, tag = 'input window, operand 3, single buffered']
    #allocation5 [shape = 's32[1]{0}', space=sflag, size = 0x4, scoped, tag = 'scoped memory for colt5_encoder_forward.9']
    #allocation6 [shape = 'u8[512]{0}', space=vmem, size = 0x400, scoped, tag = 'input window, operand 5, single buffered']
    %11 = vsyncpa [#allocation3], 0
    %12 = vsyncpa [#allocation5], 0
    loop: start=0, step=1, limit=4
    $region2: #{colt5_encoder_forward.9} parent=1 // loop_pre_header
      _
    $region3: #{colt5_encoder_forward.9} parent=1 // loop_header
      %s14 = sphi 0, %s18
      %p15 = scmp.ge.s32.totalorder %s14, 4
      %s24 = sphi 0, %s26
      %s27 = sphi 0, %s24
      %s28 = sphi 0, %s27
      %s44 = sphi 0, %s28
      %s48 = sphi 0, %s48
      %s50 = sphi 0, %s48
      %s51 = sphi 0, %s50
      %s65 = sphi 0, %s51
      %s69 = sphi 0, %s69
      %s71 = sphi 0, %s69
      %s72 = sphi 0, %s71
      %s86 = sphi 0, %s72
      %s90 = sphi 0, %s90
      %s92 = sphi 0, %s90
      %s93 = sphi 0, %s92
      %s107 = sphi 0, %s93
      %s111 = sphi 0, %s111
      %s113 = sphi 0, %s111
      %s114 = sphi 0, %s113
      %s128 = sphi 0, %s114
      %s132 = sphi 0, %s132
      %s134 = sphi 0, %s132
      %s135 = sphi 0, %s134
      %s149 = sphi 0, %s135
      %s155 = sphi 0, %s157
      %s158 = sphi 0, %s155
      %s159 = sphi 0, %s158
      %s175 = sphi 0, %s159
    $region4: #{colt5_encoder_forward.9} parent=1 // loop_header_branch
      %17 = sbr.rel (%p15) target = $region8
    $region5: #{colt5_encoder_forward.9} parent=1 // loop_body
      %s19 = ssub.s32 %s14, 1
      %s20 = ssub.s32 %s14, 2
      %s21 = sadd.s32 %s14, 1
      %s22 = ssub.s32 %s14, %s21
      %p23 = scmp.eq.s32.totalorder %s22, 0
      %s25 = sadd.s32 %s24, 1
      %s26 = scalar_select %p23, %s24, %s25
      %p29 = pneg %p23
      %p30 = scmp.eq.s32.totalorder %s14, 1
      %p31 = por %p29, %p30
      %p32 = scmp.ne.s32.totalorder %s24, %s27
      %p33 = scmp.eq.s32.totalorder %s14, 0
      %p34 = por %p32, %p33
      %p35 = scmp.ne.s32.totalorder %s24, %s27
      %p36 = scmp.eq.s32.totalorder %s19, 1
      %p37 = por %p35, %p36
      %p38 = scmp.ne.s32.totalorder %s27, %s28
      %p39 = scmp.eq.s32.totalorder %s19, 0
      %p40 = por %p38, %p39
      %p41 = scmp.ne.s32.totalorder %s27, %s28
      %p42 = scmp.eq.s32.totalorder %s20, 1
      %p43 = por %p41, %p42
      %p45 = scmp.ne.s32.totalorder %s28, %s44
      %p46 = scmp.eq.s32.totalorder %s20, 0
      %p47 = por %p45, %p46
      %s49 = sadd.s32 %s48, 1
      %p52 = scmp.eq.s32.totalorder %s14, 1
      %p53 = scmp.ne.s32.totalorder %s48, %s50
      %p54 = scmp.eq.s32.totalorder %s14, 0
      %p55 = por %p53, %p54
      %p56 = scmp.ne.s32.totalorder %s48, %s50
      %p57 = scmp.eq.s32.totalorder %s19, 1
      %p58 = por %p56, %p57
      %p59 = scmp.ne.s32.totalorder %s50, %s51
      %p60 = scmp.eq.s32.totalorder %s19, 0
      %p61 = por %p59, %p60
      %p62 = scmp.ne.s32.totalorder %s50, %s51
      %p63 = scmp.eq.s32.totalorder %s20, 1
      %p64 = por %p62, %p63
      %p66 = scmp.ne.s32.totalorder %s51, %s65
      %p67 = scmp.eq.s32.totalorder %s20, 0
      %p68 = por %p66, %p67
      %s70 = sadd.s32 %s69, 1
      %p73 = scmp.eq.s32.totalorder %s14, 1
      %p74 = scmp.ne.s32.totalorder %s69, %s71
      %p75 = scmp.eq.s32.totalorder %s14, 0
      %p76 = por %p74, %p75
      %p77 = scmp.ne.s32.totalorder %s69, %s71
      %p78 = scmp.eq.s32.totalorder %s19, 1
      %p79 = por %p77, %p78
      %p80 = scmp.ne.s32.totalorder %s71, %s72
      %p81 = scmp.eq.s32.totalorder %s19, 0
      %p82 = por %p80, %p81
      %p83 = scmp.ne.s32.totalorder %s71, %s72
      %p84 = scmp.eq.s32.totalorder %s20, 1
      %p85 = por %p83, %p84
      %p87 = scmp.ne.s32.totalorder %s72, %s86
      %p88 = scmp.eq.s32.totalorder %s20, 0
      %p89 = por %p87, %p88
      %s91 = sadd.s32 %s90, 1
      %p94 = scmp.eq.s32.totalorder %s14, 1
      %p95 = scmp.ne.s32.totalorder %s90, %s92
      %p96 = scmp.eq.s32.totalorder %s14, 0
      %p97 = por %p95, %p96
      %p98 = scmp.ne.s32.totalorder %s90, %s92
      %p99 = scmp.eq.s32.totalorder %s19, 1
      %p100 = por %p98, %p99
      %p101 = scmp.ne.s32.totalorder %s92, %s93
      %p102 = scmp.eq.s32.totalorder %s19, 0
      %p103 = por %p101, %p102
      %p104 = scmp.ne.s32.totalorder %s92, %s93
      %p105 = scmp.eq.s32.totalorder %s20, 1
      %p106 = por %p104, %p105
      %p108 = scmp.ne.s32.totalorder %s93, %s107
      %p109 = scmp.eq.s32.totalorder %s20, 0
      %p110 = por %p108, %p109
      %s112 = sadd.s32 %s111, 1
      %p115 = scmp.eq.s32.totalorder %s14, 1
      %p116 = scmp.ne.s32.totalorder %s111, %s113
      %p117 = scmp.eq.s32.totalorder %s14, 0
      %p118 = por %p116, %p117
      %p119 = scmp.ne.s32.totalorder %s111, %s113
      %p120 = scmp.eq.s32.totalorder %s19, 1
      %p121 = por %p119, %p120
      %p122 = scmp.ne.s32.totalorder %s113, %s114
      %p123 = scmp.eq.s32.totalorder %s19, 0
      %p124 = por %p122, %p123
      %p125 = scmp.ne.s32.totalorder %s113, %s114
      %p126 = scmp.eq.s32.totalorder %s20, 1
      %p127 = por %p125, %p126
      %p129 = scmp.ne.s32.totalorder %s114, %s128
      %p130 = scmp.eq.s32.totalorder %s20, 0
      %p131 = por %p129, %p130
      %s133 = sadd.s32 %s132, 1
      %p136 = scmp.eq.s32.totalorder %s14, 1
      %p137 = scmp.ne.s32.totalorder %s132, %s134
      %p138 = scmp.eq.s32.totalorder %s14, 0
      %p139 = por %p137, %p138
      %p140 = scmp.ne.s32.totalorder %s132, %s134
      %p141 = scmp.eq.s32.totalorder %s19, 1
      %p142 = por %p140, %p141
      %p143 = scmp.ne.s32.totalorder %s134, %s135
      %p144 = scmp.eq.s32.totalorder %s19, 0
      %p145 = por %p143, %p144
      %p146 = scmp.ne.s32.totalorder %s134, %s135
      %p147 = scmp.eq.s32.totalorder %s20, 1
      %p148 = por %p146, %p147
      %p150 = scmp.ne.s32.totalorder %s135, %s149
      %p151 = scmp.eq.s32.totalorder %s20, 0
      %p152 = por %p150, %p151
      %s153 = ssub.s32 %s14, %s21
      %p154 = scmp.eq.s32.totalorder %s153, 0
      %s156 = sadd.s32 %s155, 1
      %s157 = scalar_select %p154, %s155, %s156
      %p160 = pneg %p154
      %p161 = scmp.eq.s32.totalorder %s14, 1
      %p162 = por %p160, %p161
      %p163 = scmp.ne.s32.totalorder %s155, %s158
      %p164 = scmp.eq.s32.totalorder %s14, 0
      %p165 = por %p163, %p164
      %p166 = scmp.ne.s32.totalorder %s155, %s158
      %p167 = scmp.eq.s32.totalorder %s19, 1
      %p168 = por %p166, %p167
      %p169 = scmp.ne.s32.totalorder %s158, %s159
      %p170 = scmp.eq.s32.totalorder %s19, 0
      %p171 = por %p169, %p170
      %p172 = scmp.ne.s32.totalorder %s158, %s159
      %p173 = scmp.eq.s32.totalorder %s20, 1
      %p174 = por %p172, %p173
      %p176 = scmp.ne.s32.totalorder %s159, %s175
      %p177 = scmp.eq.s32.totalorder %s20, 0
      %p178 = por %p176, %p177
      %p179 = scmp.le.s32.totalorder 1, %s14
      %p180 = scmp.lt.s32.totalorder %s14, 3
      %p181 = pnand %p179, %p180
      %p182 = pneg %p181
      // Predicated region
      $region9: #{colt5_encoder_forward.9} parent=5 // pred_check
        _
      $region10: #{colt5_encoder_forward.9} parent=5 // pred_check_branch
        %184 = sbr.rel (%p181) target = $region12
      $region11: #{colt5_encoder_forward.9} parent=5 // pred_region
        %s185 = ssub.s32 %s14, 1
        // Predicated region
        $region13: #{colt5_encoder_forward.9} parent=11 // pred_check
          %p186 = pneg %p61
        $region14: #{colt5_encoder_forward.9} parent=11 // pred_check_branch
          %188 = sbr.rel (%p186) target = $region16
        $region15: #{colt5_encoder_forward.9} parent=11 // pred_region
          %s190 = ssub.s32 16, 16
          %191 = vsyncadd [#allocation3], %s190
          %s193 = sshll.u32 [#allocation2], 4
          %s194 = int_to_ptr.vmem [resolvable:$true] %s193
          %196 = dma.hbm_to_vmem [thread:$0]  %s1, 16, %s194, [#allocation3]
        $region16: #{colt5_encoder_forward.9} parent=11 // pred_fallthru
          _
        // Predicated region
        $region17: #{colt5_encoder_forward.9} parent=11 // pred_check
          %p197 = pneg %p82
        $region18: #{colt5_encoder_forward.9} parent=11 // pred_check_branch
          %199 = sbr.rel (%p197) target = $region20
        $region19: #{colt5_encoder_forward.9} parent=11 // pred_region
          _
        $region20: #{colt5_encoder_forward.9} parent=11 // pred_fallthru
          _
        // Predicated region
        $region21: #{colt5_encoder_forward.9} parent=11 // pred_check
          %p200 = pneg %p103
        $region22: #{colt5_encoder_forward.9} parent=11 // pred_check_branch
          %202 = sbr.rel (%p200) target = $region24
        $region23: #{colt5_encoder_forward.9} parent=11 // pred_region
          %s204 = ssub.s32 16, 16
          %205 = vsyncadd [#allocation5], %s204
          %s207 = sshll.u32 [#allocation4], 4
          %s208 = int_to_ptr.vmem [resolvable:$true] %s207
          %210 = dma.hbm_to_vmem [thread:$0]  %s3, 16, %s208, [#allocation5]
        $region24: #{colt5_encoder_forward.9} parent=11 // pred_fallthru
          _
        // Predicated region
        $region25: #{colt5_encoder_forward.9} parent=11 // pred_check
          %p211 = pneg %p124
        $region26: #{colt5_encoder_forward.9} parent=11 // pred_check_branch
          %213 = sbr.rel (%p211) target = $region28
        $region27: #{colt5_encoder_forward.9} parent=11 // pred_region
          _
        $region28: #{colt5_encoder_forward.9} parent=11 // pred_fallthru
          _
        // Predicated region
        $region29: #{colt5_encoder_forward.9} parent=11 // pred_check
          %p214 = pneg %p145
        $region30: #{colt5_encoder_forward.9} parent=11 // pred_check_branch
          %216 = sbr.rel (%p214) target = $region32
        $region31: #{colt5_encoder_forward.9} parent=11 // pred_region
          %s218 = ssub.s32 16, 16
          %219 = vsyncadd [#allocation5], %s218
          %s221 = sshll.u32 [#allocation6], 4
          %s222 = int_to_ptr.vmem [resolvable:$true] %s221
          %224 = dma.hbm_to_vmem [thread:$0]  %s5, 16, %s222, [#allocation5]
        $region32: #{colt5_encoder_forward.9} parent=11 // pred_fallthru
          _
      $region12: #{colt5_encoder_forward.9} parent=5 // pred_fallthru
        _
      %p225 = scmp.lt.s32.totalorder %s14, 2
      // Predicated region
      $region33: #{colt5_encoder_forward.9} parent=5 // pred_check
        %p226 = pneg %p225
      $region34: #{colt5_encoder_forward.9} parent=5 // pred_check_branch
        %228 = sbr.rel (%p226) target = $region36
      $region35: #{colt5_encoder_forward.9} parent=5 // pred_region
        // Predicated region
        $region37: #{colt5_encoder_forward.9} parent=35 // pred_check
          %p229 = pneg %p34
        $region38: #{colt5_encoder_forward.9} parent=35 // pred_check_branch
          %231 = sbr.rel (%p229) target = $region40
        $region39: #{colt5_encoder_forward.9} parent=35 // pred_region
          %p232 = scmp.lt.s32.totalorder %s14, 1
          %s233 = scalar_select %p232, %s14, 1
          %s234 = smul.addr %s233, 8
          %s235 = scalar_lea.vmem %s0, %s234
        $region40: #{colt5_encoder_forward.9} parent=35 // pred_fallthru
          _
      $region36: #{colt5_encoder_forward.9} parent=5 // pred_fallthru
        _
      %p236 = scmp.le.s32.totalorder 1, %s14
      %p237 = scmp.lt.s32.totalorder %s14, 3
      %p238 = pnand %p236, %p237
      %p239 = pneg %p238
      // Predicated region
      $region41: #{colt5_encoder_forward.9} parent=5 // pred_check
        _
      $region42: #{colt5_encoder_forward.9} parent=5 // pred_check_branch
        %241 = sbr.rel (%p238) target = $region44
      $region43: #{colt5_encoder_forward.9} parent=5 // pred_region
        %s242 = ssub.s32 %s14, 1
        // Predicated region
        $region45: #{colt5_encoder_forward.9} parent=43 // pred_check
          %p243 = pneg %p61
        $region46: #{colt5_encoder_forward.9} parent=43 // pred_check_branch
          %245 = sbr.rel (%p243) target = $region48
        $region47: #{colt5_encoder_forward.9} parent=43 // pred_region
          %246 = dma.done [#allocation3], 16
        $region48: #{colt5_encoder_forward.9} parent=43 // pred_fallthru
          _
        // Predicated region
        $region49: #{colt5_encoder_forward.9} parent=43 // pred_check
          %p247 = pneg %p103
        $region50: #{colt5_encoder_forward.9} parent=43 // pred_check_branch
          %249 = sbr.rel (%p247) target = $region52
        $region51: #{colt5_encoder_forward.9} parent=43 // pred_region
          %250 = dma.done [#allocation5], 16
        $region52: #{colt5_encoder_forward.9} parent=43 // pred_fallthru
          _
        // Predicated region
        $region53: #{colt5_encoder_forward.9} parent=43 // pred_check
          %p251 = pneg %p145
        $region54: #{colt5_encoder_forward.9} parent=43 // pred_check_branch
          %253 = sbr.rel (%p251) target = $region56
        $region55: #{colt5_encoder_forward.9} parent=43 // pred_region
          %254 = dma.done [#allocation5], 16
        $region56: #{colt5_encoder_forward.9} parent=43 // pred_fallthru
          _
        %p255 = scmp.lt.s32.totalorder %s19, 1
        %s256 = scalar_select %p255, %s19, 1
        %s257 = smul.addr %s256, 8
        %s258 = scalar_lea.vmem %s0, %s257
        %p259 = pneg %p40
        %p260 = pneg %p37
        %p261 = pneg %p61
        %p262 = pneg %p58
        %p263 = pneg %p82
        %p264 = pneg %p79
        %p265 = pneg %p103
        %p266 = pneg %p100
        %p267 = pneg %p124
        %p268 = pneg %p121
        %p269 = pneg %p145
        %p270 = pneg %p142
        %p271 = pneg %p171
        %p272 = pneg %p168
        %p273 = scmp.lt.s32.totalorder %s19, 1
        %s274 = scalar_select %p273, %s19, 1
        %s275 = smul.addr %s274, 8
        %s276 = scalar_lea.vmem %s6, %s275
        %p277 = scmp.lt.s32.totalorder %s19, 1
        %s278 = scalar_select %p277, %s19, 1
        %s279 = smul.addr %s278, 8
        %s280 = scalar_lea.vmem %s0, %s279
        %p281 = scmp.lt.s32.totalorder %s19, 1
        %s282 = scalar_select %p281, %s19, 1
        %s283 = smul.addr %s282, 8
        %s284 = scalar_lea.vmem %s6, %s283
        %v286 = vld [vmem:[%s280] sm:$0xff]
        %v287 = vmul.f32 %v286, %v286
        %vm288 = vcmask 261120
        %v289 = vsel %vm288, %v287, 0.0
        %290 = vadd.xlane.f32.xlu0 %v289
        %v291 = vpop.xlane.xlu0 %290
        %v292 = vrcp.pop 32.0
        %v293 = vmul.f32 %v291, %v292
        %v294 = vadd.f32 %v293, 1e-06
        %v295 = vrsqrt.pop %v294
        %v296 = vmul.f32 %v286, %v295
        %v297 = vld [vmem:[#allocation2] sm:$0x1]
        %v299 = vlaneseq
        %v300 = vshrl.u32 %v299, 7
        %v301 = vsub.s32 0, %v300
        %v302 = vrot.slane %v297, %v301
        %v304 = vmul.f32 %v296, %v302
        %v305 = vpack.c.bf16 %v304, %v304
        %v306 = vld [vmem:[%s2] sm:$0xf]
        %v307 = vld [vmem:[%s2 + $0x4] sm:$0xf]
        %v308 = vld [vmem:[%s2 + $0x8] sm:$0xf]
        %v309 = vld [vmem:[%s2 + $0xc] sm:$0xf]
        %v310 = vld [vmem:[#allocation4] sm:$0x1]
        %v312 = vlaneseq
        %v313 = vshrl.u32 %v312, 7
        %v314 = vsub.s32 0, %v313
        %v315 = vrot.slane %v310, %v314
        %v321 = vunpack.c.l.b16 %v306
        %v322 = vunpack.c.l.b16 %v307
        %v323 = vunpack.c.l.b16 %v308
        %v324 = vunpack.c.l.b16 %v309
        %v325 = vpack.c.b16 %v322, %v321
        %v326 = vpack.c.b16 %v324, %v323
        %v330 = vsel %vm288, %v305, 0
        %332 = vmatprep.subr.bf16.mxu0 0
        %333 = vmatpush1.bf16.msra.mxu0 %v325
        %334 = vmatprep.subr.bf16.mxu0 0
        %335 = vmatpush1.bf16.msra.mxu0 %v326
        %336 = vmatprep.subr.bf16.mxu0 0
        %337 = vmatpush1.bf16.msra.mxu0 0
        %338 = vmatprep.subr.bf16.mxu0 0
        %339 = vmatpush1.bf16.msra.mxu0 0
        %340 = vmatprep.subr.bf16.mxu0 0
        %341 = vmatpush1.bf16.msra.mxu0 0
        %342 = vmatprep.subr.bf16.mxu0 0
        %343 = vmatpush1.bf16.msra.mxu0 0
        %344 = vmatprep.subr.bf16.mxu0 0
        %345 = vmatpush1.bf16.msra.mxu0 0
        %346 = vmatprep.subr.bf16.mxu0 0
        %347 = vmatpush1.bf16.msra.mxu0 0
        %348 = vmatprep.subr.bf16.mxu0 0
        %349 = vmatpush1.bf16.msra.mxu0 0
        %350 = vmatprep.subr.bf16.mxu0 0
        %351 = vmatpush1.bf16.msra.mxu0 0
        %352 = vmatprep.subr.bf16.mxu0 0
        %353 = vmatpush1.bf16.msra.mxu0 0
        %354 = vmatprep.subr.bf16.mxu0 0
        %355 = vmatpush1.bf16.msra.mxu0 0
        %356 = vmatprep.subr.bf16.mxu0 0
        %357 = vmatpush1.bf16.msra.mxu0 0
        %358 = vmatprep.subr.bf16.mxu0 0
        %359 = vmatpush1.bf16.msra.mxu0 0
        %360 = vmatprep.subr.bf16.mxu0 0
        %361 = vmatpush1.bf16.msra.mxu0 0
        %362 = vmatprep.subr.bf16.mxu0 0
        %363 = vmatpush1.bf16.msra.mxu0 0
        %364 = vmatprep.mubr.bf16.mxu0 0
        %365 = vmatmul.mubr.bf16.gmra.mrb[0].mxu0 %v330
        %v366 = vpop.f32.mrb[0].mxu0
        %v367 = vadd.f32 %v315, %v366
        %v368 = vpop.f32.mrb[0].mxu0
        %v369 = vpop.f32.mrb[0].mxu0
        %v370 = vpop.f32.mrb[0].mxu0
        %371 = vdwg.mxu0
        %v372 = vpack.c.bf16 %v367, %v367
        %374 = vrot.lane.b32.xlu0 %v372, 96
        %v375 = vpop.permute.xlu0 %374
        %vm376 = vcmask 130048
        %v378 = vsel %vm376, %v372, 0
        %v381 = vsel %vm376, %v375, 0
        %383 = vmatprep.subr.bf16.mxu0 0
        %384 = vmatpush1.bf16.xpose.msra.mxu0 %v381
        %385 = vmatprep.subr.bf16.mxu0 0
        %386 = vmatpush1.bf16.xpose.msra.mxu0 0
        %387 = vmatprep.subr.bf16.mxu0 0
        %388 = vmatpush1.bf16.xpose.msra.mxu0 0
        %389 = vmatprep.subr.bf16.mxu0 0
        %390 = vmatpush1.bf16.xpose.msra.mxu0 0
        %391 = vmatprep.subr.bf16.mxu0 0
        %392 = vmatpush1.bf16.xpose.msra.mxu0 0
        %393 = vmatprep.subr.bf16.mxu0 0
        %394 = vmatpush1.bf16.xpose.msra.mxu0 0
        %395 = vmatprep.subr.bf16.mxu0 0
        %396 = vmatpush1.bf16.xpose.msra.mxu0 0
        %397 = vmatprep.subr.bf16.mxu0 0
        %398 = vmatpush1.bf16.xpose.msra.mxu0 0
        %399 = vmatprep.subr.bf16.mxu0 0
        %400 = vmatpush1.bf16.xpose.msra.mxu0 0
        %401 = vmatprep.subr.bf16.mxu0 0
        %402 = vmatpush1.bf16.xpose.msra.mxu0 0
        %403 = vmatprep.subr.bf16.mxu0 0
        %404 = vmatpush1.bf16.xpose.msra.mxu0 0
        %405 = vmatprep.subr.bf16.mxu0 0
        %406 = vmatpush1.bf16.xpose.msra.mxu0 0
        %407 = vmatprep.subr.bf16.mxu0 0
        %408 = vmatpush1.bf16.xpose.msra.mxu0 0
        %409 = vmatprep.subr.bf16.mxu0 0
        %410 = vmatpush1.bf16.xpose.msra.mxu0 0
        %411 = vmatprep.subr.bf16.mxu0 0
        %412 = vmatpush1.bf16.xpose.msra.mxu0 0
        %413 = vmatprep.subr.bf16.mxu0 0
        %414 = vmatpush1.bf16.xpose.msra.mxu0 0
        %415 = vmatprep.mubr.bf16.mxu0 0
        %416 = vmatmul.mubr.bf16.gmra.mrb[0].mxu0 %v378
        %v417 = vpop.f32.mrb[0].mxu0
        %v418 = vadd.f32 0.0, %v417
        %v419 = vpop.f32.mrb[0].mxu0
        %v420 = vpop.f32.mrb[0].mxu0
        %v421 = vpop.f32.mrb[0].mxu0
        %422 = vdwg.mxu0
        %v423 = vmul.f32 %v418, 0.25
        %vm424 = vcmask 64512
        %v425 = vsel %vm424, %v423, -inf
        %426 = vmax.xlane.f32.xlu0 %v425
        %v427 = vpop.xlane.xlu0 %426
        %v428 = vsub.f32 %v423, %v427
        %v429 = vmul.f32 %v428, 1.442695
        %v430 = vpow.pop %v429
        %v431 = vsel %vm424, %v430, 0.0
        %432 = vadd.xlane.f32.xlu0 %v431
        %v433 = vpop.xlane.xlu0 %432
        %v434 = vpack.c.bf16 %v430, %v430
        %435 = vrot.lane.b32.xlu0 %v372, 64
        %v436 = vpop.permute.xlu0 %435
        %v438 = vsel %vm424, %v434, 0
        %vm440 = vcmask 1043456
        %v442 = vsel %vm440, %v436, 0
        %444 = vmatprep.subr.bf16.mxu0 0
        %445 = vmatpush1.bf16.msra.mxu0 %v442
        %446 = vmatprep.subr.bf16.mxu0 0
        %447 = vmatpush1.bf16.msra.mxu0 0
        %448 = vmatprep.subr.bf16.mxu0 0
        %449 = vmatpush1.bf16.msra.mxu0 0
        %450 = vmatprep.subr.bf16.mxu0 0
        %451 = vmatpush1.bf16.msra.mxu0 0
        %452 = vmatprep.subr.bf16.mxu0 0
        %453 = vmatpush1.bf16.msra.mxu0 0
        %454 = vmatprep.subr.bf16.mxu0 0
        %455 = vmatpush1.bf16.msra.mxu0 0
        %456 = vmatprep.subr.bf16.mxu0 0
        %457 = vmatpush1.bf16.msra.mxu0 0
        %458 = vmatprep.subr.bf16.mxu0 0
        %459 = vmatpush1.bf16.msra.mxu0 0
        %460 = vmatprep.subr.bf16.mxu0 0
        %461 = vmatpush1.bf16.msra.mxu0 0
        %462 = vmatprep.subr.bf16.mxu0 0
        %463 = vmatpush1.bf16.msra.mxu0 0
        %464 = vmatprep.subr.bf16.mxu0 0
        %465 = vmatpush1.bf16.msra.mxu0 0
        %466 = vmatprep.subr.bf16.mxu0 0
        %467 = vmatpush1.bf16.msra.mxu0 0
        %468 = vmatprep.subr.bf16.mxu0 0
        %469 = vmatpush1.bf16.msra.mxu0 0
        %470 = vmatprep.subr.bf16.mxu0 0
        %471 = vmatpush1.bf16.msra.mxu0 0
        %472 = vmatprep.subr.bf16.mxu0 0
        %473 = vmatpush1.bf16.msra.mxu0 0
        %474 = vmatprep.subr.bf16.mxu0 0
        %475 = vmatpush1.bf16.msra.mxu0 0
        %476 = vmatprep.mubr.bf16.mxu0 0
        %477 = vmatmul.mubr.bf16.gmra.mrb[0].mxu0 %v438
        %v478 = vpop.f32.mrb[0].mxu0
        %v479 = vadd.f32 0.0, %v478
        %v480 = vpop.f32.mrb[0].mxu0
        %v481 = vpop.f32.mrb[0].mxu0
        %v482 = vpop.f32.mrb[0].mxu0
        %483 = vdwg.mxu0
        %v484 = vrcp.pop %v433
        %v485 = vmul.f32 %v479, %v484
        %486 = vrot.lane.b32.xlu0 %v372, 112
        %v487 = vpop.permute.xlu0 %486
        %488 = vrot.lane.b32.xlu0 %v372, 80
        %v489 = vpop.permute.xlu0 %488
        %v491 = vsel %vm376, %v487, 0
        %v494 = vsel %vm376, %v489, 0
        %496 = vmatprep.subr.bf16.mxu0 0
        %497 = vmatpush1.bf16.xpose.msra.mxu0 %v494
        %498 = vmatprep.subr.bf16.mxu0 0
        %499 = vmatpush1.bf16.xpose.msra.mxu0 0
        %500 = vmatprep.subr.bf16.mxu0 0
        %501 = vmatpush1.bf16.xpose.msra.mxu0 0
        %502 = vmatprep.subr.bf16.mxu0 0
        %503 = vmatpush1.bf16.xpose.msra.mxu0 0
        %504 = vmatprep.subr.bf16.mxu0 0
        %505 = vmatpush1.bf16.xpose.msra.mxu0 0
        %506 = vmatprep.subr.bf16.mxu0 0
        %507 = vmatpush1.bf16.xpose.msra.mxu0 0
        %508 = vmatprep.subr.bf16.mxu0 0
        %509 = vmatpush1.bf16.xpose.msra.mxu0 0
        %510 = vmatprep.subr.bf16.mxu0 0
        %511 = vmatpush1.bf16.xpose.msra.mxu0 0
        %512 = vmatprep.subr.bf16.mxu0 0
        %513 = vmatpush1.bf16.xpose.msra.mxu0 0
        %514 = vmatprep.subr.bf16.mxu0 0
        %515 = vmatpush1.bf16.xpose.msra.mxu0 0
        %516 = vmatprep.subr.bf16.mxu0 0
        %517 = vmatpush1.bf16.xpose.msra.mxu0 0
        %518 = vmatprep.subr.bf16.mxu0 0
        %519 = vmatpush1.bf16.xpose.msra.mxu0 0
        %520 = vmatprep.subr.bf16.mxu0 0
        %521 = vmatpush1.bf16.xpose.msra.mxu0 0
        %522 = vmatprep.subr.bf16.mxu0 0
        %523 = vmatpush1.bf16.xpose.msra.mxu0 0
        %524 = vmatprep.subr.bf16.mxu0 0
        %525 = vmatpush1.bf16.xpose.msra.mxu0 0
        %526 = vmatprep.subr.bf16.mxu0 0
        %527 = vmatpush1.bf16.xpose.msra.mxu0 0
        %528 = vmatprep.mubr.bf16.mxu0 0
        %529 = vmatmul.mubr.bf16.gmra.mrb[0].mxu0 %v491
        %v530 = vpop.f32.mrb[0].mxu0
        %v531 = vadd.f32 0.0, %v530
        %v532 = vpop.f32.mrb[0].mxu0
        %v533 = vpop.f32.mrb[0].mxu0
        %v534 = vpop.f32.mrb[0].mxu0
        %535 = vdwg.mxu0
        %v536 = vmul.f32 %v531, 0.25
        %v537 = vsel %vm424, %v536, -inf
        %538 = vmax.xlane.f32.xlu0 %v537
        %v539 = vpop.xlane.xlu0 %538
        %v540 = vsub.f32 %v536, %v539
        %v541 = vmul.f32 %v540, 1.442695
        %v542 = vpow.pop %v541
        %v543 = vsel %vm424, %v542, 0.0
        %544 = vadd.xlane.f32.xlu0 %v543
        %v545 = vpop.xlane.xlu0 %544
        %v546 = vpack.c.bf16 %v542, %v542
        %547 = vrot.lane.b32.xlu0 %v372, 48
        %v548 = vpop.permute.xlu0 %547
        %v550 = vsel %vm424, %v546, 0
        %v553 = vsel %vm440, %v548, 0
        %555 = vmatprep.subr.bf16.mxu0 0
        %556 = vmatpush1.bf16.msra.mxu0 %v553
        %557 = vmatprep.subr.bf16.mxu0 0
        %558 = vmatpush1.bf16.msra.mxu0 0
        %559 = vmatprep.subr.bf16.mxu0 0
        %560 = vmatpush1.bf16.msra.mxu0 0
        %561 = vmatprep.subr.bf16.mxu0 0
        %562 = vmatpush1.bf16.msra.mxu0 0
        %563 = vmatprep.subr.bf16.mxu0 0
        %564 = vmatpush1.bf16.msra.mxu0 0
        %565 = vmatprep.subr.bf16.mxu0 0
        %566 = vmatpush1.bf16.msra.mxu0 0
        %567 = vmatprep.subr.bf16.mxu0 0
        %568 = vmatpush1.bf16.msra.mxu0 0
        %569 = vmatprep.subr.bf16.mxu0 0
        %570 = vmatpush1.bf16.msra.mxu0 0
        %571 = vmatprep.subr.bf16.mxu0 0
        %572 = vmatpush1.bf16.msra.mxu0 0
        %573 = vmatprep.subr.bf16.mxu0 0
        %574 = vmatpush1.bf16.msra.mxu0 0
        %575 = vmatprep.subr.bf16.mxu0 0
        %576 = vmatpush1.bf16.msra.mxu0 0
        %577 = vmatprep.subr.bf16.mxu0 0
        %578 = vmatpush1.bf16.msra.mxu0 0
        %579 = vmatprep.subr.bf16.mxu0 0
        %580 = vmatpush1.bf16.msra.mxu0 0
        %581 = vmatprep.subr.bf16.mxu0 0
        %582 = vmatpush1.bf16.msra.mxu0 0
        %583 = vmatprep.subr.bf16.mxu0 0
        %584 = vmatpush1.bf16.msra.mxu0 0
        %585 = vmatprep.subr.bf16.mxu0 0
        %586 = vmatpush1.bf16.msra.mxu0 0
        %587 = vmatprep.mubr.bf16.mxu0 0
        %588 = vmatmul.mubr.bf16.gmra.mrb[0].mxu0 %v550
        %v589 = vpop.f32.mrb[0].mxu0
        %v590 = vadd.f32 0.0, %v589
        %v591 = vpop.f32.mrb[0].mxu0
        %v592 = vpop.f32.mrb[0].mxu0
        %v593 = vpop.f32.mrb[0].mxu0
        %594 = vdwg.mxu0
        %v595 = vrcp.pop %v545
        %v596 = vmul.f32 %v590, %v595
        %598 = vrot.lane.b32.xlu0 %v596, 16
        %v599 = vpop.permute.xlu0 %598
        %v601 = vsel %vm376, %v485, %v599
        %v602 = vpack.c.bf16 %v601, %v601
        %v603 = vld [vmem:[%s4] sm:$0xf]
        %v604 = vld [vmem:[%s4 + $0x4] sm:$0xf]
        %v605 = vld [vmem:[%s4 + $0x8] sm:$0xf]
        %v606 = vld [vmem:[%s4 + $0xc] sm:$0xf]
        %v607 = vld [vmem:[#allocation6] sm:$0x1]
        %v609 = vlaneseq
        %v610 = vshrl.u32 %v609, 7
        %v611 = vsub.s32 0, %v610
        %v612 = vrot.slane %v607, %v611
        %v618 = vunpack.c.l.b16 %v603
        %v619 = vunpack.c.l.b16 %v604
        %v620 = vunpack.c.l.b16 %v605
        %v621 = vunpack.c.l.b16 %v606
        %v622 = vpack.c.b16 %v619, %v618
        %v623 = vpack.c.b16 %v621, %v620
        %v627 = vsel %vm288, %v602, 0
        %629 = vmatprep.subr.bf16.mxu0 0
        %630 = vmatpush1.bf16.msra.mxu0 %v622
        %631 = vmatprep.subr.bf16.mxu0 0
        %632 = vmatpush1.bf16.msra.mxu0 %v623
        %633 = vmatprep.subr.bf16.mxu0 0
        %634 = vmatpush1.bf16.msra.mxu0 0
        %635 = vmatprep.subr.bf16.mxu0 0
        %636 = vmatpush1.bf16.msra.mxu0 0
        %637 = vmatprep.subr.bf16.mxu0 0
        %638 = vmatpush1.bf16.msra.mxu0 0
        %639 = vmatprep.subr.bf16.mxu0 0
        %640 = vmatpush1.bf16.msra.mxu0 0
        %641 = vmatprep.subr.bf16.mxu0 0
        %642 = vmatpush1.bf16.msra.mxu0 0
        %643 = vmatprep.subr.bf16.mxu0 0
        %644 = vmatpush1.bf16.msra.mxu0 0
        %645 = vmatprep.subr.bf16.mxu0 0
        %646 = vmatpush1.bf16.msra.mxu0 0
        %647 = vmatprep.subr.bf16.mxu0 0
        %648 = vmatpush1.bf16.msra.mxu0 0
        %649 = vmatprep.subr.bf16.mxu0 0
        %650 = vmatpush1.bf16.msra.mxu0 0
        %651 = vmatprep.subr.bf16.mxu0 0
        %652 = vmatpush1.bf16.msra.mxu0 0
        %653 = vmatprep.subr.bf16.mxu0 0
        %654 = vmatpush1.bf16.msra.mxu0 0
        %655 = vmatprep.subr.bf16.mxu0 0
        %656 = vmatpush1.bf16.msra.mxu0 0
        %657 = vmatprep.subr.bf16.mxu0 0
        %658 = vmatpush1.bf16.msra.mxu0 0
        %659 = vmatprep.subr.bf16.mxu0 0
        %660 = vmatpush1.bf16.msra.mxu0 0
        %661 = vmatprep.mubr.bf16.mxu0 0
        %662 = vmatmul.mubr.bf16.gmra.mrb[0].mxu0 %v627
        %v663 = vpop.f32.mrb[0].mxu0
        %v664 = vadd.f32 %v612, %v663
        %v665 = vpop.f32.mrb[0].mxu0
        %v666 = vpop.f32.mrb[0].mxu0
        %v667 = vpop.f32.mrb[0].mxu0
        %668 = vdwg.mxu0
        %669 = vst.msk [vmem:[%s284] sm:$0xff] %vm288, %v664
        %p670 = scmp.lt.s32.totalorder %s19, 1
        %s671 = scalar_select %p670, %s19, 1
        %s672 = smul.addr %s671, 8
        %s673 = scalar_lea.vmem %s6, %s672
        // Predicated region
        $region57: #{colt5_encoder_forward.9} parent=43 // pred_check
          %p674 = pneg %p168
        $region58: #{colt5_encoder_forward.9} parent=43 // pred_check_branch
          %676 = sbr.rel (%p674) target = $region60
        $region59: #{colt5_encoder_forward.9} parent=43 // pred_region
          _
        $region60: #{colt5_encoder_forward.9} parent=43 // pred_fallthru
          _
      $region44: #{colt5_encoder_forward.9} parent=5 // pred_fallthru
        _
      %p677 = scmp.le.s32.totalorder 2, %s14
      // Predicated region
      $region61: #{colt5_encoder_forward.9} parent=5 // pred_check
        %p678 = pneg %p677
      $region62: #{colt5_encoder_forward.9} parent=5 // pred_check_branch
        %680 = sbr.rel (%p678) target = $region64
      $region63: #{colt5_encoder_forward.9} parent=5 // pred_region
        %s681 = ssub.s32 %s14, 2
        // Predicated region
        $region65: #{colt5_encoder_forward.9} parent=63 // pred_check
          %p682 = pneg %p174
        $region66: #{colt5_encoder_forward.9} parent=63 // pred_check_branch
          %684 = sbr.rel (%p682) target = $region68
        $region67: #{colt5_encoder_forward.9} parent=63 // pred_region
          %p685 = scmp.lt.s32.totalorder %s20, 1
          %s686 = scalar_select %p685, %s20, 1
          %s687 = smul.addr %s686, 8
          %s688 = scalar_lea.vmem %s6, %s687
        $region68: #{colt5_encoder_forward.9} parent=63 // pred_fallthru
          _
      $region64: #{colt5_encoder_forward.9} parent=5 // pred_fallthru
        _
    $region6: #{colt5_encoder_forward.9} parent=1 // loop_footer
      %s18 = sadd.s32 1, %s14
    $region7: #{colt5_encoder_forward.9} parent=1 // loop_footer_branch
      %13 = sbr.rel target = $region3
    $region8: #{colt5_encoder_forward.9} parent=1 // loop_exit
      _
    %689 = vsyncpa [#allocation3], 1
    %s690 = scalar_lea.sflag [#allocation3], 1
    %691 = vsyncpa %s690, 1
    %692 = vsyncpa [#allocation5], 1

</llo_original>
